<compile_context>
chip_gen: v7x
topology: tpu7x:2x2x1
jax: 0.10.0
libtpu: 0.0.40
codegen_flags: <defaults>
</compile_context>

<pallas_src>
import jax
import jax.numpy as jnp
from jax.experimental import pallas as pl
from jax.experimental.pallas import tpu as pltpu

IN_FEATURES = 2048 * 3   # 6144
HIDDEN = 200
OUT = 40
K_CHUNK = 2048           # 6144 = 3 chunks; keeps the bf16 cast temp small
N_CHUNKS = IN_FEATURES // K_CHUNK


def _round_up(n, m):
    return ((n + m - 1) // m) * m


def _mlp_kernel(x_ref, w1_ref, b1_ref, w2_ref, b2_ref, o_ref):
    tb = x_ref.shape[0]

    # ---- Linear 1 (bf16 MXU, f32 accumulation), chunked over K -----------
    # Chunking the cast keeps the bf16 temp at TB x 2048 instead of a full
    # TB x 6144 copy (VMEM headroom; matters most on v7x's 64 MiB VMEM).
    h = jnp.zeros((tb, HIDDEN), jnp.float32)
    for kk in range(N_CHUNKS):
        lo = kk * K_CHUNK
        xk = x_ref[:, lo:lo + K_CHUNK].astype(jnp.bfloat16)   # no-op if x is bf16
        h = h + jnp.dot(xk, w1_ref[lo:lo + K_CHUNK, :],
                        preferred_element_type=jnp.float32)

    # ---- bias + ReLU (VPU) ------------------------------------------------
    h = jnp.maximum(h + b1_ref[...], 0.0)                     # (TB,200)+(1,200)

    # ---- Linear 2 (tiny; bf16 inputs, f32 accumulation) -------------------
    logits = jnp.dot(h.astype(jnp.bfloat16), w2_ref[...],
                     preferred_element_type=jnp.float32)
    logits = logits + b2_ref[...]                              # (TB,40)+(1,40)

    # ---- Softmax over dim=1 (numerically stable, exact normalization) -----
    m = jnp.max(logits, axis=1, keepdims=True)
    e = jnp.exp(logits - m)
    denom = jnp.sum(e, axis=1, keepdims=True)
    o_ref[...] = (e / denom).astype(o_ref.dtype)


def prepare_params(w1, b1, w2, b2):
    """One-time parameter prep: W1/W2 -> bf16, biases -> (1,N) f32 rows."""
    return (
        w1.astype(jnp.bfloat16),                    # (6144, 200) bf16
        b1.reshape(1, HIDDEN).astype(jnp.float32),  # (1, 200) f32
        w2.astype(jnp.bfloat16),                    # (200, 40) bf16
        b2.reshape(1, OUT).astype(jnp.float32),     # (1, 40) f32
    )


def _resident_spec(shape, single_buffer):
    """Constant-index (VMEM-resident) parameter block."""
    if single_buffer:
        return pl.BlockSpec(shape, lambda i: (0, 0), pipeline_mode=pl.Buffered(1))
    return pl.BlockSpec(shape, lambda i: (0, 0))


def _build_mlp_call(B, TB, x_dtype, single_buffer_params):
    grid = (pl.cdiv(B, TB),)
    cost = pl.CostEstimate(
        flops=2 * B * IN_FEATURES * HIDDEN + 2 * B * HIDDEN * OUT,
        transcendentals=B * OUT,
        bytes_accessed=(B * IN_FEATURES * jnp.dtype(x_dtype).itemsize
                        + IN_FEATURES * HIDDEN * 2 + HIDDEN * OUT * 2
                        + (HIDDEN + OUT) * 4
                        + B * OUT * 4),
    )
    return pl.pallas_call(
        _mlp_kernel,
        out_shape=jax.ShapeDtypeStruct((B, OUT), jnp.float32),
        grid=grid,
        in_specs=[
            pl.BlockSpec((TB, IN_FEATURES), lambda i: (i, 0)),      # X: streamed
            _resident_spec((IN_FEATURES, HIDDEN), single_buffer_params),  # W1
            _resident_spec((1, HIDDEN), single_buffer_params),            # b1
            _resident_spec((HIDDEN, OUT), single_buffer_params),          # W2
            _resident_spec((1, OUT), single_buffer_params),               # b2
        ],
        out_specs=pl.BlockSpec((TB, OUT), lambda i: (i, 0)),
        compiler_params=pltpu.CompilerParams(
            dimension_semantics=("parallel",),   # megacore sharding (v7x)
            vmem_limit_bytes=48 << 20,           # fits v7x's 64 MiB physical VMEM
        ),
        cost_estimate=cost,
    )


def mlp_forward(x, w1_bf16, b1r, w2_bf16, b2r, *, max_tile=512):
    """x: (B, ...) with prod(tail) == 6144 (f32 or bf16). Returns (B, 40) f32."""
    B = x.shape[0]
    x2d = x.reshape(B, -1)                       # flatten(1,-1); no dtype cast here
    assert x2d.shape[1] == IN_FEATURES

    # Batch tile: multiple of 8 (f32 sublane), capped at max_tile; keep >= 2
    # grid tiles when the batch allows it so both v7x TensorCores get work.
    TB = min(max_tile, _round_up(B, 8))
    if B > 8 and pl.cdiv(B, TB) < 2:
        TB = max(8, _round_up(pl.cdiv(B, 2), 8))

    args = (x2d, w1_bf16, b1r, w2_bf16, b2r)
    try:
        return _build_mlp_call(B, TB, x2d.dtype, True)(*args)
    except Exception:
        # pl.Buffered(1) unsupported on this jax build: fall back to default
        # double buffering of the resident params (identical results).
        return _build_mlp_call(B, TB, x2d.dtype, False)(*args)


def _init_params(key):
    """Deterministic parameter init (PyTorch-style uniform bounds)."""
    k1, k2, k3, k4 = jax.random.split(key, 4)
    bound1 = 1.0 / jnp.sqrt(IN_FEATURES)
    bound2 = 1.0 / jnp.sqrt(HIDDEN)
    # stored as (in, out) — i.e. transpose of torch's (out, in) weight layout
    w1 = jax.random.uniform(k1, (IN_FEATURES, HIDDEN), jnp.float32, -bound1, bound1)
    b1 = jax.random.uniform(k2, (HIDDEN,), jnp.float32, -bound1, bound1)
    w2 = jax.random.uniform(k3, (HIDDEN, OUT), jnp.float32, -bound2, bound2)
    b2 = jax.random.uniform(k4, (OUT,), jnp.float32, -bound2, bound2)
    return w1, b1, w2, b2


if __name__ == "__main__":
    key = jax.random.PRNGKey(0)
    kx, kp = jax.random.split(key)

    # Input consistent with flatten(1,-1) -> 6144 features: (B=2, C=3, L=2048)
    x = jax.random.normal(kx, (2, 3, 2048), dtype=jnp.float32)
    w1, b1, w2, b2 = _init_params(kp)
    params = prepare_params(w1, b1, w2, b2)      # one-time bf16 cast of W1/W2

    out = jax.block_until_ready(mlp_forward(x, *params))

    assert out.shape == (2, OUT)
    # softmax rows sum to 1 (exact division in the epilogue)
    assert bool(jnp.allclose(jnp.sum(out, axis=1), 1.0, atol=1e-4))

    # reference in plain JAX with the same bf16 matmul inputs / f32 accumulation
    # (bf16 matmuls => ~1e-3 relative deviation vs a pure-f32 PyTorch Linear)
    xf = x.reshape(2, -1)
    h_ref = jnp.dot(xf.astype(jnp.bfloat16), w1.astype(jnp.bfloat16),
                    preferred_element_type=jnp.float32) + b1
    h_ref = jnp.maximum(h_ref, 0.0)
    logits_ref = jnp.dot(h_ref.astype(jnp.bfloat16), w2.astype(jnp.bfloat16),
                         preferred_element_type=jnp.float32) + b2
    ref = jax.nn.softmax(logits_ref, axis=1)
    assert bool(jnp.allclose(out, ref, atol=3e-3, rtol=3e-3))

    print("KERNEL_OK")
</pallas_src>

<mosaic_0001>
module attributes {stable_mosaic.version = 11 : i64} {
  func.func @_mlp_kernel(%arg0: i32, %arg1: memref<8x6144xf32, #tpu.memory_space<vmem>>, %arg2: memref<6144x200xbf16, #tpu.memory_space<vmem>>, %arg3: memref<1x200xf32, #tpu.memory_space<vmem>>, %arg4: memref<200x40xbf16, #tpu.memory_space<vmem>>, %arg5: memref<1x40xf32, #tpu.memory_space<vmem>>, %arg6: memref<8x40xf32, #tpu.memory_space<vmem>>) attributes {dimension_semantics = [#tpu.dimension_semantics<parallel>], iteration_bounds = array<i64: 1>, scalar_prefetch = 0 : i64, scratch_operands = 0 : i64, tpu.core_type = #tpu.core_type<tc>, window_params = [{transform_indices = @transform_0, window_bounds = array<i64: 8, 6144>}, {pipeline_mode = #tpu.pipeline_mode<synchronous>, transform_indices = @transform_1, window_bounds = array<i64: 6144, 200>}, {pipeline_mode = #tpu.pipeline_mode<synchronous>, transform_indices = @transform_2, window_bounds = array<i64: 1, 200>}, {pipeline_mode = #tpu.pipeline_mode<synchronous>, transform_indices = @transform_3, window_bounds = array<i64: 200, 40>}, {pipeline_mode = #tpu.pipeline_mode<synchronous>, transform_indices = @transform_4, window_bounds = array<i64: 1, 40>}, {transform_indices = @transform_5, window_bounds = array<i64: 8, 40>}]} {
    %cst = arith.constant 0.000000e+00 : f32
    %0 = vector.broadcast %cst : f32 to vector<8x200xf32>
    %c0 = arith.constant 0 : index
    %c0_0 = arith.constant 0 : index
    %1 = vector.load %arg1[%c0, %c0_0] : memref<8x6144xf32, #tpu.memory_space<vmem>>, vector<8x2048xf32>
    %2 = arith.truncf %1 : vector<8x2048xf32> to vector<8x2048xbf16>
    %c0_1 = arith.constant 0 : index
    %c0_2 = arith.constant 0 : index
    %3 = vector.load %arg2[%c0_1, %c0_2] : memref<6144x200xbf16, #tpu.memory_space<vmem>>, vector<2048x200xbf16>
    %cst_3 = arith.constant dense<0.000000e+00> : vector<8x200xf32>
    %4 = tpu.matmul %2, %3, %cst_3 {dimension_numbers = #tpu.dot_dimension_numbers<[1], [0], [0], [1], [0, 0, 1, 1], [], []>} : vector<8x2048xbf16>, vector<2048x200xbf16>, vector<8x200xf32> -> vector<8x200xf32>
    %5 = arith.addf %0, %4 : vector<8x200xf32>
    %c0_4 = arith.constant 0 : index
    %c2048 = arith.constant 2048 : index
    %6 = vector.load %arg1[%c0_4, %c2048] : memref<8x6144xf32, #tpu.memory_space<vmem>>, vector<8x2048xf32>
    %7 = arith.truncf %6 : vector<8x2048xf32> to vector<8x2048xbf16>
    %c2048_5 = arith.constant 2048 : index
    %c0_6 = arith.constant 0 : index
    %8 = vector.load %arg2[%c2048_5, %c0_6] : memref<6144x200xbf16, #tpu.memory_space<vmem>>, vector<2048x200xbf16>
    %cst_7 = arith.constant dense<0.000000e+00> : vector<8x200xf32>
    %9 = tpu.matmul %7, %8, %cst_7 {dimension_numbers = #tpu.dot_dimension_numbers<[1], [0], [0], [1], [0, 0, 1, 1], [], []>} : vector<8x2048xbf16>, vector<2048x200xbf16>, vector<8x200xf32> -> vector<8x200xf32>
    %10 = arith.addf %5, %9 : vector<8x200xf32>
    %c0_8 = arith.constant 0 : index
    %c4096 = arith.constant 4096 : index
    %11 = vector.load %arg1[%c0_8, %c4096] : memref<8x6144xf32, #tpu.memory_space<vmem>>, vector<8x2048xf32>
    %12 = arith.truncf %11 : vector<8x2048xf32> to vector<8x2048xbf16>
    %c4096_9 = arith.constant 4096 : index
    %c0_10 = arith.constant 0 : index
    %13 = vector.load %arg2[%c4096_9, %c0_10] : memref<6144x200xbf16, #tpu.memory_space<vmem>>, vector<2048x200xbf16>
    %cst_11 = arith.constant dense<0.000000e+00> : vector<8x200xf32>
    %14 = tpu.matmul %12, %13, %cst_11 {dimension_numbers = #tpu.dot_dimension_numbers<[1], [0], [0], [1], [0, 0, 1, 1], [], []>} : vector<8x2048xbf16>, vector<2048x200xbf16>, vector<8x200xf32> -> vector<8x200xf32>
    %15 = arith.addf %10, %14 : vector<8x200xf32>
    %c0_12 = arith.constant 0 : index
    %c0_13 = arith.constant 0 : index
    %16 = vector.load %arg3[%c0_12, %c0_13] : memref<1x200xf32, #tpu.memory_space<vmem>>, vector<1x200xf32>
    %17 = vector.broadcast %16 : vector<1x200xf32> to vector<8x200xf32>
    %18 = arith.addf %15, %17 : vector<8x200xf32>
    %cst_14 = arith.constant 0.000000e+00 : f32
    %19 = vector.broadcast %cst_14 : f32 to vector<8x200xf32>
    %20 = arith.maximumf %18, %19 : vector<8x200xf32>
    %21 = arith.truncf %20 : vector<8x200xf32> to vector<8x200xbf16>
    %c0_15 = arith.constant 0 : index
    %c0_16 = arith.constant 0 : index
    %22 = vector.load %arg4[%c0_15, %c0_16] : memref<200x40xbf16, #tpu.memory_space<vmem>>, vector<200x40xbf16>
    %cst_17 = arith.constant dense<0.000000e+00> : vector<8x40xf32>
    %23 = tpu.matmul %21, %22, %cst_17 {dimension_numbers = #tpu.dot_dimension_numbers<[1], [0], [0], [1], [0, 0, 1, 1], [], []>} : vector<8x200xbf16>, vector<200x40xbf16>, vector<8x40xf32> -> vector<8x40xf32>
    %c0_18 = arith.constant 0 : index
    %c0_19 = arith.constant 0 : index
    %24 = vector.load %arg5[%c0_18, %c0_19] : memref<1x40xf32, #tpu.memory_space<vmem>>, vector<1x40xf32>
    %25 = vector.broadcast %24 : vector<1x40xf32> to vector<8x40xf32>
    %26 = arith.addf %23, %25 : vector<8x40xf32>
    %cst_20 = arith.constant dense<0xFF800000> : vector<8xf32>
    %27 = vector.multi_reduction <maximumf>, %26, %cst_20 [1] : vector<8x40xf32> to vector<8xf32>
    %28 = vector.shape_cast %27 : vector<8xf32> to vector<8x1xf32>
    %29 = vector.broadcast %28 : vector<8x1xf32> to vector<8x40xf32>
    %30 = arith.subf %26, %29 : vector<8x40xf32>
    %31 = math.exp %30 : vector<8x40xf32>
    %cst_21 = arith.constant dense<0.000000e+00> : vector<8xf32>
    %32 = vector.multi_reduction <add>, %31, %cst_21 [1] : vector<8x40xf32> to vector<8xf32>
    %33 = vector.shape_cast %32 : vector<8xf32> to vector<8x1xf32>
    %34 = vector.broadcast %33 : vector<8x1xf32> to vector<8x40xf32>
    %35 = arith.divf %31, %34 : vector<8x40xf32>
    %c0_22 = arith.constant 0 : index
    %c0_23 = arith.constant 0 : index
    %36 = vector.load %arg6[%c0_22, %c0_23] : memref<8x40xf32, #tpu.memory_space<vmem>>, vector<8x40xf32>
    tpu.vector_store %arg6[%c0_22, %c0_23], %35 {strides = array<i32>} : memref<8x40xf32, #tpu.memory_space<vmem>>, vector<8x40xf32>,
    return
  }
  func.func @transform_0(%arg0: i32) -> (i32, i32) {
    %c0_i32 = arith.constant 0 : i32
    %c0_i32_0 = arith.constant 0 : i32
    return %arg0, %c0_i32 : i32, i32
  }
  func.func @transform_1(%arg0: i32) -> (i32, i32) {
    %c0_i32 = arith.constant 0 : i32
    %c0_i32_0 = arith.constant 0 : i32
    %c0_i32_1 = arith.constant 0 : i32
    return %c0_i32, %c0_i32_0 : i32, i32
  }
  func.func @transform_2(%arg0: i32) -> (i32, i32) {
    %c0_i32 = arith.constant 0 : i32
    %c0_i32_0 = arith.constant 0 : i32
    %c0_i32_1 = arith.constant 0 : i32
    return %c0_i32, %c0_i32_0 : i32, i32
  }
  func.func @transform_3(%arg0: i32) -> (i32, i32) {
    %c0_i32 = arith.constant 0 : i32
    %c0_i32_0 = arith.constant 0 : i32
    %c0_i32_1 = arith.constant 0 : i32
    return %c0_i32, %c0_i32_0 : i32, i32
  }
  func.func @transform_4(%arg0: i32) -> (i32, i32) {
    %c0_i32 = arith.constant 0 : i32
    %c0_i32_0 = arith.constant 0 : i32
    %c0_i32_1 = arith.constant 0 : i32
    return %c0_i32, %c0_i32_0 : i32, i32
  }
  func.func @transform_5(%arg0: i32) -> (i32, i32) {
    %c0_i32 = arith.constant 0 : i32
    %c0_i32_0 = arith.constant 0 : i32
    return %arg0, %c0_i32 : i32, i32
  }
}

module attributes {stable_mosaic.version = 11 : i64} {
  func.func @_mlp_kernel(%arg0: i32, %arg1: memref<8x6144xf32, #tpu.memory_space<vmem>>, %arg2: memref<6144x200xbf16, #tpu.memory_space<vmem>>, %arg3: memref<1x200xf32, #tpu.memory_space<vmem>>, %arg4: memref<200x40xbf16, #tpu.memory_space<vmem>>, %arg5: memref<1x40xf32, #tpu.memory_space<vmem>>, %arg6: memref<8x40xf32, #tpu.memory_space<vmem>>) attributes {dimension_semantics = [#tpu.dimension_semantics<parallel>], iteration_bounds = array<i64: 1>, scalar_prefetch = 0 : i64, scratch_operands = 0 : i64, tpu.core_type = #tpu.core_type<tc>, window_params = [{transform_indices = @transform_0, window_bounds = array<i64: 8, 6144>}, {pipeline_mode = #tpu.pipeline_mode<synchronous>, transform_indices = @transform_1, window_bounds = array<i64: 6144, 200>}, {pipeline_mode = #tpu.pipeline_mode<synchronous>, transform_indices = @transform_2, window_bounds = array<i64: 1, 200>}, {pipeline_mode = #tpu.pipeline_mode<synchronous>, transform_indices = @transform_3, window_bounds = array<i64: 200, 40>}, {pipeline_mode = #tpu.pipeline_mode<synchronous>, transform_indices = @transform_4, window_bounds = array<i64: 1, 40>}, {transform_indices = @transform_5, window_bounds = array<i64: 8, 40>}]} {
    %cst = arith.constant 0.000000e+00 : f32
    %0 = vector.broadcast %cst : f32 to vector<8x200xf32>
    %c0 = arith.constant 0 : index
    %c0_0 = arith.constant 0 : index
    %1 = vector.load %arg1[%c0, %c0_0] : memref<8x6144xf32, #tpu.memory_space<vmem>>, vector<8x2048xf32>
    %2 = arith.truncf %1 : vector<8x2048xf32> to vector<8x2048xbf16>
    %c0_1 = arith.constant 0 : index
    %c0_2 = arith.constant 0 : index
    %3 = vector.load %arg2[%c0_1, %c0_2] : memref<6144x200xbf16, #tpu.memory_space<vmem>>, vector<2048x200xbf16>
    %cst_3 = arith.constant dense<0.000000e+00> : vector<8x200xf32>
    %4 = tpu.matmul %2, %3, %cst_3 {dimension_numbers = #tpu.dot_dimension_numbers<[1], [0], [0], [1], [0, 0, 1, 1], [], []>} : vector<8x2048xbf16>, vector<2048x200xbf16>, vector<8x200xf32> -> vector<8x200xf32>
    %5 = arith.addf %0, %4 : vector<8x200xf32>
    %c0_4 = arith.constant 0 : index
    %c2048 = arith.constant 2048 : index
    %6 = vector.load %arg1[%c0_4, %c2048] : memref<8x6144xf32, #tpu.memory_space<vmem>>, vector<8x2048xf32>
    %7 = arith.truncf %6 : vector<8x2048xf32> to vector<8x2048xbf16>
    %c2048_5 = arith.constant 2048 : index
    %c0_6 = arith.constant 0 : index
    %8 = vector.load %arg2[%c2048_5, %c0_6] : memref<6144x200xbf16, #tpu.memory_space<vmem>>, vector<2048x200xbf16>
    %cst_7 = arith.constant dense<0.000000e+00> : vector<8x200xf32>
    %9 = tpu.matmul %7, %8, %cst_7 {dimension_numbers = #tpu.dot_dimension_numbers<[1], [0], [0], [1], [0, 0, 1, 1], [], []>} : vector<8x2048xbf16>, vector<2048x200xbf16>, vector<8x200xf32> -> vector<8x200xf32>
    %10 = arith.addf %5, %9 : vector<8x200xf32>
    %c0_8 = arith.constant 0 : index
    %c4096 = arith.constant 4096 : index
    %11 = vector.load %arg1[%c0_8, %c4096] : memref<8x6144xf32, #tpu.memory_space<vmem>>, vector<8x2048xf32>
    %12 = arith.truncf %11 : vector<8x2048xf32> to vector<8x2048xbf16>
    %c4096_9 = arith.constant 4096 : index
    %c0_10 = arith.constant 0 : index
    %13 = vector.load %arg2[%c4096_9, %c0_10] : memref<6144x200xbf16, #tpu.memory_space<vmem>>, vector<2048x200xbf16>
    %cst_11 = arith.constant dense<0.000000e+00> : vector<8x200xf32>
    %14 = tpu.matmul %12, %13, %cst_11 {dimension_numbers = #tpu.dot_dimension_numbers<[1], [0], [0], [1], [0, 0, 1, 1], [], []>} : vector<8x2048xbf16>, vector<2048x200xbf16>, vector<8x200xf32> -> vector<8x200xf32>
    %15 = arith.addf %10, %14 : vector<8x200xf32>
    %c0_12 = arith.constant 0 : index
    %c0_13 = arith.constant 0 : index
    %16 = vector.load %arg3[%c0_12, %c0_13] : memref<1x200xf32, #tpu.memory_space<vmem>>, vector<1x200xf32>
    %17 = vector.broadcast %16 : vector<1x200xf32> to vector<8x200xf32>
    %18 = arith.addf %15, %17 : vector<8x200xf32>
    %cst_14 = arith.constant 0.000000e+00 : f32
    %19 = vector.broadcast %cst_14 : f32 to vector<8x200xf32>
    %20 = arith.maximumf %18, %19 : vector<8x200xf32>
    %21 = arith.truncf %20 : vector<8x200xf32> to vector<8x200xbf16>
    %c0_15 = arith.constant 0 : index
    %c0_16 = arith.constant 0 : index
    %22 = vector.load %arg4[%c0_15, %c0_16] : memref<200x40xbf16, #tpu.memory_space<vmem>>, vector<200x40xbf16>
    %cst_17 = arith.constant dense<0.000000e+00> : vector<8x40xf32>
    %23 = tpu.matmul %21, %22, %cst_17 {dimension_numbers = #tpu.dot_dimension_numbers<[1], [0], [0], [1], [0, 0, 1, 1], [], []>} : vector<8x200xbf16>, vector<200x40xbf16>, vector<8x40xf32> -> vector<8x40xf32>
    %c0_18 = arith.constant 0 : index
    %c0_19 = arith.constant 0 : index
    %24 = vector.load %arg5[%c0_18, %c0_19] : memref<1x40xf32, #tpu.memory_space<vmem>>, vector<1x40xf32>
    %25 = vector.broadcast %24 : vector<1x40xf32> to vector<8x40xf32>
    %26 = arith.addf %23, %25 : vector<8x40xf32>
    %cst_20 = arith.constant dense<0xFF800000> : vector<8xf32>
    %27 = vector.multi_reduction <maximumf>, %26, %cst_20 [1] : vector<8x40xf32> to vector<8xf32>
    %28 = vector.shape_cast %27 : vector<8xf32> to vector<8x1xf32>
    %29 = vector.broadcast %28 : vector<8x1xf32> to vector<8x40xf32>
    %30 = arith.subf %26, %29 : vector<8x40xf32>
    %31 = math.exp %30 : vector<8x40xf32>
    %cst_21 = arith.constant dense<0.000000e+00> : vector<8xf32>
    %32 = vector.multi_reduction <add>, %31, %cst_21 [1] : vector<8x40xf32> to vector<8xf32>
    %33 = vector.shape_cast %32 : vector<8xf32> to vector<8x1xf32>
    %34 = vector.broadcast %33 : vector<8x1xf32> to vector<8x40xf32>
    %35 = arith.divf %31, %34 : vector<8x40xf32>
    %c0_22 = arith.constant 0 : index
    %c0_23 = arith.constant 0 : index
    %36 = vector.load %arg6[%c0_22, %c0_23] : memref<8x40xf32, #tpu.memory_space<vmem>>, vector<8x40xf32>
    tpu.vector_store %arg6[%c0_22, %c0_23], %35 {strides = array<i32>} : memref<8x40xf32, #tpu.memory_space<vmem>>, vector<8x40xf32>,
    return
  }
  func.func @transform_0(%arg0: i32) -> (i32, i32) {
    %c0_i32 = arith.constant 0 : i32
    %c0_i32_0 = arith.constant 0 : i32
    return %arg0, %c0_i32 : i32, i32
  }
  func.func @transform_1(%arg0: i32) -> (i32, i32) {
    %c0_i32 = arith.constant 0 : i32
    %c0_i32_0 = arith.constant 0 : i32
    %c0_i32_1 = arith.constant 0 : i32
    return %c0_i32, %c0_i32_0 : i32, i32
  }
  func.func @transform_2(%arg0: i32) -> (i32, i32) {
    %c0_i32 = arith.constant 0 : i32
    %c0_i32_0 = arith.constant 0 : i32
    %c0_i32_1 = arith.constant 0 : i32
    return %c0_i32, %c0_i32_0 : i32, i32
  }
  func.func @transform_3(%arg0: i32) -> (i32, i32) {
    %c0_i32 = arith.constant 0 : i32
    %c0_i32_0 = arith.constant 0 : i32
    %c0_i32_1 = arith.constant 0 : i32
    return %c0_i32, %c0_i32_0 : i32, i32
  }
  func.func @transform_4(%arg0: i32) -> (i32, i32) {
    %c0_i32 = arith.constant 0 : i32
    %c0_i32_0 = arith.constant 0 : i32
    %c0_i32_1 = arith.constant 0 : i32
    return %c0_i32, %c0_i32_0 : i32, i32
  }
  func.func @transform_5(%arg0: i32) -> (i32, i32) {
    %c0_i32 = arith.constant 0 : i32
    %c0_i32_0 = arith.constant 0 : i32
    return %arg0, %c0_i32 : i32, i32
  }
}

</mosaic_0001>

<llo_original>
// kernel: tpu_custom_call.1
$region0: #{tpu_custom_call.1}
  #allocation0 [shape = 'u32[]', space=smem, size = 0x4, offset = 0x4, fixed_abs, tag = 'smem constant byte address 0x4 - core index']
  #allocation1 [shape = 'u32[144,128]{1,0:T(1,128)}', space=vmem, size = 0x12000, scoped, tag = 'internal scratch']
  %s0 = inlined_call_operand.vmem [shape: f32[2,6144], index: 0, kind: input, shape index: {}]
  %s1 = inlined_call_operand.vmem [shape: bf16[6144,200], index: 1, kind: input, shape index: {}]
  %s2 = inlined_call_operand.vmem [shape: f32[1,200], index: 2, kind: input, shape index: {}]
  %s3 = inlined_call_operand.vmem [shape: bf16[200,40], index: 3, kind: input, shape index: {}]
  %s4 = inlined_call_operand.vmem [shape: f32[1,40], index: 4, kind: input, shape index: {}]
  %s5 = inlined_call_operand.hbm [shape: f32[2,40], index: 5, kind: output, shape index: {}]
  %s6 = sld [smem:[#allocation0]]
  $region30: #{tpu_custom_call.1} parent=0
    _
  %s8 = ssub.s32 1, %s6
  %s9 = scalar_select 0, %s8, %s6
  $region1: #{tpu_custom_call.1} parent=0
    #allocation2 [shape = 'u8[4096]{0}', space=vmem, size = 0x1000, scoped, tag = 'output window, operand 0, single buffered']
    #allocation3 [shape = 's32[1]{0}', space=sflag, size = 0x4, scoped, tag = 'scoped memory for tpu_custom_call.1']
    %10 = vsyncpa [#allocation3], 0
    // Predicated region
    $region2: #{tpu_custom_call.1} parent=1 // pred_check
      _
    $region3: #{tpu_custom_call.1} parent=1 // pred_check_branch
      %12 = sbr.rel (0) target = $region5
    $region4: #{tpu_custom_call.1} parent=1 // pred_region
      _
    $region5: #{tpu_custom_call.1} parent=1 // pred_fallthru
      _
    // Predicated region
    $region6: #{tpu_custom_call.1} parent=1 // pred_check
      _
    $region7: #{tpu_custom_call.1} parent=1 // pred_check_branch
      %14 = sbr.rel (0) target = $region9
    $region8: #{tpu_custom_call.1} parent=1 // pred_region
      _
    $region9: #{tpu_custom_call.1} parent=1 // pred_fallthru
      _
    // Predicated region
    $region10: #{tpu_custom_call.1} parent=1 // pred_check
      _
    $region11: #{tpu_custom_call.1} parent=1 // pred_check_branch
      %16 = sbr.rel (0) target = $region13
    $region12: #{tpu_custom_call.1} parent=1 // pred_region
      _
    $region13: #{tpu_custom_call.1} parent=1 // pred_fallthru
      _
    // Predicated region
    $region14: #{tpu_custom_call.1} parent=1 // pred_check
      _
    $region15: #{tpu_custom_call.1} parent=1 // pred_check_branch
      %18 = sbr.rel (0) target = $region17
    $region16: #{tpu_custom_call.1} parent=1 // pred_region
      _
    $region17: #{tpu_custom_call.1} parent=1 // pred_fallthru
      _
    // Predicated region
    $region18: #{tpu_custom_call.1} parent=1 // pred_check
      _
    $region19: #{tpu_custom_call.1} parent=1 // pred_check_branch
      %20 = sbr.rel (0) target = $region21
    $region20: #{tpu_custom_call.1} parent=1 // pred_region
      _
    $region21: #{tpu_custom_call.1} parent=1 // pred_fallthru
      _
    %v22 = vld [vmem:[%s0] sm:$0xff]
    %v23 = vld [vmem:[%s0 + $0x8] sm:$0xff]
    %v24 = vld [vmem:[%s0 + $0x10] sm:$0xff]
    %v25 = vld [vmem:[%s0 + $0x18] sm:$0xff]
    %v26 = vld [vmem:[%s0 + $0x60] sm:$0xff]
    %v27 = vld [vmem:[%s0 + $0x68] sm:$0xff]
    %v28 = vld [vmem:[%s0 + $0x70] sm:$0xff]
    %v29 = vld [vmem:[%s0 + $0x78] sm:$0xff]
    %v30 = vld [vmem:[%s0 + $0xc0] sm:$0xff]
    %v31 = vld [vmem:[%s0 + $0xc8] sm:$0xff]
    %v32 = vld [vmem:[%s0 + $0xd0] sm:$0xff]
    %v33 = vld [vmem:[%s0 + $0xd8] sm:$0xff]
    %v34 = vld [vmem:[%s0 + $0x120] sm:$0xff]
    %v35 = vld [vmem:[%s0 + $0x128] sm:$0xff]
    %v36 = vld [vmem:[%s0 + $0x130] sm:$0xff]
    %v37 = vld [vmem:[%s0 + $0x138] sm:$0xff]
    %v54 = vcombine.low %v22, %v26
    %v55 = vcombine.high %v22, %v26
    %v56 = vcombine.low %v30, %v34
    %v57 = vcombine.high %v30, %v34
    %v59 = vunpack.c.l.s4 1983009808
    %v60 = vunpack.c.0.s8 %v59
    %v61 = vlaneseq
    %v62 = vshrl.u32 %v61, 7
    %v63 = vsub.s32 %v60, %v62
    %v64 = vrot.slane %v54, %v63
    %v66 = vunpack.c.l.s4 1983009808
    %v67 = vunpack.c.0.s8 %v66
    %v68 = vlaneseq
    %v69 = vshrl.u32 %v68, 7
    %v70 = vsub.s32 %v67, %v69
    %v71 = vrot.slane %v55, %v70
    %v73 = vunpack.c.l.s4 1983009808
    %v74 = vunpack.c.0.s8 %v73
    %v75 = vlaneseq
    %v76 = vshrl.u32 %v75, 7
    %v77 = vsub.s32 %v74, %v76
    %v78 = vrot.slane %v56, %v77
    %v80 = vunpack.c.l.s4 1983009808
    %v81 = vunpack.c.0.s8 %v80
    %v82 = vlaneseq
    %v83 = vshrl.u32 %v82, 7
    %v84 = vsub.s32 %v81, %v83
    %v85 = vrot.slane %v57, %v84
    %v86 = vcombine.low %v64, %v78
    %v87 = vcombine.high %v64, %v78
    %v88 = vcombine.low %v71, %v85
    %v89 = vcombine.high %v71, %v85
    %v90 = vcombine.low %v23, %v27
    %v91 = vcombine.high %v23, %v27
    %v92 = vcombine.low %v31, %v35
    %v93 = vcombine.high %v31, %v35
    %v95 = vunpack.c.l.s4 1983009808
    %v96 = vunpack.c.0.s8 %v95
    %v97 = vlaneseq
    %v98 = vshrl.u32 %v97, 7
    %v99 = vsub.s32 %v96, %v98
    %v100 = vrot.slane %v90, %v99
    %v102 = vunpack.c.l.s4 1983009808
    %v103 = vunpack.c.0.s8 %v102
    %v104 = vlaneseq
    %v105 = vshrl.u32 %v104, 7
    %v106 = vsub.s32 %v103, %v105
    %v107 = vrot.slane %v91, %v106
    %v109 = vunpack.c.l.s4 1983009808
    %v110 = vunpack.c.0.s8 %v109
    %v111 = vlaneseq
    %v112 = vshrl.u32 %v111, 7
    %v113 = vsub.s32 %v110, %v112
    %v114 = vrot.slane %v92, %v113
    %v116 = vunpack.c.l.s4 1983009808
    %v117 = vunpack.c.0.s8 %v116
    %v118 = vlaneseq
    %v119 = vshrl.u32 %v118, 7
    %v120 = vsub.s32 %v117, %v119
    %v121 = vrot.slane %v93, %v120
    %v122 = vcombine.low %v100, %v114
    %v123 = vcombine.high %v100, %v114
    %v124 = vcombine.low %v107, %v121
    %v125 = vcombine.high %v107, %v121
    %v126 = vcombine.low %v24, %v28
    %v127 = vcombine.high %v24, %v28
    %v128 = vcombine.low %v32, %v36
    %v129 = vcombine.high %v32, %v36
    %v131 = vunpack.c.l.s4 1983009808
    %v132 = vunpack.c.0.s8 %v131
    %v133 = vlaneseq
    %v134 = vshrl.u32 %v133, 7
    %v135 = vsub.s32 %v132, %v134
    %v136 = vrot.slane %v126, %v135
    %v138 = vunpack.c.l.s4 1983009808
    %v139 = vunpack.c.0.s8 %v138
    %v140 = vlaneseq
    %v141 = vshrl.u32 %v140, 7
    %v142 = vsub.s32 %v139, %v141
    %v143 = vrot.slane %v127, %v142
    %v145 = vunpack.c.l.s4 1983009808
    %v146 = vunpack.c.0.s8 %v145
    %v147 = vlaneseq
    %v148 = vshrl.u32 %v147, 7
    %v149 = vsub.s32 %v146, %v148
    %v150 = vrot.slane %v128, %v149
    %v152 = vunpack.c.l.s4 1983009808
    %v153 = vunpack.c.0.s8 %v152
    %v154 = vlaneseq
    %v155 = vshrl.u32 %v154, 7
    %v156 = vsub.s32 %v153, %v155
    %v157 = vrot.slane %v129, %v156
    %v158 = vcombine.low %v136, %v150
    %v159 = vcombine.high %v136, %v150
    %v160 = vcombine.low %v143, %v157
    %v161 = vcombine.high %v143, %v157
    %v162 = vcombine.low %v25, %v29
    %v163 = vcombine.high %v25, %v29
    %v164 = vcombine.low %v33, %v37
    %v165 = vcombine.high %v33, %v37
    %v167 = vunpack.c.l.s4 1983009808
    %v168 = vunpack.c.0.s8 %v167
    %v169 = vlaneseq
    %v170 = vshrl.u32 %v169, 7
    %v171 = vsub.s32 %v168, %v170
    %v172 = vrot.slane %v162, %v171
    %v174 = vunpack.c.l.s4 1983009808
    %v175 = vunpack.c.0.s8 %v174
    %v176 = vlaneseq
    %v177 = vshrl.u32 %v176, 7
    %v178 = vsub.s32 %v175, %v177
    %v179 = vrot.slane %v163, %v178
    %v181 = vunpack.c.l.s4 1983009808
    %v182 = vunpack.c.0.s8 %v181
    %v183 = vlaneseq
    %v184 = vshrl.u32 %v183, 7
    %v185 = vsub.s32 %v182, %v184
    %v186 = vrot.slane %v164, %v185
    %v188 = vunpack.c.l.s4 1983009808
    %v189 = vunpack.c.0.s8 %v188
    %v190 = vlaneseq
    %v191 = vshrl.u32 %v190, 7
    %v192 = vsub.s32 %v189, %v191
    %v193 = vrot.slane %v165, %v192
    %v194 = vcombine.low %v172, %v186
    %v195 = vcombine.high %v172, %v186
    %v196 = vcombine.low %v179, %v193
    %v197 = vcombine.high %v179, %v193
    %v214 = vpack.c.bf16 %v86, %v86
    %v215 = vpack.c.bf16 %v87, %v87
    %v216 = vpack.c.bf16 %v88, %v88
    %v217 = vpack.c.bf16 %v89, %v89
    %v218 = vpack.c.bf16 %v122, %v122
    %v219 = vpack.c.bf16 %v123, %v123
    %v220 = vpack.c.bf16 %v124, %v124
    %v221 = vpack.c.bf16 %v125, %v125
    %v222 = vpack.c.bf16 %v158, %v158
    %v223 = vpack.c.bf16 %v159, %v159
    %v224 = vpack.c.bf16 %v160, %v160
    %v225 = vpack.c.bf16 %v161, %v161
    %v226 = vpack.c.bf16 %v194, %v194
    %v227 = vpack.c.bf16 %v195, %v195
    %v228 = vpack.c.bf16 %v196, %v196
    %v229 = vpack.c.bf16 %v197, %v197
    %v230 = vld [vmem:[%s1] sm:$0xff]
    %v231 = vld [vmem:[%s1 + $0x8] sm:$0xff]
    %v232 = vld [vmem:[%s1 + $0x10] sm:$0xff]
    %v233 = vld [vmem:[%s1 + $0x18] sm:$0xff]
    %v234 = vld [vmem:[%s1 + $0x20] sm:$0xff]
    %v235 = vld [vmem:[%s1 + $0x28] sm:$0xff]
    %v236 = vld [vmem:[%s1 + $0x30] sm:$0xff]
    %v237 = vld [vmem:[%s1 + $0x38] sm:$0xff]
    %v238 = vld [vmem:[%s1 + $0x40] sm:$0xff]
    %v239 = vld [vmem:[%s1 + $0x48] sm:$0xff]
    %v240 = vld [vmem:[%s1 + $0x50] sm:$0xff]
    %v241 = vld [vmem:[%s1 + $0x58] sm:$0xff]
    %v242 = vld [vmem:[%s1 + $0x60] sm:$0xff]
    %v243 = vld [vmem:[%s1 + $0x68] sm:$0xff]
    %v244 = vld [vmem:[%s1 + $0x70] sm:$0xff]
    %v245 = vld [vmem:[%s1 + $0x78] sm:$0xff]
    %v246 = vld [vmem:[%s1 + $0x80] sm:$0xff]
    %v247 = vld [vmem:[%s1 + $0x88] sm:$0xff]
    %v248 = vld [vmem:[%s1 + $0x90] sm:$0xff]
    %v249 = vld [vmem:[%s1 + $0x98] sm:$0xff]
    %v250 = vld [vmem:[%s1 + $0xa0] sm:$0xff]
    %v251 = vld [vmem:[%s1 + $0xa8] sm:$0xff]
    %v252 = vld [vmem:[%s1 + $0xb0] sm:$0xff]
    %v253 = vld [vmem:[%s1 + $0xb8] sm:$0xff]
    %v254 = vld [vmem:[%s1 + $0xc0] sm:$0xff]
    %v255 = vld [vmem:[%s1 + $0xc8] sm:$0xff]
    %v256 = vld [vmem:[%s1 + $0xd0] sm:$0xff]
    %v257 = vld [vmem:[%s1 + $0xd8] sm:$0xff]
    %v258 = vld [vmem:[%s1 + $0xe0] sm:$0xff]
    %v259 = vld [vmem:[%s1 + $0xe8] sm:$0xff]
    %v260 = vld [vmem:[%s1 + $0xf0] sm:$0xff]
    %v261 = vld [vmem:[%s1 + $0xf8] sm:$0xff]
    %v262 = vld [vmem:[%s1 + $0x100] sm:$0xff]
    %v263 = vld [vmem:[%s1 + $0x108] sm:$0xff]
    %v264 = vld [vmem:[%s1 + $0x110] sm:$0xff]
    %v265 = vld [vmem:[%s1 + $0x118] sm:$0xff]
    %v266 = vld [vmem:[%s1 + $0x120] sm:$0xff]
    %v267 = vld [vmem:[%s1 + $0x128] sm:$0xff]
    %v268 = vld [vmem:[%s1 + $0x130] sm:$0xff]
    %v269 = vld [vmem:[%s1 + $0x138] sm:$0xff]
    %v270 = vld [vmem:[%s1 + $0x140] sm:$0xff]
    %v271 = vld [vmem:[%s1 + $0x148] sm:$0xff]
    %v272 = vld [vmem:[%s1 + $0x150] sm:$0xff]
    %v273 = vld [vmem:[%s1 + $0x158] sm:$0xff]
    %v274 = vld [vmem:[%s1 + $0x160] sm:$0xff]
    %v275 = vld [vmem:[%s1 + $0x168] sm:$0xff]
    %v276 = vld [vmem:[%s1 + $0x170] sm:$0xff]
    %v277 = vld [vmem:[%s1 + $0x178] sm:$0xff]
    %v278 = vld [vmem:[%s1 + $0x180] sm:$0xff]
    %v279 = vld [vmem:[%s1 + $0x188] sm:$0xff]
    %v280 = vld [vmem:[%s1 + $0x190] sm:$0xff]
    %v281 = vld [vmem:[%s1 + $0x198] sm:$0xff]
    %v282 = vld [vmem:[%s1 + $0x1a0] sm:$0xff]
    %v283 = vld [vmem:[%s1 + $0x1a8] sm:$0xff]
    %v284 = vld [vmem:[%s1 + $0x1b0] sm:$0xff]
    %v285 = vld [vmem:[%s1 + $0x1b8] sm:$0xff]
    %v286 = vld [vmem:[%s1 + $0x1c0] sm:$0xff]
    %v287 = vld [vmem:[%s1 + $0x1c8] sm:$0xff]
    %v288 = vld [vmem:[%s1 + $0x1d0] sm:$0xff]
    %v289 = vld [vmem:[%s1 + $0x1d8] sm:$0xff]
    %v290 = vld [vmem:[%s1 + $0x1e0] sm:$0xff]
    %v291 = vld [vmem:[%s1 + $0x1e8] sm:$0xff]
    %v292 = vld [vmem:[%s1 + $0x1f0] sm:$0xff]
    %v293 = vld [vmem:[%s1 + $0x1f8] sm:$0xff]
    %v294 = vld [vmem:[%s1 + $0x200] sm:$0xff]
    %v295 = vld [vmem:[%s1 + $0x208] sm:$0xff]
    %v296 = vld [vmem:[%s1 + $0x210] sm:$0xff]
    %v297 = vld [vmem:[%s1 + $0x218] sm:$0xff]
    %v298 = vld [vmem:[%s1 + $0x220] sm:$0xff]
    %v299 = vld [vmem:[%s1 + $0x228] sm:$0xff]
    %v300 = vld [vmem:[%s1 + $0x230] sm:$0xff]
    %v301 = vld [vmem:[%s1 + $0x238] sm:$0xff]
    %v302 = vld [vmem:[%s1 + $0x240] sm:$0xff]
    %v303 = vld [vmem:[%s1 + $0x248] sm:$0xff]
    %v304 = vld [vmem:[%s1 + $0x250] sm:$0xff]
    %v305 = vld [vmem:[%s1 + $0x258] sm:$0xff]
    %v306 = vld [vmem:[%s1 + $0x260] sm:$0xff]
    %v307 = vld [vmem:[%s1 + $0x268] sm:$0xff]
    %v308 = vld [vmem:[%s1 + $0x270] sm:$0xff]
    %v309 = vld [vmem:[%s1 + $0x278] sm:$0xff]
    %v310 = vld [vmem:[%s1 + $0x280] sm:$0xff]
    %v311 = vld [vmem:[%s1 + $0x288] sm:$0xff]
    %v312 = vld [vmem:[%s1 + $0x290] sm:$0xff]
    %v313 = vld [vmem:[%s1 + $0x298] sm:$0xff]
    %v314 = vld [vmem:[%s1 + $0x2a0] sm:$0xff]
    %v315 = vld [vmem:[%s1 + $0x2a8] sm:$0xff]
    %v316 = vld [vmem:[%s1 + $0x2b0] sm:$0xff]
    %v317 = vld [vmem:[%s1 + $0x2b8] sm:$0xff]
    %v318 = vld [vmem:[%s1 + $0x2c0] sm:$0xff]
    %v319 = vld [vmem:[%s1 + $0x2c8] sm:$0xff]
    %v320 = vld [vmem:[%s1 + $0x2d0] sm:$0xff]
    %v321 = vld [vmem:[%s1 + $0x2d8] sm:$0xff]
    %v322 = vld [vmem:[%s1 + $0x2e0] sm:$0xff]
    %v323 = vld [vmem:[%s1 + $0x2e8] sm:$0xff]
    %v324 = vld [vmem:[%s1 + $0x2f0] sm:$0xff]
    %v325 = vld [vmem:[%s1 + $0x2f8] sm:$0xff]
    %v326 = vld [vmem:[%s1 + $0x300] sm:$0xff]
    %v327 = vld [vmem:[%s1 + $0x308] sm:$0xff]
    %v328 = vld [vmem:[%s1 + $0x310] sm:$0xff]
    %v329 = vld [vmem:[%s1 + $0x318] sm:$0xff]
    %v330 = vld [vmem:[%s1 + $0x320] sm:$0xff]
    %v331 = vld [vmem:[%s1 + $0x328] sm:$0xff]
    %v332 = vld [vmem:[%s1 + $0x330] sm:$0xff]
    %v333 = vld [vmem:[%s1 + $0x338] sm:$0xff]
    %v334 = vld [vmem:[%s1 + $0x340] sm:$0xff]
    %v335 = vld [vmem:[%s1 + $0x348] sm:$0xff]
    %v336 = vld [vmem:[%s1 + $0x350] sm:$0xff]
    %v337 = vld [vmem:[%s1 + $0x358] sm:$0xff]
    %v338 = vld [vmem:[%s1 + $0x360] sm:$0xff]
    %v339 = vld [vmem:[%s1 + $0x368] sm:$0xff]
    %v340 = vld [vmem:[%s1 + $0x370] sm:$0xff]
    %v341 = vld [vmem:[%s1 + $0x378] sm:$0xff]
    %v342 = vld [vmem:[%s1 + $0x380] sm:$0xff]
    %v343 = vld [vmem:[%s1 + $0x388] sm:$0xff]
    %v344 = vld [vmem:[%s1 + $0x390] sm:$0xff]
    %v345 = vld [vmem:[%s1 + $0x398] sm:$0xff]
    %v346 = vld [vmem:[%s1 + $0x3a0] sm:$0xff]
    %v347 = vld [vmem:[%s1 + $0x3a8] sm:$0xff]
    %v348 = vld [vmem:[%s1 + $0x3b0] sm:$0xff]
    %v349 = vld [vmem:[%s1 + $0x3b8] sm:$0xff]
    %v350 = vld [vmem:[%s1 + $0x3c0] sm:$0xff]
    %v351 = vld [vmem:[%s1 + $0x3c8] sm:$0xff]
    %v352 = vld [vmem:[%s1 + $0x3d0] sm:$0xff]
    %v353 = vld [vmem:[%s1 + $0x3d8] sm:$0xff]
    %v354 = vld [vmem:[%s1 + $0x3e0] sm:$0xff]
    %v355 = vld [vmem:[%s1 + $0x3e8] sm:$0xff]
    %v356 = vld [vmem:[%s1 + $0x3f0] sm:$0xff]
    %v357 = vld [vmem:[%s1 + $0x3f8] sm:$0xff]
    %v358 = vld [vmem:[%s1 + $0x400] sm:$0xff]
    %v359 = vld [vmem:[%s1 + $0x408] sm:$0xff]
    %v360 = vld [vmem:[%s1 + $0x410] sm:$0xff]
    %v361 = vld [vmem:[%s1 + $0x418] sm:$0xff]
    %v362 = vld [vmem:[%s1 + $0x420] sm:$0xff]
    %v363 = vld [vmem:[%s1 + $0x428] sm:$0xff]
    %v364 = vld [vmem:[%s1 + $0x430] sm:$0xff]
    %v365 = vld [vmem:[%s1 + $0x438] sm:$0xff]
    %v366 = vld [vmem:[%s1 + $0x440] sm:$0xff]
    %v367 = vld [vmem:[%s1 + $0x448] sm:$0xff]
    %v368 = vld [vmem:[%s1 + $0x450] sm:$0xff]
    %v369 = vld [vmem:[%s1 + $0x458] sm:$0xff]
    %v370 = vld [vmem:[%s1 + $0x460] sm:$0xff]
    %v371 = vld [vmem:[%s1 + $0x468] sm:$0xff]
    %v372 = vld [vmem:[%s1 + $0x470] sm:$0xff]
    %v373 = vld [vmem:[%s1 + $0x478] sm:$0xff]
    %v374 = vld [vmem:[%s1 + $0x480] sm:$0xff]
    %v375 = vld [vmem:[%s1 + $0x488] sm:$0xff]
    %v376 = vld [vmem:[%s1 + $0x490] sm:$0xff]
    %v377 = vld [vmem:[%s1 + $0x498] sm:$0xff]
    %v378 = vld [vmem:[%s1 + $0x4a0] sm:$0xff]
    %v379 = vld [vmem:[%s1 + $0x4a8] sm:$0xff]
    %v380 = vld [vmem:[%s1 + $0x4b0] sm:$0xff]
    %v381 = vld [vmem:[%s1 + $0x4b8] sm:$0xff]
    %v382 = vld [vmem:[%s1 + $0x4c0] sm:$0xff]
    %v383 = vld [vmem:[%s1 + $0x4c8] sm:$0xff]
    %v384 = vld [vmem:[%s1 + $0x4d0] sm:$0xff]
    %v385 = vld [vmem:[%s1 + $0x4d8] sm:$0xff]
    %v386 = vld [vmem:[%s1 + $0x4e0] sm:$0xff]
    %v387 = vld [vmem:[%s1 + $0x4e8] sm:$0xff]
    %v388 = vld [vmem:[%s1 + $0x4f0] sm:$0xff]
    %v389 = vld [vmem:[%s1 + $0x4f8] sm:$0xff]
    %v390 = vld [vmem:[%s1 + $0x500] sm:$0xff]
    %v391 = vld [vmem:[%s1 + $0x508] sm:$0xff]
    %v392 = vld [vmem:[%s1 + $0x510] sm:$0xff]
    %v393 = vld [vmem:[%s1 + $0x518] sm:$0xff]
    %v394 = vld [vmem:[%s1 + $0x520] sm:$0xff]
    %v395 = vld [vmem:[%s1 + $0x528] sm:$0xff]
    %v396 = vld [vmem:[%s1 + $0x530] sm:$0xff]
    %v397 = vld [vmem:[%s1 + $0x538] sm:$0xff]
    %v398 = vld [vmem:[%s1 + $0x540] sm:$0xff]
    %v399 = vld [vmem:[%s1 + $0x548] sm:$0xff]
    %v400 = vld [vmem:[%s1 + $0x550] sm:$0xff]
    %v401 = vld [vmem:[%s1 + $0x558] sm:$0xff]
    %v402 = vld [vmem:[%s1 + $0x560] sm:$0xff]
    %v403 = vld [vmem:[%s1 + $0x568] sm:$0xff]
    %v404 = vld [vmem:[%s1 + $0x570] sm:$0xff]
    %v405 = vld [vmem:[%s1 + $0x578] sm:$0xff]
    %v406 = vld [vmem:[%s1 + $0x580] sm:$0xff]
    %v407 = vld [vmem:[%s1 + $0x588] sm:$0xff]
    %v408 = vld [vmem:[%s1 + $0x590] sm:$0xff]
    %v409 = vld [vmem:[%s1 + $0x598] sm:$0xff]
    %v410 = vld [vmem:[%s1 + $0x5a0] sm:$0xff]
    %v411 = vld [vmem:[%s1 + $0x5a8] sm:$0xff]
    %v412 = vld [vmem:[%s1 + $0x5b0] sm:$0xff]
    %v413 = vld [vmem:[%s1 + $0x5b8] sm:$0xff]
    %v414 = vld [vmem:[%s1 + $0x5c0] sm:$0xff]
    %v415 = vld [vmem:[%s1 + $0x5c8] sm:$0xff]
    %v416 = vld [vmem:[%s1 + $0x5d0] sm:$0xff]
    %v417 = vld [vmem:[%s1 + $0x5d8] sm:$0xff]
    %v418 = vld [vmem:[%s1 + $0x5e0] sm:$0xff]
    %v419 = vld [vmem:[%s1 + $0x5e8] sm:$0xff]
    %v420 = vld [vmem:[%s1 + $0x5f0] sm:$0xff]
    %v421 = vld [vmem:[%s1 + $0x5f8] sm:$0xff]
    %v422 = vld [vmem:[%s1 + $0x600] sm:$0xff]
    %v423 = vld [vmem:[%s1 + $0x608] sm:$0xff]
    %v424 = vld [vmem:[%s1 + $0x610] sm:$0xff]
    %v425 = vld [vmem:[%s1 + $0x618] sm:$0xff]
    %v426 = vld [vmem:[%s1 + $0x620] sm:$0xff]
    %v427 = vld [vmem:[%s1 + $0x628] sm:$0xff]
    %v428 = vld [vmem:[%s1 + $0x630] sm:$0xff]
    %v429 = vld [vmem:[%s1 + $0x638] sm:$0xff]
    %v430 = vld [vmem:[%s1 + $0x640] sm:$0xff]
    %v431 = vld [vmem:[%s1 + $0x648] sm:$0xff]
    %v432 = vld [vmem:[%s1 + $0x650] sm:$0xff]
    %v433 = vld [vmem:[%s1 + $0x658] sm:$0xff]
    %v434 = vld [vmem:[%s1 + $0x660] sm:$0xff]
    %v435 = vld [vmem:[%s1 + $0x668] sm:$0xff]
    %v436 = vld [vmem:[%s1 + $0x670] sm:$0xff]
    %v437 = vld [vmem:[%s1 + $0x678] sm:$0xff]
    %v438 = vld [vmem:[%s1 + $0x680] sm:$0xff]
    %v439 = vld [vmem:[%s1 + $0x688] sm:$0xff]
    %v440 = vld [vmem:[%s1 + $0x690] sm:$0xff]
    %v441 = vld [vmem:[%s1 + $0x698] sm:$0xff]
    %v442 = vld [vmem:[%s1 + $0x6a0] sm:$0xff]
    %v443 = vld [vmem:[%s1 + $0x6a8] sm:$0xff]
    %v444 = vld [vmem:[%s1 + $0x6b0] sm:$0xff]
    %v445 = vld [vmem:[%s1 + $0x6b8] sm:$0xff]
    %v446 = vld [vmem:[%s1 + $0x6c0] sm:$0xff]
    %v447 = vld [vmem:[%s1 + $0x6c8] sm:$0xff]
    %v448 = vld [vmem:[%s1 + $0x6d0] sm:$0xff]
    %v449 = vld [vmem:[%s1 + $0x6d8] sm:$0xff]
    %v450 = vld [vmem:[%s1 + $0x6e0] sm:$0xff]
    %v451 = vld [vmem:[%s1 + $0x6e8] sm:$0xff]
    %v452 = vld [vmem:[%s1 + $0x6f0] sm:$0xff]
    %v453 = vld [vmem:[%s1 + $0x6f8] sm:$0xff]
    %v454 = vld [vmem:[%s1 + $0x700] sm:$0xff]
    %v455 = vld [vmem:[%s1 + $0x708] sm:$0xff]
    %v456 = vld [vmem:[%s1 + $0x710] sm:$0xff]
    %v457 = vld [vmem:[%s1 + $0x718] sm:$0xff]
    %v458 = vld [vmem:[%s1 + $0x720] sm:$0xff]
    %v459 = vld [vmem:[%s1 + $0x728] sm:$0xff]
    %v460 = vld [vmem:[%s1 + $0x730] sm:$0xff]
    %v461 = vld [vmem:[%s1 + $0x738] sm:$0xff]
    %v462 = vld [vmem:[%s1 + $0x740] sm:$0xff]
    %v463 = vld [vmem:[%s1 + $0x748] sm:$0xff]
    %v464 = vld [vmem:[%s1 + $0x750] sm:$0xff]
    %v465 = vld [vmem:[%s1 + $0x758] sm:$0xff]
    %v466 = vld [vmem:[%s1 + $0x760] sm:$0xff]
    %v467 = vld [vmem:[%s1 + $0x768] sm:$0xff]
    %v468 = vld [vmem:[%s1 + $0x770] sm:$0xff]
    %v469 = vld [vmem:[%s1 + $0x778] sm:$0xff]
    %v470 = vld [vmem:[%s1 + $0x780] sm:$0xff]
    %v471 = vld [vmem:[%s1 + $0x788] sm:$0xff]
    %v472 = vld [vmem:[%s1 + $0x790] sm:$0xff]
    %v473 = vld [vmem:[%s1 + $0x798] sm:$0xff]
    %v474 = vld [vmem:[%s1 + $0x7a0] sm:$0xff]
    %v475 = vld [vmem:[%s1 + $0x7a8] sm:$0xff]
    %v476 = vld [vmem:[%s1 + $0x7b0] sm:$0xff]
    %v477 = vld [vmem:[%s1 + $0x7b8] sm:$0xff]
    %v478 = vld [vmem:[%s1 + $0x7c0] sm:$0xff]
    %v479 = vld [vmem:[%s1 + $0x7c8] sm:$0xff]
    %v480 = vld [vmem:[%s1 + $0x7d0] sm:$0xff]
    %v481 = vld [vmem:[%s1 + $0x7d8] sm:$0xff]
    %v482 = vld [vmem:[%s1 + $0x7e0] sm:$0xff]
    %v483 = vld [vmem:[%s1 + $0x7e8] sm:$0xff]
    %v484 = vld [vmem:[%s1 + $0x7f0] sm:$0xff]
    %v485 = vld [vmem:[%s1 + $0x7f8] sm:$0xff]
    %v486 = vld [vmem:[%s0 + $0x20] sm:$0xff]
    %v487 = vld [vmem:[%s0 + $0x28] sm:$0xff]
    %v488 = vld [vmem:[%s0 + $0x30] sm:$0xff]
    %v489 = vld [vmem:[%s0 + $0x38] sm:$0xff]
    %v490 = vld [vmem:[%s0 + $0x80] sm:$0xff]
    %v491 = vld [vmem:[%s0 + $0x88] sm:$0xff]
    %v492 = vld [vmem:[%s0 + $0x90] sm:$0xff]
    %v493 = vld [vmem:[%s0 + $0x98] sm:$0xff]
    %v494 = vld [vmem:[%s0 + $0xe0] sm:$0xff]
    %v495 = vld [vmem:[%s0 + $0xe8] sm:$0xff]
    %v496 = vld [vmem:[%s0 + $0xf0] sm:$0xff]
    %v497 = vld [vmem:[%s0 + $0xf8] sm:$0xff]
    %v498 = vld [vmem:[%s0 + $0x140] sm:$0xff]
    %v499 = vld [vmem:[%s0 + $0x148] sm:$0xff]
    %v500 = vld [vmem:[%s0 + $0x150] sm:$0xff]
    %v501 = vld [vmem:[%s0 + $0x158] sm:$0xff]
    %v518 = vcombine.low %v486, %v490
    %v519 = vcombine.high %v486, %v490
    %v520 = vcombine.low %v494, %v498
    %v521 = vcombine.high %v494, %v498
    %v523 = vunpack.c.l.s4 1983009808
    %v524 = vunpack.c.0.s8 %v523
    %v525 = vlaneseq
    %v526 = vshrl.u32 %v525, 7
    %v527 = vsub.s32 %v524, %v526
    %v528 = vrot.slane %v518, %v527
    %v530 = vunpack.c.l.s4 1983009808
    %v531 = vunpack.c.0.s8 %v530
    %v532 = vlaneseq
    %v533 = vshrl.u32 %v532, 7
    %v534 = vsub.s32 %v531, %v533
    %v535 = vrot.slane %v519, %v534
    %v537 = vunpack.c.l.s4 1983009808
    %v538 = vunpack.c.0.s8 %v537
    %v539 = vlaneseq
    %v540 = vshrl.u32 %v539, 7
    %v541 = vsub.s32 %v538, %v540
    %v542 = vrot.slane %v520, %v541
    %v544 = vunpack.c.l.s4 1983009808
    %v545 = vunpack.c.0.s8 %v544
    %v546 = vlaneseq
    %v547 = vshrl.u32 %v546, 7
    %v548 = vsub.s32 %v545, %v547
    %v549 = vrot.slane %v521, %v548
    %v550 = vcombine.low %v528, %v542
    %v551 = vcombine.high %v528, %v542
    %v552 = vcombine.low %v535, %v549
    %v553 = vcombine.high %v535, %v549
    %v554 = vcombine.low %v487, %v491
    %v555 = vcombine.high %v487, %v491
    %v556 = vcombine.low %v495, %v499
    %v557 = vcombine.high %v495, %v499
    %v559 = vunpack.c.l.s4 1983009808
    %v560 = vunpack.c.0.s8 %v559
    %v561 = vlaneseq
    %v562 = vshrl.u32 %v561, 7
    %v563 = vsub.s32 %v560, %v562
    %v564 = vrot.slane %v554, %v563
    %v566 = vunpack.c.l.s4 1983009808
    %v567 = vunpack.c.0.s8 %v566
    %v568 = vlaneseq
    %v569 = vshrl.u32 %v568, 7
    %v570 = vsub.s32 %v567, %v569
    %v571 = vrot.slane %v555, %v570
    %v573 = vunpack.c.l.s4 1983009808
    %v574 = vunpack.c.0.s8 %v573
    %v575 = vlaneseq
    %v576 = vshrl.u32 %v575, 7
    %v577 = vsub.s32 %v574, %v576
    %v578 = vrot.slane %v556, %v577
    %v580 = vunpack.c.l.s4 1983009808
    %v581 = vunpack.c.0.s8 %v580
    %v582 = vlaneseq
    %v583 = vshrl.u32 %v582, 7
    %v584 = vsub.s32 %v581, %v583
    %v585 = vrot.slane %v557, %v584
    %v586 = vcombine.low %v564, %v578
    %v587 = vcombine.high %v564, %v578
    %v588 = vcombine.low %v571, %v585
    %v589 = vcombine.high %v571, %v585
    %v590 = vcombine.low %v488, %v492
    %v591 = vcombine.high %v488, %v492
    %v592 = vcombine.low %v496, %v500
    %v593 = vcombine.high %v496, %v500
    %v595 = vunpack.c.l.s4 1983009808
    %v596 = vunpack.c.0.s8 %v595
    %v597 = vlaneseq
    %v598 = vshrl.u32 %v597, 7
    %v599 = vsub.s32 %v596, %v598
    %v600 = vrot.slane %v590, %v599
    %v602 = vunpack.c.l.s4 1983009808
    %v603 = vunpack.c.0.s8 %v602
    %v604 = vlaneseq
    %v605 = vshrl.u32 %v604, 7
    %v606 = vsub.s32 %v603, %v605
    %v607 = vrot.slane %v591, %v606
    %v609 = vunpack.c.l.s4 1983009808
    %v610 = vunpack.c.0.s8 %v609
    %v611 = vlaneseq
    %v612 = vshrl.u32 %v611, 7
    %v613 = vsub.s32 %v610, %v612
    %v614 = vrot.slane %v592, %v613
    %v616 = vunpack.c.l.s4 1983009808
    %v617 = vunpack.c.0.s8 %v616
    %v618 = vlaneseq
    %v619 = vshrl.u32 %v618, 7
    %v620 = vsub.s32 %v617, %v619
    %v621 = vrot.slane %v593, %v620
    %v622 = vcombine.low %v600, %v614
    %v623 = vcombine.high %v600, %v614
    %v624 = vcombine.low %v607, %v621
    %v625 = vcombine.high %v607, %v621
    %v626 = vcombine.low %v489, %v493
    %v627 = vcombine.high %v489, %v493
    %v628 = vcombine.low %v497, %v501
    %v629 = vcombine.high %v497, %v501
    %v631 = vunpack.c.l.s4 1983009808
    %v632 = vunpack.c.0.s8 %v631
    %v633 = vlaneseq
    %v634 = vshrl.u32 %v633, 7
    %v635 = vsub.s32 %v632, %v634
    %v636 = vrot.slane %v626, %v635
    %v638 = vunpack.c.l.s4 1983009808
    %v639 = vunpack.c.0.s8 %v638
    %v640 = vlaneseq
    %v641 = vshrl.u32 %v640, 7
    %v642 = vsub.s32 %v639, %v641
    %v643 = vrot.slane %v627, %v642
    %v645 = vunpack.c.l.s4 1983009808
    %v646 = vunpack.c.0.s8 %v645
    %v647 = vlaneseq
    %v648 = vshrl.u32 %v647, 7
    %v649 = vsub.s32 %v646, %v648
    %v650 = vrot.slane %v628, %v649
    %v652 = vunpack.c.l.s4 1983009808
    %v653 = vunpack.c.0.s8 %v652
    %v654 = vlaneseq
    %v655 = vshrl.u32 %v654, 7
    %v656 = vsub.s32 %v653, %v655
    %v657 = vrot.slane %v629, %v656
    %v658 = vcombine.low %v636, %v650
    %v659 = vcombine.high %v636, %v650
    %v660 = vcombine.low %v643, %v657
    %v661 = vcombine.high %v643, %v657
    %v678 = vpack.c.bf16 %v550, %v550
    %v679 = vpack.c.bf16 %v551, %v551
    %v680 = vpack.c.bf16 %v552, %v552
    %v681 = vpack.c.bf16 %v553, %v553
    %v682 = vpack.c.bf16 %v586, %v586
    %v683 = vpack.c.bf16 %v587, %v587
    %v684 = vpack.c.bf16 %v588, %v588
    %v685 = vpack.c.bf16 %v589, %v589
    %v686 = vpack.c.bf16 %v622, %v622
    %v687 = vpack.c.bf16 %v623, %v623
    %v688 = vpack.c.bf16 %v624, %v624
    %v689 = vpack.c.bf16 %v625, %v625
    %v690 = vpack.c.bf16 %v658, %v658
    %v691 = vpack.c.bf16 %v659, %v659
    %v692 = vpack.c.bf16 %v660, %v660
    %v693 = vpack.c.bf16 %v661, %v661
    %v694 = vld [vmem:[%s1 + $0x800] sm:$0xff]
    %v695 = vld [vmem:[%s1 + $0x808] sm:$0xff]
    %v696 = vld [vmem:[%s1 + $0x810] sm:$0xff]
    %v697 = vld [vmem:[%s1 + $0x818] sm:$0xff]
    %v698 = vld [vmem:[%s1 + $0x820] sm:$0xff]
    %v699 = vld [vmem:[%s1 + $0x828] sm:$0xff]
    %v700 = vld [vmem:[%s1 + $0x830] sm:$0xff]
    %v701 = vld [vmem:[%s1 + $0x838] sm:$0xff]
    %v702 = vld [vmem:[%s1 + $0x840] sm:$0xff]
    %v703 = vld [vmem:[%s1 + $0x848] sm:$0xff]
    %v704 = vld [vmem:[%s1 + $0x850] sm:$0xff]
    %v705 = vld [vmem:[%s1 + $0x858] sm:$0xff]
    %v706 = vld [vmem:[%s1 + $0x860] sm:$0xff]
    %v707 = vld [vmem:[%s1 + $0x868] sm:$0xff]
    %v708 = vld [vmem:[%s1 + $0x870] sm:$0xff]
    %v709 = vld [vmem:[%s1 + $0x878] sm:$0xff]
    %v710 = vld [vmem:[%s1 + $0x880] sm:$0xff]
    %v711 = vld [vmem:[%s1 + $0x888] sm:$0xff]
    %v712 = vld [vmem:[%s1 + $0x890] sm:$0xff]
    %v713 = vld [vmem:[%s1 + $0x898] sm:$0xff]
    %v714 = vld [vmem:[%s1 + $0x8a0] sm:$0xff]
    %v715 = vld [vmem:[%s1 + $0x8a8] sm:$0xff]
    %v716 = vld [vmem:[%s1 + $0x8b0] sm:$0xff]
    %v717 = vld [vmem:[%s1 + $0x8b8] sm:$0xff]
    %v718 = vld [vmem:[%s1 + $0x8c0] sm:$0xff]
    %v719 = vld [vmem:[%s1 + $0x8c8] sm:$0xff]
    %v720 = vld [vmem:[%s1 + $0x8d0] sm:$0xff]
    %v721 = vld [vmem:[%s1 + $0x8d8] sm:$0xff]
    %v722 = vld [vmem:[%s1 + $0x8e0] sm:$0xff]
    %v723 = vld [vmem:[%s1 + $0x8e8] sm:$0xff]
    %v724 = vld [vmem:[%s1 + $0x8f0] sm:$0xff]
    %v725 = vld [vmem:[%s1 + $0x8f8] sm:$0xff]
    %v726 = vld [vmem:[%s1 + $0x900] sm:$0xff]
    %v727 = vld [vmem:[%s1 + $0x908] sm:$0xff]
    %v728 = vld [vmem:[%s1 + $0x910] sm:$0xff]
    %v729 = vld [vmem:[%s1 + $0x918] sm:$0xff]
    %v730 = vld [vmem:[%s1 + $0x920] sm:$0xff]
    %v731 = vld [vmem:[%s1 + $0x928] sm:$0xff]
    %v732 = vld [vmem:[%s1 + $0x930] sm:$0xff]
    %v733 = vld [vmem:[%s1 + $0x938] sm:$0xff]
    %v734 = vld [vmem:[%s1 + $0x940] sm:$0xff]
    %v735 = vld [vmem:[%s1 + $0x948] sm:$0xff]
    %v736 = vld [vmem:[%s1 + $0x950] sm:$0xff]
    %v737 = vld [vmem:[%s1 + $0x958] sm:$0xff]
    %v738 = vld [vmem:[%s1 + $0x960] sm:$0xff]
    %v739 = vld [vmem:[%s1 + $0x968] sm:$0xff]
    %v740 = vld [vmem:[%s1 + $0x970] sm:$0xff]
    %v741 = vld [vmem:[%s1 + $0x978] sm:$0xff]
    %v742 = vld [vmem:[%s1 + $0x980] sm:$0xff]
    %v743 = vld [vmem:[%s1 + $0x988] sm:$0xff]
    %v744 = vld [vmem:[%s1 + $0x990] sm:$0xff]
    %v745 = vld [vmem:[%s1 + $0x998] sm:$0xff]
    %v746 = vld [vmem:[%s1 + $0x9a0] sm:$0xff]
    %v747 = vld [vmem:[%s1 + $0x9a8] sm:$0xff]
    %v748 = vld [vmem:[%s1 + $0x9b0] sm:$0xff]
    %v749 = vld [vmem:[%s1 + $0x9b8] sm:$0xff]
    %v750 = vld [vmem:[%s1 + $0x9c0] sm:$0xff]
    %v751 = vld [vmem:[%s1 + $0x9c8] sm:$0xff]
    %v752 = vld [vmem:[%s1 + $0x9d0] sm:$0xff]
    %v753 = vld [vmem:[%s1 + $0x9d8] sm:$0xff]
    %v754 = vld [vmem:[%s1 + $0x9e0] sm:$0xff]
    %v755 = vld [vmem:[%s1 + $0x9e8] sm:$0xff]
    %v756 = vld [vmem:[%s1 + $0x9f0] sm:$0xff]
    %v757 = vld [vmem:[%s1 + $0x9f8] sm:$0xff]
    %v758 = vld [vmem:[%s1 + $0xa00] sm:$0xff]
    %v759 = vld [vmem:[%s1 + $0xa08] sm:$0xff]
    %v760 = vld [vmem:[%s1 + $0xa10] sm:$0xff]
    %v761 = vld [vmem:[%s1 + $0xa18] sm:$0xff]
    %v762 = vld [vmem:[%s1 + $0xa20] sm:$0xff]
    %v763 = vld [vmem:[%s1 + $0xa28] sm:$0xff]
    %v764 = vld [vmem:[%s1 + $0xa30] sm:$0xff]
    %v765 = vld [vmem:[%s1 + $0xa38] sm:$0xff]
    %v766 = vld [vmem:[%s1 + $0xa40] sm:$0xff]
    %v767 = vld [vmem:[%s1 + $0xa48] sm:$0xff]
    %v768 = vld [vmem:[%s1 + $0xa50] sm:$0xff]
    %v769 = vld [vmem:[%s1 + $0xa58] sm:$0xff]
    %v770 = vld [vmem:[%s1 + $0xa60] sm:$0xff]
    %v771 = vld [vmem:[%s1 + $0xa68] sm:$0xff]
    %v772 = vld [vmem:[%s1 + $0xa70] sm:$0xff]
    %v773 = vld [vmem:[%s1 + $0xa78] sm:$0xff]
    %v774 = vld [vmem:[%s1 + $0xa80] sm:$0xff]
    %v775 = vld [vmem:[%s1 + $0xa88] sm:$0xff]
    %v776 = vld [vmem:[%s1 + $0xa90] sm:$0xff]
    %v777 = vld [vmem:[%s1 + $0xa98] sm:$0xff]
    %v778 = vld [vmem:[%s1 + $0xaa0] sm:$0xff]
    %v779 = vld [vmem:[%s1 + $0xaa8] sm:$0xff]
    %v780 = vld [vmem:[%s1 + $0xab0] sm:$0xff]
    %v781 = vld [vmem:[%s1 + $0xab8] sm:$0xff]
    %v782 = vld [vmem:[%s1 + $0xac0] sm:$0xff]
    %v783 = vld [vmem:[%s1 + $0xac8] sm:$0xff]
    %v784 = vld [vmem:[%s1 + $0xad0] sm:$0xff]
    %v785 = vld [vmem:[%s1 + $0xad8] sm:$0xff]
    %v786 = vld [vmem:[%s1 + $0xae0] sm:$0xff]
    %v787 = vld [vmem:[%s1 + $0xae8] sm:$0xff]
    %v788 = vld [vmem:[%s1 + $0xaf0] sm:$0xff]
    %v789 = vld [vmem:[%s1 + $0xaf8] sm:$0xff]
    %v790 = vld [vmem:[%s1 + $0xb00] sm:$0xff]
    %v791 = vld [vmem:[%s1 + $0xb08] sm:$0xff]
    %v792 = vld [vmem:[%s1 + $0xb10] sm:$0xff]
    %v793 = vld [vmem:[%s1 + $0xb18] sm:$0xff]
    %v794 = vld [vmem:[%s1 + $0xb20] sm:$0xff]
    %v795 = vld [vmem:[%s1 + $0xb28] sm:$0xff]
    %v796 = vld [vmem:[%s1 + $0xb30] sm:$0xff]
    %v797 = vld [vmem:[%s1 + $0xb38] sm:$0xff]
    %v798 = vld [vmem:[%s1 + $0xb40] sm:$0xff]
    %v799 = vld [vmem:[%s1 + $0xb48] sm:$0xff]
    %v800 = vld [vmem:[%s1 + $0xb50] sm:$0xff]
    %v801 = vld [vmem:[%s1 + $0xb58] sm:$0xff]
    %v802 = vld [vmem:[%s1 + $0xb60] sm:$0xff]
    %v803 = vld [vmem:[%s1 + $0xb68] sm:$0xff]
    %v804 = vld [vmem:[%s1 + $0xb70] sm:$0xff]
    %v805 = vld [vmem:[%s1 + $0xb78] sm:$0xff]
    %v806 = vld [vmem:[%s1 + $0xb80] sm:$0xff]
    %v807 = vld [vmem:[%s1 + $0xb88] sm:$0xff]
    %v808 = vld [vmem:[%s1 + $0xb90] sm:$0xff]
    %v809 = vld [vmem:[%s1 + $0xb98] sm:$0xff]
    %v810 = vld [vmem:[%s1 + $0xba0] sm:$0xff]
    %v811 = vld [vmem:[%s1 + $0xba8] sm:$0xff]
    %v812 = vld [vmem:[%s1 + $0xbb0] sm:$0xff]
    %v813 = vld [vmem:[%s1 + $0xbb8] sm:$0xff]
    %v814 = vld [vmem:[%s1 + $0xbc0] sm:$0xff]
    %v815 = vld [vmem:[%s1 + $0xbc8] sm:$0xff]
    %v816 = vld [vmem:[%s1 + $0xbd0] sm:$0xff]
    %v817 = vld [vmem:[%s1 + $0xbd8] sm:$0xff]
    %v818 = vld [vmem:[%s1 + $0xbe0] sm:$0xff]
    %v819 = vld [vmem:[%s1 + $0xbe8] sm:$0xff]
    %v820 = vld [vmem:[%s1 + $0xbf0] sm:$0xff]
    %v821 = vld [vmem:[%s1 + $0xbf8] sm:$0xff]
    %v822 = vld [vmem:[%s1 + $0xc00] sm:$0xff]
    %v823 = vld [vmem:[%s1 + $0xc08] sm:$0xff]
    %v824 = vld [vmem:[%s1 + $0xc10] sm:$0xff]
    %v825 = vld [vmem:[%s1 + $0xc18] sm:$0xff]
    %v826 = vld [vmem:[%s1 + $0xc20] sm:$0xff]
    %v827 = vld [vmem:[%s1 + $0xc28] sm:$0xff]
    %v828 = vld [vmem:[%s1 + $0xc30] sm:$0xff]
    %v829 = vld [vmem:[%s1 + $0xc38] sm:$0xff]
    %v830 = vld [vmem:[%s1 + $0xc40] sm:$0xff]
    %v831 = vld [vmem:[%s1 + $0xc48] sm:$0xff]
    %v832 = vld [vmem:[%s1 + $0xc50] sm:$0xff]
    %v833 = vld [vmem:[%s1 + $0xc58] sm:$0xff]
    %v834 = vld [vmem:[%s1 + $0xc60] sm:$0xff]
    %v835 = vld [vmem:[%s1 + $0xc68] sm:$0xff]
    %v836 = vld [vmem:[%s1 + $0xc70] sm:$0xff]
    %v837 = vld [vmem:[%s1 + $0xc78] sm:$0xff]
    %v838 = vld [vmem:[%s1 + $0xc80] sm:$0xff]
    %v839 = vld [vmem:[%s1 + $0xc88] sm:$0xff]
    %v840 = vld [vmem:[%s1 + $0xc90] sm:$0xff]
    %v841 = vld [vmem:[%s1 + $0xc98] sm:$0xff]
    %v842 = vld [vmem:[%s1 + $0xca0] sm:$0xff]
    %v843 = vld [vmem:[%s1 + $0xca8] sm:$0xff]
    %v844 = vld [vmem:[%s1 + $0xcb0] sm:$0xff]
    %v845 = vld [vmem:[%s1 + $0xcb8] sm:$0xff]
    %v846 = vld [vmem:[%s1 + $0xcc0] sm:$0xff]
    %v847 = vld [vmem:[%s1 + $0xcc8] sm:$0xff]
    %v848 = vld [vmem:[%s1 + $0xcd0] sm:$0xff]
    %v849 = vld [vmem:[%s1 + $0xcd8] sm:$0xff]
    %v850 = vld [vmem:[%s1 + $0xce0] sm:$0xff]
    %v851 = vld [vmem:[%s1 + $0xce8] sm:$0xff]
    %v852 = vld [vmem:[%s1 + $0xcf0] sm:$0xff]
    %v853 = vld [vmem:[%s1 + $0xcf8] sm:$0xff]
    %v854 = vld [vmem:[%s1 + $0xd00] sm:$0xff]
    %v855 = vld [vmem:[%s1 + $0xd08] sm:$0xff]
    %v856 = vld [vmem:[%s1 + $0xd10] sm:$0xff]
    %v857 = vld [vmem:[%s1 + $0xd18] sm:$0xff]
    %v858 = vld [vmem:[%s1 + $0xd20] sm:$0xff]
    %v859 = vld [vmem:[%s1 + $0xd28] sm:$0xff]
    %v860 = vld [vmem:[%s1 + $0xd30] sm:$0xff]
    %v861 = vld [vmem:[%s1 + $0xd38] sm:$0xff]
    %v862 = vld [vmem:[%s1 + $0xd40] sm:$0xff]
    %v863 = vld [vmem:[%s1 + $0xd48] sm:$0xff]
    %v864 = vld [vmem:[%s1 + $0xd50] sm:$0xff]
    %v865 = vld [vmem:[%s1 + $0xd58] sm:$0xff]
    %v866 = vld [vmem:[%s1 + $0xd60] sm:$0xff]
    %v867 = vld [vmem:[%s1 + $0xd68] sm:$0xff]
    %v868 = vld [vmem:[%s1 + $0xd70] sm:$0xff]
    %v869 = vld [vmem:[%s1 + $0xd78] sm:$0xff]
    %v870 = vld [vmem:[%s1 + $0xd80] sm:$0xff]
    %v871 = vld [vmem:[%s1 + $0xd88] sm:$0xff]
    %v872 = vld [vmem:[%s1 + $0xd90] sm:$0xff]
    %v873 = vld [vmem:[%s1 + $0xd98] sm:$0xff]
    %v874 = vld [vmem:[%s1 + $0xda0] sm:$0xff]
    %v875 = vld [vmem:[%s1 + $0xda8] sm:$0xff]
    %v876 = vld [vmem:[%s1 + $0xdb0] sm:$0xff]
    %v877 = vld [vmem:[%s1 + $0xdb8] sm:$0xff]
    %v878 = vld [vmem:[%s1 + $0xdc0] sm:$0xff]
    %v879 = vld [vmem:[%s1 + $0xdc8] sm:$0xff]
    %v880 = vld [vmem:[%s1 + $0xdd0] sm:$0xff]
    %v881 = vld [vmem:[%s1 + $0xdd8] sm:$0xff]
    %v882 = vld [vmem:[%s1 + $0xde0] sm:$0xff]
    %v883 = vld [vmem:[%s1 + $0xde8] sm:$0xff]
    %v884 = vld [vmem:[%s1 + $0xdf0] sm:$0xff]
    %v885 = vld [vmem:[%s1 + $0xdf8] sm:$0xff]
    %v886 = vld [vmem:[%s1 + $0xe00] sm:$0xff]
    %v887 = vld [vmem:[%s1 + $0xe08] sm:$0xff]
    %v888 = vld [vmem:[%s1 + $0xe10] sm:$0xff]
    %v889 = vld [vmem:[%s1 + $0xe18] sm:$0xff]
    %v890 = vld [vmem:[%s1 + $0xe20] sm:$0xff]
    %v891 = vld [vmem:[%s1 + $0xe28] sm:$0xff]
    %v892 = vld [vmem:[%s1 + $0xe30] sm:$0xff]
    %v893 = vld [vmem:[%s1 + $0xe38] sm:$0xff]
    %v894 = vld [vmem:[%s1 + $0xe40] sm:$0xff]
    %v895 = vld [vmem:[%s1 + $0xe48] sm:$0xff]
    %v896 = vld [vmem:[%s1 + $0xe50] sm:$0xff]
    %v897 = vld [vmem:[%s1 + $0xe58] sm:$0xff]
    %v898 = vld [vmem:[%s1 + $0xe60] sm:$0xff]
    %v899 = vld [vmem:[%s1 + $0xe68] sm:$0xff]
    %v900 = vld [vmem:[%s1 + $0xe70] sm:$0xff]
    %v901 = vld [vmem:[%s1 + $0xe78] sm:$0xff]
    %v902 = vld [vmem:[%s1 + $0xe80] sm:$0xff]
    %v903 = vld [vmem:[%s1 + $0xe88] sm:$0xff]
    %v904 = vld [vmem:[%s1 + $0xe90] sm:$0xff]
    %v905 = vld [vmem:[%s1 + $0xe98] sm:$0xff]
    %v906 = vld [vmem:[%s1 + $0xea0] sm:$0xff]
    %v907 = vld [vmem:[%s1 + $0xea8] sm:$0xff]
    %v908 = vld [vmem:[%s1 + $0xeb0] sm:$0xff]
    %v909 = vld [vmem:[%s1 + $0xeb8] sm:$0xff]
    %v910 = vld [vmem:[%s1 + $0xec0] sm:$0xff]
    %v911 = vld [vmem:[%s1 + $0xec8] sm:$0xff]
    %v912 = vld [vmem:[%s1 + $0xed0] sm:$0xff]
    %v913 = vld [vmem:[%s1 + $0xed8] sm:$0xff]
    %v914 = vld [vmem:[%s1 + $0xee0] sm:$0xff]
    %v915 = vld [vmem:[%s1 + $0xee8] sm:$0xff]
    %v916 = vld [vmem:[%s1 + $0xef0] sm:$0xff]
    %v917 = vld [vmem:[%s1 + $0xef8] sm:$0xff]
    %v918 = vld [vmem:[%s1 + $0xf00] sm:$0xff]
    %v919 = vld [vmem:[%s1 + $0xf08] sm:$0xff]
    %v920 = vld [vmem:[%s1 + $0xf10] sm:$0xff]
    %v921 = vld [vmem:[%s1 + $0xf18] sm:$0xff]
    %v922 = vld [vmem:[%s1 + $0xf20] sm:$0xff]
    %v923 = vld [vmem:[%s1 + $0xf28] sm:$0xff]
    %v924 = vld [vmem:[%s1 + $0xf30] sm:$0xff]
    %v925 = vld [vmem:[%s1 + $0xf38] sm:$0xff]
    %v926 = vld [vmem:[%s1 + $0xf40] sm:$0xff]
    %v927 = vld [vmem:[%s1 + $0xf48] sm:$0xff]
    %v928 = vld [vmem:[%s1 + $0xf50] sm:$0xff]
    %v929 = vld [vmem:[%s1 + $0xf58] sm:$0xff]
    %v930 = vld [vmem:[%s1 + $0xf60] sm:$0xff]
    %v931 = vld [vmem:[%s1 + $0xf68] sm:$0xff]
    %v932 = vld [vmem:[%s1 + $0xf70] sm:$0xff]
    %v933 = vld [vmem:[%s1 + $0xf78] sm:$0xff]
    %v934 = vld [vmem:[%s1 + $0xf80] sm:$0xff]
    %v935 = vld [vmem:[%s1 + $0xf88] sm:$0xff]
    %v936 = vld [vmem:[%s1 + $0xf90] sm:$0xff]
    %v937 = vld [vmem:[%s1 + $0xf98] sm:$0xff]
    %v938 = vld [vmem:[%s1 + $0xfa0] sm:$0xff]
    %v939 = vld [vmem:[%s1 + $0xfa8] sm:$0xff]
    %v940 = vld [vmem:[%s1 + $0xfb0] sm:$0xff]
    %v941 = vld [vmem:[%s1 + $0xfb8] sm:$0xff]
    %v942 = vld [vmem:[%s1 + $0xfc0] sm:$0xff]
    %v943 = vld [vmem:[%s1 + $0xfc8] sm:$0xff]
    %v944 = vld [vmem:[%s1 + $0xfd0] sm:$0xff]
    %v945 = vld [vmem:[%s1 + $0xfd8] sm:$0xff]
    %v946 = vld [vmem:[%s1 + $0xfe0] sm:$0xff]
    %v947 = vld [vmem:[%s1 + $0xfe8] sm:$0xff]
    %v948 = vld [vmem:[%s1 + $0xff0] sm:$0xff]
    %v949 = vld [vmem:[%s1 + $0xff8] sm:$0xff]
    %v1206 = vunpack.c.l.b16 %v694
    %v1207 = vunpack.c.h.b16 %v694
    %v1208 = vunpack.c.l.b16 %v695
    %v1209 = vunpack.c.h.b16 %v695
    %v1210 = vunpack.c.l.b16 %v696
    %v1211 = vunpack.c.h.b16 %v696
    %v1212 = vunpack.c.l.b16 %v697
    %v1213 = vunpack.c.h.b16 %v697
    %v1214 = vunpack.c.l.b16 %v698
    %v1215 = vunpack.c.h.b16 %v698
    %v1216 = vunpack.c.l.b16 %v699
    %v1217 = vunpack.c.h.b16 %v699
    %v1218 = vunpack.c.l.b16 %v700
    %v1219 = vunpack.c.h.b16 %v700
    %v1220 = vunpack.c.l.b16 %v701
    %v1221 = vunpack.c.h.b16 %v701
    %v1222 = vunpack.c.l.b16 %v702
    %v1223 = vunpack.c.h.b16 %v702
    %v1224 = vunpack.c.l.b16 %v703
    %v1225 = vunpack.c.h.b16 %v703
    %v1226 = vunpack.c.l.b16 %v704
    %v1227 = vunpack.c.h.b16 %v704
    %v1228 = vunpack.c.l.b16 %v705
    %v1229 = vunpack.c.h.b16 %v705
    %v1230 = vunpack.c.l.b16 %v706
    %v1231 = vunpack.c.h.b16 %v706
    %v1232 = vunpack.c.l.b16 %v707
    %v1233 = vunpack.c.h.b16 %v707
    %v1234 = vunpack.c.l.b16 %v708
    %v1235 = vunpack.c.h.b16 %v708
    %v1236 = vunpack.c.l.b16 %v709
    %v1237 = vunpack.c.h.b16 %v709
    %v1238 = vunpack.c.l.b16 %v710
    %v1239 = vunpack.c.h.b16 %v710
    %v1240 = vunpack.c.l.b16 %v711
    %v1241 = vunpack.c.h.b16 %v711
    %v1242 = vunpack.c.l.b16 %v712
    %v1243 = vunpack.c.h.b16 %v712
    %v1244 = vunpack.c.l.b16 %v713
    %v1245 = vunpack.c.h.b16 %v713
    %v1246 = vunpack.c.l.b16 %v714
    %v1247 = vunpack.c.h.b16 %v714
    %v1248 = vunpack.c.l.b16 %v715
    %v1249 = vunpack.c.h.b16 %v715
    %v1250 = vunpack.c.l.b16 %v716
    %v1251 = vunpack.c.h.b16 %v716
    %v1252 = vunpack.c.l.b16 %v717
    %v1253 = vunpack.c.h.b16 %v717
    %v1254 = vunpack.c.l.b16 %v718
    %v1255 = vunpack.c.h.b16 %v718
    %v1256 = vunpack.c.l.b16 %v719
    %v1257 = vunpack.c.h.b16 %v719
    %v1258 = vunpack.c.l.b16 %v720
    %v1259 = vunpack.c.h.b16 %v720
    %v1260 = vunpack.c.l.b16 %v721
    %v1261 = vunpack.c.h.b16 %v721
    %v1262 = vunpack.c.l.b16 %v722
    %v1263 = vunpack.c.h.b16 %v722
    %v1264 = vunpack.c.l.b16 %v723
    %v1265 = vunpack.c.h.b16 %v723
    %v1266 = vunpack.c.l.b16 %v724
    %v1267 = vunpack.c.h.b16 %v724
    %v1268 = vunpack.c.l.b16 %v725
    %v1269 = vunpack.c.h.b16 %v725
    %v1270 = vunpack.c.l.b16 %v726
    %v1271 = vunpack.c.h.b16 %v726
    %v1272 = vunpack.c.l.b16 %v727
    %v1273 = vunpack.c.h.b16 %v727
    %v1274 = vunpack.c.l.b16 %v728
    %v1275 = vunpack.c.h.b16 %v728
    %v1276 = vunpack.c.l.b16 %v729
    %v1277 = vunpack.c.h.b16 %v729
    %v1278 = vunpack.c.l.b16 %v730
    %v1279 = vunpack.c.h.b16 %v730
    %v1280 = vunpack.c.l.b16 %v731
    %v1281 = vunpack.c.h.b16 %v731
    %v1282 = vunpack.c.l.b16 %v732
    %v1283 = vunpack.c.h.b16 %v732
    %v1284 = vunpack.c.l.b16 %v733
    %v1285 = vunpack.c.h.b16 %v733
    %v1286 = vunpack.c.l.b16 %v734
    %v1287 = vunpack.c.h.b16 %v734
    %v1288 = vunpack.c.l.b16 %v735
    %v1289 = vunpack.c.h.b16 %v735
    %v1290 = vunpack.c.l.b16 %v736
    %v1291 = vunpack.c.h.b16 %v736
    %v1292 = vunpack.c.l.b16 %v737
    %v1293 = vunpack.c.h.b16 %v737
    %v1294 = vunpack.c.l.b16 %v738
    %v1295 = vunpack.c.h.b16 %v738
    %v1296 = vunpack.c.l.b16 %v739
    %v1297 = vunpack.c.h.b16 %v739
    %v1298 = vunpack.c.l.b16 %v740
    %v1299 = vunpack.c.h.b16 %v740
    %v1300 = vunpack.c.l.b16 %v741
    %v1301 = vunpack.c.h.b16 %v741
    %v1302 = vunpack.c.l.b16 %v742
    %v1303 = vunpack.c.h.b16 %v742
    %v1304 = vunpack.c.l.b16 %v743
    %v1305 = vunpack.c.h.b16 %v743
    %v1306 = vunpack.c.l.b16 %v744
    %v1307 = vunpack.c.h.b16 %v744
    %v1308 = vunpack.c.l.b16 %v745
    %v1309 = vunpack.c.h.b16 %v745
    %v1310 = vunpack.c.l.b16 %v746
    %v1311 = vunpack.c.h.b16 %v746
    %v1312 = vunpack.c.l.b16 %v747
    %v1313 = vunpack.c.h.b16 %v747
    %v1314 = vunpack.c.l.b16 %v748
    %v1315 = vunpack.c.h.b16 %v748
    %v1316 = vunpack.c.l.b16 %v749
    %v1317 = vunpack.c.h.b16 %v749
    %v1318 = vunpack.c.l.b16 %v750
    %v1319 = vunpack.c.h.b16 %v750
    %v1320 = vunpack.c.l.b16 %v751
    %v1321 = vunpack.c.h.b16 %v751
    %v1322 = vunpack.c.l.b16 %v752
    %v1323 = vunpack.c.h.b16 %v752
    %v1324 = vunpack.c.l.b16 %v753
    %v1325 = vunpack.c.h.b16 %v753
    %v1326 = vunpack.c.l.b16 %v754
    %v1327 = vunpack.c.h.b16 %v754
    %v1328 = vunpack.c.l.b16 %v755
    %v1329 = vunpack.c.h.b16 %v755
    %v1330 = vunpack.c.l.b16 %v756
    %v1331 = vunpack.c.h.b16 %v756
    %v1332 = vunpack.c.l.b16 %v757
    %v1333 = vunpack.c.h.b16 %v757
    %v1334 = vunpack.c.l.b16 %v758
    %v1335 = vunpack.c.h.b16 %v758
    %v1336 = vunpack.c.l.b16 %v759
    %v1337 = vunpack.c.h.b16 %v759
    %v1338 = vunpack.c.l.b16 %v760
    %v1339 = vunpack.c.h.b16 %v760
    %v1340 = vunpack.c.l.b16 %v761
    %v1341 = vunpack.c.h.b16 %v761
    %v1342 = vunpack.c.l.b16 %v762
    %v1343 = vunpack.c.h.b16 %v762
    %v1344 = vunpack.c.l.b16 %v763
    %v1345 = vunpack.c.h.b16 %v763
    %v1346 = vunpack.c.l.b16 %v764
    %v1347 = vunpack.c.h.b16 %v764
    %v1348 = vunpack.c.l.b16 %v765
    %v1349 = vunpack.c.h.b16 %v765
    %v1350 = vunpack.c.l.b16 %v766
    %v1351 = vunpack.c.h.b16 %v766
    %v1352 = vunpack.c.l.b16 %v767
    %v1353 = vunpack.c.h.b16 %v767
    %v1354 = vunpack.c.l.b16 %v768
    %v1355 = vunpack.c.h.b16 %v768
    %v1356 = vunpack.c.l.b16 %v769
    %v1357 = vunpack.c.h.b16 %v769
    %v1358 = vunpack.c.l.b16 %v770
    %v1359 = vunpack.c.h.b16 %v770
    %v1360 = vunpack.c.l.b16 %v771
    %v1361 = vunpack.c.h.b16 %v771
    %v1362 = vunpack.c.l.b16 %v772
    %v1363 = vunpack.c.h.b16 %v772
    %v1364 = vunpack.c.l.b16 %v773
    %v1365 = vunpack.c.h.b16 %v773
    %v1366 = vunpack.c.l.b16 %v774
    %v1367 = vunpack.c.h.b16 %v774
    %v1368 = vunpack.c.l.b16 %v775
    %v1369 = vunpack.c.h.b16 %v775
    %v1370 = vunpack.c.l.b16 %v776
    %v1371 = vunpack.c.h.b16 %v776
    %v1372 = vunpack.c.l.b16 %v777
    %v1373 = vunpack.c.h.b16 %v777
    %v1374 = vunpack.c.l.b16 %v778
    %v1375 = vunpack.c.h.b16 %v778
    %v1376 = vunpack.c.l.b16 %v779
    %v1377 = vunpack.c.h.b16 %v779
    %v1378 = vunpack.c.l.b16 %v780
    %v1379 = vunpack.c.h.b16 %v780
    %v1380 = vunpack.c.l.b16 %v781
    %v1381 = vunpack.c.h.b16 %v781
    %v1382 = vunpack.c.l.b16 %v782
    %v1383 = vunpack.c.h.b16 %v782
    %v1384 = vunpack.c.l.b16 %v783
    %v1385 = vunpack.c.h.b16 %v783
    %v1386 = vunpack.c.l.b16 %v784
    %v1387 = vunpack.c.h.b16 %v784
    %v1388 = vunpack.c.l.b16 %v785
    %v1389 = vunpack.c.h.b16 %v785
    %v1390 = vunpack.c.l.b16 %v786
    %v1391 = vunpack.c.h.b16 %v786
    %v1392 = vunpack.c.l.b16 %v787
    %v1393 = vunpack.c.h.b16 %v787
    %v1394 = vunpack.c.l.b16 %v788
    %v1395 = vunpack.c.h.b16 %v788
    %v1396 = vunpack.c.l.b16 %v789
    %v1397 = vunpack.c.h.b16 %v789
    %v1398 = vunpack.c.l.b16 %v790
    %v1399 = vunpack.c.h.b16 %v790
    %v1400 = vunpack.c.l.b16 %v791
    %v1401 = vunpack.c.h.b16 %v791
    %v1402 = vunpack.c.l.b16 %v792
    %v1403 = vunpack.c.h.b16 %v792
    %v1404 = vunpack.c.l.b16 %v793
    %v1405 = vunpack.c.h.b16 %v793
    %v1406 = vunpack.c.l.b16 %v794
    %v1407 = vunpack.c.h.b16 %v794
    %v1408 = vunpack.c.l.b16 %v795
    %v1409 = vunpack.c.h.b16 %v795
    %v1410 = vunpack.c.l.b16 %v796
    %v1411 = vunpack.c.h.b16 %v796
    %v1412 = vunpack.c.l.b16 %v797
    %v1413 = vunpack.c.h.b16 %v797
    %v1414 = vunpack.c.l.b16 %v798
    %v1415 = vunpack.c.h.b16 %v798
    %v1416 = vunpack.c.l.b16 %v799
    %v1417 = vunpack.c.h.b16 %v799
    %v1418 = vunpack.c.l.b16 %v800
    %v1419 = vunpack.c.h.b16 %v800
    %v1420 = vunpack.c.l.b16 %v801
    %v1421 = vunpack.c.h.b16 %v801
    %v1422 = vunpack.c.l.b16 %v802
    %v1423 = vunpack.c.h.b16 %v802
    %v1424 = vunpack.c.l.b16 %v803
    %v1425 = vunpack.c.h.b16 %v803
    %v1426 = vunpack.c.l.b16 %v804
    %v1427 = vunpack.c.h.b16 %v804
    %v1428 = vunpack.c.l.b16 %v805
    %v1429 = vunpack.c.h.b16 %v805
    %v1430 = vunpack.c.l.b16 %v806
    %v1431 = vunpack.c.h.b16 %v806
    %v1432 = vunpack.c.l.b16 %v807
    %v1433 = vunpack.c.h.b16 %v807
    %v1434 = vunpack.c.l.b16 %v808
    %v1435 = vunpack.c.h.b16 %v808
    %v1436 = vunpack.c.l.b16 %v809
    %v1437 = vunpack.c.h.b16 %v809
    %v1438 = vunpack.c.l.b16 %v810
    %v1439 = vunpack.c.h.b16 %v810
    %v1440 = vunpack.c.l.b16 %v811
    %v1441 = vunpack.c.h.b16 %v811
    %v1442 = vunpack.c.l.b16 %v812
    %v1443 = vunpack.c.h.b16 %v812
    %v1444 = vunpack.c.l.b16 %v813
    %v1445 = vunpack.c.h.b16 %v813
    %v1446 = vunpack.c.l.b16 %v814
    %v1447 = vunpack.c.h.b16 %v814
    %v1448 = vunpack.c.l.b16 %v815
    %v1449 = vunpack.c.h.b16 %v815
    %v1450 = vunpack.c.l.b16 %v816
    %v1451 = vunpack.c.h.b16 %v816
    %v1452 = vunpack.c.l.b16 %v817
    %v1453 = vunpack.c.h.b16 %v817
    %v1454 = vunpack.c.l.b16 %v818
    %v1455 = vunpack.c.h.b16 %v818
    %v1456 = vunpack.c.l.b16 %v819
    %v1457 = vunpack.c.h.b16 %v819
    %v1458 = vunpack.c.l.b16 %v820
    %v1459 = vunpack.c.h.b16 %v820
    %v1460 = vunpack.c.l.b16 %v821
    %v1461 = vunpack.c.h.b16 %v821
    %v1462 = vunpack.c.l.b16 %v822
    %v1463 = vunpack.c.h.b16 %v822
    %v1464 = vunpack.c.l.b16 %v823
    %v1465 = vunpack.c.h.b16 %v823
    %v1466 = vunpack.c.l.b16 %v824
    %v1467 = vunpack.c.h.b16 %v824
    %v1468 = vunpack.c.l.b16 %v825
    %v1469 = vunpack.c.h.b16 %v825
    %v1470 = vunpack.c.l.b16 %v826
    %v1471 = vunpack.c.h.b16 %v826
    %v1472 = vunpack.c.l.b16 %v827
    %v1473 = vunpack.c.h.b16 %v827
    %v1474 = vunpack.c.l.b16 %v828
    %v1475 = vunpack.c.h.b16 %v828
    %v1476 = vunpack.c.l.b16 %v829
    %v1477 = vunpack.c.h.b16 %v829
    %v1478 = vunpack.c.l.b16 %v830
    %v1479 = vunpack.c.h.b16 %v830
    %v1480 = vunpack.c.l.b16 %v831
    %v1481 = vunpack.c.h.b16 %v831
    %v1482 = vunpack.c.l.b16 %v832
    %v1483 = vunpack.c.h.b16 %v832
    %v1484 = vunpack.c.l.b16 %v833
    %v1485 = vunpack.c.h.b16 %v833
    %v1486 = vunpack.c.l.b16 %v834
    %v1487 = vunpack.c.h.b16 %v834
    %v1488 = vunpack.c.l.b16 %v835
    %v1489 = vunpack.c.h.b16 %v835
    %v1490 = vunpack.c.l.b16 %v836
    %v1491 = vunpack.c.h.b16 %v836
    %v1492 = vunpack.c.l.b16 %v837
    %v1493 = vunpack.c.h.b16 %v837
    %v1494 = vunpack.c.l.b16 %v838
    %v1495 = vunpack.c.h.b16 %v838
    %v1496 = vunpack.c.l.b16 %v839
    %v1497 = vunpack.c.h.b16 %v839
    %v1498 = vunpack.c.l.b16 %v840
    %v1499 = vunpack.c.h.b16 %v840
    %v1500 = vunpack.c.l.b16 %v841
    %v1501 = vunpack.c.h.b16 %v841
    %v1502 = vunpack.c.l.b16 %v842
    %v1503 = vunpack.c.h.b16 %v842
    %v1504 = vunpack.c.l.b16 %v843
    %v1505 = vunpack.c.h.b16 %v843
    %v1506 = vunpack.c.l.b16 %v844
    %v1507 = vunpack.c.h.b16 %v844
    %v1508 = vunpack.c.l.b16 %v845
    %v1509 = vunpack.c.h.b16 %v845
    %v1510 = vunpack.c.l.b16 %v846
    %v1511 = vunpack.c.h.b16 %v846
    %v1512 = vunpack.c.l.b16 %v847
    %v1513 = vunpack.c.h.b16 %v847
    %v1514 = vunpack.c.l.b16 %v848
    %v1515 = vunpack.c.h.b16 %v848
    %v1516 = vunpack.c.l.b16 %v849
    %v1517 = vunpack.c.h.b16 %v849
    %v1518 = vunpack.c.l.b16 %v850
    %v1519 = vunpack.c.h.b16 %v850
    %v1520 = vunpack.c.l.b16 %v851
    %v1521 = vunpack.c.h.b16 %v851
    %v1522 = vunpack.c.l.b16 %v852
    %v1523 = vunpack.c.h.b16 %v852
    %v1524 = vunpack.c.l.b16 %v853
    %v1525 = vunpack.c.h.b16 %v853
    %v1526 = vunpack.c.l.b16 %v854
    %v1527 = vunpack.c.h.b16 %v854
    %v1528 = vunpack.c.l.b16 %v855
    %v1529 = vunpack.c.h.b16 %v855
    %v1530 = vunpack.c.l.b16 %v856
    %v1531 = vunpack.c.h.b16 %v856
    %v1532 = vunpack.c.l.b16 %v857
    %v1533 = vunpack.c.h.b16 %v857
    %v1534 = vunpack.c.l.b16 %v858
    %v1535 = vunpack.c.h.b16 %v858
    %v1536 = vunpack.c.l.b16 %v859
    %v1537 = vunpack.c.h.b16 %v859
    %v1538 = vunpack.c.l.b16 %v860
    %v1539 = vunpack.c.h.b16 %v860
    %v1540 = vunpack.c.l.b16 %v861
    %v1541 = vunpack.c.h.b16 %v861
    %v1542 = vunpack.c.l.b16 %v862
    %v1543 = vunpack.c.h.b16 %v862
    %v1544 = vunpack.c.l.b16 %v863
    %v1545 = vunpack.c.h.b16 %v863
    %v1546 = vunpack.c.l.b16 %v864
    %v1547 = vunpack.c.h.b16 %v864
    %v1548 = vunpack.c.l.b16 %v865
    %v1549 = vunpack.c.h.b16 %v865
    %v1550 = vunpack.c.l.b16 %v866
    %v1551 = vunpack.c.h.b16 %v866
    %v1552 = vunpack.c.l.b16 %v867
    %v1553 = vunpack.c.h.b16 %v867
    %v1554 = vunpack.c.l.b16 %v868
    %v1555 = vunpack.c.h.b16 %v868
    %v1556 = vunpack.c.l.b16 %v869
    %v1557 = vunpack.c.h.b16 %v869
    %v1558 = vunpack.c.l.b16 %v870
    %v1559 = vunpack.c.h.b16 %v870
    %v1560 = vunpack.c.l.b16 %v871
    %v1561 = vunpack.c.h.b16 %v871
    %v1562 = vunpack.c.l.b16 %v872
    %v1563 = vunpack.c.h.b16 %v872
    %v1564 = vunpack.c.l.b16 %v873
    %v1565 = vunpack.c.h.b16 %v873
    %v1566 = vunpack.c.l.b16 %v874
    %v1567 = vunpack.c.h.b16 %v874
    %v1568 = vunpack.c.l.b16 %v875
    %v1569 = vunpack.c.h.b16 %v875
    %v1570 = vunpack.c.l.b16 %v876
    %v1571 = vunpack.c.h.b16 %v876
    %v1572 = vunpack.c.l.b16 %v877
    %v1573 = vunpack.c.h.b16 %v877
    %v1574 = vunpack.c.l.b16 %v878
    %v1575 = vunpack.c.h.b16 %v878
    %v1576 = vunpack.c.l.b16 %v879
    %v1577 = vunpack.c.h.b16 %v879
    %v1578 = vunpack.c.l.b16 %v880
    %v1579 = vunpack.c.h.b16 %v880
    %v1580 = vunpack.c.l.b16 %v881
    %v1581 = vunpack.c.h.b16 %v881
    %v1582 = vunpack.c.l.b16 %v882
    %v1583 = vunpack.c.h.b16 %v882
    %v1584 = vunpack.c.l.b16 %v883
    %v1585 = vunpack.c.h.b16 %v883
    %v1586 = vunpack.c.l.b16 %v884
    %v1587 = vunpack.c.h.b16 %v884
    %v1588 = vunpack.c.l.b16 %v885
    %v1589 = vunpack.c.h.b16 %v885
    %v1590 = vunpack.c.l.b16 %v886
    %v1591 = vunpack.c.h.b16 %v886
    %v1592 = vunpack.c.l.b16 %v887
    %v1593 = vunpack.c.h.b16 %v887
    %v1594 = vunpack.c.l.b16 %v888
    %v1595 = vunpack.c.h.b16 %v888
    %v1596 = vunpack.c.l.b16 %v889
    %v1597 = vunpack.c.h.b16 %v889
    %v1598 = vunpack.c.l.b16 %v890
    %v1599 = vunpack.c.h.b16 %v890
    %v1600 = vunpack.c.l.b16 %v891
    %v1601 = vunpack.c.h.b16 %v891
    %v1602 = vunpack.c.l.b16 %v892
    %v1603 = vunpack.c.h.b16 %v892
    %v1604 = vunpack.c.l.b16 %v893
    %v1605 = vunpack.c.h.b16 %v893
    %v1606 = vunpack.c.l.b16 %v894
    %v1607 = vunpack.c.h.b16 %v894
    %v1608 = vunpack.c.l.b16 %v895
    %v1609 = vunpack.c.h.b16 %v895
    %v1610 = vunpack.c.l.b16 %v896
    %v1611 = vunpack.c.h.b16 %v896
    %v1612 = vunpack.c.l.b16 %v897
    %v1613 = vunpack.c.h.b16 %v897
    %v1614 = vunpack.c.l.b16 %v898
    %v1615 = vunpack.c.h.b16 %v898
    %v1616 = vunpack.c.l.b16 %v899
    %v1617 = vunpack.c.h.b16 %v899
    %v1618 = vunpack.c.l.b16 %v900
    %v1619 = vunpack.c.h.b16 %v900
    %v1620 = vunpack.c.l.b16 %v901
    %v1621 = vunpack.c.h.b16 %v901
    %v1622 = vunpack.c.l.b16 %v902
    %v1623 = vunpack.c.h.b16 %v902
    %v1624 = vunpack.c.l.b16 %v903
    %v1625 = vunpack.c.h.b16 %v903
    %v1626 = vunpack.c.l.b16 %v904
    %v1627 = vunpack.c.h.b16 %v904
    %v1628 = vunpack.c.l.b16 %v905
    %v1629 = vunpack.c.h.b16 %v905
    %v1630 = vunpack.c.l.b16 %v906
    %v1631 = vunpack.c.h.b16 %v906
    %v1632 = vunpack.c.l.b16 %v907
    %v1633 = vunpack.c.h.b16 %v907
    %v1634 = vunpack.c.l.b16 %v908
    %v1635 = vunpack.c.h.b16 %v908
    %v1636 = vunpack.c.l.b16 %v909
    %v1637 = vunpack.c.h.b16 %v909
    %v1638 = vunpack.c.l.b16 %v910
    %v1639 = vunpack.c.h.b16 %v910
    %v1640 = vunpack.c.l.b16 %v911
    %v1641 = vunpack.c.h.b16 %v911
    %v1642 = vunpack.c.l.b16 %v912
    %v1643 = vunpack.c.h.b16 %v912
    %v1644 = vunpack.c.l.b16 %v913
    %v1645 = vunpack.c.h.b16 %v913
    %v1646 = vunpack.c.l.b16 %v914
    %v1647 = vunpack.c.h.b16 %v914
    %v1648 = vunpack.c.l.b16 %v915
    %v1649 = vunpack.c.h.b16 %v915
    %v1650 = vunpack.c.l.b16 %v916
    %v1651 = vunpack.c.h.b16 %v916
    %v1652 = vunpack.c.l.b16 %v917
    %v1653 = vunpack.c.h.b16 %v917
    %v1654 = vunpack.c.l.b16 %v918
    %v1655 = vunpack.c.h.b16 %v918
    %v1656 = vunpack.c.l.b16 %v919
    %v1657 = vunpack.c.h.b16 %v919
    %v1658 = vunpack.c.l.b16 %v920
    %v1659 = vunpack.c.h.b16 %v920
    %v1660 = vunpack.c.l.b16 %v921
    %v1661 = vunpack.c.h.b16 %v921
    %v1662 = vunpack.c.l.b16 %v922
    %v1663 = vunpack.c.h.b16 %v922
    %v1664 = vunpack.c.l.b16 %v923
    %v1665 = vunpack.c.h.b16 %v923
    %v1666 = vunpack.c.l.b16 %v924
    %v1667 = vunpack.c.h.b16 %v924
    %v1668 = vunpack.c.l.b16 %v925
    %v1669 = vunpack.c.h.b16 %v925
    %v1670 = vunpack.c.l.b16 %v926
    %v1671 = vunpack.c.h.b16 %v926
    %v1672 = vunpack.c.l.b16 %v927
    %v1673 = vunpack.c.h.b16 %v927
    %v1674 = vunpack.c.l.b16 %v928
    %v1675 = vunpack.c.h.b16 %v928
    %v1676 = vunpack.c.l.b16 %v929
    %v1677 = vunpack.c.h.b16 %v929
    %v1678 = vunpack.c.l.b16 %v930
    %v1679 = vunpack.c.h.b16 %v930
    %v1680 = vunpack.c.l.b16 %v931
    %v1681 = vunpack.c.h.b16 %v931
    %v1682 = vunpack.c.l.b16 %v932
    %v1683 = vunpack.c.h.b16 %v932
    %v1684 = vunpack.c.l.b16 %v933
    %v1685 = vunpack.c.h.b16 %v933
    %v1686 = vunpack.c.l.b16 %v934
    %v1687 = vunpack.c.h.b16 %v934
    %v1688 = vunpack.c.l.b16 %v935
    %v1689 = vunpack.c.h.b16 %v935
    %v1690 = vunpack.c.l.b16 %v936
    %v1691 = vunpack.c.h.b16 %v936
    %v1692 = vunpack.c.l.b16 %v937
    %v1693 = vunpack.c.h.b16 %v937
    %v1694 = vunpack.c.l.b16 %v938
    %v1695 = vunpack.c.h.b16 %v938
    %v1696 = vunpack.c.l.b16 %v939
    %v1697 = vunpack.c.h.b16 %v939
    %v1698 = vunpack.c.l.b16 %v940
    %v1699 = vunpack.c.h.b16 %v940
    %v1700 = vunpack.c.l.b16 %v941
    %v1701 = vunpack.c.h.b16 %v941
    %v1702 = vunpack.c.l.b16 %v942
    %v1703 = vunpack.c.h.b16 %v942
    %v1704 = vunpack.c.l.b16 %v943
    %v1705 = vunpack.c.h.b16 %v943
    %v1706 = vunpack.c.l.b16 %v944
    %v1707 = vunpack.c.h.b16 %v944
    %v1708 = vunpack.c.l.b16 %v945
    %v1709 = vunpack.c.h.b16 %v945
    %v1710 = vunpack.c.l.b16 %v946
    %v1711 = vunpack.c.h.b16 %v946
    %v1712 = vunpack.c.l.b16 %v947
    %v1713 = vunpack.c.h.b16 %v947
    %v1714 = vunpack.c.l.b16 %v948
    %v1715 = vunpack.c.h.b16 %v948
    %v1716 = vunpack.c.l.b16 %v949
    %v1717 = vunpack.c.h.b16 %v949
    %v1718 = vpack.c.b16 %v1208, %v1206
    %v1719 = vpack.c.b16 %v1209, %v1207
    %v1720 = vpack.c.b16 %v1212, %v1210
    %v1721 = vpack.c.b16 %v1213, %v1211
    %v1722 = vpack.c.b16 %v1216, %v1214
    %v1723 = vpack.c.b16 %v1217, %v1215
    %v1724 = vpack.c.b16 %v1220, %v1218
    %v1725 = vpack.c.b16 %v1221, %v1219
    %v1726 = vpack.c.b16 %v1224, %v1222
    %v1727 = vpack.c.b16 %v1225, %v1223
    %v1728 = vpack.c.b16 %v1228, %v1226
    %v1729 = vpack.c.b16 %v1229, %v1227
    %v1730 = vpack.c.b16 %v1232, %v1230
    %v1731 = vpack.c.b16 %v1233, %v1231
    %v1732 = vpack.c.b16 %v1236, %v1234
    %v1733 = vpack.c.b16 %v1237, %v1235
    %v1734 = vpack.c.b16 %v1240, %v1238
    %v1735 = vpack.c.b16 %v1241, %v1239
    %v1736 = vpack.c.b16 %v1244, %v1242
    %v1737 = vpack.c.b16 %v1245, %v1243
    %v1738 = vpack.c.b16 %v1248, %v1246
    %v1739 = vpack.c.b16 %v1249, %v1247
    %v1740 = vpack.c.b16 %v1252, %v1250
    %v1741 = vpack.c.b16 %v1253, %v1251
    %v1742 = vpack.c.b16 %v1256, %v1254
    %v1743 = vpack.c.b16 %v1257, %v1255
    %v1744 = vpack.c.b16 %v1260, %v1258
    %v1745 = vpack.c.b16 %v1261, %v1259
    %v1746 = vpack.c.b16 %v1264, %v1262
    %v1747 = vpack.c.b16 %v1265, %v1263
    %v1748 = vpack.c.b16 %v1268, %v1266
    %v1749 = vpack.c.b16 %v1269, %v1267
    %v1750 = vpack.c.b16 %v1272, %v1270
    %v1751 = vpack.c.b16 %v1273, %v1271
    %v1752 = vpack.c.b16 %v1276, %v1274
    %v1753 = vpack.c.b16 %v1277, %v1275
    %v1754 = vpack.c.b16 %v1280, %v1278
    %v1755 = vpack.c.b16 %v1281, %v1279
    %v1756 = vpack.c.b16 %v1284, %v1282
    %v1757 = vpack.c.b16 %v1285, %v1283
    %v1758 = vpack.c.b16 %v1288, %v1286
    %v1759 = vpack.c.b16 %v1289, %v1287
    %v1760 = vpack.c.b16 %v1292, %v1290
    %v1761 = vpack.c.b16 %v1293, %v1291
    %v1762 = vpack.c.b16 %v1296, %v1294
    %v1763 = vpack.c.b16 %v1297, %v1295
    %v1764 = vpack.c.b16 %v1300, %v1298
    %v1765 = vpack.c.b16 %v1301, %v1299
    %v1766 = vpack.c.b16 %v1304, %v1302
    %v1767 = vpack.c.b16 %v1305, %v1303
    %v1768 = vpack.c.b16 %v1308, %v1306
    %v1769 = vpack.c.b16 %v1309, %v1307
    %v1770 = vpack.c.b16 %v1312, %v1310
    %v1771 = vpack.c.b16 %v1313, %v1311
    %v1772 = vpack.c.b16 %v1316, %v1314
    %v1773 = vpack.c.b16 %v1317, %v1315
    %v1774 = vpack.c.b16 %v1320, %v1318
    %v1775 = vpack.c.b16 %v1321, %v1319
    %v1776 = vpack.c.b16 %v1324, %v1322
    %v1777 = vpack.c.b16 %v1325, %v1323
    %v1778 = vpack.c.b16 %v1328, %v1326
    %v1779 = vpack.c.b16 %v1329, %v1327
    %v1780 = vpack.c.b16 %v1332, %v1330
    %v1781 = vpack.c.b16 %v1333, %v1331
    %v1782 = vpack.c.b16 %v1336, %v1334
    %v1783 = vpack.c.b16 %v1337, %v1335
    %v1784 = vpack.c.b16 %v1340, %v1338
    %v1785 = vpack.c.b16 %v1341, %v1339
    %v1786 = vpack.c.b16 %v1344, %v1342
    %v1787 = vpack.c.b16 %v1345, %v1343
    %v1788 = vpack.c.b16 %v1348, %v1346
    %v1789 = vpack.c.b16 %v1349, %v1347
    %v1790 = vpack.c.b16 %v1352, %v1350
    %v1791 = vpack.c.b16 %v1353, %v1351
    %v1792 = vpack.c.b16 %v1356, %v1354
    %v1793 = vpack.c.b16 %v1357, %v1355
    %v1794 = vpack.c.b16 %v1360, %v1358
    %v1795 = vpack.c.b16 %v1361, %v1359
    %v1796 = vpack.c.b16 %v1364, %v1362
    %v1797 = vpack.c.b16 %v1365, %v1363
    %v1798 = vpack.c.b16 %v1368, %v1366
    %v1799 = vpack.c.b16 %v1369, %v1367
    %v1800 = vpack.c.b16 %v1372, %v1370
    %v1801 = vpack.c.b16 %v1373, %v1371
    %v1802 = vpack.c.b16 %v1376, %v1374
    %v1803 = vpack.c.b16 %v1377, %v1375
    %v1804 = vpack.c.b16 %v1380, %v1378
    %v1805 = vpack.c.b16 %v1381, %v1379
    %v1806 = vpack.c.b16 %v1384, %v1382
    %v1807 = vpack.c.b16 %v1385, %v1383
    %v1808 = vpack.c.b16 %v1388, %v1386
    %v1809 = vpack.c.b16 %v1389, %v1387
    %v1810 = vpack.c.b16 %v1392, %v1390
    %v1811 = vpack.c.b16 %v1393, %v1391
    %v1812 = vpack.c.b16 %v1396, %v1394
    %v1813 = vpack.c.b16 %v1397, %v1395
    %v1814 = vpack.c.b16 %v1400, %v1398
    %v1815 = vpack.c.b16 %v1401, %v1399
    %v1816 = vpack.c.b16 %v1404, %v1402
    %v1817 = vpack.c.b16 %v1405, %v1403
    %v1818 = vpack.c.b16 %v1408, %v1406
    %v1819 = vpack.c.b16 %v1409, %v1407
    %v1820 = vpack.c.b16 %v1412, %v1410
    %v1821 = vpack.c.b16 %v1413, %v1411
    %v1822 = vpack.c.b16 %v1416, %v1414
    %v1823 = vpack.c.b16 %v1417, %v1415
    %v1824 = vpack.c.b16 %v1420, %v1418
    %v1825 = vpack.c.b16 %v1421, %v1419
    %v1826 = vpack.c.b16 %v1424, %v1422
    %v1827 = vpack.c.b16 %v1425, %v1423
    %v1828 = vpack.c.b16 %v1428, %v1426
    %v1829 = vpack.c.b16 %v1429, %v1427
    %v1830 = vpack.c.b16 %v1432, %v1430
    %v1831 = vpack.c.b16 %v1433, %v1431
    %v1832 = vpack.c.b16 %v1436, %v1434
    %v1833 = vpack.c.b16 %v1437, %v1435
    %v1834 = vpack.c.b16 %v1440, %v1438
    %v1835 = vpack.c.b16 %v1441, %v1439
    %v1836 = vpack.c.b16 %v1444, %v1442
    %v1837 = vpack.c.b16 %v1445, %v1443
    %v1838 = vpack.c.b16 %v1448, %v1446
    %v1839 = vpack.c.b16 %v1449, %v1447
    %v1840 = vpack.c.b16 %v1452, %v1450
    %v1841 = vpack.c.b16 %v1453, %v1451
    %v1842 = vpack.c.b16 %v1456, %v1454
    %v1843 = vpack.c.b16 %v1457, %v1455
    %v1844 = vpack.c.b16 %v1460, %v1458
    %v1845 = vpack.c.b16 %v1461, %v1459
    %v1846 = vpack.c.b16 %v1464, %v1462
    %v1847 = vpack.c.b16 %v1465, %v1463
    %v1848 = vpack.c.b16 %v1468, %v1466
    %v1849 = vpack.c.b16 %v1469, %v1467
    %v1850 = vpack.c.b16 %v1472, %v1470
    %v1851 = vpack.c.b16 %v1473, %v1471
    %v1852 = vpack.c.b16 %v1476, %v1474
    %v1853 = vpack.c.b16 %v1477, %v1475
    %v1854 = vpack.c.b16 %v1480, %v1478
    %v1855 = vpack.c.b16 %v1481, %v1479
    %v1856 = vpack.c.b16 %v1484, %v1482
    %v1857 = vpack.c.b16 %v1485, %v1483
    %v1858 = vpack.c.b16 %v1488, %v1486
    %v1859 = vpack.c.b16 %v1489, %v1487
    %v1860 = vpack.c.b16 %v1492, %v1490
    %v1861 = vpack.c.b16 %v1493, %v1491
    %v1862 = vpack.c.b16 %v1496, %v1494
    %v1863 = vpack.c.b16 %v1497, %v1495
    %v1864 = vpack.c.b16 %v1500, %v1498
    %v1865 = vpack.c.b16 %v1501, %v1499
    %v1866 = vpack.c.b16 %v1504, %v1502
    %v1867 = vpack.c.b16 %v1505, %v1503
    %v1868 = vpack.c.b16 %v1508, %v1506
    %v1869 = vpack.c.b16 %v1509, %v1507
    %v1870 = vpack.c.b16 %v1512, %v1510
    %v1871 = vpack.c.b16 %v1513, %v1511
    %v1872 = vpack.c.b16 %v1516, %v1514
    %v1873 = vpack.c.b16 %v1517, %v1515
    %v1874 = vpack.c.b16 %v1520, %v1518
    %v1875 = vpack.c.b16 %v1521, %v1519
    %v1876 = vpack.c.b16 %v1524, %v1522
    %v1877 = vpack.c.b16 %v1525, %v1523
    %v1878 = vpack.c.b16 %v1528, %v1526
    %v1879 = vpack.c.b16 %v1529, %v1527
    %v1880 = vpack.c.b16 %v1532, %v1530
    %v1881 = vpack.c.b16 %v1533, %v1531
    %v1882 = vpack.c.b16 %v1536, %v1534
    %v1883 = vpack.c.b16 %v1537, %v1535
    %v1884 = vpack.c.b16 %v1540, %v1538
    %v1885 = vpack.c.b16 %v1541, %v1539
    %v1886 = vpack.c.b16 %v1544, %v1542
    %v1887 = vpack.c.b16 %v1545, %v1543
    %v1888 = vpack.c.b16 %v1548, %v1546
    %v1889 = vpack.c.b16 %v1549, %v1547
    %v1890 = vpack.c.b16 %v1552, %v1550
    %v1891 = vpack.c.b16 %v1553, %v1551
    %v1892 = vpack.c.b16 %v1556, %v1554
    %v1893 = vpack.c.b16 %v1557, %v1555
    %v1894 = vpack.c.b16 %v1560, %v1558
    %v1895 = vpack.c.b16 %v1561, %v1559
    %v1896 = vpack.c.b16 %v1564, %v1562
    %v1897 = vpack.c.b16 %v1565, %v1563
    %v1898 = vpack.c.b16 %v1568, %v1566
    %v1899 = vpack.c.b16 %v1569, %v1567
    %v1900 = vpack.c.b16 %v1572, %v1570
    %v1901 = vpack.c.b16 %v1573, %v1571
    %v1902 = vpack.c.b16 %v1576, %v1574
    %v1903 = vpack.c.b16 %v1577, %v1575
    %v1904 = vpack.c.b16 %v1580, %v1578
    %v1905 = vpack.c.b16 %v1581, %v1579
    %v1906 = vpack.c.b16 %v1584, %v1582
    %v1907 = vpack.c.b16 %v1585, %v1583
    %v1908 = vpack.c.b16 %v1588, %v1586
    %v1909 = vpack.c.b16 %v1589, %v1587
    %v1910 = vpack.c.b16 %v1592, %v1590
    %v1911 = vpack.c.b16 %v1593, %v1591
    %v1912 = vpack.c.b16 %v1596, %v1594
    %v1913 = vpack.c.b16 %v1597, %v1595
    %v1914 = vpack.c.b16 %v1600, %v1598
    %v1915 = vpack.c.b16 %v1601, %v1599
    %v1916 = vpack.c.b16 %v1604, %v1602
    %v1917 = vpack.c.b16 %v1605, %v1603
    %v1918 = vpack.c.b16 %v1608, %v1606
    %v1919 = vpack.c.b16 %v1609, %v1607
    %v1920 = vpack.c.b16 %v1612, %v1610
    %v1921 = vpack.c.b16 %v1613, %v1611
    %v1922 = vpack.c.b16 %v1616, %v1614
    %v1923 = vpack.c.b16 %v1617, %v1615
    %v1924 = vpack.c.b16 %v1620, %v1618
    %v1925 = vpack.c.b16 %v1621, %v1619
    %v1926 = vpack.c.b16 %v1624, %v1622
    %v1927 = vpack.c.b16 %v1625, %v1623
    %v1928 = vpack.c.b16 %v1628, %v1626
    %v1929 = vpack.c.b16 %v1629, %v1627
    %v1930 = vpack.c.b16 %v1632, %v1630
    %v1931 = vpack.c.b16 %v1633, %v1631
    %v1932 = vpack.c.b16 %v1636, %v1634
    %v1933 = vpack.c.b16 %v1637, %v1635
    %v1934 = vpack.c.b16 %v1640, %v1638
    %v1935 = vpack.c.b16 %v1641, %v1639
    %v1936 = vpack.c.b16 %v1644, %v1642
    %v1937 = vpack.c.b16 %v1645, %v1643
    %v1938 = vpack.c.b16 %v1648, %v1646
    %v1939 = vpack.c.b16 %v1649, %v1647
    %v1940 = vpack.c.b16 %v1652, %v1650
    %v1941 = vpack.c.b16 %v1653, %v1651
    %v1942 = vpack.c.b16 %v1656, %v1654
    %v1943 = vpack.c.b16 %v1657, %v1655
    %v1944 = vpack.c.b16 %v1660, %v1658
    %v1945 = vpack.c.b16 %v1661, %v1659
    %v1946 = vpack.c.b16 %v1664, %v1662
    %v1947 = vpack.c.b16 %v1665, %v1663
    %v1948 = vpack.c.b16 %v1668, %v1666
    %v1949 = vpack.c.b16 %v1669, %v1667
    %v1950 = vpack.c.b16 %v1672, %v1670
    %v1951 = vpack.c.b16 %v1673, %v1671
    %v1952 = vpack.c.b16 %v1676, %v1674
    %v1953 = vpack.c.b16 %v1677, %v1675
    %v1954 = vpack.c.b16 %v1680, %v1678
    %v1955 = vpack.c.b16 %v1681, %v1679
    %v1956 = vpack.c.b16 %v1684, %v1682
    %v1957 = vpack.c.b16 %v1685, %v1683
    %v1958 = vpack.c.b16 %v1688, %v1686
    %v1959 = vpack.c.b16 %v1689, %v1687
    %v1960 = vpack.c.b16 %v1692, %v1690
    %v1961 = vpack.c.b16 %v1693, %v1691
    %v1962 = vpack.c.b16 %v1696, %v1694
    %v1963 = vpack.c.b16 %v1697, %v1695
    %v1964 = vpack.c.b16 %v1700, %v1698
    %v1965 = vpack.c.b16 %v1701, %v1699
    %v1966 = vpack.c.b16 %v1704, %v1702
    %v1967 = vpack.c.b16 %v1705, %v1703
    %v1968 = vpack.c.b16 %v1708, %v1706
    %v1969 = vpack.c.b16 %v1709, %v1707
    %v1970 = vpack.c.b16 %v1712, %v1710
    %v1971 = vpack.c.b16 %v1713, %v1711
    %v1972 = vpack.c.b16 %v1716, %v1714
    %v1973 = vpack.c.b16 %v1717, %v1715
    %2230 = vmatprep.subr.bf16.mxu0 %v1719
    %2231 = vmatpush1.bf16.msra.mxu0 %v1718
    %2232 = vmatprep.subr.bf16.mxu0 %v1721
    %2233 = vmatpush1.bf16.msra.mxu0 %v1720
    %2234 = vmatprep.subr.bf16.mxu0 %v1723
    %2235 = vmatpush1.bf16.msra.mxu0 %v1722
    %2236 = vmatprep.subr.bf16.mxu0 %v1725
    %2237 = vmatpush1.bf16.msra.mxu0 %v1724
    %2238 = vmatprep.subr.bf16.mxu0 %v1727
    %2239 = vmatpush1.bf16.msra.mxu0 %v1726
    %2240 = vmatprep.subr.bf16.mxu0 %v1729
    %2241 = vmatpush1.bf16.msra.mxu0 %v1728
    %2242 = vmatprep.subr.bf16.mxu0 %v1731
    %2243 = vmatpush1.bf16.msra.mxu0 %v1730
    %2244 = vmatprep.subr.bf16.mxu0 %v1733
    %2245 = vmatpush1.bf16.msra.mxu0 %v1732
    %2246 = vmatprep.subr.bf16.mxu0 %v1735
    %2247 = vmatpush1.bf16.msra.mxu0 %v1734
    %2248 = vmatprep.subr.bf16.mxu0 %v1737
    %2249 = vmatpush1.bf16.msra.mxu0 %v1736
    %2250 = vmatprep.subr.bf16.mxu0 %v1739
    %2251 = vmatpush1.bf16.msra.mxu0 %v1738
    %2252 = vmatprep.subr.bf16.mxu0 %v1741
    %2253 = vmatpush1.bf16.msra.mxu0 %v1740
    %2254 = vmatprep.subr.bf16.mxu0 %v1743
    %2255 = vmatpush1.bf16.msra.mxu0 %v1742
    %2256 = vmatprep.subr.bf16.mxu0 %v1745
    %2257 = vmatpush1.bf16.msra.mxu0 %v1744
    %2258 = vmatprep.subr.bf16.mxu0 %v1747
    %2259 = vmatpush1.bf16.msra.mxu0 %v1746
    %2260 = vmatprep.subr.bf16.mxu0 %v1749
    %2261 = vmatpush1.bf16.msra.mxu0 %v1748
    %2262 = vmatprep.mubr.bf16.mxu0 %v679
    %2263 = vmatmul.mubr.bf16.gmra.mrb[0].mxu0 %v678
    %v2264 = vpop.f32.mrb[0].mxu0
    %v2265 = vadd.f32 0.0, %v2264
    %v2266 = vpop.f32.mrb[0].mxu0
    %v2267 = vadd.f32 0.0, %v2266
    %v2268 = vpop.f32.mrb[0].mxu0
    %v2269 = vpop.f32.mrb[0].mxu0
    %2270 = vdwg.mxu0
    %2271 = vmatprep.subr.bf16.mxu0 %v1751
    %2272 = vmatpush1.bf16.msra.mxu0 %v1750
    %2273 = vmatprep.subr.bf16.mxu0 %v1753
    %2274 = vmatpush1.bf16.msra.mxu0 %v1752
    %2275 = vmatprep.subr.bf16.mxu0 %v1755
    %2276 = vmatpush1.bf16.msra.mxu0 %v1754
    %2277 = vmatprep.subr.bf16.mxu0 %v1757
    %2278 = vmatpush1.bf16.msra.mxu0 %v1756
    %2279 = vmatprep.subr.bf16.mxu0 %v1759
    %2280 = vmatpush1.bf16.msra.mxu0 %v1758
    %2281 = vmatprep.subr.bf16.mxu0 %v1761
    %2282 = vmatpush1.bf16.msra.mxu0 %v1760
    %2283 = vmatprep.subr.bf16.mxu0 %v1763
    %2284 = vmatpush1.bf16.msra.mxu0 %v1762
    %2285 = vmatprep.subr.bf16.mxu0 %v1765
    %2286 = vmatpush1.bf16.msra.mxu0 %v1764
    %2287 = vmatprep.subr.bf16.mxu0 %v1767
    %2288 = vmatpush1.bf16.msra.mxu0 %v1766
    %2289 = vmatprep.subr.bf16.mxu0 %v1769
    %2290 = vmatpush1.bf16.msra.mxu0 %v1768
    %2291 = vmatprep.subr.bf16.mxu0 %v1771
    %2292 = vmatpush1.bf16.msra.mxu0 %v1770
    %2293 = vmatprep.subr.bf16.mxu0 %v1773
    %2294 = vmatpush1.bf16.msra.mxu0 %v1772
    %2295 = vmatprep.subr.bf16.mxu0 %v1775
    %2296 = vmatpush1.bf16.msra.mxu0 %v1774
    %2297 = vmatprep.subr.bf16.mxu0 %v1777
    %2298 = vmatpush1.bf16.msra.mxu0 %v1776
    %2299 = vmatprep.subr.bf16.mxu0 %v1779
    %2300 = vmatpush1.bf16.msra.mxu0 %v1778
    %2301 = vmatprep.subr.bf16.mxu0 %v1781
    %2302 = vmatpush1.bf16.msra.mxu0 %v1780
    %2303 = vmatprep.mubr.bf16.mxu0 %v681
    %2304 = vmatmul.mubr.bf16.gmra.mrb[0].mxu0 %v680
    %v2305 = vpop.f32.mrb[0].mxu0
    %v2306 = vadd.f32 %v2265, %v2305
    %v2307 = vpop.f32.mrb[0].mxu0
    %v2308 = vadd.f32 %v2267, %v2307
    %v2309 = vpop.f32.mrb[0].mxu0
    %v2310 = vpop.f32.mrb[0].mxu0
    %2311 = vdwg.mxu0
    %2312 = vmatprep.subr.bf16.mxu0 %v1783
    %2313 = vmatpush1.bf16.msra.mxu0 %v1782
    %2314 = vmatprep.subr.bf16.mxu0 %v1785
    %2315 = vmatpush1.bf16.msra.mxu0 %v1784
    %2316 = vmatprep.subr.bf16.mxu0 %v1787
    %2317 = vmatpush1.bf16.msra.mxu0 %v1786
    %2318 = vmatprep.subr.bf16.mxu0 %v1789
    %2319 = vmatpush1.bf16.msra.mxu0 %v1788
    %2320 = vmatprep.subr.bf16.mxu0 %v1791
    %2321 = vmatpush1.bf16.msra.mxu0 %v1790
    %2322 = vmatprep.subr.bf16.mxu0 %v1793
    %2323 = vmatpush1.bf16.msra.mxu0 %v1792
    %2324 = vmatprep.subr.bf16.mxu0 %v1795
    %2325 = vmatpush1.bf16.msra.mxu0 %v1794
    %2326 = vmatprep.subr.bf16.mxu0 %v1797
    %2327 = vmatpush1.bf16.msra.mxu0 %v1796
    %2328 = vmatprep.subr.bf16.mxu0 %v1799
    %2329 = vmatpush1.bf16.msra.mxu0 %v1798
    %2330 = vmatprep.subr.bf16.mxu0 %v1801
    %2331 = vmatpush1.bf16.msra.mxu0 %v1800
    %2332 = vmatprep.subr.bf16.mxu0 %v1803
    %2333 = vmatpush1.bf16.msra.mxu0 %v1802
    %2334 = vmatprep.subr.bf16.mxu0 %v1805
    %2335 = vmatpush1.bf16.msra.mxu0 %v1804
    %2336 = vmatprep.subr.bf16.mxu0 %v1807
    %2337 = vmatpush1.bf16.msra.mxu0 %v1806
    %2338 = vmatprep.subr.bf16.mxu0 %v1809
    %2339 = vmatpush1.bf16.msra.mxu0 %v1808
    %2340 = vmatprep.subr.bf16.mxu0 %v1811
    %2341 = vmatpush1.bf16.msra.mxu0 %v1810
    %2342 = vmatprep.subr.bf16.mxu0 %v1813
    %2343 = vmatpush1.bf16.msra.mxu0 %v1812
    %2344 = vmatprep.mubr.bf16.mxu0 %v683
    %2345 = vmatmul.mubr.bf16.gmra.mrb[0].mxu0 %v682
    %v2346 = vpop.f32.mrb[0].mxu0
    %v2347 = vadd.f32 %v2306, %v2346
    %v2348 = vpop.f32.mrb[0].mxu0
    %v2349 = vadd.f32 %v2308, %v2348
    %v2350 = vpop.f32.mrb[0].mxu0
    %v2351 = vpop.f32.mrb[0].mxu0
    %2352 = vdwg.mxu0
    %2353 = vmatprep.subr.bf16.mxu0 %v1815
    %2354 = vmatpush1.bf16.msra.mxu0 %v1814
    %2355 = vmatprep.subr.bf16.mxu0 %v1817
    %2356 = vmatpush1.bf16.msra.mxu0 %v1816
    %2357 = vmatprep.subr.bf16.mxu0 %v1819
    %2358 = vmatpush1.bf16.msra.mxu0 %v1818
    %2359 = vmatprep.subr.bf16.mxu0 %v1821
    %2360 = vmatpush1.bf16.msra.mxu0 %v1820
    %2361 = vmatprep.subr.bf16.mxu0 %v1823
    %2362 = vmatpush1.bf16.msra.mxu0 %v1822
    %2363 = vmatprep.subr.bf16.mxu0 %v1825
    %2364 = vmatpush1.bf16.msra.mxu0 %v1824
    %2365 = vmatprep.subr.bf16.mxu0 %v1827
    %2366 = vmatpush1.bf16.msra.mxu0 %v1826
    %2367 = vmatprep.subr.bf16.mxu0 %v1829
    %2368 = vmatpush1.bf16.msra.mxu0 %v1828
    %2369 = vmatprep.subr.bf16.mxu0 %v1831
    %2370 = vmatpush1.bf16.msra.mxu0 %v1830
    %2371 = vmatprep.subr.bf16.mxu0 %v1833
    %2372 = vmatpush1.bf16.msra.mxu0 %v1832
    %2373 = vmatprep.subr.bf16.mxu0 %v1835
    %2374 = vmatpush1.bf16.msra.mxu0 %v1834
    %2375 = vmatprep.subr.bf16.mxu0 %v1837
    %2376 = vmatpush1.bf16.msra.mxu0 %v1836
    %2377 = vmatprep.subr.bf16.mxu0 %v1839
    %2378 = vmatpush1.bf16.msra.mxu0 %v1838
    %2379 = vmatprep.subr.bf16.mxu0 %v1841
    %2380 = vmatpush1.bf16.msra.mxu0 %v1840
    %2381 = vmatprep.subr.bf16.mxu0 %v1843
    %2382 = vmatpush1.bf16.msra.mxu0 %v1842
    %2383 = vmatprep.subr.bf16.mxu0 %v1845
    %2384 = vmatpush1.bf16.msra.mxu0 %v1844
    %2385 = vmatprep.mubr.bf16.mxu0 %v685
    %2386 = vmatmul.mubr.bf16.gmra.mrb[0].mxu0 %v684
    %v2387 = vpop.f32.mrb[0].mxu0
    %v2388 = vadd.f32 %v2347, %v2387
    %v2389 = vpop.f32.mrb[0].mxu0
    %v2390 = vadd.f32 %v2349, %v2389
    %v2391 = vpop.f32.mrb[0].mxu0
    %v2392 = vpop.f32.mrb[0].mxu0
    %2393 = vdwg.mxu0
    %2394 = vmatprep.subr.bf16.mxu0 %v1847
    %2395 = vmatpush1.bf16.msra.mxu0 %v1846
    %2396 = vmatprep.subr.bf16.mxu0 %v1849
    %2397 = vmatpush1.bf16.msra.mxu0 %v1848
    %2398 = vmatprep.subr.bf16.mxu0 %v1851
    %2399 = vmatpush1.bf16.msra.mxu0 %v1850
    %2400 = vmatprep.subr.bf16.mxu0 %v1853
    %2401 = vmatpush1.bf16.msra.mxu0 %v1852
    %2402 = vmatprep.subr.bf16.mxu0 %v1855
    %2403 = vmatpush1.bf16.msra.mxu0 %v1854
    %2404 = vmatprep.subr.bf16.mxu0 %v1857
    %2405 = vmatpush1.bf16.msra.mxu0 %v1856
    %2406 = vmatprep.subr.bf16.mxu0 %v1859
    %2407 = vmatpush1.bf16.msra.mxu0 %v1858
    %2408 = vmatprep.subr.bf16.mxu0 %v1861
    %2409 = vmatpush1.bf16.msra.mxu0 %v1860
    %2410 = vmatprep.subr.bf16.mxu0 %v1863
    %2411 = vmatpush1.bf16.msra.mxu0 %v1862
    %2412 = vmatprep.subr.bf16.mxu0 %v1865
    %2413 = vmatpush1.bf16.msra.mxu0 %v1864
    %2414 = vmatprep.subr.bf16.mxu0 %v1867
    %2415 = vmatpush1.bf16.msra.mxu0 %v1866
    %2416 = vmatprep.subr.bf16.mxu0 %v1869
    %2417 = vmatpush1.bf16.msra.mxu0 %v1868
    %2418 = vmatprep.subr.bf16.mxu0 %v1871
    %2419 = vmatpush1.bf16.msra.mxu0 %v1870
    %2420 = vmatprep.subr.bf16.mxu0 %v1873
    %2421 = vmatpush1.bf16.msra.mxu0 %v1872
    %2422 = vmatprep.subr.bf16.mxu0 %v1875
    %2423 = vmatpush1.bf16.msra.mxu0 %v1874
    %2424 = vmatprep.subr.bf16.mxu0 %v1877
    %2425 = vmatpush1.bf16.msra.mxu0 %v1876
    %2426 = vmatprep.mubr.bf16.mxu0 %v687
    %2427 = vmatmul.mubr.bf16.gmra.mrb[0].mxu0 %v686
    %v2428 = vpop.f32.mrb[0].mxu0
    %v2429 = vadd.f32 %v2388, %v2428
    %v2430 = vpop.f32.mrb[0].mxu0
    %v2431 = vadd.f32 %v2390, %v2430
    %v2432 = vpop.f32.mrb[0].mxu0
    %v2433 = vpop.f32.mrb[0].mxu0
    %2434 = vdwg.mxu0
    %2435 = vmatprep.subr.bf16.mxu0 %v1879
    %2436 = vmatpush1.bf16.msra.mxu0 %v1878
    %2437 = vmatprep.subr.bf16.mxu0 %v1881
    %2438 = vmatpush1.bf16.msra.mxu0 %v1880
    %2439 = vmatprep.subr.bf16.mxu0 %v1883
    %2440 = vmatpush1.bf16.msra.mxu0 %v1882
    %2441 = vmatprep.subr.bf16.mxu0 %v1885
    %2442 = vmatpush1.bf16.msra.mxu0 %v1884
    %2443 = vmatprep.subr.bf16.mxu0 %v1887
    %2444 = vmatpush1.bf16.msra.mxu0 %v1886
    %2445 = vmatprep.subr.bf16.mxu0 %v1889
    %2446 = vmatpush1.bf16.msra.mxu0 %v1888
    %2447 = vmatprep.subr.bf16.mxu0 %v1891
    %2448 = vmatpush1.bf16.msra.mxu0 %v1890
    %2449 = vmatprep.subr.bf16.mxu0 %v1893
    %2450 = vmatpush1.bf16.msra.mxu0 %v1892
    %2451 = vmatprep.subr.bf16.mxu0 %v1895
    %2452 = vmatpush1.bf16.msra.mxu0 %v1894
    %2453 = vmatprep.subr.bf16.mxu0 %v1897
    %2454 = vmatpush1.bf16.msra.mxu0 %v1896
    %2455 = vmatprep.subr.bf16.mxu0 %v1899
    %2456 = vmatpush1.bf16.msra.mxu0 %v1898
    %2457 = vmatprep.subr.bf16.mxu0 %v1901
    %2458 = vmatpush1.bf16.msra.mxu0 %v1900
    %2459 = vmatprep.subr.bf16.mxu0 %v1903
    %2460 = vmatpush1.bf16.msra.mxu0 %v1902
    %2461 = vmatprep.subr.bf16.mxu0 %v1905
    %2462 = vmatpush1.bf16.msra.mxu0 %v1904
    %2463 = vmatprep.subr.bf16.mxu0 %v1907
    %2464 = vmatpush1.bf16.msra.mxu0 %v1906
    %2465 = vmatprep.subr.bf16.mxu0 %v1909
    %2466 = vmatpush1.bf16.msra.mxu0 %v1908
    %2467 = vmatprep.mubr.bf16.mxu0 %v689
    %2468 = vmatmul.mubr.bf16.gmra.mrb[0].mxu0 %v688
    %v2469 = vpop.f32.mrb[0].mxu0
    %v2470 = vadd.f32 %v2429, %v2469
    %v2471 = vpop.f32.mrb[0].mxu0
    %v2472 = vadd.f32 %v2431, %v2471
    %v2473 = vpop.f32.mrb[0].mxu0
    %v2474 = vpop.f32.mrb[0].mxu0
    %2475 = vdwg.mxu0
    %2476 = vmatprep.subr.bf16.mxu0 %v1911
    %2477 = vmatpush1.bf16.msra.mxu0 %v1910
    %2478 = vmatprep.subr.bf16.mxu0 %v1913
    %2479 = vmatpush1.bf16.msra.mxu0 %v1912
    %2480 = vmatprep.subr.bf16.mxu0 %v1915
    %2481 = vmatpush1.bf16.msra.mxu0 %v1914
    %2482 = vmatprep.subr.bf16.mxu0 %v1917
    %2483 = vmatpush1.bf16.msra.mxu0 %v1916
    %2484 = vmatprep.subr.bf16.mxu0 %v1919
    %2485 = vmatpush1.bf16.msra.mxu0 %v1918
    %2486 = vmatprep.subr.bf16.mxu0 %v1921
    %2487 = vmatpush1.bf16.msra.mxu0 %v1920
    %2488 = vmatprep.subr.bf16.mxu0 %v1923
    %2489 = vmatpush1.bf16.msra.mxu0 %v1922
    %2490 = vmatprep.subr.bf16.mxu0 %v1925
    %2491 = vmatpush1.bf16.msra.mxu0 %v1924
    %2492 = vmatprep.subr.bf16.mxu0 %v1927
    %2493 = vmatpush1.bf16.msra.mxu0 %v1926
    %2494 = vmatprep.subr.bf16.mxu0 %v1929
    %2495 = vmatpush1.bf16.msra.mxu0 %v1928
    %2496 = vmatprep.subr.bf16.mxu0 %v1931
    %2497 = vmatpush1.bf16.msra.mxu0 %v1930
    %2498 = vmatprep.subr.bf16.mxu0 %v1933
    %2499 = vmatpush1.bf16.msra.mxu0 %v1932
    %2500 = vmatprep.subr.bf16.mxu0 %v1935
    %2501 = vmatpush1.bf16.msra.mxu0 %v1934
    %2502 = vmatprep.subr.bf16.mxu0 %v1937
    %2503 = vmatpush1.bf16.msra.mxu0 %v1936
    %2504 = vmatprep.subr.bf16.mxu0 %v1939
    %2505 = vmatpush1.bf16.msra.mxu0 %v1938
    %2506 = vmatprep.subr.bf16.mxu0 %v1941
    %2507 = vmatpush1.bf16.msra.mxu0 %v1940
    %2508 = vmatprep.mubr.bf16.mxu0 %v691
    %2509 = vmatmul.mubr.bf16.gmra.mrb[0].mxu0 %v690
    %v2510 = vpop.f32.mrb[0].mxu0
    %v2511 = vadd.f32 %v2470, %v2510
    %v2512 = vpop.f32.mrb[0].mxu0
    %v2513 = vadd.f32 %v2472, %v2512
    %v2514 = vpop.f32.mrb[0].mxu0
    %v2515 = vpop.f32.mrb[0].mxu0
    %2516 = vdwg.mxu0
    %2517 = vmatprep.subr.bf16.mxu0 %v1943
    %2518 = vmatpush1.bf16.msra.mxu0 %v1942
    %2519 = vmatprep.subr.bf16.mxu0 %v1945
    %2520 = vmatpush1.bf16.msra.mxu0 %v1944
    %2521 = vmatprep.subr.bf16.mxu0 %v1947
    %2522 = vmatpush1.bf16.msra.mxu0 %v1946
    %2523 = vmatprep.subr.bf16.mxu0 %v1949
    %2524 = vmatpush1.bf16.msra.mxu0 %v1948
    %2525 = vmatprep.subr.bf16.mxu0 %v1951
    %2526 = vmatpush1.bf16.msra.mxu0 %v1950
    %2527 = vmatprep.subr.bf16.mxu0 %v1953
    %2528 = vmatpush1.bf16.msra.mxu0 %v1952
    %2529 = vmatprep.subr.bf16.mxu0 %v1955
    %2530 = vmatpush1.bf16.msra.mxu0 %v1954
    %2531 = vmatprep.subr.bf16.mxu0 %v1957
    %2532 = vmatpush1.bf16.msra.mxu0 %v1956
    %2533 = vmatprep.subr.bf16.mxu0 %v1959
    %2534 = vmatpush1.bf16.msra.mxu0 %v1958
    %2535 = vmatprep.subr.bf16.mxu0 %v1961
    %2536 = vmatpush1.bf16.msra.mxu0 %v1960
    %2537 = vmatprep.subr.bf16.mxu0 %v1963
    %2538 = vmatpush1.bf16.msra.mxu0 %v1962
    %2539 = vmatprep.subr.bf16.mxu0 %v1965
    %2540 = vmatpush1.bf16.msra.mxu0 %v1964
    %2541 = vmatprep.subr.bf16.mxu0 %v1967
    %2542 = vmatpush1.bf16.msra.mxu0 %v1966
    %2543 = vmatprep.subr.bf16.mxu0 %v1969
    %2544 = vmatpush1.bf16.msra.mxu0 %v1968
    %2545 = vmatprep.subr.bf16.mxu0 %v1971
    %2546 = vmatpush1.bf16.msra.mxu0 %v1970
    %2547 = vmatprep.subr.bf16.mxu0 %v1973
    %2548 = vmatpush1.bf16.msra.mxu0 %v1972
    %2549 = vmatprep.mubr.bf16.mxu0 %v693
    %2550 = vmatmul.mubr.bf16.gmra.mrb[0].mxu0 %v692
    %v2551 = vpop.f32.mrb[0].mxu0
    %v2552 = vadd.f32 %v2511, %v2551
    %v2553 = vpop.f32.mrb[0].mxu0
    %v2554 = vadd.f32 %v2513, %v2553
    %v2555 = vpop.f32.mrb[0].mxu0
    %v2556 = vpop.f32.mrb[0].mxu0
    %2557 = vdwg.mxu0
    %v2814 = vunpack.c.l.b16 %v230
    %v2815 = vunpack.c.h.b16 %v230
    %v2816 = vunpack.c.l.b16 %v231
    %v2817 = vunpack.c.h.b16 %v231
    %v2818 = vunpack.c.l.b16 %v232
    %v2819 = vunpack.c.h.b16 %v232
    %v2820 = vunpack.c.l.b16 %v233
    %v2821 = vunpack.c.h.b16 %v233
    %v2822 = vunpack.c.l.b16 %v234
    %v2823 = vunpack.c.h.b16 %v234
    %v2824 = vunpack.c.l.b16 %v235
    %v2825 = vunpack.c.h.b16 %v235
    %v2826 = vunpack.c.l.b16 %v236
    %v2827 = vunpack.c.h.b16 %v236
    %v2828 = vunpack.c.l.b16 %v237
    %v2829 = vunpack.c.h.b16 %v237
    %v2830 = vunpack.c.l.b16 %v238
    %v2831 = vunpack.c.h.b16 %v238
    %v2832 = vunpack.c.l.b16 %v239
    %v2833 = vunpack.c.h.b16 %v239
    %v2834 = vunpack.c.l.b16 %v240
    %v2835 = vunpack.c.h.b16 %v240
    %v2836 = vunpack.c.l.b16 %v241
    %v2837 = vunpack.c.h.b16 %v241
    %v2838 = vunpack.c.l.b16 %v242
    %v2839 = vunpack.c.h.b16 %v242
    %v2840 = vunpack.c.l.b16 %v243
    %v2841 = vunpack.c.h.b16 %v243
    %v2842 = vunpack.c.l.b16 %v244
    %v2843 = vunpack.c.h.b16 %v244
    %v2844 = vunpack.c.l.b16 %v245
    %v2845 = vunpack.c.h.b16 %v245
    %v2846 = vunpack.c.l.b16 %v246
    %v2847 = vunpack.c.h.b16 %v246
    %v2848 = vunpack.c.l.b16 %v247
    %v2849 = vunpack.c.h.b16 %v247
    %v2850 = vunpack.c.l.b16 %v248
    %v2851 = vunpack.c.h.b16 %v248
    %v2852 = vunpack.c.l.b16 %v249
    %v2853 = vunpack.c.h.b16 %v249
    %v2854 = vunpack.c.l.b16 %v250
    %v2855 = vunpack.c.h.b16 %v250
    %v2856 = vunpack.c.l.b16 %v251
    %v2857 = vunpack.c.h.b16 %v251
    %v2858 = vunpack.c.l.b16 %v252
    %v2859 = vunpack.c.h.b16 %v252
    %v2860 = vunpack.c.l.b16 %v253
    %v2861 = vunpack.c.h.b16 %v253
    %v2862 = vunpack.c.l.b16 %v254
    %v2863 = vunpack.c.h.b16 %v254
    %v2864 = vunpack.c.l.b16 %v255
    %v2865 = vunpack.c.h.b16 %v255
    %v2866 = vunpack.c.l.b16 %v256
    %v2867 = vunpack.c.h.b16 %v256
    %v2868 = vunpack.c.l.b16 %v257
    %v2869 = vunpack.c.h.b16 %v257
    %v2870 = vunpack.c.l.b16 %v258
    %v2871 = vunpack.c.h.b16 %v258
    %v2872 = vunpack.c.l.b16 %v259
    %v2873 = vunpack.c.h.b16 %v259
    %v2874 = vunpack.c.l.b16 %v260
    %v2875 = vunpack.c.h.b16 %v260
    %v2876 = vunpack.c.l.b16 %v261
    %v2877 = vunpack.c.h.b16 %v261
    %v2878 = vunpack.c.l.b16 %v262
    %v2879 = vunpack.c.h.b16 %v262
    %v2880 = vunpack.c.l.b16 %v263
    %v2881 = vunpack.c.h.b16 %v263
    %v2882 = vunpack.c.l.b16 %v264
    %v2883 = vunpack.c.h.b16 %v264
    %v2884 = vunpack.c.l.b16 %v265
    %v2885 = vunpack.c.h.b16 %v265
    %v2886 = vunpack.c.l.b16 %v266
    %v2887 = vunpack.c.h.b16 %v266
    %v2888 = vunpack.c.l.b16 %v267
    %v2889 = vunpack.c.h.b16 %v267
    %v2890 = vunpack.c.l.b16 %v268
    %v2891 = vunpack.c.h.b16 %v268
    %v2892 = vunpack.c.l.b16 %v269
    %v2893 = vunpack.c.h.b16 %v269
    %v2894 = vunpack.c.l.b16 %v270
    %v2895 = vunpack.c.h.b16 %v270
    %v2896 = vunpack.c.l.b16 %v271
    %v2897 = vunpack.c.h.b16 %v271
    %v2898 = vunpack.c.l.b16 %v272
    %v2899 = vunpack.c.h.b16 %v272
    %v2900 = vunpack.c.l.b16 %v273
    %v2901 = vunpack.c.h.b16 %v273
    %v2902 = vunpack.c.l.b16 %v274
    %v2903 = vunpack.c.h.b16 %v274
    %v2904 = vunpack.c.l.b16 %v275
    %v2905 = vunpack.c.h.b16 %v275
    %v2906 = vunpack.c.l.b16 %v276
    %v2907 = vunpack.c.h.b16 %v276
    %v2908 = vunpack.c.l.b16 %v277
    %v2909 = vunpack.c.h.b16 %v277
    %v2910 = vunpack.c.l.b16 %v278
    %v2911 = vunpack.c.h.b16 %v278
    %v2912 = vunpack.c.l.b16 %v279
    %v2913 = vunpack.c.h.b16 %v279
    %v2914 = vunpack.c.l.b16 %v280
    %v2915 = vunpack.c.h.b16 %v280
    %v2916 = vunpack.c.l.b16 %v281
    %v2917 = vunpack.c.h.b16 %v281
    %v2918 = vunpack.c.l.b16 %v282
    %v2919 = vunpack.c.h.b16 %v282
    %v2920 = vunpack.c.l.b16 %v283
    %v2921 = vunpack.c.h.b16 %v283
    %v2922 = vunpack.c.l.b16 %v284
    %v2923 = vunpack.c.h.b16 %v284
    %v2924 = vunpack.c.l.b16 %v285
    %v2925 = vunpack.c.h.b16 %v285
    %v2926 = vunpack.c.l.b16 %v286
    %v2927 = vunpack.c.h.b16 %v286
    %v2928 = vunpack.c.l.b16 %v287
    %v2929 = vunpack.c.h.b16 %v287
    %v2930 = vunpack.c.l.b16 %v288
    %v2931 = vunpack.c.h.b16 %v288
    %v2932 = vunpack.c.l.b16 %v289
    %v2933 = vunpack.c.h.b16 %v289
    %v2934 = vunpack.c.l.b16 %v290
    %v2935 = vunpack.c.h.b16 %v290
    %v2936 = vunpack.c.l.b16 %v291
    %v2937 = vunpack.c.h.b16 %v291
    %v2938 = vunpack.c.l.b16 %v292
    %v2939 = vunpack.c.h.b16 %v292
    %v2940 = vunpack.c.l.b16 %v293
    %v2941 = vunpack.c.h.b16 %v293
    %v2942 = vunpack.c.l.b16 %v294
    %v2943 = vunpack.c.h.b16 %v294
    %v2944 = vunpack.c.l.b16 %v295
    %v2945 = vunpack.c.h.b16 %v295
    %v2946 = vunpack.c.l.b16 %v296
    %v2947 = vunpack.c.h.b16 %v296
    %v2948 = vunpack.c.l.b16 %v297
    %v2949 = vunpack.c.h.b16 %v297
    %v2950 = vunpack.c.l.b16 %v298
    %v2951 = vunpack.c.h.b16 %v298
    %v2952 = vunpack.c.l.b16 %v299
    %v2953 = vunpack.c.h.b16 %v299
    %v2954 = vunpack.c.l.b16 %v300
    %v2955 = vunpack.c.h.b16 %v300
    %v2956 = vunpack.c.l.b16 %v301
    %v2957 = vunpack.c.h.b16 %v301
    %v2958 = vunpack.c.l.b16 %v302
    %v2959 = vunpack.c.h.b16 %v302
    %v2960 = vunpack.c.l.b16 %v303
    %v2961 = vunpack.c.h.b16 %v303
    %v2962 = vunpack.c.l.b16 %v304
    %v2963 = vunpack.c.h.b16 %v304
    %v2964 = vunpack.c.l.b16 %v305
    %v2965 = vunpack.c.h.b16 %v305
    %v2966 = vunpack.c.l.b16 %v306
    %v2967 = vunpack.c.h.b16 %v306
    %v2968 = vunpack.c.l.b16 %v307
    %v2969 = vunpack.c.h.b16 %v307
    %v2970 = vunpack.c.l.b16 %v308
    %v2971 = vunpack.c.h.b16 %v308
    %v2972 = vunpack.c.l.b16 %v309
    %v2973 = vunpack.c.h.b16 %v309
    %v2974 = vunpack.c.l.b16 %v310
    %v2975 = vunpack.c.h.b16 %v310
    %v2976 = vunpack.c.l.b16 %v311
    %v2977 = vunpack.c.h.b16 %v311
    %v2978 = vunpack.c.l.b16 %v312
    %v2979 = vunpack.c.h.b16 %v312
    %v2980 = vunpack.c.l.b16 %v313
    %v2981 = vunpack.c.h.b16 %v313
    %v2982 = vunpack.c.l.b16 %v314
    %v2983 = vunpack.c.h.b16 %v314
    %v2984 = vunpack.c.l.b16 %v315
    %v2985 = vunpack.c.h.b16 %v315
    %v2986 = vunpack.c.l.b16 %v316
    %v2987 = vunpack.c.h.b16 %v316
    %v2988 = vunpack.c.l.b16 %v317
    %v2989 = vunpack.c.h.b16 %v317
    %v2990 = vunpack.c.l.b16 %v318
    %v2991 = vunpack.c.h.b16 %v318
    %v2992 = vunpack.c.l.b16 %v319
    %v2993 = vunpack.c.h.b16 %v319
    %v2994 = vunpack.c.l.b16 %v320
    %v2995 = vunpack.c.h.b16 %v320
    %v2996 = vunpack.c.l.b16 %v321
    %v2997 = vunpack.c.h.b16 %v321
    %v2998 = vunpack.c.l.b16 %v322
    %v2999 = vunpack.c.h.b16 %v322
    %v3000 = vunpack.c.l.b16 %v323
    %v3001 = vunpack.c.h.b16 %v323
    %v3002 = vunpack.c.l.b16 %v324
    %v3003 = vunpack.c.h.b16 %v324
    %v3004 = vunpack.c.l.b16 %v325
    %v3005 = vunpack.c.h.b16 %v325
    %v3006 = vunpack.c.l.b16 %v326
    %v3007 = vunpack.c.h.b16 %v326
    %v3008 = vunpack.c.l.b16 %v327
    %v3009 = vunpack.c.h.b16 %v327
    %v3010 = vunpack.c.l.b16 %v328
    %v3011 = vunpack.c.h.b16 %v328
    %v3012 = vunpack.c.l.b16 %v329
    %v3013 = vunpack.c.h.b16 %v329
    %v3014 = vunpack.c.l.b16 %v330
    %v3015 = vunpack.c.h.b16 %v330
    %v3016 = vunpack.c.l.b16 %v331
    %v3017 = vunpack.c.h.b16 %v331
    %v3018 = vunpack.c.l.b16 %v332
    %v3019 = vunpack.c.h.b16 %v332
    %v3020 = vunpack.c.l.b16 %v333
    %v3021 = vunpack.c.h.b16 %v333
    %v3022 = vunpack.c.l.b16 %v334
    %v3023 = vunpack.c.h.b16 %v334
    %v3024 = vunpack.c.l.b16 %v335
    %v3025 = vunpack.c.h.b16 %v335
    %v3026 = vunpack.c.l.b16 %v336
    %v3027 = vunpack.c.h.b16 %v336
    %v3028 = vunpack.c.l.b16 %v337
    %v3029 = vunpack.c.h.b16 %v337
    %v3030 = vunpack.c.l.b16 %v338
    %v3031 = vunpack.c.h.b16 %v338
    %v3032 = vunpack.c.l.b16 %v339
    %v3033 = vunpack.c.h.b16 %v339
    %v3034 = vunpack.c.l.b16 %v340
    %v3035 = vunpack.c.h.b16 %v340
    %v3036 = vunpack.c.l.b16 %v341
    %v3037 = vunpack.c.h.b16 %v341
    %v3038 = vunpack.c.l.b16 %v342
    %v3039 = vunpack.c.h.b16 %v342
    %v3040 = vunpack.c.l.b16 %v343
    %v3041 = vunpack.c.h.b16 %v343
    %v3042 = vunpack.c.l.b16 %v344
    %v3043 = vunpack.c.h.b16 %v344
    %v3044 = vunpack.c.l.b16 %v345
    %v3045 = vunpack.c.h.b16 %v345
    %v3046 = vunpack.c.l.b16 %v346
    %v3047 = vunpack.c.h.b16 %v346
    %v3048 = vunpack.c.l.b16 %v347
    %v3049 = vunpack.c.h.b16 %v347
    %v3050 = vunpack.c.l.b16 %v348
    %v3051 = vunpack.c.h.b16 %v348
    %v3052 = vunpack.c.l.b16 %v349
    %v3053 = vunpack.c.h.b16 %v349
    %v3054 = vunpack.c.l.b16 %v350
    %v3055 = vunpack.c.h.b16 %v350
    %v3056 = vunpack.c.l.b16 %v351
    %v3057 = vunpack.c.h.b16 %v351
    %v3058 = vunpack.c.l.b16 %v352
    %v3059 = vunpack.c.h.b16 %v352
    %v3060 = vunpack.c.l.b16 %v353
    %v3061 = vunpack.c.h.b16 %v353
    %v3062 = vunpack.c.l.b16 %v354
    %v3063 = vunpack.c.h.b16 %v354
    %v3064 = vunpack.c.l.b16 %v355
    %v3065 = vunpack.c.h.b16 %v355
    %v3066 = vunpack.c.l.b16 %v356
    %v3067 = vunpack.c.h.b16 %v356
    %v3068 = vunpack.c.l.b16 %v357
    %v3069 = vunpack.c.h.b16 %v357
    %v3070 = vunpack.c.l.b16 %v358
    %v3071 = vunpack.c.h.b16 %v358
    %v3072 = vunpack.c.l.b16 %v359
    %v3073 = vunpack.c.h.b16 %v359
    %v3074 = vunpack.c.l.b16 %v360
    %v3075 = vunpack.c.h.b16 %v360
    %v3076 = vunpack.c.l.b16 %v361
    %v3077 = vunpack.c.h.b16 %v361
    %v3078 = vunpack.c.l.b16 %v362
    %v3079 = vunpack.c.h.b16 %v362
    %v3080 = vunpack.c.l.b16 %v363
    %v3081 = vunpack.c.h.b16 %v363
    %v3082 = vunpack.c.l.b16 %v364
    %v3083 = vunpack.c.h.b16 %v364
    %v3084 = vunpack.c.l.b16 %v365
    %v3085 = vunpack.c.h.b16 %v365
    %v3086 = vunpack.c.l.b16 %v366
    %v3087 = vunpack.c.h.b16 %v366
    %v3088 = vunpack.c.l.b16 %v367
    %v3089 = vunpack.c.h.b16 %v367
    %v3090 = vunpack.c.l.b16 %v368
    %v3091 = vunpack.c.h.b16 %v368
    %v3092 = vunpack.c.l.b16 %v369
    %v3093 = vunpack.c.h.b16 %v369
    %v3094 = vunpack.c.l.b16 %v370
    %v3095 = vunpack.c.h.b16 %v370
    %v3096 = vunpack.c.l.b16 %v371
    %v3097 = vunpack.c.h.b16 %v371
    %v3098 = vunpack.c.l.b16 %v372
    %v3099 = vunpack.c.h.b16 %v372
    %v3100 = vunpack.c.l.b16 %v373
    %v3101 = vunpack.c.h.b16 %v373
    %v3102 = vunpack.c.l.b16 %v374
    %v3103 = vunpack.c.h.b16 %v374
    %v3104 = vunpack.c.l.b16 %v375
    %v3105 = vunpack.c.h.b16 %v375
    %v3106 = vunpack.c.l.b16 %v376
    %v3107 = vunpack.c.h.b16 %v376
    %v3108 = vunpack.c.l.b16 %v377
    %v3109 = vunpack.c.h.b16 %v377
    %v3110 = vunpack.c.l.b16 %v378
    %v3111 = vunpack.c.h.b16 %v378
    %v3112 = vunpack.c.l.b16 %v379
    %v3113 = vunpack.c.h.b16 %v379
    %v3114 = vunpack.c.l.b16 %v380
    %v3115 = vunpack.c.h.b16 %v380
    %v3116 = vunpack.c.l.b16 %v381
    %v3117 = vunpack.c.h.b16 %v381
    %v3118 = vunpack.c.l.b16 %v382
    %v3119 = vunpack.c.h.b16 %v382
    %v3120 = vunpack.c.l.b16 %v383
    %v3121 = vunpack.c.h.b16 %v383
    %v3122 = vunpack.c.l.b16 %v384
    %v3123 = vunpack.c.h.b16 %v384
    %v3124 = vunpack.c.l.b16 %v385
    %v3125 = vunpack.c.h.b16 %v385
    %v3126 = vunpack.c.l.b16 %v386
    %v3127 = vunpack.c.h.b16 %v386
    %v3128 = vunpack.c.l.b16 %v387
    %v3129 = vunpack.c.h.b16 %v387
    %v3130 = vunpack.c.l.b16 %v388
    %v3131 = vunpack.c.h.b16 %v388
    %v3132 = vunpack.c.l.b16 %v389
    %v3133 = vunpack.c.h.b16 %v389
    %v3134 = vunpack.c.l.b16 %v390
    %v3135 = vunpack.c.h.b16 %v390
    %v3136 = vunpack.c.l.b16 %v391
    %v3137 = vunpack.c.h.b16 %v391
    %v3138 = vunpack.c.l.b16 %v392
    %v3139 = vunpack.c.h.b16 %v392
    %v3140 = vunpack.c.l.b16 %v393
    %v3141 = vunpack.c.h.b16 %v393
    %v3142 = vunpack.c.l.b16 %v394
    %v3143 = vunpack.c.h.b16 %v394
    %v3144 = vunpack.c.l.b16 %v395
    %v3145 = vunpack.c.h.b16 %v395
    %v3146 = vunpack.c.l.b16 %v396
    %v3147 = vunpack.c.h.b16 %v396
    %v3148 = vunpack.c.l.b16 %v397
    %v3149 = vunpack.c.h.b16 %v397
    %v3150 = vunpack.c.l.b16 %v398
    %v3151 = vunpack.c.h.b16 %v398
    %v3152 = vunpack.c.l.b16 %v399
    %v3153 = vunpack.c.h.b16 %v399
    %v3154 = vunpack.c.l.b16 %v400
    %v3155 = vunpack.c.h.b16 %v400
    %v3156 = vunpack.c.l.b16 %v401
    %v3157 = vunpack.c.h.b16 %v401
    %v3158 = vunpack.c.l.b16 %v402
    %v3159 = vunpack.c.h.b16 %v402
    %v3160 = vunpack.c.l.b16 %v403
    %v3161 = vunpack.c.h.b16 %v403
    %v3162 = vunpack.c.l.b16 %v404
    %v3163 = vunpack.c.h.b16 %v404
    %v3164 = vunpack.c.l.b16 %v405
    %v3165 = vunpack.c.h.b16 %v405
    %v3166 = vunpack.c.l.b16 %v406
    %v3167 = vunpack.c.h.b16 %v406
    %v3168 = vunpack.c.l.b16 %v407
    %v3169 = vunpack.c.h.b16 %v407
    %v3170 = vunpack.c.l.b16 %v408
    %v3171 = vunpack.c.h.b16 %v408
    %v3172 = vunpack.c.l.b16 %v409
    %v3173 = vunpack.c.h.b16 %v409
    %v3174 = vunpack.c.l.b16 %v410
    %v3175 = vunpack.c.h.b16 %v410
    %v3176 = vunpack.c.l.b16 %v411
    %v3177 = vunpack.c.h.b16 %v411
    %v3178 = vunpack.c.l.b16 %v412
    %v3179 = vunpack.c.h.b16 %v412
    %v3180 = vunpack.c.l.b16 %v413
    %v3181 = vunpack.c.h.b16 %v413
    %v3182 = vunpack.c.l.b16 %v414
    %v3183 = vunpack.c.h.b16 %v414
    %v3184 = vunpack.c.l.b16 %v415
    %v3185 = vunpack.c.h.b16 %v415
    %v3186 = vunpack.c.l.b16 %v416
    %v3187 = vunpack.c.h.b16 %v416
    %v3188 = vunpack.c.l.b16 %v417
    %v3189 = vunpack.c.h.b16 %v417
    %v3190 = vunpack.c.l.b16 %v418
    %v3191 = vunpack.c.h.b16 %v418
    %v3192 = vunpack.c.l.b16 %v419
    %v3193 = vunpack.c.h.b16 %v419
    %v3194 = vunpack.c.l.b16 %v420
    %v3195 = vunpack.c.h.b16 %v420
    %v3196 = vunpack.c.l.b16 %v421
    %v3197 = vunpack.c.h.b16 %v421
    %v3198 = vunpack.c.l.b16 %v422
    %v3199 = vunpack.c.h.b16 %v422
    %v3200 = vunpack.c.l.b16 %v423
    %v3201 = vunpack.c.h.b16 %v423
    %v3202 = vunpack.c.l.b16 %v424
    %v3203 = vunpack.c.h.b16 %v424
    %v3204 = vunpack.c.l.b16 %v425
    %v3205 = vunpack.c.h.b16 %v425
    %v3206 = vunpack.c.l.b16 %v426
    %v3207 = vunpack.c.h.b16 %v426
    %v3208 = vunpack.c.l.b16 %v427
    %v3209 = vunpack.c.h.b16 %v427
    %v3210 = vunpack.c.l.b16 %v428
    %v3211 = vunpack.c.h.b16 %v428
    %v3212 = vunpack.c.l.b16 %v429
    %v3213 = vunpack.c.h.b16 %v429
    %v3214 = vunpack.c.l.b16 %v430
    %v3215 = vunpack.c.h.b16 %v430
    %v3216 = vunpack.c.l.b16 %v431
    %v3217 = vunpack.c.h.b16 %v431
    %v3218 = vunpack.c.l.b16 %v432
    %v3219 = vunpack.c.h.b16 %v432
    %v3220 = vunpack.c.l.b16 %v433
    %v3221 = vunpack.c.h.b16 %v433
    %v3222 = vunpack.c.l.b16 %v434
    %v3223 = vunpack.c.h.b16 %v434
    %v3224 = vunpack.c.l.b16 %v435
    %v3225 = vunpack.c.h.b16 %v435
    %v3226 = vunpack.c.l.b16 %v436
    %v3227 = vunpack.c.h.b16 %v436
    %v3228 = vunpack.c.l.b16 %v437
    %v3229 = vunpack.c.h.b16 %v437
    %v3230 = vunpack.c.l.b16 %v438
    %v3231 = vunpack.c.h.b16 %v438
    %v3232 = vunpack.c.l.b16 %v439
    %v3233 = vunpack.c.h.b16 %v439
    %v3234 = vunpack.c.l.b16 %v440
    %v3235 = vunpack.c.h.b16 %v440
    %v3236 = vunpack.c.l.b16 %v441
    %v3237 = vunpack.c.h.b16 %v441
    %v3238 = vunpack.c.l.b16 %v442
    %v3239 = vunpack.c.h.b16 %v442
    %v3240 = vunpack.c.l.b16 %v443
    %v3241 = vunpack.c.h.b16 %v443
    %v3242 = vunpack.c.l.b16 %v444
    %v3243 = vunpack.c.h.b16 %v444
    %v3244 = vunpack.c.l.b16 %v445
    %v3245 = vunpack.c.h.b16 %v445
    %v3246 = vunpack.c.l.b16 %v446
    %v3247 = vunpack.c.h.b16 %v446
    %v3248 = vunpack.c.l.b16 %v447
    %v3249 = vunpack.c.h.b16 %v447
    %v3250 = vunpack.c.l.b16 %v448
    %v3251 = vunpack.c.h.b16 %v448
    %v3252 = vunpack.c.l.b16 %v449
    %v3253 = vunpack.c.h.b16 %v449
    %v3254 = vunpack.c.l.b16 %v450
    %v3255 = vunpack.c.h.b16 %v450
    %v3256 = vunpack.c.l.b16 %v451
    %v3257 = vunpack.c.h.b16 %v451
    %v3258 = vunpack.c.l.b16 %v452
    %v3259 = vunpack.c.h.b16 %v452
    %v3260 = vunpack.c.l.b16 %v453
    %v3261 = vunpack.c.h.b16 %v453
    %v3262 = vunpack.c.l.b16 %v454
    %v3263 = vunpack.c.h.b16 %v454
    %v3264 = vunpack.c.l.b16 %v455
    %v3265 = vunpack.c.h.b16 %v455
    %v3266 = vunpack.c.l.b16 %v456
    %v3267 = vunpack.c.h.b16 %v456
    %v3268 = vunpack.c.l.b16 %v457
    %v3269 = vunpack.c.h.b16 %v457
    %v3270 = vunpack.c.l.b16 %v458
    %v3271 = vunpack.c.h.b16 %v458
    %v3272 = vunpack.c.l.b16 %v459
    %v3273 = vunpack.c.h.b16 %v459
    %v3274 = vunpack.c.l.b16 %v460
    %v3275 = vunpack.c.h.b16 %v460
    %v3276 = vunpack.c.l.b16 %v461
    %v3277 = vunpack.c.h.b16 %v461
    %v3278 = vunpack.c.l.b16 %v462
    %v3279 = vunpack.c.h.b16 %v462
    %v3280 = vunpack.c.l.b16 %v463
    %v3281 = vunpack.c.h.b16 %v463
    %v3282 = vunpack.c.l.b16 %v464
    %v3283 = vunpack.c.h.b16 %v464
    %v3284 = vunpack.c.l.b16 %v465
    %v3285 = vunpack.c.h.b16 %v465
    %v3286 = vunpack.c.l.b16 %v466
    %v3287 = vunpack.c.h.b16 %v466
    %v3288 = vunpack.c.l.b16 %v467
    %v3289 = vunpack.c.h.b16 %v467
    %v3290 = vunpack.c.l.b16 %v468
    %v3291 = vunpack.c.h.b16 %v468
    %v3292 = vunpack.c.l.b16 %v469
    %v3293 = vunpack.c.h.b16 %v469
    %v3294 = vunpack.c.l.b16 %v470
    %v3295 = vunpack.c.h.b16 %v470
    %v3296 = vunpack.c.l.b16 %v471
    %v3297 = vunpack.c.h.b16 %v471
    %v3298 = vunpack.c.l.b16 %v472
    %v3299 = vunpack.c.h.b16 %v472
    %v3300 = vunpack.c.l.b16 %v473
    %v3301 = vunpack.c.h.b16 %v473
    %v3302 = vunpack.c.l.b16 %v474
    %v3303 = vunpack.c.h.b16 %v474
    %v3304 = vunpack.c.l.b16 %v475
    %v3305 = vunpack.c.h.b16 %v475
    %v3306 = vunpack.c.l.b16 %v476
    %v3307 = vunpack.c.h.b16 %v476
    %v3308 = vunpack.c.l.b16 %v477
    %v3309 = vunpack.c.h.b16 %v477
    %v3310 = vunpack.c.l.b16 %v478
    %v3311 = vunpack.c.h.b16 %v478
    %v3312 = vunpack.c.l.b16 %v479
    %v3313 = vunpack.c.h.b16 %v479
    %v3314 = vunpack.c.l.b16 %v480
    %v3315 = vunpack.c.h.b16 %v480
    %v3316 = vunpack.c.l.b16 %v481
    %v3317 = vunpack.c.h.b16 %v481
    %v3318 = vunpack.c.l.b16 %v482
    %v3319 = vunpack.c.h.b16 %v482
    %v3320 = vunpack.c.l.b16 %v483
    %v3321 = vunpack.c.h.b16 %v483
    %v3322 = vunpack.c.l.b16 %v484
    %v3323 = vunpack.c.h.b16 %v484
    %v3324 = vunpack.c.l.b16 %v485
    %v3325 = vunpack.c.h.b16 %v485
    %v3326 = vpack.c.b16 %v2816, %v2814
    %v3327 = vpack.c.b16 %v2817, %v2815
    %v3328 = vpack.c.b16 %v2820, %v2818
    %v3329 = vpack.c.b16 %v2821, %v2819
    %v3330 = vpack.c.b16 %v2824, %v2822
    %v3331 = vpack.c.b16 %v2825, %v2823
    %v3332 = vpack.c.b16 %v2828, %v2826
    %v3333 = vpack.c.b16 %v2829, %v2827
    %v3334 = vpack.c.b16 %v2832, %v2830
    %v3335 = vpack.c.b16 %v2833, %v2831
    %v3336 = vpack.c.b16 %v2836, %v2834
    %v3337 = vpack.c.b16 %v2837, %v2835
    %v3338 = vpack.c.b16 %v2840, %v2838
    %v3339 = vpack.c.b16 %v2841, %v2839
    %v3340 = vpack.c.b16 %v2844, %v2842
    %v3341 = vpack.c.b16 %v2845, %v2843
    %v3342 = vpack.c.b16 %v2848, %v2846
    %v3343 = vpack.c.b16 %v2849, %v2847
    %v3344 = vpack.c.b16 %v2852, %v2850
    %v3345 = vpack.c.b16 %v2853, %v2851
    %v3346 = vpack.c.b16 %v2856, %v2854
    %v3347 = vpack.c.b16 %v2857, %v2855
    %v3348 = vpack.c.b16 %v2860, %v2858
    %v3349 = vpack.c.b16 %v2861, %v2859
    %v3350 = vpack.c.b16 %v2864, %v2862
    %v3351 = vpack.c.b16 %v2865, %v2863
    %v3352 = vpack.c.b16 %v2868, %v2866
    %v3353 = vpack.c.b16 %v2869, %v2867
    %v3354 = vpack.c.b16 %v2872, %v2870
    %v3355 = vpack.c.b16 %v2873, %v2871
    %v3356 = vpack.c.b16 %v2876, %v2874
    %v3357 = vpack.c.b16 %v2877, %v2875
    %v3358 = vpack.c.b16 %v2880, %v2878
    %v3359 = vpack.c.b16 %v2881, %v2879
    %v3360 = vpack.c.b16 %v2884, %v2882
    %v3361 = vpack.c.b16 %v2885, %v2883
    %v3362 = vpack.c.b16 %v2888, %v2886
    %v3363 = vpack.c.b16 %v2889, %v2887
    %v3364 = vpack.c.b16 %v2892, %v2890
    %v3365 = vpack.c.b16 %v2893, %v2891
    %v3366 = vpack.c.b16 %v2896, %v2894
    %v3367 = vpack.c.b16 %v2897, %v2895
    %v3368 = vpack.c.b16 %v2900, %v2898
    %v3369 = vpack.c.b16 %v2901, %v2899
    %v3370 = vpack.c.b16 %v2904, %v2902
    %v3371 = vpack.c.b16 %v2905, %v2903
    %v3372 = vpack.c.b16 %v2908, %v2906
    %v3373 = vpack.c.b16 %v2909, %v2907
    %v3374 = vpack.c.b16 %v2912, %v2910
    %v3375 = vpack.c.b16 %v2913, %v2911
    %v3376 = vpack.c.b16 %v2916, %v2914
    %v3377 = vpack.c.b16 %v2917, %v2915
    %v3378 = vpack.c.b16 %v2920, %v2918
    %v3379 = vpack.c.b16 %v2921, %v2919
    %v3380 = vpack.c.b16 %v2924, %v2922
    %v3381 = vpack.c.b16 %v2925, %v2923
    %v3382 = vpack.c.b16 %v2928, %v2926
    %v3383 = vpack.c.b16 %v2929, %v2927
    %v3384 = vpack.c.b16 %v2932, %v2930
    %v3385 = vpack.c.b16 %v2933, %v2931
    %v3386 = vpack.c.b16 %v2936, %v2934
    %v3387 = vpack.c.b16 %v2937, %v2935
    %v3388 = vpack.c.b16 %v2940, %v2938
    %v3389 = vpack.c.b16 %v2941, %v2939
    %v3390 = vpack.c.b16 %v2944, %v2942
    %v3391 = vpack.c.b16 %v2945, %v2943
    %v3392 = vpack.c.b16 %v2948, %v2946
    %v3393 = vpack.c.b16 %v2949, %v2947
    %v3394 = vpack.c.b16 %v2952, %v2950
    %v3395 = vpack.c.b16 %v2953, %v2951
    %v3396 = vpack.c.b16 %v2956, %v2954
    %v3397 = vpack.c.b16 %v2957, %v2955
    %v3398 = vpack.c.b16 %v2960, %v2958
    %v3399 = vpack.c.b16 %v2961, %v2959
    %v3400 = vpack.c.b16 %v2964, %v2962
    %v3401 = vpack.c.b16 %v2965, %v2963
    %v3402 = vpack.c.b16 %v2968, %v2966
    %v3403 = vpack.c.b16 %v2969, %v2967
    %v3404 = vpack.c.b16 %v2972, %v2970
    %v3405 = vpack.c.b16 %v2973, %v2971
    %v3406 = vpack.c.b16 %v2976, %v2974
    %v3407 = vpack.c.b16 %v2977, %v2975
    %v3408 = vpack.c.b16 %v2980, %v2978
    %v3409 = vpack.c.b16 %v2981, %v2979
    %v3410 = vpack.c.b16 %v2984, %v2982
    %v3411 = vpack.c.b16 %v2985, %v2983
    %v3412 = vpack.c.b16 %v2988, %v2986
    %v3413 = vpack.c.b16 %v2989, %v2987
    %v3414 = vpack.c.b16 %v2992, %v2990
    %v3415 = vpack.c.b16 %v2993, %v2991
    %v3416 = vpack.c.b16 %v2996, %v2994
    %v3417 = vpack.c.b16 %v2997, %v2995
    %v3418 = vpack.c.b16 %v3000, %v2998
    %v3419 = vpack.c.b16 %v3001, %v2999
    %v3420 = vpack.c.b16 %v3004, %v3002
    %v3421 = vpack.c.b16 %v3005, %v3003
    %v3422 = vpack.c.b16 %v3008, %v3006
    %v3423 = vpack.c.b16 %v3009, %v3007
    %v3424 = vpack.c.b16 %v3012, %v3010
    %v3425 = vpack.c.b16 %v3013, %v3011
    %v3426 = vpack.c.b16 %v3016, %v3014
    %v3427 = vpack.c.b16 %v3017, %v3015
    %v3428 = vpack.c.b16 %v3020, %v3018
    %v3429 = vpack.c.b16 %v3021, %v3019
    %v3430 = vpack.c.b16 %v3024, %v3022
    %v3431 = vpack.c.b16 %v3025, %v3023
    %v3432 = vpack.c.b16 %v3028, %v3026
    %v3433 = vpack.c.b16 %v3029, %v3027
    %v3434 = vpack.c.b16 %v3032, %v3030
    %v3435 = vpack.c.b16 %v3033, %v3031
    %v3436 = vpack.c.b16 %v3036, %v3034
    %v3437 = vpack.c.b16 %v3037, %v3035
    %v3438 = vpack.c.b16 %v3040, %v3038
    %v3439 = vpack.c.b16 %v3041, %v3039
    %v3440 = vpack.c.b16 %v3044, %v3042
    %v3441 = vpack.c.b16 %v3045, %v3043
    %v3442 = vpack.c.b16 %v3048, %v3046
    %v3443 = vpack.c.b16 %v3049, %v3047
    %v3444 = vpack.c.b16 %v3052, %v3050
    %v3445 = vpack.c.b16 %v3053, %v3051
    %v3446 = vpack.c.b16 %v3056, %v3054
    %v3447 = vpack.c.b16 %v3057, %v3055
    %v3448 = vpack.c.b16 %v3060, %v3058
    %v3449 = vpack.c.b16 %v3061, %v3059
    %v3450 = vpack.c.b16 %v3064, %v3062
    %v3451 = vpack.c.b16 %v3065, %v3063
    %v3452 = vpack.c.b16 %v3068, %v3066
    %v3453 = vpack.c.b16 %v3069, %v3067
    %v3454 = vpack.c.b16 %v3072, %v3070
    %v3455 = vpack.c.b16 %v3073, %v3071
    %v3456 = vpack.c.b16 %v3076, %v3074
    %v3457 = vpack.c.b16 %v3077, %v3075
    %v3458 = vpack.c.b16 %v3080, %v3078
    %v3459 = vpack.c.b16 %v3081, %v3079
    %v3460 = vpack.c.b16 %v3084, %v3082
    %v3461 = vpack.c.b16 %v3085, %v3083
    %v3462 = vpack.c.b16 %v3088, %v3086
    %v3463 = vpack.c.b16 %v3089, %v3087
    %v3464 = vpack.c.b16 %v3092, %v3090
    %v3465 = vpack.c.b16 %v3093, %v3091
    %v3466 = vpack.c.b16 %v3096, %v3094
    %v3467 = vpack.c.b16 %v3097, %v3095
    %v3468 = vpack.c.b16 %v3100, %v3098
    %v3469 = vpack.c.b16 %v3101, %v3099
    %v3470 = vpack.c.b16 %v3104, %v3102
    %v3471 = vpack.c.b16 %v3105, %v3103
    %v3472 = vpack.c.b16 %v3108, %v3106
    %v3473 = vpack.c.b16 %v3109, %v3107
    %v3474 = vpack.c.b16 %v3112, %v3110
    %v3475 = vpack.c.b16 %v3113, %v3111
    %v3476 = vpack.c.b16 %v3116, %v3114
    %v3477 = vpack.c.b16 %v3117, %v3115
    %v3478 = vpack.c.b16 %v3120, %v3118
    %v3479 = vpack.c.b16 %v3121, %v3119
    %v3480 = vpack.c.b16 %v3124, %v3122
    %v3481 = vpack.c.b16 %v3125, %v3123
    %v3482 = vpack.c.b16 %v3128, %v3126
    %v3483 = vpack.c.b16 %v3129, %v3127
    %v3484 = vpack.c.b16 %v3132, %v3130
    %v3485 = vpack.c.b16 %v3133, %v3131
    %v3486 = vpack.c.b16 %v3136, %v3134
    %v3487 = vpack.c.b16 %v3137, %v3135
    %v3488 = vpack.c.b16 %v3140, %v3138
    %v3489 = vpack.c.b16 %v3141, %v3139
    %v3490 = vpack.c.b16 %v3144, %v3142
    %v3491 = vpack.c.b16 %v3145, %v3143
    %v3492 = vpack.c.b16 %v3148, %v3146
    %v3493 = vpack.c.b16 %v3149, %v3147
    %v3494 = vpack.c.b16 %v3152, %v3150
    %v3495 = vpack.c.b16 %v3153, %v3151
    %v3496 = vpack.c.b16 %v3156, %v3154
    %v3497 = vpack.c.b16 %v3157, %v3155
    %v3498 = vpack.c.b16 %v3160, %v3158
    %v3499 = vpack.c.b16 %v3161, %v3159
    %v3500 = vpack.c.b16 %v3164, %v3162
    %v3501 = vpack.c.b16 %v3165, %v3163
    %v3502 = vpack.c.b16 %v3168, %v3166
    %v3503 = vpack.c.b16 %v3169, %v3167
    %v3504 = vpack.c.b16 %v3172, %v3170
    %v3505 = vpack.c.b16 %v3173, %v3171
    %v3506 = vpack.c.b16 %v3176, %v3174
    %v3507 = vpack.c.b16 %v3177, %v3175
    %v3508 = vpack.c.b16 %v3180, %v3178
    %v3509 = vpack.c.b16 %v3181, %v3179
    %v3510 = vpack.c.b16 %v3184, %v3182
    %v3511 = vpack.c.b16 %v3185, %v3183
    %v3512 = vpack.c.b16 %v3188, %v3186
    %v3513 = vpack.c.b16 %v3189, %v3187
    %v3514 = vpack.c.b16 %v3192, %v3190
    %v3515 = vpack.c.b16 %v3193, %v3191
    %v3516 = vpack.c.b16 %v3196, %v3194
    %v3517 = vpack.c.b16 %v3197, %v3195
    %v3518 = vpack.c.b16 %v3200, %v3198
    %v3519 = vpack.c.b16 %v3201, %v3199
    %v3520 = vpack.c.b16 %v3204, %v3202
    %v3521 = vpack.c.b16 %v3205, %v3203
    %v3522 = vpack.c.b16 %v3208, %v3206
    %v3523 = vpack.c.b16 %v3209, %v3207
    %v3524 = vpack.c.b16 %v3212, %v3210
    %v3525 = vpack.c.b16 %v3213, %v3211
    %v3526 = vpack.c.b16 %v3216, %v3214
    %v3527 = vpack.c.b16 %v3217, %v3215
    %v3528 = vpack.c.b16 %v3220, %v3218
    %v3529 = vpack.c.b16 %v3221, %v3219
    %v3530 = vpack.c.b16 %v3224, %v3222
    %v3531 = vpack.c.b16 %v3225, %v3223
    %v3532 = vpack.c.b16 %v3228, %v3226
    %v3533 = vpack.c.b16 %v3229, %v3227
    %v3534 = vpack.c.b16 %v3232, %v3230
    %v3535 = vpack.c.b16 %v3233, %v3231
    %v3536 = vpack.c.b16 %v3236, %v3234
    %v3537 = vpack.c.b16 %v3237, %v3235
    %v3538 = vpack.c.b16 %v3240, %v3238
    %v3539 = vpack.c.b16 %v3241, %v3239
    %v3540 = vpack.c.b16 %v3244, %v3242
    %v3541 = vpack.c.b16 %v3245, %v3243
    %v3542 = vpack.c.b16 %v3248, %v3246
    %v3543 = vpack.c.b16 %v3249, %v3247
    %v3544 = vpack.c.b16 %v3252, %v3250
    %v3545 = vpack.c.b16 %v3253, %v3251
    %v3546 = vpack.c.b16 %v3256, %v3254
    %v3547 = vpack.c.b16 %v3257, %v3255
    %v3548 = vpack.c.b16 %v3260, %v3258
    %v3549 = vpack.c.b16 %v3261, %v3259
    %v3550 = vpack.c.b16 %v3264, %v3262
    %v3551 = vpack.c.b16 %v3265, %v3263
    %v3552 = vpack.c.b16 %v3268, %v3266
    %v3553 = vpack.c.b16 %v3269, %v3267
    %v3554 = vpack.c.b16 %v3272, %v3270
    %v3555 = vpack.c.b16 %v3273, %v3271
    %v3556 = vpack.c.b16 %v3276, %v3274
    %v3557 = vpack.c.b16 %v3277, %v3275
    %v3558 = vpack.c.b16 %v3280, %v3278
    %v3559 = vpack.c.b16 %v3281, %v3279
    %v3560 = vpack.c.b16 %v3284, %v3282
    %v3561 = vpack.c.b16 %v3285, %v3283
    %v3562 = vpack.c.b16 %v3288, %v3286
    %v3563 = vpack.c.b16 %v3289, %v3287
    %v3564 = vpack.c.b16 %v3292, %v3290
    %v3565 = vpack.c.b16 %v3293, %v3291
    %v3566 = vpack.c.b16 %v3296, %v3294
    %v3567 = vpack.c.b16 %v3297, %v3295
    %v3568 = vpack.c.b16 %v3300, %v3298
    %v3569 = vpack.c.b16 %v3301, %v3299
    %v3570 = vpack.c.b16 %v3304, %v3302
    %v3571 = vpack.c.b16 %v3305, %v3303
    %v3572 = vpack.c.b16 %v3308, %v3306
    %v3573 = vpack.c.b16 %v3309, %v3307
    %v3574 = vpack.c.b16 %v3312, %v3310
    %v3575 = vpack.c.b16 %v3313, %v3311
    %v3576 = vpack.c.b16 %v3316, %v3314
    %v3577 = vpack.c.b16 %v3317, %v3315
    %v3578 = vpack.c.b16 %v3320, %v3318
    %v3579 = vpack.c.b16 %v3321, %v3319
    %v3580 = vpack.c.b16 %v3324, %v3322
    %v3581 = vpack.c.b16 %v3325, %v3323
    %3838 = vmatprep.subr.bf16.mxu0 %v3327
    %3839 = vmatpush1.bf16.msra.mxu0 %v3326
    %3840 = vmatprep.subr.bf16.mxu0 %v3329
    %3841 = vmatpush1.bf16.msra.mxu0 %v3328
    %3842 = vmatprep.subr.bf16.mxu0 %v3331
    %3843 = vmatpush1.bf16.msra.mxu0 %v3330
    %3844 = vmatprep.subr.bf16.mxu0 %v3333
    %3845 = vmatpush1.bf16.msra.mxu0 %v3332
    %3846 = vmatprep.subr.bf16.mxu0 %v3335
    %3847 = vmatpush1.bf16.msra.mxu0 %v3334
    %3848 = vmatprep.subr.bf16.mxu0 %v3337
    %3849 = vmatpush1.bf16.msra.mxu0 %v3336
    %3850 = vmatprep.subr.bf16.mxu0 %v3339
    %3851 = vmatpush1.bf16.msra.mxu0 %v3338
    %3852 = vmatprep.subr.bf16.mxu0 %v3341
    %3853 = vmatpush1.bf16.msra.mxu0 %v3340
    %3854 = vmatprep.subr.bf16.mxu0 %v3343
    %3855 = vmatpush1.bf16.msra.mxu0 %v3342
    %3856 = vmatprep.subr.bf16.mxu0 %v3345
    %3857 = vmatpush1.bf16.msra.mxu0 %v3344
    %3858 = vmatprep.subr.bf16.mxu0 %v3347
    %3859 = vmatpush1.bf16.msra.mxu0 %v3346
    %3860 = vmatprep.subr.bf16.mxu0 %v3349
    %3861 = vmatpush1.bf16.msra.mxu0 %v3348
    %3862 = vmatprep.subr.bf16.mxu0 %v3351
    %3863 = vmatpush1.bf16.msra.mxu0 %v3350
    %3864 = vmatprep.subr.bf16.mxu0 %v3353
    %3865 = vmatpush1.bf16.msra.mxu0 %v3352
    %3866 = vmatprep.subr.bf16.mxu0 %v3355
    %3867 = vmatpush1.bf16.msra.mxu0 %v3354
    %3868 = vmatprep.subr.bf16.mxu0 %v3357
    %3869 = vmatpush1.bf16.msra.mxu0 %v3356
    %3870 = vmatprep.mubr.bf16.mxu0 %v215
    %3871 = vmatmul.mubr.bf16.gmra.mrb[0].mxu0 %v214
    %v3872 = vpop.f32.mrb[0].mxu0
    %v3873 = vadd.f32 %v2552, %v3872
    %v3874 = vpop.f32.mrb[0].mxu0
    %v3875 = vadd.f32 %v2554, %v3874
    %v3876 = vpop.f32.mrb[0].mxu0
    %v3877 = vpop.f32.mrb[0].mxu0
    %3878 = vdwg.mxu0
    %3879 = vmatprep.subr.bf16.mxu0 %v3359
    %3880 = vmatpush1.bf16.msra.mxu0 %v3358
    %3881 = vmatprep.subr.bf16.mxu0 %v3361
    %3882 = vmatpush1.bf16.msra.mxu0 %v3360
    %3883 = vmatprep.subr.bf16.mxu0 %v3363
    %3884 = vmatpush1.bf16.msra.mxu0 %v3362
    %3885 = vmatprep.subr.bf16.mxu0 %v3365
    %3886 = vmatpush1.bf16.msra.mxu0 %v3364
    %3887 = vmatprep.subr.bf16.mxu0 %v3367
    %3888 = vmatpush1.bf16.msra.mxu0 %v3366
    %3889 = vmatprep.subr.bf16.mxu0 %v3369
    %3890 = vmatpush1.bf16.msra.mxu0 %v3368
    %3891 = vmatprep.subr.bf16.mxu0 %v3371
    %3892 = vmatpush1.bf16.msra.mxu0 %v3370
    %3893 = vmatprep.subr.bf16.mxu0 %v3373
    %3894 = vmatpush1.bf16.msra.mxu0 %v3372
    %3895 = vmatprep.subr.bf16.mxu0 %v3375
    %3896 = vmatpush1.bf16.msra.mxu0 %v3374
    %3897 = vmatprep.subr.bf16.mxu0 %v3377
    %3898 = vmatpush1.bf16.msra.mxu0 %v3376
    %3899 = vmatprep.subr.bf16.mxu0 %v3379
    %3900 = vmatpush1.bf16.msra.mxu0 %v3378
    %3901 = vmatprep.subr.bf16.mxu0 %v3381
    %3902 = vmatpush1.bf16.msra.mxu0 %v3380
    %3903 = vmatprep.subr.bf16.mxu0 %v3383
    %3904 = vmatpush1.bf16.msra.mxu0 %v3382
    %3905 = vmatprep.subr.bf16.mxu0 %v3385
    %3906 = vmatpush1.bf16.msra.mxu0 %v3384
    %3907 = vmatprep.subr.bf16.mxu0 %v3387
    %3908 = vmatpush1.bf16.msra.mxu0 %v3386
    %3909 = vmatprep.subr.bf16.mxu0 %v3389
    %3910 = vmatpush1.bf16.msra.mxu0 %v3388
    %3911 = vmatprep.mubr.bf16.mxu0 %v217
    %3912 = vmatmul.mubr.bf16.gmra.mrb[0].mxu0 %v216
    %v3913 = vpop.f32.mrb[0].mxu0
    %v3914 = vadd.f32 %v3873, %v3913
    %v3915 = vpop.f32.mrb[0].mxu0
    %v3916 = vadd.f32 %v3875, %v3915
    %v3917 = vpop.f32.mrb[0].mxu0
    %v3918 = vpop.f32.mrb[0].mxu0
    %3919 = vdwg.mxu0
    %3920 = vmatprep.subr.bf16.mxu0 %v3391
    %3921 = vmatpush1.bf16.msra.mxu0 %v3390
    %3922 = vmatprep.subr.bf16.mxu0 %v3393
    %3923 = vmatpush1.bf16.msra.mxu0 %v3392
    %3924 = vmatprep.subr.bf16.mxu0 %v3395
    %3925 = vmatpush1.bf16.msra.mxu0 %v3394
    %3926 = vmatprep.subr.bf16.mxu0 %v3397
    %3927 = vmatpush1.bf16.msra.mxu0 %v3396
    %3928 = vmatprep.subr.bf16.mxu0 %v3399
    %3929 = vmatpush1.bf16.msra.mxu0 %v3398
    %3930 = vmatprep.subr.bf16.mxu0 %v3401
    %3931 = vmatpush1.bf16.msra.mxu0 %v3400
    %3932 = vmatprep.subr.bf16.mxu0 %v3403
    %3933 = vmatpush1.bf16.msra.mxu0 %v3402
    %3934 = vmatprep.subr.bf16.mxu0 %v3405
    %3935 = vmatpush1.bf16.msra.mxu0 %v3404
    %3936 = vmatprep.subr.bf16.mxu0 %v3407
    %3937 = vmatpush1.bf16.msra.mxu0 %v3406
    %3938 = vmatprep.subr.bf16.mxu0 %v3409
    %3939 = vmatpush1.bf16.msra.mxu0 %v3408
    %3940 = vmatprep.subr.bf16.mxu0 %v3411
    %3941 = vmatpush1.bf16.msra.mxu0 %v3410
    %3942 = vmatprep.subr.bf16.mxu0 %v3413
    %3943 = vmatpush1.bf16.msra.mxu0 %v3412
    %3944 = vmatprep.subr.bf16.mxu0 %v3415
    %3945 = vmatpush1.bf16.msra.mxu0 %v3414
    %3946 = vmatprep.subr.bf16.mxu0 %v3417
    %3947 = vmatpush1.bf16.msra.mxu0 %v3416
    %3948 = vmatprep.subr.bf16.mxu0 %v3419
    %3949 = vmatpush1.bf16.msra.mxu0 %v3418
    %3950 = vmatprep.subr.bf16.mxu0 %v3421
    %3951 = vmatpush1.bf16.msra.mxu0 %v3420
    %3952 = vmatprep.mubr.bf16.mxu0 %v219
    %3953 = vmatmul.mubr.bf16.gmra.mrb[0].mxu0 %v218
    %v3954 = vpop.f32.mrb[0].mxu0
    %v3955 = vadd.f32 %v3914, %v3954
    %v3956 = vpop.f32.mrb[0].mxu0
    %v3957 = vadd.f32 %v3916, %v3956
    %v3958 = vpop.f32.mrb[0].mxu0
    %v3959 = vpop.f32.mrb[0].mxu0
    %3960 = vdwg.mxu0
    %3961 = vmatprep.subr.bf16.mxu0 %v3423
    %3962 = vmatpush1.bf16.msra.mxu0 %v3422
    %3963 = vmatprep.subr.bf16.mxu0 %v3425
    %3964 = vmatpush1.bf16.msra.mxu0 %v3424
    %3965 = vmatprep.subr.bf16.mxu0 %v3427
    %3966 = vmatpush1.bf16.msra.mxu0 %v3426
    %3967 = vmatprep.subr.bf16.mxu0 %v3429
    %3968 = vmatpush1.bf16.msra.mxu0 %v3428
    %3969 = vmatprep.subr.bf16.mxu0 %v3431
    %3970 = vmatpush1.bf16.msra.mxu0 %v3430
    %3971 = vmatprep.subr.bf16.mxu0 %v3433
    %3972 = vmatpush1.bf16.msra.mxu0 %v3432
    %3973 = vmatprep.subr.bf16.mxu0 %v3435
    %3974 = vmatpush1.bf16.msra.mxu0 %v3434
    %3975 = vmatprep.subr.bf16.mxu0 %v3437
    %3976 = vmatpush1.bf16.msra.mxu0 %v3436
    %3977 = vmatprep.subr.bf16.mxu0 %v3439
    %3978 = vmatpush1.bf16.msra.mxu0 %v3438
    %3979 = vmatprep.subr.bf16.mxu0 %v3441
    %3980 = vmatpush1.bf16.msra.mxu0 %v3440
    %3981 = vmatprep.subr.bf16.mxu0 %v3443
    %3982 = vmatpush1.bf16.msra.mxu0 %v3442
    %3983 = vmatprep.subr.bf16.mxu0 %v3445
    %3984 = vmatpush1.bf16.msra.mxu0 %v3444
    %3985 = vmatprep.subr.bf16.mxu0 %v3447
    %3986 = vmatpush1.bf16.msra.mxu0 %v3446
    %3987 = vmatprep.subr.bf16.mxu0 %v3449
    %3988 = vmatpush1.bf16.msra.mxu0 %v3448
    %3989 = vmatprep.subr.bf16.mxu0 %v3451
    %3990 = vmatpush1.bf16.msra.mxu0 %v3450
    %3991 = vmatprep.subr.bf16.mxu0 %v3453
    %3992 = vmatpush1.bf16.msra.mxu0 %v3452
    %3993 = vmatprep.mubr.bf16.mxu0 %v221
    %3994 = vmatmul.mubr.bf16.gmra.mrb[0].mxu0 %v220
    %v3995 = vpop.f32.mrb[0].mxu0
    %v3996 = vadd.f32 %v3955, %v3995
    %v3997 = vpop.f32.mrb[0].mxu0
    %v3998 = vadd.f32 %v3957, %v3997
    %v3999 = vpop.f32.mrb[0].mxu0
    %v4000 = vpop.f32.mrb[0].mxu0
    %4001 = vdwg.mxu0
    %4002 = vmatprep.subr.bf16.mxu0 %v3455
    %4003 = vmatpush1.bf16.msra.mxu0 %v3454
    %4004 = vmatprep.subr.bf16.mxu0 %v3457
    %4005 = vmatpush1.bf16.msra.mxu0 %v3456
    %4006 = vmatprep.subr.bf16.mxu0 %v3459
    %4007 = vmatpush1.bf16.msra.mxu0 %v3458
    %4008 = vmatprep.subr.bf16.mxu0 %v3461
    %4009 = vmatpush1.bf16.msra.mxu0 %v3460
    %4010 = vmatprep.subr.bf16.mxu0 %v3463
    %4011 = vmatpush1.bf16.msra.mxu0 %v3462
    %4012 = vmatprep.subr.bf16.mxu0 %v3465
    %4013 = vmatpush1.bf16.msra.mxu0 %v3464
    %4014 = vmatprep.subr.bf16.mxu0 %v3467
    %4015 = vmatpush1.bf16.msra.mxu0 %v3466
    %4016 = vmatprep.subr.bf16.mxu0 %v3469
    %4017 = vmatpush1.bf16.msra.mxu0 %v3468
    %4018 = vmatprep.subr.bf16.mxu0 %v3471
    %4019 = vmatpush1.bf16.msra.mxu0 %v3470
    %4020 = vmatprep.subr.bf16.mxu0 %v3473
    %4021 = vmatpush1.bf16.msra.mxu0 %v3472
    %4022 = vmatprep.subr.bf16.mxu0 %v3475
    %4023 = vmatpush1.bf16.msra.mxu0 %v3474
    %4024 = vmatprep.subr.bf16.mxu0 %v3477
    %4025 = vmatpush1.bf16.msra.mxu0 %v3476
    %4026 = vmatprep.subr.bf16.mxu0 %v3479
    %4027 = vmatpush1.bf16.msra.mxu0 %v3478
    %4028 = vmatprep.subr.bf16.mxu0 %v3481
    %4029 = vmatpush1.bf16.msra.mxu0 %v3480
    %4030 = vmatprep.subr.bf16.mxu0 %v3483
    %4031 = vmatpush1.bf16.msra.mxu0 %v3482
    %4032 = vmatprep.subr.bf16.mxu0 %v3485
    %4033 = vmatpush1.bf16.msra.mxu0 %v3484
    %4034 = vmatprep.mubr.bf16.mxu0 %v223
    %4035 = vmatmul.mubr.bf16.gmra.mrb[0].mxu0 %v222
    %v4036 = vpop.f32.mrb[0].mxu0
    %v4037 = vadd.f32 %v3996, %v4036
    %v4038 = vpop.f32.mrb[0].mxu0
    %v4039 = vadd.f32 %v3998, %v4038
    %v4040 = vpop.f32.mrb[0].mxu0
    %v4041 = vpop.f32.mrb[0].mxu0
    %4042 = vdwg.mxu0
    %4043 = vmatprep.subr.bf16.mxu0 %v3487
    %4044 = vmatpush1.bf16.msra.mxu0 %v3486
    %4045 = vmatprep.subr.bf16.mxu0 %v3489
    %4046 = vmatpush1.bf16.msra.mxu0 %v3488
    %4047 = vmatprep.subr.bf16.mxu0 %v3491
    %4048 = vmatpush1.bf16.msra.mxu0 %v3490
    %4049 = vmatprep.subr.bf16.mxu0 %v3493
    %4050 = vmatpush1.bf16.msra.mxu0 %v3492
    %4051 = vmatprep.subr.bf16.mxu0 %v3495
    %4052 = vmatpush1.bf16.msra.mxu0 %v3494
    %4053 = vmatprep.subr.bf16.mxu0 %v3497
    %4054 = vmatpush1.bf16.msra.mxu0 %v3496
    %4055 = vmatprep.subr.bf16.mxu0 %v3499
    %4056 = vmatpush1.bf16.msra.mxu0 %v3498
    %4057 = vmatprep.subr.bf16.mxu0 %v3501
    %4058 = vmatpush1.bf16.msra.mxu0 %v3500
    %4059 = vmatprep.subr.bf16.mxu0 %v3503
    %4060 = vmatpush1.bf16.msra.mxu0 %v3502
    %4061 = vmatprep.subr.bf16.mxu0 %v3505
    %4062 = vmatpush1.bf16.msra.mxu0 %v3504
    %4063 = vmatprep.subr.bf16.mxu0 %v3507
    %4064 = vmatpush1.bf16.msra.mxu0 %v3506
    %4065 = vmatprep.subr.bf16.mxu0 %v3509
    %4066 = vmatpush1.bf16.msra.mxu0 %v3508
    %4067 = vmatprep.subr.bf16.mxu0 %v3511
    %4068 = vmatpush1.bf16.msra.mxu0 %v3510
    %4069 = vmatprep.subr.bf16.mxu0 %v3513
    %4070 = vmatpush1.bf16.msra.mxu0 %v3512
    %4071 = vmatprep.subr.bf16.mxu0 %v3515
    %4072 = vmatpush1.bf16.msra.mxu0 %v3514
    %4073 = vmatprep.subr.bf16.mxu0 %v3517
    %4074 = vmatpush1.bf16.msra.mxu0 %v3516
    %4075 = vmatprep.mubr.bf16.mxu0 %v225
    %4076 = vmatmul.mubr.bf16.gmra.mrb[0].mxu0 %v224
    %v4077 = vpop.f32.mrb[0].mxu0
    %v4078 = vadd.f32 %v4037, %v4077
    %v4079 = vpop.f32.mrb[0].mxu0
    %v4080 = vadd.f32 %v4039, %v4079
    %v4081 = vpop.f32.mrb[0].mxu0
    %v4082 = vpop.f32.mrb[0].mxu0
    %4083 = vdwg.mxu0
    %4084 = vmatprep.subr.bf16.mxu0 %v3519
    %4085 = vmatpush1.bf16.msra.mxu0 %v3518
    %4086 = vmatprep.subr.bf16.mxu0 %v3521
    %4087 = vmatpush1.bf16.msra.mxu0 %v3520
    %4088 = vmatprep.subr.bf16.mxu0 %v3523
    %4089 = vmatpush1.bf16.msra.mxu0 %v3522
    %4090 = vmatprep.subr.bf16.mxu0 %v3525
    %4091 = vmatpush1.bf16.msra.mxu0 %v3524
    %4092 = vmatprep.subr.bf16.mxu0 %v3527
    %4093 = vmatpush1.bf16.msra.mxu0 %v3526
    %4094 = vmatprep.subr.bf16.mxu0 %v3529
    %4095 = vmatpush1.bf16.msra.mxu0 %v3528
    %4096 = vmatprep.subr.bf16.mxu0 %v3531
    %4097 = vmatpush1.bf16.msra.mxu0 %v3530
    %4098 = vmatprep.subr.bf16.mxu0 %v3533
    %4099 = vmatpush1.bf16.msra.mxu0 %v3532
    %4100 = vmatprep.subr.bf16.mxu0 %v3535
    %4101 = vmatpush1.bf16.msra.mxu0 %v3534
    %4102 = vmatprep.subr.bf16.mxu0 %v3537
    %4103 = vmatpush1.bf16.msra.mxu0 %v3536
    %4104 = vmatprep.subr.bf16.mxu0 %v3539
    %4105 = vmatpush1.bf16.msra.mxu0 %v3538
    %4106 = vmatprep.subr.bf16.mxu0 %v3541
    %4107 = vmatpush1.bf16.msra.mxu0 %v3540
    %4108 = vmatprep.subr.bf16.mxu0 %v3543
    %4109 = vmatpush1.bf16.msra.mxu0 %v3542
    %4110 = vmatprep.subr.bf16.mxu0 %v3545
    %4111 = vmatpush1.bf16.msra.mxu0 %v3544
    %4112 = vmatprep.subr.bf16.mxu0 %v3547
    %4113 = vmatpush1.bf16.msra.mxu0 %v3546
    %4114 = vmatprep.subr.bf16.mxu0 %v3549
    %4115 = vmatpush1.bf16.msra.mxu0 %v3548
    %4116 = vmatprep.mubr.bf16.mxu0 %v227
    %4117 = vmatmul.mubr.bf16.gmra.mrb[0].mxu0 %v226
    %v4118 = vpop.f32.mrb[0].mxu0
    %v4119 = vadd.f32 %v4078, %v4118
    %v4120 = vpop.f32.mrb[0].mxu0
    %v4121 = vadd.f32 %v4080, %v4120
    %v4122 = vpop.f32.mrb[0].mxu0
    %v4123 = vpop.f32.mrb[0].mxu0
    %4124 = vdwg.mxu0
    %4125 = vmatprep.subr.bf16.mxu0 %v3551
    %4126 = vmatpush1.bf16.msra.mxu0 %v3550
    %4127 = vmatprep.subr.bf16.mxu0 %v3553
    %4128 = vmatpush1.bf16.msra.mxu0 %v3552
    %4129 = vmatprep.subr.bf16.mxu0 %v3555
    %4130 = vmatpush1.bf16.msra.mxu0 %v3554
    %4131 = vmatprep.subr.bf16.mxu0 %v3557
    %4132 = vmatpush1.bf16.msra.mxu0 %v3556
    %4133 = vmatprep.subr.bf16.mxu0 %v3559
    %4134 = vmatpush1.bf16.msra.mxu0 %v3558
    %4135 = vmatprep.subr.bf16.mxu0 %v3561
    %4136 = vmatpush1.bf16.msra.mxu0 %v3560
    %4137 = vmatprep.subr.bf16.mxu0 %v3563
    %4138 = vmatpush1.bf16.msra.mxu0 %v3562
    %4139 = vmatprep.subr.bf16.mxu0 %v3565
    %4140 = vmatpush1.bf16.msra.mxu0 %v3564
    %4141 = vmatprep.subr.bf16.mxu0 %v3567
    %4142 = vmatpush1.bf16.msra.mxu0 %v3566
    %4143 = vmatprep.subr.bf16.mxu0 %v3569
    %4144 = vmatpush1.bf16.msra.mxu0 %v3568
    %4145 = vmatprep.subr.bf16.mxu0 %v3571
    %4146 = vmatpush1.bf16.msra.mxu0 %v3570
    %4147 = vmatprep.subr.bf16.mxu0 %v3573
    %4148 = vmatpush1.bf16.msra.mxu0 %v3572
    %4149 = vmatprep.subr.bf16.mxu0 %v3575
    %4150 = vmatpush1.bf16.msra.mxu0 %v3574
    %4151 = vmatprep.subr.bf16.mxu0 %v3577
    %4152 = vmatpush1.bf16.msra.mxu0 %v3576
    %4153 = vmatprep.subr.bf16.mxu0 %v3579
    %4154 = vmatpush1.bf16.msra.mxu0 %v3578
    %4155 = vmatprep.subr.bf16.mxu0 %v3581
    %4156 = vmatpush1.bf16.msra.mxu0 %v3580
    %4157 = vmatprep.mubr.bf16.mxu0 %v229
    %4158 = vmatmul.mubr.bf16.gmra.mrb[0].mxu0 %v228
    %v4159 = vpop.f32.mrb[0].mxu0
    %v4160 = vadd.f32 %v4119, %v4159
    %v4161 = vpop.f32.mrb[0].mxu0
    %v4162 = vadd.f32 %v4121, %v4161
    %v4163 = vpop.f32.mrb[0].mxu0
    %v4164 = vpop.f32.mrb[0].mxu0
    %4165 = vdwg.mxu0
    %v4166 = vld [vmem:[%s0 + $0x40] sm:$0xff]
    %v4167 = vld [vmem:[%s0 + $0x48] sm:$0xff]
    %v4168 = vld [vmem:[%s0 + $0x50] sm:$0xff]
    %v4169 = vld [vmem:[%s0 + $0x58] sm:$0xff]
    %v4170 = vld [vmem:[%s0 + $0xa0] sm:$0xff]
    %v4171 = vld [vmem:[%s0 + $0xa8] sm:$0xff]
    %v4172 = vld [vmem:[%s0 + $0xb0] sm:$0xff]
    %v4173 = vld [vmem:[%s0 + $0xb8] sm:$0xff]
    %v4174 = vld [vmem:[%s0 + $0x100] sm:$0xff]
    %v4175 = vld [vmem:[%s0 + $0x108] sm:$0xff]
    %v4176 = vld [vmem:[%s0 + $0x110] sm:$0xff]
    %v4177 = vld [vmem:[%s0 + $0x118] sm:$0xff]
    %v4178 = vld [vmem:[%s0 + $0x160] sm:$0xff]
    %v4179 = vld [vmem:[%s0 + $0x168] sm:$0xff]
    %v4180 = vld [vmem:[%s0 + $0x170] sm:$0xff]
    %v4181 = vld [vmem:[%s0 + $0x178] sm:$0xff]
    %v4198 = vcombine.low %v4166, %v4170
    %v4199 = vcombine.high %v4166, %v4170
    %v4200 = vcombine.low %v4174, %v4178
    %v4201 = vcombine.high %v4174, %v4178
    %v4203 = vunpack.c.l.s4 1983009808
    %v4204 = vunpack.c.0.s8 %v4203
    %v4205 = vlaneseq
    %v4206 = vshrl.u32 %v4205, 7
    %v4207 = vsub.s32 %v4204, %v4206
    %v4208 = vrot.slane %v4198, %v4207
    %v4210 = vunpack.c.l.s4 1983009808
    %v4211 = vunpack.c.0.s8 %v4210
    %v4212 = vlaneseq
    %v4213 = vshrl.u32 %v4212, 7
    %v4214 = vsub.s32 %v4211, %v4213
    %v4215 = vrot.slane %v4199, %v4214
    %v4217 = vunpack.c.l.s4 1983009808
    %v4218 = vunpack.c.0.s8 %v4217
    %v4219 = vlaneseq
    %v4220 = vshrl.u32 %v4219, 7
    %v4221 = vsub.s32 %v4218, %v4220
    %v4222 = vrot.slane %v4200, %v4221
    %v4224 = vunpack.c.l.s4 1983009808
    %v4225 = vunpack.c.0.s8 %v4224
    %v4226 = vlaneseq
    %v4227 = vshrl.u32 %v4226, 7
    %v4228 = vsub.s32 %v4225, %v4227
    %v4229 = vrot.slane %v4201, %v4228
    %v4230 = vcombine.low %v4208, %v4222
    %v4231 = vcombine.high %v4208, %v4222
    %v4232 = vcombine.low %v4215, %v4229
    %v4233 = vcombine.high %v4215, %v4229
    %v4234 = vcombine.low %v4167, %v4171
    %v4235 = vcombine.high %v4167, %v4171
    %v4236 = vcombine.low %v4175, %v4179
    %v4237 = vcombine.high %v4175, %v4179
    %v4239 = vunpack.c.l.s4 1983009808
    %v4240 = vunpack.c.0.s8 %v4239
    %v4241 = vlaneseq
    %v4242 = vshrl.u32 %v4241, 7
    %v4243 = vsub.s32 %v4240, %v4242
    %v4244 = vrot.slane %v4234, %v4243
    %v4246 = vunpack.c.l.s4 1983009808
    %v4247 = vunpack.c.0.s8 %v4246
    %v4248 = vlaneseq
    %v4249 = vshrl.u32 %v4248, 7
    %v4250 = vsub.s32 %v4247, %v4249
    %v4251 = vrot.slane %v4235, %v4250
    %v4253 = vunpack.c.l.s4 1983009808
    %v4254 = vunpack.c.0.s8 %v4253
    %v4255 = vlaneseq
    %v4256 = vshrl.u32 %v4255, 7
    %v4257 = vsub.s32 %v4254, %v4256
    %v4258 = vrot.slane %v4236, %v4257
    %v4260 = vunpack.c.l.s4 1983009808
    %v4261 = vunpack.c.0.s8 %v4260
    %v4262 = vlaneseq
    %v4263 = vshrl.u32 %v4262, 7
    %v4264 = vsub.s32 %v4261, %v4263
    %v4265 = vrot.slane %v4237, %v4264
    %v4266 = vcombine.low %v4244, %v4258
    %v4267 = vcombine.high %v4244, %v4258
    %v4268 = vcombine.low %v4251, %v4265
    %v4269 = vcombine.high %v4251, %v4265
    %v4270 = vcombine.low %v4168, %v4172
    %v4271 = vcombine.high %v4168, %v4172
    %v4272 = vcombine.low %v4176, %v4180
    %v4273 = vcombine.high %v4176, %v4180
    %v4275 = vunpack.c.l.s4 1983009808
    %v4276 = vunpack.c.0.s8 %v4275
    %v4277 = vlaneseq
    %v4278 = vshrl.u32 %v4277, 7
    %v4279 = vsub.s32 %v4276, %v4278
    %v4280 = vrot.slane %v4270, %v4279
    %v4282 = vunpack.c.l.s4 1983009808
    %v4283 = vunpack.c.0.s8 %v4282
    %v4284 = vlaneseq
    %v4285 = vshrl.u32 %v4284, 7
    %v4286 = vsub.s32 %v4283, %v4285
    %v4287 = vrot.slane %v4271, %v4286
    %v4289 = vunpack.c.l.s4 1983009808
    %v4290 = vunpack.c.0.s8 %v4289
    %v4291 = vlaneseq
    %v4292 = vshrl.u32 %v4291, 7
    %v4293 = vsub.s32 %v4290, %v4292
    %v4294 = vrot.slane %v4272, %v4293
    %v4296 = vunpack.c.l.s4 1983009808
    %v4297 = vunpack.c.0.s8 %v4296
    %v4298 = vlaneseq
    %v4299 = vshrl.u32 %v4298, 7
    %v4300 = vsub.s32 %v4297, %v4299
    %v4301 = vrot.slane %v4273, %v4300
    %v4302 = vcombine.low %v4280, %v4294
    %v4303 = vcombine.high %v4280, %v4294
    %v4304 = vcombine.low %v4287, %v4301
    %v4305 = vcombine.high %v4287, %v4301
    %v4306 = vcombine.low %v4169, %v4173
    %v4307 = vcombine.high %v4169, %v4173
    %v4308 = vcombine.low %v4177, %v4181
    %v4309 = vcombine.high %v4177, %v4181
    %v4311 = vunpack.c.l.s4 1983009808
    %v4312 = vunpack.c.0.s8 %v4311
    %v4313 = vlaneseq
    %v4314 = vshrl.u32 %v4313, 7
    %v4315 = vsub.s32 %v4312, %v4314
    %v4316 = vrot.slane %v4306, %v4315
    %v4318 = vunpack.c.l.s4 1983009808
    %v4319 = vunpack.c.0.s8 %v4318
    %v4320 = vlaneseq
    %v4321 = vshrl.u32 %v4320, 7
    %v4322 = vsub.s32 %v4319, %v4321
    %v4323 = vrot.slane %v4307, %v4322
    %v4325 = vunpack.c.l.s4 1983009808
    %v4326 = vunpack.c.0.s8 %v4325
    %v4327 = vlaneseq
    %v4328 = vshrl.u32 %v4327, 7
    %v4329 = vsub.s32 %v4326, %v4328
    %v4330 = vrot.slane %v4308, %v4329
    %v4332 = vunpack.c.l.s4 1983009808
    %v4333 = vunpack.c.0.s8 %v4332
    %v4334 = vlaneseq
    %v4335 = vshrl.u32 %v4334, 7
    %v4336 = vsub.s32 %v4333, %v4335
    %v4337 = vrot.slane %v4309, %v4336
    %v4338 = vcombine.low %v4316, %v4330
    %v4339 = vcombine.high %v4316, %v4330
    %v4340 = vcombine.low %v4323, %v4337
    %v4341 = vcombine.high %v4323, %v4337
    %v4358 = vpack.c.bf16 %v4230, %v4230
    %v4359 = vpack.c.bf16 %v4231, %v4231
    %v4360 = vpack.c.bf16 %v4232, %v4232
    %v4361 = vpack.c.bf16 %v4233, %v4233
    %v4362 = vpack.c.bf16 %v4266, %v4266
    %v4363 = vpack.c.bf16 %v4267, %v4267
    %v4364 = vpack.c.bf16 %v4268, %v4268
    %v4365 = vpack.c.bf16 %v4269, %v4269
    %v4366 = vpack.c.bf16 %v4302, %v4302
    %v4367 = vpack.c.bf16 %v4303, %v4303
    %v4368 = vpack.c.bf16 %v4304, %v4304
    %v4369 = vpack.c.bf16 %v4305, %v4305
    %v4370 = vpack.c.bf16 %v4338, %v4338
    %v4371 = vpack.c.bf16 %v4339, %v4339
    %v4372 = vpack.c.bf16 %v4340, %v4340
    %v4373 = vpack.c.bf16 %v4341, %v4341
    %v4374 = vld [vmem:[%s1 + $0x1000] sm:$0xff]
    %v4375 = vld [vmem:[%s1 + $0x1008] sm:$0xff]
    %v4376 = vld [vmem:[%s1 + $0x1010] sm:$0xff]
    %v4377 = vld [vmem:[%s1 + $0x1018] sm:$0xff]
    %v4378 = vld [vmem:[%s1 + $0x1020] sm:$0xff]
    %v4379 = vld [vmem:[%s1 + $0x1028] sm:$0xff]
    %v4380 = vld [vmem:[%s1 + $0x1030] sm:$0xff]
    %v4381 = vld [vmem:[%s1 + $0x1038] sm:$0xff]
    %v4382 = vld [vmem:[%s1 + $0x1040] sm:$0xff]
    %v4383 = vld [vmem:[%s1 + $0x1048] sm:$0xff]
    %v4384 = vld [vmem:[%s1 + $0x1050] sm:$0xff]
    %v4385 = vld [vmem:[%s1 + $0x1058] sm:$0xff]
    %v4386 = vld [vmem:[%s1 + $0x1060] sm:$0xff]
    %v4387 = vld [vmem:[%s1 + $0x1068] sm:$0xff]
    %v4388 = vld [vmem:[%s1 + $0x1070] sm:$0xff]
    %v4389 = vld [vmem:[%s1 + $0x1078] sm:$0xff]
    %v4390 = vld [vmem:[%s1 + $0x1080] sm:$0xff]
    %v4391 = vld [vmem:[%s1 + $0x1088] sm:$0xff]
    %v4392 = vld [vmem:[%s1 + $0x1090] sm:$0xff]
    %v4393 = vld [vmem:[%s1 + $0x1098] sm:$0xff]
    %v4394 = vld [vmem:[%s1 + $0x10a0] sm:$0xff]
    %v4395 = vld [vmem:[%s1 + $0x10a8] sm:$0xff]
    %v4396 = vld [vmem:[%s1 + $0x10b0] sm:$0xff]
    %v4397 = vld [vmem:[%s1 + $0x10b8] sm:$0xff]
    %v4398 = vld [vmem:[%s1 + $0x10c0] sm:$0xff]
    %v4399 = vld [vmem:[%s1 + $0x10c8] sm:$0xff]
    %v4400 = vld [vmem:[%s1 + $0x10d0] sm:$0xff]
    %v4401 = vld [vmem:[%s1 + $0x10d8] sm:$0xff]
    %v4402 = vld [vmem:[%s1 + $0x10e0] sm:$0xff]
    %v4403 = vld [vmem:[%s1 + $0x10e8] sm:$0xff]
    %v4404 = vld [vmem:[%s1 + $0x10f0] sm:$0xff]
    %v4405 = vld [vmem:[%s1 + $0x10f8] sm:$0xff]
    %v4406 = vld [vmem:[%s1 + $0x1100] sm:$0xff]
    %v4407 = vld [vmem:[%s1 + $0x1108] sm:$0xff]
    %v4408 = vld [vmem:[%s1 + $0x1110] sm:$0xff]
    %v4409 = vld [vmem:[%s1 + $0x1118] sm:$0xff]
    %v4410 = vld [vmem:[%s1 + $0x1120] sm:$0xff]
    %v4411 = vld [vmem:[%s1 + $0x1128] sm:$0xff]
    %v4412 = vld [vmem:[%s1 + $0x1130] sm:$0xff]
    %v4413 = vld [vmem:[%s1 + $0x1138] sm:$0xff]
    %v4414 = vld [vmem:[%s1 + $0x1140] sm:$0xff]
    %v4415 = vld [vmem:[%s1 + $0x1148] sm:$0xff]
    %v4416 = vld [vmem:[%s1 + $0x1150] sm:$0xff]
    %v4417 = vld [vmem:[%s1 + $0x1158] sm:$0xff]
    %v4418 = vld [vmem:[%s1 + $0x1160] sm:$0xff]
    %v4419 = vld [vmem:[%s1 + $0x1168] sm:$0xff]
    %v4420 = vld [vmem:[%s1 + $0x1170] sm:$0xff]
    %v4421 = vld [vmem:[%s1 + $0x1178] sm:$0xff]
    %v4422 = vld [vmem:[%s1 + $0x1180] sm:$0xff]
    %v4423 = vld [vmem:[%s1 + $0x1188] sm:$0xff]
    %v4424 = vld [vmem:[%s1 + $0x1190] sm:$0xff]
    %v4425 = vld [vmem:[%s1 + $0x1198] sm:$0xff]
    %v4426 = vld [vmem:[%s1 + $0x11a0] sm:$0xff]
    %v4427 = vld [vmem:[%s1 + $0x11a8] sm:$0xff]
    %v4428 = vld [vmem:[%s1 + $0x11b0] sm:$0xff]
    %v4429 = vld [vmem:[%s1 + $0x11b8] sm:$0xff]
    %v4430 = vld [vmem:[%s1 + $0x11c0] sm:$0xff]
    %v4431 = vld [vmem:[%s1 + $0x11c8] sm:$0xff]
    %v4432 = vld [vmem:[%s1 + $0x11d0] sm:$0xff]
    %v4433 = vld [vmem:[%s1 + $0x11d8] sm:$0xff]
    %v4434 = vld [vmem:[%s1 + $0x11e0] sm:$0xff]
    %v4435 = vld [vmem:[%s1 + $0x11e8] sm:$0xff]
    %v4436 = vld [vmem:[%s1 + $0x11f0] sm:$0xff]
    %v4437 = vld [vmem:[%s1 + $0x11f8] sm:$0xff]
    %v4438 = vld [vmem:[%s1 + $0x1200] sm:$0xff]
    %v4439 = vld [vmem:[%s1 + $0x1208] sm:$0xff]
    %v4440 = vld [vmem:[%s1 + $0x1210] sm:$0xff]
    %v4441 = vld [vmem:[%s1 + $0x1218] sm:$0xff]
    %v4442 = vld [vmem:[%s1 + $0x1220] sm:$0xff]
    %v4443 = vld [vmem:[%s1 + $0x1228] sm:$0xff]
    %v4444 = vld [vmem:[%s1 + $0x1230] sm:$0xff]
    %v4445 = vld [vmem:[%s1 + $0x1238] sm:$0xff]
    %v4446 = vld [vmem:[%s1 + $0x1240] sm:$0xff]
    %v4447 = vld [vmem:[%s1 + $0x1248] sm:$0xff]
    %v4448 = vld [vmem:[%s1 + $0x1250] sm:$0xff]
    %v4449 = vld [vmem:[%s1 + $0x1258] sm:$0xff]
    %v4450 = vld [vmem:[%s1 + $0x1260] sm:$0xff]
    %v4451 = vld [vmem:[%s1 + $0x1268] sm:$0xff]
    %v4452 = vld [vmem:[%s1 + $0x1270] sm:$0xff]
    %v4453 = vld [vmem:[%s1 + $0x1278] sm:$0xff]
    %v4454 = vld [vmem:[%s1 + $0x1280] sm:$0xff]
    %v4455 = vld [vmem:[%s1 + $0x1288] sm:$0xff]
    %v4456 = vld [vmem:[%s1 + $0x1290] sm:$0xff]
    %v4457 = vld [vmem:[%s1 + $0x1298] sm:$0xff]
    %v4458 = vld [vmem:[%s1 + $0x12a0] sm:$0xff]
    %v4459 = vld [vmem:[%s1 + $0x12a8] sm:$0xff]
    %v4460 = vld [vmem:[%s1 + $0x12b0] sm:$0xff]
    %v4461 = vld [vmem:[%s1 + $0x12b8] sm:$0xff]
    %v4462 = vld [vmem:[%s1 + $0x12c0] sm:$0xff]
    %v4463 = vld [vmem:[%s1 + $0x12c8] sm:$0xff]
    %v4464 = vld [vmem:[%s1 + $0x12d0] sm:$0xff]
    %v4465 = vld [vmem:[%s1 + $0x12d8] sm:$0xff]
    %v4466 = vld [vmem:[%s1 + $0x12e0] sm:$0xff]
    %v4467 = vld [vmem:[%s1 + $0x12e8] sm:$0xff]
    %v4468 = vld [vmem:[%s1 + $0x12f0] sm:$0xff]
    %v4469 = vld [vmem:[%s1 + $0x12f8] sm:$0xff]
    %v4470 = vld [vmem:[%s1 + $0x1300] sm:$0xff]
    %v4471 = vld [vmem:[%s1 + $0x1308] sm:$0xff]
    %v4472 = vld [vmem:[%s1 + $0x1310] sm:$0xff]
    %v4473 = vld [vmem:[%s1 + $0x1318] sm:$0xff]
    %v4474 = vld [vmem:[%s1 + $0x1320] sm:$0xff]
    %v4475 = vld [vmem:[%s1 + $0x1328] sm:$0xff]
    %v4476 = vld [vmem:[%s1 + $0x1330] sm:$0xff]
    %v4477 = vld [vmem:[%s1 + $0x1338] sm:$0xff]
    %v4478 = vld [vmem:[%s1 + $0x1340] sm:$0xff]
    %v4479 = vld [vmem:[%s1 + $0x1348] sm:$0xff]
    %v4480 = vld [vmem:[%s1 + $0x1350] sm:$0xff]
    %v4481 = vld [vmem:[%s1 + $0x1358] sm:$0xff]
    %v4482 = vld [vmem:[%s1 + $0x1360] sm:$0xff]
    %v4483 = vld [vmem:[%s1 + $0x1368] sm:$0xff]
    %v4484 = vld [vmem:[%s1 + $0x1370] sm:$0xff]
    %v4485 = vld [vmem:[%s1 + $0x1378] sm:$0xff]
    %v4486 = vld [vmem:[%s1 + $0x1380] sm:$0xff]
    %v4487 = vld [vmem:[%s1 + $0x1388] sm:$0xff]
    %v4488 = vld [vmem:[%s1 + $0x1390] sm:$0xff]
    %v4489 = vld [vmem:[%s1 + $0x1398] sm:$0xff]
    %v4490 = vld [vmem:[%s1 + $0x13a0] sm:$0xff]
    %v4491 = vld [vmem:[%s1 + $0x13a8] sm:$0xff]
    %v4492 = vld [vmem:[%s1 + $0x13b0] sm:$0xff]
    %v4493 = vld [vmem:[%s1 + $0x13b8] sm:$0xff]
    %v4494 = vld [vmem:[%s1 + $0x13c0] sm:$0xff]
    %v4495 = vld [vmem:[%s1 + $0x13c8] sm:$0xff]
    %v4496 = vld [vmem:[%s1 + $0x13d0] sm:$0xff]
    %v4497 = vld [vmem:[%s1 + $0x13d8] sm:$0xff]
    %v4498 = vld [vmem:[%s1 + $0x13e0] sm:$0xff]
    %v4499 = vld [vmem:[%s1 + $0x13e8] sm:$0xff]
    %v4500 = vld [vmem:[%s1 + $0x13f0] sm:$0xff]
    %v4501 = vld [vmem:[%s1 + $0x13f8] sm:$0xff]
    %v4502 = vld [vmem:[%s1 + $0x1400] sm:$0xff]
    %v4503 = vld [vmem:[%s1 + $0x1408] sm:$0xff]
    %v4504 = vld [vmem:[%s1 + $0x1410] sm:$0xff]
    %v4505 = vld [vmem:[%s1 + $0x1418] sm:$0xff]
    %v4506 = vld [vmem:[%s1 + $0x1420] sm:$0xff]
    %v4507 = vld [vmem:[%s1 + $0x1428] sm:$0xff]
    %v4508 = vld [vmem:[%s1 + $0x1430] sm:$0xff]
    %v4509 = vld [vmem:[%s1 + $0x1438] sm:$0xff]
    %v4510 = vld [vmem:[%s1 + $0x1440] sm:$0xff]
    %v4511 = vld [vmem:[%s1 + $0x1448] sm:$0xff]
    %v4512 = vld [vmem:[%s1 + $0x1450] sm:$0xff]
    %v4513 = vld [vmem:[%s1 + $0x1458] sm:$0xff]
    %v4514 = vld [vmem:[%s1 + $0x1460] sm:$0xff]
    %v4515 = vld [vmem:[%s1 + $0x1468] sm:$0xff]
    %v4516 = vld [vmem:[%s1 + $0x1470] sm:$0xff]
    %v4517 = vld [vmem:[%s1 + $0x1478] sm:$0xff]
    %v4518 = vld [vmem:[%s1 + $0x1480] sm:$0xff]
    %v4519 = vld [vmem:[%s1 + $0x1488] sm:$0xff]
    %v4520 = vld [vmem:[%s1 + $0x1490] sm:$0xff]
    %v4521 = vld [vmem:[%s1 + $0x1498] sm:$0xff]
    %v4522 = vld [vmem:[%s1 + $0x14a0] sm:$0xff]
    %v4523 = vld [vmem:[%s1 + $0x14a8] sm:$0xff]
    %v4524 = vld [vmem:[%s1 + $0x14b0] sm:$0xff]
    %v4525 = vld [vmem:[%s1 + $0x14b8] sm:$0xff]
    %v4526 = vld [vmem:[%s1 + $0x14c0] sm:$0xff]
    %v4527 = vld [vmem:[%s1 + $0x14c8] sm:$0xff]
    %v4528 = vld [vmem:[%s1 + $0x14d0] sm:$0xff]
    %v4529 = vld [vmem:[%s1 + $0x14d8] sm:$0xff]
    %v4530 = vld [vmem:[%s1 + $0x14e0] sm:$0xff]
    %v4531 = vld [vmem:[%s1 + $0x14e8] sm:$0xff]
    %v4532 = vld [vmem:[%s1 + $0x14f0] sm:$0xff]
    %v4533 = vld [vmem:[%s1 + $0x14f8] sm:$0xff]
    %v4534 = vld [vmem:[%s1 + $0x1500] sm:$0xff]
    %v4535 = vld [vmem:[%s1 + $0x1508] sm:$0xff]
    %v4536 = vld [vmem:[%s1 + $0x1510] sm:$0xff]
    %v4537 = vld [vmem:[%s1 + $0x1518] sm:$0xff]
    %v4538 = vld [vmem:[%s1 + $0x1520] sm:$0xff]
    %v4539 = vld [vmem:[%s1 + $0x1528] sm:$0xff]
    %v4540 = vld [vmem:[%s1 + $0x1530] sm:$0xff]
    %v4541 = vld [vmem:[%s1 + $0x1538] sm:$0xff]
    %v4542 = vld [vmem:[%s1 + $0x1540] sm:$0xff]
    %v4543 = vld [vmem:[%s1 + $0x1548] sm:$0xff]
    %v4544 = vld [vmem:[%s1 + $0x1550] sm:$0xff]
    %v4545 = vld [vmem:[%s1 + $0x1558] sm:$0xff]
    %v4546 = vld [vmem:[%s1 + $0x1560] sm:$0xff]
    %v4547 = vld [vmem:[%s1 + $0x1568] sm:$0xff]
    %v4548 = vld [vmem:[%s1 + $0x1570] sm:$0xff]
    %v4549 = vld [vmem:[%s1 + $0x1578] sm:$0xff]
    %v4550 = vld [vmem:[%s1 + $0x1580] sm:$0xff]
    %v4551 = vld [vmem:[%s1 + $0x1588] sm:$0xff]
    %v4552 = vld [vmem:[%s1 + $0x1590] sm:$0xff]
    %v4553 = vld [vmem:[%s1 + $0x1598] sm:$0xff]
    %v4554 = vld [vmem:[%s1 + $0x15a0] sm:$0xff]
    %v4555 = vld [vmem:[%s1 + $0x15a8] sm:$0xff]
    %v4556 = vld [vmem:[%s1 + $0x15b0] sm:$0xff]
    %v4557 = vld [vmem:[%s1 + $0x15b8] sm:$0xff]
    %v4558 = vld [vmem:[%s1 + $0x15c0] sm:$0xff]
    %v4559 = vld [vmem:[%s1 + $0x15c8] sm:$0xff]
    %v4560 = vld [vmem:[%s1 + $0x15d0] sm:$0xff]
    %v4561 = vld [vmem:[%s1 + $0x15d8] sm:$0xff]
    %v4562 = vld [vmem:[%s1 + $0x15e0] sm:$0xff]
    %v4563 = vld [vmem:[%s1 + $0x15e8] sm:$0xff]
    %v4564 = vld [vmem:[%s1 + $0x15f0] sm:$0xff]
    %v4565 = vld [vmem:[%s1 + $0x15f8] sm:$0xff]
    %v4566 = vld [vmem:[%s1 + $0x1600] sm:$0xff]
    %v4567 = vld [vmem:[%s1 + $0x1608] sm:$0xff]
    %v4568 = vld [vmem:[%s1 + $0x1610] sm:$0xff]
    %v4569 = vld [vmem:[%s1 + $0x1618] sm:$0xff]
    %v4570 = vld [vmem:[%s1 + $0x1620] sm:$0xff]
    %v4571 = vld [vmem:[%s1 + $0x1628] sm:$0xff]
    %v4572 = vld [vmem:[%s1 + $0x1630] sm:$0xff]
    %v4573 = vld [vmem:[%s1 + $0x1638] sm:$0xff]
    %v4574 = vld [vmem:[%s1 + $0x1640] sm:$0xff]
    %v4575 = vld [vmem:[%s1 + $0x1648] sm:$0xff]
    %v4576 = vld [vmem:[%s1 + $0x1650] sm:$0xff]
    %v4577 = vld [vmem:[%s1 + $0x1658] sm:$0xff]
    %v4578 = vld [vmem:[%s1 + $0x1660] sm:$0xff]
    %v4579 = vld [vmem:[%s1 + $0x1668] sm:$0xff]
    %v4580 = vld [vmem:[%s1 + $0x1670] sm:$0xff]
    %v4581 = vld [vmem:[%s1 + $0x1678] sm:$0xff]
    %v4582 = vld [vmem:[%s1 + $0x1680] sm:$0xff]
    %v4583 = vld [vmem:[%s1 + $0x1688] sm:$0xff]
    %v4584 = vld [vmem:[%s1 + $0x1690] sm:$0xff]
    %v4585 = vld [vmem:[%s1 + $0x1698] sm:$0xff]
    %v4586 = vld [vmem:[%s1 + $0x16a0] sm:$0xff]
    %v4587 = vld [vmem:[%s1 + $0x16a8] sm:$0xff]
    %v4588 = vld [vmem:[%s1 + $0x16b0] sm:$0xff]
    %v4589 = vld [vmem:[%s1 + $0x16b8] sm:$0xff]
    %v4590 = vld [vmem:[%s1 + $0x16c0] sm:$0xff]
    %v4591 = vld [vmem:[%s1 + $0x16c8] sm:$0xff]
    %v4592 = vld [vmem:[%s1 + $0x16d0] sm:$0xff]
    %v4593 = vld [vmem:[%s1 + $0x16d8] sm:$0xff]
    %v4594 = vld [vmem:[%s1 + $0x16e0] sm:$0xff]
    %v4595 = vld [vmem:[%s1 + $0x16e8] sm:$0xff]
    %v4596 = vld [vmem:[%s1 + $0x16f0] sm:$0xff]
    %v4597 = vld [vmem:[%s1 + $0x16f8] sm:$0xff]
    %v4598 = vld [vmem:[%s1 + $0x1700] sm:$0xff]
    %v4599 = vld [vmem:[%s1 + $0x1708] sm:$0xff]
    %v4600 = vld [vmem:[%s1 + $0x1710] sm:$0xff]
    %v4601 = vld [vmem:[%s1 + $0x1718] sm:$0xff]
    %v4602 = vld [vmem:[%s1 + $0x1720] sm:$0xff]
    %v4603 = vld [vmem:[%s1 + $0x1728] sm:$0xff]
    %v4604 = vld [vmem:[%s1 + $0x1730] sm:$0xff]
    %v4605 = vld [vmem:[%s1 + $0x1738] sm:$0xff]
    %v4606 = vld [vmem:[%s1 + $0x1740] sm:$0xff]
    %v4607 = vld [vmem:[%s1 + $0x1748] sm:$0xff]
    %v4608 = vld [vmem:[%s1 + $0x1750] sm:$0xff]
    %v4609 = vld [vmem:[%s1 + $0x1758] sm:$0xff]
    %v4610 = vld [vmem:[%s1 + $0x1760] sm:$0xff]
    %v4611 = vld [vmem:[%s1 + $0x1768] sm:$0xff]
    %v4612 = vld [vmem:[%s1 + $0x1770] sm:$0xff]
    %v4613 = vld [vmem:[%s1 + $0x1778] sm:$0xff]
    %v4614 = vld [vmem:[%s1 + $0x1780] sm:$0xff]
    %v4615 = vld [vmem:[%s1 + $0x1788] sm:$0xff]
    %v4616 = vld [vmem:[%s1 + $0x1790] sm:$0xff]
    %v4617 = vld [vmem:[%s1 + $0x1798] sm:$0xff]
    %v4618 = vld [vmem:[%s1 + $0x17a0] sm:$0xff]
    %v4619 = vld [vmem:[%s1 + $0x17a8] sm:$0xff]
    %v4620 = vld [vmem:[%s1 + $0x17b0] sm:$0xff]
    %v4621 = vld [vmem:[%s1 + $0x17b8] sm:$0xff]
    %v4622 = vld [vmem:[%s1 + $0x17c0] sm:$0xff]
    %v4623 = vld [vmem:[%s1 + $0x17c8] sm:$0xff]
    %v4624 = vld [vmem:[%s1 + $0x17d0] sm:$0xff]
    %v4625 = vld [vmem:[%s1 + $0x17d8] sm:$0xff]
    %v4626 = vld [vmem:[%s1 + $0x17e0] sm:$0xff]
    %v4627 = vld [vmem:[%s1 + $0x17e8] sm:$0xff]
    %v4628 = vld [vmem:[%s1 + $0x17f0] sm:$0xff]
    %v4629 = vld [vmem:[%s1 + $0x17f8] sm:$0xff]
    %v4886 = vunpack.c.l.b16 %v4374
    %v4887 = vunpack.c.h.b16 %v4374
    %v4888 = vunpack.c.l.b16 %v4375
    %v4889 = vunpack.c.h.b16 %v4375
    %v4890 = vunpack.c.l.b16 %v4376
    %v4891 = vunpack.c.h.b16 %v4376
    %v4892 = vunpack.c.l.b16 %v4377
    %v4893 = vunpack.c.h.b16 %v4377
    %v4894 = vunpack.c.l.b16 %v4378
    %v4895 = vunpack.c.h.b16 %v4378
    %v4896 = vunpack.c.l.b16 %v4379
    %v4897 = vunpack.c.h.b16 %v4379
    %v4898 = vunpack.c.l.b16 %v4380
    %v4899 = vunpack.c.h.b16 %v4380
    %v4900 = vunpack.c.l.b16 %v4381
    %v4901 = vunpack.c.h.b16 %v4381
    %v4902 = vunpack.c.l.b16 %v4382
    %v4903 = vunpack.c.h.b16 %v4382
    %v4904 = vunpack.c.l.b16 %v4383
    %v4905 = vunpack.c.h.b16 %v4383
    %v4906 = vunpack.c.l.b16 %v4384
    %v4907 = vunpack.c.h.b16 %v4384
    %v4908 = vunpack.c.l.b16 %v4385
    %v4909 = vunpack.c.h.b16 %v4385
    %v4910 = vunpack.c.l.b16 %v4386
    %v4911 = vunpack.c.h.b16 %v4386
    %v4912 = vunpack.c.l.b16 %v4387
    %v4913 = vunpack.c.h.b16 %v4387
    %v4914 = vunpack.c.l.b16 %v4388
    %v4915 = vunpack.c.h.b16 %v4388
    %v4916 = vunpack.c.l.b16 %v4389
    %v4917 = vunpack.c.h.b16 %v4389
    %v4918 = vunpack.c.l.b16 %v4390
    %v4919 = vunpack.c.h.b16 %v4390
    %v4920 = vunpack.c.l.b16 %v4391
    %v4921 = vunpack.c.h.b16 %v4391
    %v4922 = vunpack.c.l.b16 %v4392
    %v4923 = vunpack.c.h.b16 %v4392
    %v4924 = vunpack.c.l.b16 %v4393
    %v4925 = vunpack.c.h.b16 %v4393
    %v4926 = vunpack.c.l.b16 %v4394
    %v4927 = vunpack.c.h.b16 %v4394
    %v4928 = vunpack.c.l.b16 %v4395
    %v4929 = vunpack.c.h.b16 %v4395
    %v4930 = vunpack.c.l.b16 %v4396
    %v4931 = vunpack.c.h.b16 %v4396
    %v4932 = vunpack.c.l.b16 %v4397
    %v4933 = vunpack.c.h.b16 %v4397
    %v4934 = vunpack.c.l.b16 %v4398
    %v4935 = vunpack.c.h.b16 %v4398
    %v4936 = vunpack.c.l.b16 %v4399
    %v4937 = vunpack.c.h.b16 %v4399
    %v4938 = vunpack.c.l.b16 %v4400
    %v4939 = vunpack.c.h.b16 %v4400
    %v4940 = vunpack.c.l.b16 %v4401
    %v4941 = vunpack.c.h.b16 %v4401
    %v4942 = vunpack.c.l.b16 %v4402
    %v4943 = vunpack.c.h.b16 %v4402
    %v4944 = vunpack.c.l.b16 %v4403
    %v4945 = vunpack.c.h.b16 %v4403
    %v4946 = vunpack.c.l.b16 %v4404
    %v4947 = vunpack.c.h.b16 %v4404
    %v4948 = vunpack.c.l.b16 %v4405
    %v4949 = vunpack.c.h.b16 %v4405
    %v4950 = vunpack.c.l.b16 %v4406
    %v4951 = vunpack.c.h.b16 %v4406
    %v4952 = vunpack.c.l.b16 %v4407
    %v4953 = vunpack.c.h.b16 %v4407
    %v4954 = vunpack.c.l.b16 %v4408
    %v4955 = vunpack.c.h.b16 %v4408
    %v4956 = vunpack.c.l.b16 %v4409
    %v4957 = vunpack.c.h.b16 %v4409
    %v4958 = vunpack.c.l.b16 %v4410
    %v4959 = vunpack.c.h.b16 %v4410
    %v4960 = vunpack.c.l.b16 %v4411
    %v4961 = vunpack.c.h.b16 %v4411
    %v4962 = vunpack.c.l.b16 %v4412
    %v4963 = vunpack.c.h.b16 %v4412
    %v4964 = vunpack.c.l.b16 %v4413
    %v4965 = vunpack.c.h.b16 %v4413
    %v4966 = vunpack.c.l.b16 %v4414
    %v4967 = vunpack.c.h.b16 %v4414
    %v4968 = vunpack.c.l.b16 %v4415
    %v4969 = vunpack.c.h.b16 %v4415
    %v4970 = vunpack.c.l.b16 %v4416
    %v4971 = vunpack.c.h.b16 %v4416
    %v4972 = vunpack.c.l.b16 %v4417
    %v4973 = vunpack.c.h.b16 %v4417
    %v4974 = vunpack.c.l.b16 %v4418
    %v4975 = vunpack.c.h.b16 %v4418
    %v4976 = vunpack.c.l.b16 %v4419
    %v4977 = vunpack.c.h.b16 %v4419
    %v4978 = vunpack.c.l.b16 %v4420
    %v4979 = vunpack.c.h.b16 %v4420
    %v4980 = vunpack.c.l.b16 %v4421
    %v4981 = vunpack.c.h.b16 %v4421
    %v4982 = vunpack.c.l.b16 %v4422
    %v4983 = vunpack.c.h.b16 %v4422
    %v4984 = vunpack.c.l.b16 %v4423
    %v4985 = vunpack.c.h.b16 %v4423
    %v4986 = vunpack.c.l.b16 %v4424
    %v4987 = vunpack.c.h.b16 %v4424
    %v4988 = vunpack.c.l.b16 %v4425
    %v4989 = vunpack.c.h.b16 %v4425
    %v4990 = vunpack.c.l.b16 %v4426
    %v4991 = vunpack.c.h.b16 %v4426
    %v4992 = vunpack.c.l.b16 %v4427
    %v4993 = vunpack.c.h.b16 %v4427
    %v4994 = vunpack.c.l.b16 %v4428
    %v4995 = vunpack.c.h.b16 %v4428
    %v4996 = vunpack.c.l.b16 %v4429
    %v4997 = vunpack.c.h.b16 %v4429
    %v4998 = vunpack.c.l.b16 %v4430
    %v4999 = vunpack.c.h.b16 %v4430
    %v5000 = vunpack.c.l.b16 %v4431
    %v5001 = vunpack.c.h.b16 %v4431
    %v5002 = vunpack.c.l.b16 %v4432
    %v5003 = vunpack.c.h.b16 %v4432
    %v5004 = vunpack.c.l.b16 %v4433
    %v5005 = vunpack.c.h.b16 %v4433
    %v5006 = vunpack.c.l.b16 %v4434
    %v5007 = vunpack.c.h.b16 %v4434
    %v5008 = vunpack.c.l.b16 %v4435
    %v5009 = vunpack.c.h.b16 %v4435
    %v5010 = vunpack.c.l.b16 %v4436
    %v5011 = vunpack.c.h.b16 %v4436
    %v5012 = vunpack.c.l.b16 %v4437
    %v5013 = vunpack.c.h.b16 %v4437
    %v5014 = vunpack.c.l.b16 %v4438
    %v5015 = vunpack.c.h.b16 %v4438
    %v5016 = vunpack.c.l.b16 %v4439
    %v5017 = vunpack.c.h.b16 %v4439
    %v5018 = vunpack.c.l.b16 %v4440
    %v5019 = vunpack.c.h.b16 %v4440
    %v5020 = vunpack.c.l.b16 %v4441
    %v5021 = vunpack.c.h.b16 %v4441
    %v5022 = vunpack.c.l.b16 %v4442
    %v5023 = vunpack.c.h.b16 %v4442
    %v5024 = vunpack.c.l.b16 %v4443
    %v5025 = vunpack.c.h.b16 %v4443
    %v5026 = vunpack.c.l.b16 %v4444
    %v5027 = vunpack.c.h.b16 %v4444
    %v5028 = vunpack.c.l.b16 %v4445
    %v5029 = vunpack.c.h.b16 %v4445
    %v5030 = vunpack.c.l.b16 %v4446
    %v5031 = vunpack.c.h.b16 %v4446
    %v5032 = vunpack.c.l.b16 %v4447
    %v5033 = vunpack.c.h.b16 %v4447
    %v5034 = vunpack.c.l.b16 %v4448
    %v5035 = vunpack.c.h.b16 %v4448
    %v5036 = vunpack.c.l.b16 %v4449
    %v5037 = vunpack.c.h.b16 %v4449
    %v5038 = vunpack.c.l.b16 %v4450
    %v5039 = vunpack.c.h.b16 %v4450
    %v5040 = vunpack.c.l.b16 %v4451
    %v5041 = vunpack.c.h.b16 %v4451
    %v5042 = vunpack.c.l.b16 %v4452
    %v5043 = vunpack.c.h.b16 %v4452
    %v5044 = vunpack.c.l.b16 %v4453
    %v5045 = vunpack.c.h.b16 %v4453
    %v5046 = vunpack.c.l.b16 %v4454
    %v5047 = vunpack.c.h.b16 %v4454
    %v5048 = vunpack.c.l.b16 %v4455
    %v5049 = vunpack.c.h.b16 %v4455
    %v5050 = vunpack.c.l.b16 %v4456
    %v5051 = vunpack.c.h.b16 %v4456
    %v5052 = vunpack.c.l.b16 %v4457
    %v5053 = vunpack.c.h.b16 %v4457
    %v5054 = vunpack.c.l.b16 %v4458
    %v5055 = vunpack.c.h.b16 %v4458
    %v5056 = vunpack.c.l.b16 %v4459
    %v5057 = vunpack.c.h.b16 %v4459
    %v5058 = vunpack.c.l.b16 %v4460
    %v5059 = vunpack.c.h.b16 %v4460
    %v5060 = vunpack.c.l.b16 %v4461
    %v5061 = vunpack.c.h.b16 %v4461
    %v5062 = vunpack.c.l.b16 %v4462
    %v5063 = vunpack.c.h.b16 %v4462
    %v5064 = vunpack.c.l.b16 %v4463
    %v5065 = vunpack.c.h.b16 %v4463
    %v5066 = vunpack.c.l.b16 %v4464
    %v5067 = vunpack.c.h.b16 %v4464
    %v5068 = vunpack.c.l.b16 %v4465
    %v5069 = vunpack.c.h.b16 %v4465
    %v5070 = vunpack.c.l.b16 %v4466
    %v5071 = vunpack.c.h.b16 %v4466
    %v5072 = vunpack.c.l.b16 %v4467
    %v5073 = vunpack.c.h.b16 %v4467
    %v5074 = vunpack.c.l.b16 %v4468
    %v5075 = vunpack.c.h.b16 %v4468
    %v5076 = vunpack.c.l.b16 %v4469
    %v5077 = vunpack.c.h.b16 %v4469
    %v5078 = vunpack.c.l.b16 %v4470
    %v5079 = vunpack.c.h.b16 %v4470
    %v5080 = vunpack.c.l.b16 %v4471
    %v5081 = vunpack.c.h.b16 %v4471
    %v5082 = vunpack.c.l.b16 %v4472
    %v5083 = vunpack.c.h.b16 %v4472
    %v5084 = vunpack.c.l.b16 %v4473
    %v5085 = vunpack.c.h.b16 %v4473
    %v5086 = vunpack.c.l.b16 %v4474
    %v5087 = vunpack.c.h.b16 %v4474
    %v5088 = vunpack.c.l.b16 %v4475
    %v5089 = vunpack.c.h.b16 %v4475
    %v5090 = vunpack.c.l.b16 %v4476
    %v5091 = vunpack.c.h.b16 %v4476
    %v5092 = vunpack.c.l.b16 %v4477
    %v5093 = vunpack.c.h.b16 %v4477
    %v5094 = vunpack.c.l.b16 %v4478
    %v5095 = vunpack.c.h.b16 %v4478
    %v5096 = vunpack.c.l.b16 %v4479
    %v5097 = vunpack.c.h.b16 %v4479
    %v5098 = vunpack.c.l.b16 %v4480
    %v5099 = vunpack.c.h.b16 %v4480
    %v5100 = vunpack.c.l.b16 %v4481
    %v5101 = vunpack.c.h.b16 %v4481
    %v5102 = vunpack.c.l.b16 %v4482
    %v5103 = vunpack.c.h.b16 %v4482
    %v5104 = vunpack.c.l.b16 %v4483
    %v5105 = vunpack.c.h.b16 %v4483
    %v5106 = vunpack.c.l.b16 %v4484
    %v5107 = vunpack.c.h.b16 %v4484
    %v5108 = vunpack.c.l.b16 %v4485
    %v5109 = vunpack.c.h.b16 %v4485
    %v5110 = vunpack.c.l.b16 %v4486
    %v5111 = vunpack.c.h.b16 %v4486
    %v5112 = vunpack.c.l.b16 %v4487
    %v5113 = vunpack.c.h.b16 %v4487
    %v5114 = vunpack.c.l.b16 %v4488
    %v5115 = vunpack.c.h.b16 %v4488
    %v5116 = vunpack.c.l.b16 %v4489
    %v5117 = vunpack.c.h.b16 %v4489
    %v5118 = vunpack.c.l.b16 %v4490
    %v5119 = vunpack.c.h.b16 %v4490
    %v5120 = vunpack.c.l.b16 %v4491
    %v5121 = vunpack.c.h.b16 %v4491
    %v5122 = vunpack.c.l.b16 %v4492
    %v5123 = vunpack.c.h.b16 %v4492
    %v5124 = vunpack.c.l.b16 %v4493
    %v5125 = vunpack.c.h.b16 %v4493
    %v5126 = vunpack.c.l.b16 %v4494
    %v5127 = vunpack.c.h.b16 %v4494
    %v5128 = vunpack.c.l.b16 %v4495
    %v5129 = vunpack.c.h.b16 %v4495
    %v5130 = vunpack.c.l.b16 %v4496
    %v5131 = vunpack.c.h.b16 %v4496
    %v5132 = vunpack.c.l.b16 %v4497
    %v5133 = vunpack.c.h.b16 %v4497
    %v5134 = vunpack.c.l.b16 %v4498
    %v5135 = vunpack.c.h.b16 %v4498
    %v5136 = vunpack.c.l.b16 %v4499
    %v5137 = vunpack.c.h.b16 %v4499
    %v5138 = vunpack.c.l.b16 %v4500
    %v5139 = vunpack.c.h.b16 %v4500
    %v5140 = vunpack.c.l.b16 %v4501
    %v5141 = vunpack.c.h.b16 %v4501
    %v5142 = vunpack.c.l.b16 %v4502
    %v5143 = vunpack.c.h.b16 %v4502
    %v5144 = vunpack.c.l.b16 %v4503
    %v5145 = vunpack.c.h.b16 %v4503
    %v5146 = vunpack.c.l.b16 %v4504
    %v5147 = vunpack.c.h.b16 %v4504
    %v5148 = vunpack.c.l.b16 %v4505
    %v5149 = vunpack.c.h.b16 %v4505
    %v5150 = vunpack.c.l.b16 %v4506
    %v5151 = vunpack.c.h.b16 %v4506
    %v5152 = vunpack.c.l.b16 %v4507
    %v5153 = vunpack.c.h.b16 %v4507
    %v5154 = vunpack.c.l.b16 %v4508
    %v5155 = vunpack.c.h.b16 %v4508
    %v5156 = vunpack.c.l.b16 %v4509
    %v5157 = vunpack.c.h.b16 %v4509
    %v5158 = vunpack.c.l.b16 %v4510
    %v5159 = vunpack.c.h.b16 %v4510
    %v5160 = vunpack.c.l.b16 %v4511
    %v5161 = vunpack.c.h.b16 %v4511
    %v5162 = vunpack.c.l.b16 %v4512
    %v5163 = vunpack.c.h.b16 %v4512
    %v5164 = vunpack.c.l.b16 %v4513
    %v5165 = vunpack.c.h.b16 %v4513
    %v5166 = vunpack.c.l.b16 %v4514
    %v5167 = vunpack.c.h.b16 %v4514
    %v5168 = vunpack.c.l.b16 %v4515
    %v5169 = vunpack.c.h.b16 %v4515
    %v5170 = vunpack.c.l.b16 %v4516
    %v5171 = vunpack.c.h.b16 %v4516
    %v5172 = vunpack.c.l.b16 %v4517
    %v5173 = vunpack.c.h.b16 %v4517
    %v5174 = vunpack.c.l.b16 %v4518
    %v5175 = vunpack.c.h.b16 %v4518
    %v5176 = vunpack.c.l.b16 %v4519
    %v5177 = vunpack.c.h.b16 %v4519
    %v5178 = vunpack.c.l.b16 %v4520
    %v5179 = vunpack.c.h.b16 %v4520
    %v5180 = vunpack.c.l.b16 %v4521
    %v5181 = vunpack.c.h.b16 %v4521
    %v5182 = vunpack.c.l.b16 %v4522
    %v5183 = vunpack.c.h.b16 %v4522
    %v5184 = vunpack.c.l.b16 %v4523
    %v5185 = vunpack.c.h.b16 %v4523
    %v5186 = vunpack.c.l.b16 %v4524
    %v5187 = vunpack.c.h.b16 %v4524
    %v5188 = vunpack.c.l.b16 %v4525
    %v5189 = vunpack.c.h.b16 %v4525
    %v5190 = vunpack.c.l.b16 %v4526
    %v5191 = vunpack.c.h.b16 %v4526
    %v5192 = vunpack.c.l.b16 %v4527
    %v5193 = vunpack.c.h.b16 %v4527
    %v5194 = vunpack.c.l.b16 %v4528
    %v5195 = vunpack.c.h.b16 %v4528
    %v5196 = vunpack.c.l.b16 %v4529
    %v5197 = vunpack.c.h.b16 %v4529
    %v5198 = vunpack.c.l.b16 %v4530
    %v5199 = vunpack.c.h.b16 %v4530
    %v5200 = vunpack.c.l.b16 %v4531
    %v5201 = vunpack.c.h.b16 %v4531
    %v5202 = vunpack.c.l.b16 %v4532
    %v5203 = vunpack.c.h.b16 %v4532
    %v5204 = vunpack.c.l.b16 %v4533
    %v5205 = vunpack.c.h.b16 %v4533
    %v5206 = vunpack.c.l.b16 %v4534
    %v5207 = vunpack.c.h.b16 %v4534
    %v5208 = vunpack.c.l.b16 %v4535
    %v5209 = vunpack.c.h.b16 %v4535
    %v5210 = vunpack.c.l.b16 %v4536
    %v5211 = vunpack.c.h.b16 %v4536
    %v5212 = vunpack.c.l.b16 %v4537
    %v5213 = vunpack.c.h.b16 %v4537
    %v5214 = vunpack.c.l.b16 %v4538
    %v5215 = vunpack.c.h.b16 %v4538
    %v5216 = vunpack.c.l.b16 %v4539
    %v5217 = vunpack.c.h.b16 %v4539
    %v5218 = vunpack.c.l.b16 %v4540
    %v5219 = vunpack.c.h.b16 %v4540
    %v5220 = vunpack.c.l.b16 %v4541
    %v5221 = vunpack.c.h.b16 %v4541
    %v5222 = vunpack.c.l.b16 %v4542
    %v5223 = vunpack.c.h.b16 %v4542
    %v5224 = vunpack.c.l.b16 %v4543
    %v5225 = vunpack.c.h.b16 %v4543
    %v5226 = vunpack.c.l.b16 %v4544
    %v5227 = vunpack.c.h.b16 %v4544
    %v5228 = vunpack.c.l.b16 %v4545
    %v5229 = vunpack.c.h.b16 %v4545
    %v5230 = vunpack.c.l.b16 %v4546
    %v5231 = vunpack.c.h.b16 %v4546
    %v5232 = vunpack.c.l.b16 %v4547
    %v5233 = vunpack.c.h.b16 %v4547
    %v5234 = vunpack.c.l.b16 %v4548
    %v5235 = vunpack.c.h.b16 %v4548
    %v5236 = vunpack.c.l.b16 %v4549
    %v5237 = vunpack.c.h.b16 %v4549
    %v5238 = vunpack.c.l.b16 %v4550
    %v5239 = vunpack.c.h.b16 %v4550
    %v5240 = vunpack.c.l.b16 %v4551
    %v5241 = vunpack.c.h.b16 %v4551
    %v5242 = vunpack.c.l.b16 %v4552
    %v5243 = vunpack.c.h.b16 %v4552
    %v5244 = vunpack.c.l.b16 %v4553
    %v5245 = vunpack.c.h.b16 %v4553
    %v5246 = vunpack.c.l.b16 %v4554
    %v5247 = vunpack.c.h.b16 %v4554
    %v5248 = vunpack.c.l.b16 %v4555
    %v5249 = vunpack.c.h.b16 %v4555
    %v5250 = vunpack.c.l.b16 %v4556
    %v5251 = vunpack.c.h.b16 %v4556
    %v5252 = vunpack.c.l.b16 %v4557
    %v5253 = vunpack.c.h.b16 %v4557
    %v5254 = vunpack.c.l.b16 %v4558
    %v5255 = vunpack.c.h.b16 %v4558
    %v5256 = vunpack.c.l.b16 %v4559
    %v5257 = vunpack.c.h.b16 %v4559
    %v5258 = vunpack.c.l.b16 %v4560
    %v5259 = vunpack.c.h.b16 %v4560
    %v5260 = vunpack.c.l.b16 %v4561
    %v5261 = vunpack.c.h.b16 %v4561
    %v5262 = vunpack.c.l.b16 %v4562
    %v5263 = vunpack.c.h.b16 %v4562
    %v5264 = vunpack.c.l.b16 %v4563
    %v5265 = vunpack.c.h.b16 %v4563
    %v5266 = vunpack.c.l.b16 %v4564
    %v5267 = vunpack.c.h.b16 %v4564
    %v5268 = vunpack.c.l.b16 %v4565
    %v5269 = vunpack.c.h.b16 %v4565
    %v5270 = vunpack.c.l.b16 %v4566
    %v5271 = vunpack.c.h.b16 %v4566
    %v5272 = vunpack.c.l.b16 %v4567
    %v5273 = vunpack.c.h.b16 %v4567
    %v5274 = vunpack.c.l.b16 %v4568
    %v5275 = vunpack.c.h.b16 %v4568
    %v5276 = vunpack.c.l.b16 %v4569
    %v5277 = vunpack.c.h.b16 %v4569
    %v5278 = vunpack.c.l.b16 %v4570
    %v5279 = vunpack.c.h.b16 %v4570
    %v5280 = vunpack.c.l.b16 %v4571
    %v5281 = vunpack.c.h.b16 %v4571
    %v5282 = vunpack.c.l.b16 %v4572
    %v5283 = vunpack.c.h.b16 %v4572
    %v5284 = vunpack.c.l.b16 %v4573
    %v5285 = vunpack.c.h.b16 %v4573
    %v5286 = vunpack.c.l.b16 %v4574
    %v5287 = vunpack.c.h.b16 %v4574
    %v5288 = vunpack.c.l.b16 %v4575
    %v5289 = vunpack.c.h.b16 %v4575
    %v5290 = vunpack.c.l.b16 %v4576
    %v5291 = vunpack.c.h.b16 %v4576
    %v5292 = vunpack.c.l.b16 %v4577
    %v5293 = vunpack.c.h.b16 %v4577
    %v5294 = vunpack.c.l.b16 %v4578
    %v5295 = vunpack.c.h.b16 %v4578
    %v5296 = vunpack.c.l.b16 %v4579
    %v5297 = vunpack.c.h.b16 %v4579
    %v5298 = vunpack.c.l.b16 %v4580
    %v5299 = vunpack.c.h.b16 %v4580
    %v5300 = vunpack.c.l.b16 %v4581
    %v5301 = vunpack.c.h.b16 %v4581
    %v5302 = vunpack.c.l.b16 %v4582
    %v5303 = vunpack.c.h.b16 %v4582
    %v5304 = vunpack.c.l.b16 %v4583
    %v5305 = vunpack.c.h.b16 %v4583
    %v5306 = vunpack.c.l.b16 %v4584
    %v5307 = vunpack.c.h.b16 %v4584
    %v5308 = vunpack.c.l.b16 %v4585
    %v5309 = vunpack.c.h.b16 %v4585
    %v5310 = vunpack.c.l.b16 %v4586
    %v5311 = vunpack.c.h.b16 %v4586
    %v5312 = vunpack.c.l.b16 %v4587
    %v5313 = vunpack.c.h.b16 %v4587
    %v5314 = vunpack.c.l.b16 %v4588
    %v5315 = vunpack.c.h.b16 %v4588
    %v5316 = vunpack.c.l.b16 %v4589
    %v5317 = vunpack.c.h.b16 %v4589
    %v5318 = vunpack.c.l.b16 %v4590
    %v5319 = vunpack.c.h.b16 %v4590
    %v5320 = vunpack.c.l.b16 %v4591
    %v5321 = vunpack.c.h.b16 %v4591
    %v5322 = vunpack.c.l.b16 %v4592
    %v5323 = vunpack.c.h.b16 %v4592
    %v5324 = vunpack.c.l.b16 %v4593
    %v5325 = vunpack.c.h.b16 %v4593
    %v5326 = vunpack.c.l.b16 %v4594
    %v5327 = vunpack.c.h.b16 %v4594
    %v5328 = vunpack.c.l.b16 %v4595
    %v5329 = vunpack.c.h.b16 %v4595
    %v5330 = vunpack.c.l.b16 %v4596
    %v5331 = vunpack.c.h.b16 %v4596
    %v5332 = vunpack.c.l.b16 %v4597
    %v5333 = vunpack.c.h.b16 %v4597
    %v5334 = vunpack.c.l.b16 %v4598
    %v5335 = vunpack.c.h.b16 %v4598
    %v5336 = vunpack.c.l.b16 %v4599
    %v5337 = vunpack.c.h.b16 %v4599
    %v5338 = vunpack.c.l.b16 %v4600
    %v5339 = vunpack.c.h.b16 %v4600
    %v5340 = vunpack.c.l.b16 %v4601
    %v5341 = vunpack.c.h.b16 %v4601
    %v5342 = vunpack.c.l.b16 %v4602
    %v5343 = vunpack.c.h.b16 %v4602
    %v5344 = vunpack.c.l.b16 %v4603
    %v5345 = vunpack.c.h.b16 %v4603
    %v5346 = vunpack.c.l.b16 %v4604
    %v5347 = vunpack.c.h.b16 %v4604
    %v5348 = vunpack.c.l.b16 %v4605
    %v5349 = vunpack.c.h.b16 %v4605
    %v5350 = vunpack.c.l.b16 %v4606
    %v5351 = vunpack.c.h.b16 %v4606
    %v5352 = vunpack.c.l.b16 %v4607
    %v5353 = vunpack.c.h.b16 %v4607
    %v5354 = vunpack.c.l.b16 %v4608
    %v5355 = vunpack.c.h.b16 %v4608
    %v5356 = vunpack.c.l.b16 %v4609
    %v5357 = vunpack.c.h.b16 %v4609
    %v5358 = vunpack.c.l.b16 %v4610
    %v5359 = vunpack.c.h.b16 %v4610
    %v5360 = vunpack.c.l.b16 %v4611
    %v5361 = vunpack.c.h.b16 %v4611
    %v5362 = vunpack.c.l.b16 %v4612
    %v5363 = vunpack.c.h.b16 %v4612
    %v5364 = vunpack.c.l.b16 %v4613
    %v5365 = vunpack.c.h.b16 %v4613
    %v5366 = vunpack.c.l.b16 %v4614
    %v5367 = vunpack.c.h.b16 %v4614
    %v5368 = vunpack.c.l.b16 %v4615
    %v5369 = vunpack.c.h.b16 %v4615
    %v5370 = vunpack.c.l.b16 %v4616
    %v5371 = vunpack.c.h.b16 %v4616
    %v5372 = vunpack.c.l.b16 %v4617
    %v5373 = vunpack.c.h.b16 %v4617
    %v5374 = vunpack.c.l.b16 %v4618
    %v5375 = vunpack.c.h.b16 %v4618
    %v5376 = vunpack.c.l.b16 %v4619
    %v5377 = vunpack.c.h.b16 %v4619
    %v5378 = vunpack.c.l.b16 %v4620
    %v5379 = vunpack.c.h.b16 %v4620
    %v5380 = vunpack.c.l.b16 %v4621
    %v5381 = vunpack.c.h.b16 %v4621
    %v5382 = vunpack.c.l.b16 %v4622
    %v5383 = vunpack.c.h.b16 %v4622
    %v5384 = vunpack.c.l.b16 %v4623
    %v5385 = vunpack.c.h.b16 %v4623
    %v5386 = vunpack.c.l.b16 %v4624
    %v5387 = vunpack.c.h.b16 %v4624
    %v5388 = vunpack.c.l.b16 %v4625
    %v5389 = vunpack.c.h.b16 %v4625
    %v5390 = vunpack.c.l.b16 %v4626
    %v5391 = vunpack.c.h.b16 %v4626
    %v5392 = vunpack.c.l.b16 %v4627
    %v5393 = vunpack.c.h.b16 %v4627
    %v5394 = vunpack.c.l.b16 %v4628
    %v5395 = vunpack.c.h.b16 %v4628
    %v5396 = vunpack.c.l.b16 %v4629
    %v5397 = vunpack.c.h.b16 %v4629
    %v5398 = vpack.c.b16 %v4888, %v4886
    %v5399 = vpack.c.b16 %v4889, %v4887
    %v5400 = vpack.c.b16 %v4892, %v4890
    %v5401 = vpack.c.b16 %v4893, %v4891
    %v5402 = vpack.c.b16 %v4896, %v4894
    %v5403 = vpack.c.b16 %v4897, %v4895
    %v5404 = vpack.c.b16 %v4900, %v4898
    %v5405 = vpack.c.b16 %v4901, %v4899
    %v5406 = vpack.c.b16 %v4904, %v4902
    %v5407 = vpack.c.b16 %v4905, %v4903
    %v5408 = vpack.c.b16 %v4908, %v4906
    %v5409 = vpack.c.b16 %v4909, %v4907
    %v5410 = vpack.c.b16 %v4912, %v4910
    %v5411 = vpack.c.b16 %v4913, %v4911
    %v5412 = vpack.c.b16 %v4916, %v4914
    %v5413 = vpack.c.b16 %v4917, %v4915
    %v5414 = vpack.c.b16 %v4920, %v4918
    %v5415 = vpack.c.b16 %v4921, %v4919
    %v5416 = vpack.c.b16 %v4924, %v4922
    %v5417 = vpack.c.b16 %v4925, %v4923
    %v5418 = vpack.c.b16 %v4928, %v4926
    %v5419 = vpack.c.b16 %v4929, %v4927
    %v5420 = vpack.c.b16 %v4932, %v4930
    %v5421 = vpack.c.b16 %v4933, %v4931
    %v5422 = vpack.c.b16 %v4936, %v4934
    %v5423 = vpack.c.b16 %v4937, %v4935
    %v5424 = vpack.c.b16 %v4940, %v4938
    %v5425 = vpack.c.b16 %v4941, %v4939
    %v5426 = vpack.c.b16 %v4944, %v4942
    %v5427 = vpack.c.b16 %v4945, %v4943
    %v5428 = vpack.c.b16 %v4948, %v4946
    %v5429 = vpack.c.b16 %v4949, %v4947
    %v5430 = vpack.c.b16 %v4952, %v4950
    %v5431 = vpack.c.b16 %v4953, %v4951
    %v5432 = vpack.c.b16 %v4956, %v4954
    %v5433 = vpack.c.b16 %v4957, %v4955
    %v5434 = vpack.c.b16 %v4960, %v4958
    %v5435 = vpack.c.b16 %v4961, %v4959
    %v5436 = vpack.c.b16 %v4964, %v4962
    %v5437 = vpack.c.b16 %v4965, %v4963
    %v5438 = vpack.c.b16 %v4968, %v4966
    %v5439 = vpack.c.b16 %v4969, %v4967
    %v5440 = vpack.c.b16 %v4972, %v4970
    %v5441 = vpack.c.b16 %v4973, %v4971
    %v5442 = vpack.c.b16 %v4976, %v4974
    %v5443 = vpack.c.b16 %v4977, %v4975
    %v5444 = vpack.c.b16 %v4980, %v4978
    %v5445 = vpack.c.b16 %v4981, %v4979
    %v5446 = vpack.c.b16 %v4984, %v4982
    %v5447 = vpack.c.b16 %v4985, %v4983
    %v5448 = vpack.c.b16 %v4988, %v4986
    %v5449 = vpack.c.b16 %v4989, %v4987
    %v5450 = vpack.c.b16 %v4992, %v4990
    %v5451 = vpack.c.b16 %v4993, %v4991
    %v5452 = vpack.c.b16 %v4996, %v4994
    %v5453 = vpack.c.b16 %v4997, %v4995
    %v5454 = vpack.c.b16 %v5000, %v4998
    %v5455 = vpack.c.b16 %v5001, %v4999
    %v5456 = vpack.c.b16 %v5004, %v5002
    %v5457 = vpack.c.b16 %v5005, %v5003
    %v5458 = vpack.c.b16 %v5008, %v5006
    %v5459 = vpack.c.b16 %v5009, %v5007
    %v5460 = vpack.c.b16 %v5012, %v5010
    %v5461 = vpack.c.b16 %v5013, %v5011
    %v5462 = vpack.c.b16 %v5016, %v5014
    %v5463 = vpack.c.b16 %v5017, %v5015
    %v5464 = vpack.c.b16 %v5020, %v5018
    %v5465 = vpack.c.b16 %v5021, %v5019
    %v5466 = vpack.c.b16 %v5024, %v5022
    %v5467 = vpack.c.b16 %v5025, %v5023
    %v5468 = vpack.c.b16 %v5028, %v5026
    %v5469 = vpack.c.b16 %v5029, %v5027
    %v5470 = vpack.c.b16 %v5032, %v5030
    %v5471 = vpack.c.b16 %v5033, %v5031
    %v5472 = vpack.c.b16 %v5036, %v5034
    %v5473 = vpack.c.b16 %v5037, %v5035
    %v5474 = vpack.c.b16 %v5040, %v5038
    %v5475 = vpack.c.b16 %v5041, %v5039
    %v5476 = vpack.c.b16 %v5044, %v5042
    %v5477 = vpack.c.b16 %v5045, %v5043
    %v5478 = vpack.c.b16 %v5048, %v5046
    %v5479 = vpack.c.b16 %v5049, %v5047
    %v5480 = vpack.c.b16 %v5052, %v5050
    %v5481 = vpack.c.b16 %v5053, %v5051
    %v5482 = vpack.c.b16 %v5056, %v5054
    %v5483 = vpack.c.b16 %v5057, %v5055
    %v5484 = vpack.c.b16 %v5060, %v5058
    %v5485 = vpack.c.b16 %v5061, %v5059
    %v5486 = vpack.c.b16 %v5064, %v5062
    %v5487 = vpack.c.b16 %v5065, %v5063
    %v5488 = vpack.c.b16 %v5068, %v5066
    %v5489 = vpack.c.b16 %v5069, %v5067
    %v5490 = vpack.c.b16 %v5072, %v5070
    %v5491 = vpack.c.b16 %v5073, %v5071
    %v5492 = vpack.c.b16 %v5076, %v5074
    %v5493 = vpack.c.b16 %v5077, %v5075
    %v5494 = vpack.c.b16 %v5080, %v5078
    %v5495 = vpack.c.b16 %v5081, %v5079
    %v5496 = vpack.c.b16 %v5084, %v5082
    %v5497 = vpack.c.b16 %v5085, %v5083
    %v5498 = vpack.c.b16 %v5088, %v5086
    %v5499 = vpack.c.b16 %v5089, %v5087
    %v5500 = vpack.c.b16 %v5092, %v5090
    %v5501 = vpack.c.b16 %v5093, %v5091
    %v5502 = vpack.c.b16 %v5096, %v5094
    %v5503 = vpack.c.b16 %v5097, %v5095
    %v5504 = vpack.c.b16 %v5100, %v5098
    %v5505 = vpack.c.b16 %v5101, %v5099
    %v5506 = vpack.c.b16 %v5104, %v5102
    %v5507 = vpack.c.b16 %v5105, %v5103
    %v5508 = vpack.c.b16 %v5108, %v5106
    %v5509 = vpack.c.b16 %v5109, %v5107
    %v5510 = vpack.c.b16 %v5112, %v5110
    %v5511 = vpack.c.b16 %v5113, %v5111
    %v5512 = vpack.c.b16 %v5116, %v5114
    %v5513 = vpack.c.b16 %v5117, %v5115
    %v5514 = vpack.c.b16 %v5120, %v5118
    %v5515 = vpack.c.b16 %v5121, %v5119
    %v5516 = vpack.c.b16 %v5124, %v5122
    %v5517 = vpack.c.b16 %v5125, %v5123
    %v5518 = vpack.c.b16 %v5128, %v5126
    %v5519 = vpack.c.b16 %v5129, %v5127
    %v5520 = vpack.c.b16 %v5132, %v5130
    %v5521 = vpack.c.b16 %v5133, %v5131
    %v5522 = vpack.c.b16 %v5136, %v5134
    %v5523 = vpack.c.b16 %v5137, %v5135
    %v5524 = vpack.c.b16 %v5140, %v5138
    %v5525 = vpack.c.b16 %v5141, %v5139
    %v5526 = vpack.c.b16 %v5144, %v5142
    %v5527 = vpack.c.b16 %v5145, %v5143
    %v5528 = vpack.c.b16 %v5148, %v5146
    %v5529 = vpack.c.b16 %v5149, %v5147
    %v5530 = vpack.c.b16 %v5152, %v5150
    %v5531 = vpack.c.b16 %v5153, %v5151
    %v5532 = vpack.c.b16 %v5156, %v5154
    %v5533 = vpack.c.b16 %v5157, %v5155
    %v5534 = vpack.c.b16 %v5160, %v5158
    %v5535 = vpack.c.b16 %v5161, %v5159
    %v5536 = vpack.c.b16 %v5164, %v5162
    %v5537 = vpack.c.b16 %v5165, %v5163
    %v5538 = vpack.c.b16 %v5168, %v5166
    %v5539 = vpack.c.b16 %v5169, %v5167
    %v5540 = vpack.c.b16 %v5172, %v5170
    %v5541 = vpack.c.b16 %v5173, %v5171
    %v5542 = vpack.c.b16 %v5176, %v5174
    %v5543 = vpack.c.b16 %v5177, %v5175
    %v5544 = vpack.c.b16 %v5180, %v5178
    %v5545 = vpack.c.b16 %v5181, %v5179
    %v5546 = vpack.c.b16 %v5184, %v5182
    %v5547 = vpack.c.b16 %v5185, %v5183
    %v5548 = vpack.c.b16 %v5188, %v5186
    %v5549 = vpack.c.b16 %v5189, %v5187
    %v5550 = vpack.c.b16 %v5192, %v5190
    %v5551 = vpack.c.b16 %v5193, %v5191
    %v5552 = vpack.c.b16 %v5196, %v5194
    %v5553 = vpack.c.b16 %v5197, %v5195
    %v5554 = vpack.c.b16 %v5200, %v5198
    %v5555 = vpack.c.b16 %v5201, %v5199
    %v5556 = vpack.c.b16 %v5204, %v5202
    %v5557 = vpack.c.b16 %v5205, %v5203
    %v5558 = vpack.c.b16 %v5208, %v5206
    %v5559 = vpack.c.b16 %v5209, %v5207
    %v5560 = vpack.c.b16 %v5212, %v5210
    %v5561 = vpack.c.b16 %v5213, %v5211
    %v5562 = vpack.c.b16 %v5216, %v5214
    %v5563 = vpack.c.b16 %v5217, %v5215
    %v5564 = vpack.c.b16 %v5220, %v5218
    %v5565 = vpack.c.b16 %v5221, %v5219
    %v5566 = vpack.c.b16 %v5224, %v5222
    %v5567 = vpack.c.b16 %v5225, %v5223
    %v5568 = vpack.c.b16 %v5228, %v5226
    %v5569 = vpack.c.b16 %v5229, %v5227
    %v5570 = vpack.c.b16 %v5232, %v5230
    %v5571 = vpack.c.b16 %v5233, %v5231
    %v5572 = vpack.c.b16 %v5236, %v5234
    %v5573 = vpack.c.b16 %v5237, %v5235
    %v5574 = vpack.c.b16 %v5240, %v5238
    %v5575 = vpack.c.b16 %v5241, %v5239
    %v5576 = vpack.c.b16 %v5244, %v5242
    %v5577 = vpack.c.b16 %v5245, %v5243
    %v5578 = vpack.c.b16 %v5248, %v5246
    %v5579 = vpack.c.b16 %v5249, %v5247
    %v5580 = vpack.c.b16 %v5252, %v5250
    %v5581 = vpack.c.b16 %v5253, %v5251
    %v5582 = vpack.c.b16 %v5256, %v5254
    %v5583 = vpack.c.b16 %v5257, %v5255
    %v5584 = vpack.c.b16 %v5260, %v5258
    %v5585 = vpack.c.b16 %v5261, %v5259
    %v5586 = vpack.c.b16 %v5264, %v5262
    %v5587 = vpack.c.b16 %v5265, %v5263
    %v5588 = vpack.c.b16 %v5268, %v5266
    %v5589 = vpack.c.b16 %v5269, %v5267
    %v5590 = vpack.c.b16 %v5272, %v5270
    %v5591 = vpack.c.b16 %v5273, %v5271
    %v5592 = vpack.c.b16 %v5276, %v5274
    %v5593 = vpack.c.b16 %v5277, %v5275
    %v5594 = vpack.c.b16 %v5280, %v5278
    %v5595 = vpack.c.b16 %v5281, %v5279
    %v5596 = vpack.c.b16 %v5284, %v5282
    %v5597 = vpack.c.b16 %v5285, %v5283
    %v5598 = vpack.c.b16 %v5288, %v5286
    %v5599 = vpack.c.b16 %v5289, %v5287
    %v5600 = vpack.c.b16 %v5292, %v5290
    %v5601 = vpack.c.b16 %v5293, %v5291
    %v5602 = vpack.c.b16 %v5296, %v5294
    %v5603 = vpack.c.b16 %v5297, %v5295
    %v5604 = vpack.c.b16 %v5300, %v5298
    %v5605 = vpack.c.b16 %v5301, %v5299
    %v5606 = vpack.c.b16 %v5304, %v5302
    %v5607 = vpack.c.b16 %v5305, %v5303
    %v5608 = vpack.c.b16 %v5308, %v5306
    %v5609 = vpack.c.b16 %v5309, %v5307
    %v5610 = vpack.c.b16 %v5312, %v5310
    %v5611 = vpack.c.b16 %v5313, %v5311
    %v5612 = vpack.c.b16 %v5316, %v5314
    %v5613 = vpack.c.b16 %v5317, %v5315
    %v5614 = vpack.c.b16 %v5320, %v5318
    %v5615 = vpack.c.b16 %v5321, %v5319
    %v5616 = vpack.c.b16 %v5324, %v5322
    %v5617 = vpack.c.b16 %v5325, %v5323
    %v5618 = vpack.c.b16 %v5328, %v5326
    %v5619 = vpack.c.b16 %v5329, %v5327
    %v5620 = vpack.c.b16 %v5332, %v5330
    %v5621 = vpack.c.b16 %v5333, %v5331
    %v5622 = vpack.c.b16 %v5336, %v5334
    %v5623 = vpack.c.b16 %v5337, %v5335
    %v5624 = vpack.c.b16 %v5340, %v5338
    %v5625 = vpack.c.b16 %v5341, %v5339
    %v5626 = vpack.c.b16 %v5344, %v5342
    %v5627 = vpack.c.b16 %v5345, %v5343
    %v5628 = vpack.c.b16 %v5348, %v5346
    %v5629 = vpack.c.b16 %v5349, %v5347
    %v5630 = vpack.c.b16 %v5352, %v5350
    %v5631 = vpack.c.b16 %v5353, %v5351
    %v5632 = vpack.c.b16 %v5356, %v5354
    %v5633 = vpack.c.b16 %v5357, %v5355
    %v5634 = vpack.c.b16 %v5360, %v5358
    %v5635 = vpack.c.b16 %v5361, %v5359
    %v5636 = vpack.c.b16 %v5364, %v5362
    %v5637 = vpack.c.b16 %v5365, %v5363
    %v5638 = vpack.c.b16 %v5368, %v5366
    %v5639 = vpack.c.b16 %v5369, %v5367
    %v5640 = vpack.c.b16 %v5372, %v5370
    %v5641 = vpack.c.b16 %v5373, %v5371
    %v5642 = vpack.c.b16 %v5376, %v5374
    %v5643 = vpack.c.b16 %v5377, %v5375
    %v5644 = vpack.c.b16 %v5380, %v5378
    %v5645 = vpack.c.b16 %v5381, %v5379
    %v5646 = vpack.c.b16 %v5384, %v5382
    %v5647 = vpack.c.b16 %v5385, %v5383
    %v5648 = vpack.c.b16 %v5388, %v5386
    %v5649 = vpack.c.b16 %v5389, %v5387
    %v5650 = vpack.c.b16 %v5392, %v5390
    %v5651 = vpack.c.b16 %v5393, %v5391
    %v5652 = vpack.c.b16 %v5396, %v5394
    %v5653 = vpack.c.b16 %v5397, %v5395
    %5910 = vmatprep.subr.bf16.mxu0 %v5399
    %5911 = vmatpush1.bf16.msra.mxu0 %v5398
    %5912 = vmatprep.subr.bf16.mxu0 %v5401
    %5913 = vmatpush1.bf16.msra.mxu0 %v5400
    %5914 = vmatprep.subr.bf16.mxu0 %v5403
    %5915 = vmatpush1.bf16.msra.mxu0 %v5402
    %5916 = vmatprep.subr.bf16.mxu0 %v5405
    %5917 = vmatpush1.bf16.msra.mxu0 %v5404
    %5918 = vmatprep.subr.bf16.mxu0 %v5407
    %5919 = vmatpush1.bf16.msra.mxu0 %v5406
    %5920 = vmatprep.subr.bf16.mxu0 %v5409
    %5921 = vmatpush1.bf16.msra.mxu0 %v5408
    %5922 = vmatprep.subr.bf16.mxu0 %v5411
    %5923 = vmatpush1.bf16.msra.mxu0 %v5410
    %5924 = vmatprep.subr.bf16.mxu0 %v5413
    %5925 = vmatpush1.bf16.msra.mxu0 %v5412
    %5926 = vmatprep.subr.bf16.mxu0 %v5415
    %5927 = vmatpush1.bf16.msra.mxu0 %v5414
    %5928 = vmatprep.subr.bf16.mxu0 %v5417
    %5929 = vmatpush1.bf16.msra.mxu0 %v5416
    %5930 = vmatprep.subr.bf16.mxu0 %v5419
    %5931 = vmatpush1.bf16.msra.mxu0 %v5418
    %5932 = vmatprep.subr.bf16.mxu0 %v5421
    %5933 = vmatpush1.bf16.msra.mxu0 %v5420
    %5934 = vmatprep.subr.bf16.mxu0 %v5423
    %5935 = vmatpush1.bf16.msra.mxu0 %v5422
    %5936 = vmatprep.subr.bf16.mxu0 %v5425
    %5937 = vmatpush1.bf16.msra.mxu0 %v5424
    %5938 = vmatprep.subr.bf16.mxu0 %v5427
    %5939 = vmatpush1.bf16.msra.mxu0 %v5426
    %5940 = vmatprep.subr.bf16.mxu0 %v5429
    %5941 = vmatpush1.bf16.msra.mxu0 %v5428
    %5942 = vmatprep.mubr.bf16.mxu0 %v4359
    %5943 = vmatmul.mubr.bf16.gmra.mrb[0].mxu0 %v4358
    %v5944 = vpop.f32.mrb[0].mxu0
    %v5945 = vadd.f32 0.0, %v5944
    %v5946 = vpop.f32.mrb[0].mxu0
    %v5947 = vadd.f32 0.0, %v5946
    %v5948 = vpop.f32.mrb[0].mxu0
    %v5949 = vpop.f32.mrb[0].mxu0
    %5950 = vdwg.mxu0
    %5951 = vmatprep.subr.bf16.mxu0 %v5431
    %5952 = vmatpush1.bf16.msra.mxu0 %v5430
    %5953 = vmatprep.subr.bf16.mxu0 %v5433
    %5954 = vmatpush1.bf16.msra.mxu0 %v5432
    %5955 = vmatprep.subr.bf16.mxu0 %v5435
    %5956 = vmatpush1.bf16.msra.mxu0 %v5434
    %5957 = vmatprep.subr.bf16.mxu0 %v5437
    %5958 = vmatpush1.bf16.msra.mxu0 %v5436
    %5959 = vmatprep.subr.bf16.mxu0 %v5439
    %5960 = vmatpush1.bf16.msra.mxu0 %v5438
    %5961 = vmatprep.subr.bf16.mxu0 %v5441
    %5962 = vmatpush1.bf16.msra.mxu0 %v5440
    %5963 = vmatprep.subr.bf16.mxu0 %v5443
    %5964 = vmatpush1.bf16.msra.mxu0 %v5442
    %5965 = vmatprep.subr.bf16.mxu0 %v5445
    %5966 = vmatpush1.bf16.msra.mxu0 %v5444
    %5967 = vmatprep.subr.bf16.mxu0 %v5447
    %5968 = vmatpush1.bf16.msra.mxu0 %v5446
    %5969 = vmatprep.subr.bf16.mxu0 %v5449
    %5970 = vmatpush1.bf16.msra.mxu0 %v5448
    %5971 = vmatprep.subr.bf16.mxu0 %v5451
    %5972 = vmatpush1.bf16.msra.mxu0 %v5450
    %5973 = vmatprep.subr.bf16.mxu0 %v5453
    %5974 = vmatpush1.bf16.msra.mxu0 %v5452
    %5975 = vmatprep.subr.bf16.mxu0 %v5455
    %5976 = vmatpush1.bf16.msra.mxu0 %v5454
    %5977 = vmatprep.subr.bf16.mxu0 %v5457
    %5978 = vmatpush1.bf16.msra.mxu0 %v5456
    %5979 = vmatprep.subr.bf16.mxu0 %v5459
    %5980 = vmatpush1.bf16.msra.mxu0 %v5458
    %5981 = vmatprep.subr.bf16.mxu0 %v5461
    %5982 = vmatpush1.bf16.msra.mxu0 %v5460
    %5983 = vmatprep.mubr.bf16.mxu0 %v4361
    %5984 = vmatmul.mubr.bf16.gmra.mrb[0].mxu0 %v4360
    %v5985 = vpop.f32.mrb[0].mxu0
    %v5986 = vadd.f32 %v5945, %v5985
    %v5987 = vpop.f32.mrb[0].mxu0
    %v5988 = vadd.f32 %v5947, %v5987
    %v5989 = vpop.f32.mrb[0].mxu0
    %v5990 = vpop.f32.mrb[0].mxu0
    %5991 = vdwg.mxu0
    %5992 = vmatprep.subr.bf16.mxu0 %v5463
    %5993 = vmatpush1.bf16.msra.mxu0 %v5462
    %5994 = vmatprep.subr.bf16.mxu0 %v5465
    %5995 = vmatpush1.bf16.msra.mxu0 %v5464
    %5996 = vmatprep.subr.bf16.mxu0 %v5467
    %5997 = vmatpush1.bf16.msra.mxu0 %v5466
    %5998 = vmatprep.subr.bf16.mxu0 %v5469
    %5999 = vmatpush1.bf16.msra.mxu0 %v5468
    %6000 = vmatprep.subr.bf16.mxu0 %v5471
    %6001 = vmatpush1.bf16.msra.mxu0 %v5470
    %6002 = vmatprep.subr.bf16.mxu0 %v5473
    %6003 = vmatpush1.bf16.msra.mxu0 %v5472
    %6004 = vmatprep.subr.bf16.mxu0 %v5475
    %6005 = vmatpush1.bf16.msra.mxu0 %v5474
    %6006 = vmatprep.subr.bf16.mxu0 %v5477
    %6007 = vmatpush1.bf16.msra.mxu0 %v5476
    %6008 = vmatprep.subr.bf16.mxu0 %v5479
    %6009 = vmatpush1.bf16.msra.mxu0 %v5478
    %6010 = vmatprep.subr.bf16.mxu0 %v5481
    %6011 = vmatpush1.bf16.msra.mxu0 %v5480
    %6012 = vmatprep.subr.bf16.mxu0 %v5483
    %6013 = vmatpush1.bf16.msra.mxu0 %v5482
    %6014 = vmatprep.subr.bf16.mxu0 %v5485
    %6015 = vmatpush1.bf16.msra.mxu0 %v5484
    %6016 = vmatprep.subr.bf16.mxu0 %v5487
    %6017 = vmatpush1.bf16.msra.mxu0 %v5486
    %6018 = vmatprep.subr.bf16.mxu0 %v5489
    %6019 = vmatpush1.bf16.msra.mxu0 %v5488
    %6020 = vmatprep.subr.bf16.mxu0 %v5491
    %6021 = vmatpush1.bf16.msra.mxu0 %v5490
    %6022 = vmatprep.subr.bf16.mxu0 %v5493
    %6023 = vmatpush1.bf16.msra.mxu0 %v5492
    %6024 = vmatprep.mubr.bf16.mxu0 %v4363
    %6025 = vmatmul.mubr.bf16.gmra.mrb[0].mxu0 %v4362
    %v6026 = vpop.f32.mrb[0].mxu0
    %v6027 = vadd.f32 %v5986, %v6026
    %v6028 = vpop.f32.mrb[0].mxu0
    %v6029 = vadd.f32 %v5988, %v6028
    %v6030 = vpop.f32.mrb[0].mxu0
    %v6031 = vpop.f32.mrb[0].mxu0
    %6032 = vdwg.mxu0
    %6033 = vmatprep.subr.bf16.mxu0 %v5495
    %6034 = vmatpush1.bf16.msra.mxu0 %v5494
    %6035 = vmatprep.subr.bf16.mxu0 %v5497
    %6036 = vmatpush1.bf16.msra.mxu0 %v5496
    %6037 = vmatprep.subr.bf16.mxu0 %v5499
    %6038 = vmatpush1.bf16.msra.mxu0 %v5498
    %6039 = vmatprep.subr.bf16.mxu0 %v5501
    %6040 = vmatpush1.bf16.msra.mxu0 %v5500
    %6041 = vmatprep.subr.bf16.mxu0 %v5503
    %6042 = vmatpush1.bf16.msra.mxu0 %v5502
    %6043 = vmatprep.subr.bf16.mxu0 %v5505
    %6044 = vmatpush1.bf16.msra.mxu0 %v5504
    %6045 = vmatprep.subr.bf16.mxu0 %v5507
    %6046 = vmatpush1.bf16.msra.mxu0 %v5506
    %6047 = vmatprep.subr.bf16.mxu0 %v5509
    %6048 = vmatpush1.bf16.msra.mxu0 %v5508
    %6049 = vmatprep.subr.bf16.mxu0 %v5511
    %6050 = vmatpush1.bf16.msra.mxu0 %v5510
    %6051 = vmatprep.subr.bf16.mxu0 %v5513
    %6052 = vmatpush1.bf16.msra.mxu0 %v5512
    %6053 = vmatprep.subr.bf16.mxu0 %v5515
    %6054 = vmatpush1.bf16.msra.mxu0 %v5514
    %6055 = vmatprep.subr.bf16.mxu0 %v5517
    %6056 = vmatpush1.bf16.msra.mxu0 %v5516
    %6057 = vmatprep.subr.bf16.mxu0 %v5519
    %6058 = vmatpush1.bf16.msra.mxu0 %v5518
    %6059 = vmatprep.subr.bf16.mxu0 %v5521
    %6060 = vmatpush1.bf16.msra.mxu0 %v5520
    %6061 = vmatprep.subr.bf16.mxu0 %v5523
    %6062 = vmatpush1.bf16.msra.mxu0 %v5522
    %6063 = vmatprep.subr.bf16.mxu0 %v5525
    %6064 = vmatpush1.bf16.msra.mxu0 %v5524
    %6065 = vmatprep.mubr.bf16.mxu0 %v4365
    %6066 = vmatmul.mubr.bf16.gmra.mrb[0].mxu0 %v4364
    %v6067 = vpop.f32.mrb[0].mxu0
    %v6068 = vadd.f32 %v6027, %v6067
    %v6069 = vpop.f32.mrb[0].mxu0
    %v6070 = vadd.f32 %v6029, %v6069
    %v6071 = vpop.f32.mrb[0].mxu0
    %v6072 = vpop.f32.mrb[0].mxu0
    %6073 = vdwg.mxu0
    %6074 = vmatprep.subr.bf16.mxu0 %v5527
    %6075 = vmatpush1.bf16.msra.mxu0 %v5526
    %6076 = vmatprep.subr.bf16.mxu0 %v5529
    %6077 = vmatpush1.bf16.msra.mxu0 %v5528
    %6078 = vmatprep.subr.bf16.mxu0 %v5531
    %6079 = vmatpush1.bf16.msra.mxu0 %v5530
    %6080 = vmatprep.subr.bf16.mxu0 %v5533
    %6081 = vmatpush1.bf16.msra.mxu0 %v5532
    %6082 = vmatprep.subr.bf16.mxu0 %v5535
    %6083 = vmatpush1.bf16.msra.mxu0 %v5534
    %6084 = vmatprep.subr.bf16.mxu0 %v5537
    %6085 = vmatpush1.bf16.msra.mxu0 %v5536
    %6086 = vmatprep.subr.bf16.mxu0 %v5539
    %6087 = vmatpush1.bf16.msra.mxu0 %v5538
    %6088 = vmatprep.subr.bf16.mxu0 %v5541
    %6089 = vmatpush1.bf16.msra.mxu0 %v5540
    %6090 = vmatprep.subr.bf16.mxu0 %v5543
    %6091 = vmatpush1.bf16.msra.mxu0 %v5542
    %6092 = vmatprep.subr.bf16.mxu0 %v5545
    %6093 = vmatpush1.bf16.msra.mxu0 %v5544
    %6094 = vmatprep.subr.bf16.mxu0 %v5547
    %6095 = vmatpush1.bf16.msra.mxu0 %v5546
    %6096 = vmatprep.subr.bf16.mxu0 %v5549
    %6097 = vmatpush1.bf16.msra.mxu0 %v5548
    %6098 = vmatprep.subr.bf16.mxu0 %v5551
    %6099 = vmatpush1.bf16.msra.mxu0 %v5550
    %6100 = vmatprep.subr.bf16.mxu0 %v5553
    %6101 = vmatpush1.bf16.msra.mxu0 %v5552
    %6102 = vmatprep.subr.bf16.mxu0 %v5555
    %6103 = vmatpush1.bf16.msra.mxu0 %v5554
    %6104 = vmatprep.subr.bf16.mxu0 %v5557
    %6105 = vmatpush1.bf16.msra.mxu0 %v5556
    %6106 = vmatprep.mubr.bf16.mxu0 %v4367
    %6107 = vmatmul.mubr.bf16.gmra.mrb[0].mxu0 %v4366
    %v6108 = vpop.f32.mrb[0].mxu0
    %v6109 = vadd.f32 %v6068, %v6108
    %v6110 = vpop.f32.mrb[0].mxu0
    %v6111 = vadd.f32 %v6070, %v6110
    %v6112 = vpop.f32.mrb[0].mxu0
    %v6113 = vpop.f32.mrb[0].mxu0
    %6114 = vdwg.mxu0
    %6115 = vmatprep.subr.bf16.mxu0 %v5559
    %6116 = vmatpush1.bf16.msra.mxu0 %v5558
    %6117 = vmatprep.subr.bf16.mxu0 %v5561
    %6118 = vmatpush1.bf16.msra.mxu0 %v5560
    %6119 = vmatprep.subr.bf16.mxu0 %v5563
    %6120 = vmatpush1.bf16.msra.mxu0 %v5562
    %6121 = vmatprep.subr.bf16.mxu0 %v5565
    %6122 = vmatpush1.bf16.msra.mxu0 %v5564
    %6123 = vmatprep.subr.bf16.mxu0 %v5567
    %6124 = vmatpush1.bf16.msra.mxu0 %v5566
    %6125 = vmatprep.subr.bf16.mxu0 %v5569
    %6126 = vmatpush1.bf16.msra.mxu0 %v5568
    %6127 = vmatprep.subr.bf16.mxu0 %v5571
    %6128 = vmatpush1.bf16.msra.mxu0 %v5570
    %6129 = vmatprep.subr.bf16.mxu0 %v5573
    %6130 = vmatpush1.bf16.msra.mxu0 %v5572
    %6131 = vmatprep.subr.bf16.mxu0 %v5575
    %6132 = vmatpush1.bf16.msra.mxu0 %v5574
    %6133 = vmatprep.subr.bf16.mxu0 %v5577
    %6134 = vmatpush1.bf16.msra.mxu0 %v5576
    %6135 = vmatprep.subr.bf16.mxu0 %v5579
    %6136 = vmatpush1.bf16.msra.mxu0 %v5578
    %6137 = vmatprep.subr.bf16.mxu0 %v5581
    %6138 = vmatpush1.bf16.msra.mxu0 %v5580
    %6139 = vmatprep.subr.bf16.mxu0 %v5583
    %6140 = vmatpush1.bf16.msra.mxu0 %v5582
    %6141 = vmatprep.subr.bf16.mxu0 %v5585
    %6142 = vmatpush1.bf16.msra.mxu0 %v5584
    %6143 = vmatprep.subr.bf16.mxu0 %v5587
    %6144 = vmatpush1.bf16.msra.mxu0 %v5586
    %6145 = vmatprep.subr.bf16.mxu0 %v5589
    %6146 = vmatpush1.bf16.msra.mxu0 %v5588
    %6147 = vmatprep.mubr.bf16.mxu0 %v4369
    %6148 = vmatmul.mubr.bf16.gmra.mrb[0].mxu0 %v4368
    %v6149 = vpop.f32.mrb[0].mxu0
    %v6150 = vadd.f32 %v6109, %v6149
    %v6151 = vpop.f32.mrb[0].mxu0
    %v6152 = vadd.f32 %v6111, %v6151
    %v6153 = vpop.f32.mrb[0].mxu0
    %v6154 = vpop.f32.mrb[0].mxu0
    %6155 = vdwg.mxu0
    %6156 = vmatprep.subr.bf16.mxu0 %v5591
    %6157 = vmatpush1.bf16.msra.mxu0 %v5590
    %6158 = vmatprep.subr.bf16.mxu0 %v5593
    %6159 = vmatpush1.bf16.msra.mxu0 %v5592
    %6160 = vmatprep.subr.bf16.mxu0 %v5595
    %6161 = vmatpush1.bf16.msra.mxu0 %v5594
    %6162 = vmatprep.subr.bf16.mxu0 %v5597
    %6163 = vmatpush1.bf16.msra.mxu0 %v5596
    %6164 = vmatprep.subr.bf16.mxu0 %v5599
    %6165 = vmatpush1.bf16.msra.mxu0 %v5598
    %6166 = vmatprep.subr.bf16.mxu0 %v5601
    %6167 = vmatpush1.bf16.msra.mxu0 %v5600
    %6168 = vmatprep.subr.bf16.mxu0 %v5603
    %6169 = vmatpush1.bf16.msra.mxu0 %v5602
    %6170 = vmatprep.subr.bf16.mxu0 %v5605
    %6171 = vmatpush1.bf16.msra.mxu0 %v5604
    %6172 = vmatprep.subr.bf16.mxu0 %v5607
    %6173 = vmatpush1.bf16.msra.mxu0 %v5606
    %6174 = vmatprep.subr.bf16.mxu0 %v5609
    %6175 = vmatpush1.bf16.msra.mxu0 %v5608
    %6176 = vmatprep.subr.bf16.mxu0 %v5611
    %6177 = vmatpush1.bf16.msra.mxu0 %v5610
    %6178 = vmatprep.subr.bf16.mxu0 %v5613
    %6179 = vmatpush1.bf16.msra.mxu0 %v5612
    %6180 = vmatprep.subr.bf16.mxu0 %v5615
    %6181 = vmatpush1.bf16.msra.mxu0 %v5614
    %6182 = vmatprep.subr.bf16.mxu0 %v5617
    %6183 = vmatpush1.bf16.msra.mxu0 %v5616
    %6184 = vmatprep.subr.bf16.mxu0 %v5619
    %6185 = vmatpush1.bf16.msra.mxu0 %v5618
    %6186 = vmatprep.subr.bf16.mxu0 %v5621
    %6187 = vmatpush1.bf16.msra.mxu0 %v5620
    %6188 = vmatprep.mubr.bf16.mxu0 %v4371
    %6189 = vmatmul.mubr.bf16.gmra.mrb[0].mxu0 %v4370
    %v6190 = vpop.f32.mrb[0].mxu0
    %v6191 = vadd.f32 %v6150, %v6190
    %v6192 = vpop.f32.mrb[0].mxu0
    %v6193 = vadd.f32 %v6152, %v6192
    %v6194 = vpop.f32.mrb[0].mxu0
    %v6195 = vpop.f32.mrb[0].mxu0
    %6196 = vdwg.mxu0
    %6197 = vmatprep.subr.bf16.mxu0 %v5623
    %6198 = vmatpush1.bf16.msra.mxu0 %v5622
    %6199 = vmatprep.subr.bf16.mxu0 %v5625
    %6200 = vmatpush1.bf16.msra.mxu0 %v5624
    %6201 = vmatprep.subr.bf16.mxu0 %v5627
    %6202 = vmatpush1.bf16.msra.mxu0 %v5626
    %6203 = vmatprep.subr.bf16.mxu0 %v5629
    %6204 = vmatpush1.bf16.msra.mxu0 %v5628
    %6205 = vmatprep.subr.bf16.mxu0 %v5631
    %6206 = vmatpush1.bf16.msra.mxu0 %v5630
    %6207 = vmatprep.subr.bf16.mxu0 %v5633
    %6208 = vmatpush1.bf16.msra.mxu0 %v5632
    %6209 = vmatprep.subr.bf16.mxu0 %v5635
    %6210 = vmatpush1.bf16.msra.mxu0 %v5634
    %6211 = vmatprep.subr.bf16.mxu0 %v5637
    %6212 = vmatpush1.bf16.msra.mxu0 %v5636
    %6213 = vmatprep.subr.bf16.mxu0 %v5639
    %6214 = vmatpush1.bf16.msra.mxu0 %v5638
    %6215 = vmatprep.subr.bf16.mxu0 %v5641
    %6216 = vmatpush1.bf16.msra.mxu0 %v5640
    %6217 = vmatprep.subr.bf16.mxu0 %v5643
    %6218 = vmatpush1.bf16.msra.mxu0 %v5642
    %6219 = vmatprep.subr.bf16.mxu0 %v5645
    %6220 = vmatpush1.bf16.msra.mxu0 %v5644
    %6221 = vmatprep.subr.bf16.mxu0 %v5647
    %6222 = vmatpush1.bf16.msra.mxu0 %v5646
    %6223 = vmatprep.subr.bf16.mxu0 %v5649
    %6224 = vmatpush1.bf16.msra.mxu0 %v5648
    %6225 = vmatprep.subr.bf16.mxu0 %v5651
    %6226 = vmatpush1.bf16.msra.mxu0 %v5650
    %6227 = vmatprep.subr.bf16.mxu0 %v5653
    %6228 = vmatpush1.bf16.msra.mxu0 %v5652
    %6229 = vmatprep.mubr.bf16.mxu0 %v4373
    %6230 = vmatmul.mubr.bf16.gmra.mrb[0].mxu0 %v4372
    %v6231 = vpop.f32.mrb[0].mxu0
    %v6232 = vadd.f32 %v6191, %v6231
    %v6233 = vpop.f32.mrb[0].mxu0
    %v6234 = vadd.f32 %v6193, %v6233
    %v6235 = vpop.f32.mrb[0].mxu0
    %v6236 = vpop.f32.mrb[0].mxu0
    %6237 = vdwg.mxu0
    %v6238 = vadd.f32 %v4160, %v6232
    %v6239 = vadd.f32 %v4162, %v6234
    %v6240 = vld [vmem:[%s2] sm:$0x3]
    %v6242 = vlaneseq
    %v6243 = vshrl.u32 %v6242, 7
    %v6244 = vsub.s32 0, %v6243
    %v6245 = vrot.slane %v6240, %v6244
    %v6246 = vlaneseq
    %v6247 = vshrl.u32 %v6246, 7
    %v6248 = vsub.s32 1, %v6247
    %v6249 = vrot.slane %v6240, %v6248
    %v6252 = vadd.f32 %v6238, %v6245
    %v6253 = vadd.f32 %v6239, %v6249
    %v6254 = vmax.f32 %v6252, 0.0
    %v6255 = vmax.f32 %v6253, 0.0
    %v6256 = vpack.c.bf16 %v6254, %v6254
    %v6257 = vpack.c.bf16 %v6255, %v6255
    %v6258 = vld [vmem:[%s3] sm:$0xf]
    %v6259 = vld [vmem:[%s3 + $0x4] sm:$0xf]
    %v6260 = vld [vmem:[%s3 + $0x8] sm:$0xf]
    %v6261 = vld [vmem:[%s3 + $0xc] sm:$0xf]
    %v6262 = vld [vmem:[%s3 + $0x10] sm:$0xf]
    %v6263 = vld [vmem:[%s3 + $0x14] sm:$0xf]
    %v6264 = vld [vmem:[%s3 + $0x18] sm:$0xf]
    %v6265 = vld [vmem:[%s3 + $0x1c] sm:$0xf]
    %v6266 = vld [vmem:[%s3 + $0x20] sm:$0xf]
    %v6267 = vld [vmem:[%s3 + $0x24] sm:$0xf]
    %v6268 = vld [vmem:[%s3 + $0x28] sm:$0xf]
    %v6269 = vld [vmem:[%s3 + $0x2c] sm:$0xf]
    %v6270 = vld [vmem:[%s3 + $0x30] sm:$0xf]
    %v6271 = vld [vmem:[%s3 + $0x34] sm:$0xf]
    %v6272 = vld [vmem:[%s3 + $0x38] sm:$0xf]
    %v6273 = vld [vmem:[%s3 + $0x3c] sm:$0xf]
    %v6274 = vld [vmem:[%s3 + $0x40] sm:$0xf]
    %v6275 = vld [vmem:[%s3 + $0x44] sm:$0xf]
    %v6276 = vld [vmem:[%s3 + $0x48] sm:$0xf]
    %v6277 = vld [vmem:[%s3 + $0x4c] sm:$0xf]
    %v6278 = vld [vmem:[%s3 + $0x50] sm:$0xf]
    %v6279 = vld [vmem:[%s3 + $0x54] sm:$0xf]
    %v6280 = vld [vmem:[%s3 + $0x58] sm:$0xf]
    %v6281 = vld [vmem:[%s3 + $0x5c] sm:$0xf]
    %v6282 = vld [vmem:[%s3 + $0x60] sm:$0xf]
    %v6283 = vld [vmem:[%s4] sm:$0x1]
    %v6285 = vlaneseq
    %v6286 = vshrl.u32 %v6285, 7
    %v6287 = vsub.s32 0, %v6286
    %v6288 = vrot.slane %v6283, %v6287
    %v6315 = vunpack.c.l.b16 %v6258
    %v6316 = vunpack.c.l.b16 %v6259
    %v6317 = vunpack.c.l.b16 %v6260
    %v6318 = vunpack.c.l.b16 %v6261
    %v6319 = vunpack.c.l.b16 %v6262
    %v6320 = vunpack.c.l.b16 %v6263
    %v6321 = vunpack.c.l.b16 %v6264
    %v6322 = vunpack.c.l.b16 %v6265
    %v6323 = vunpack.c.l.b16 %v6266
    %v6324 = vunpack.c.l.b16 %v6267
    %v6325 = vunpack.c.l.b16 %v6268
    %v6326 = vunpack.c.l.b16 %v6269
    %v6327 = vunpack.c.l.b16 %v6270
    %v6328 = vunpack.c.l.b16 %v6271
    %v6329 = vunpack.c.l.b16 %v6272
    %v6330 = vunpack.c.l.b16 %v6273
    %v6331 = vunpack.c.l.b16 %v6274
    %v6332 = vunpack.c.l.b16 %v6275
    %v6333 = vunpack.c.l.b16 %v6276
    %v6334 = vunpack.c.l.b16 %v6277
    %v6335 = vunpack.c.l.b16 %v6278
    %v6336 = vunpack.c.l.b16 %v6279
    %v6337 = vunpack.c.l.b16 %v6280
    %v6338 = vunpack.c.l.b16 %v6281
    %v6339 = vunpack.c.l.b16 %v6282
    %v6340 = vpack.c.b16 %v6316, %v6315
    %v6341 = vpack.c.b16 %v6318, %v6317
    %v6342 = vpack.c.b16 %v6320, %v6319
    %v6343 = vpack.c.b16 %v6322, %v6321
    %v6344 = vpack.c.b16 %v6324, %v6323
    %v6345 = vpack.c.b16 %v6326, %v6325
    %v6346 = vpack.c.b16 %v6328, %v6327
    %v6347 = vpack.c.b16 %v6330, %v6329
    %v6348 = vpack.c.b16 %v6332, %v6331
    %v6349 = vpack.c.b16 %v6334, %v6333
    %v6350 = vpack.c.b16 %v6336, %v6335
    %v6351 = vpack.c.b16 %v6338, %v6337
    %v6352 = vpack.c.b16 %v6339, %v6339
    %vm6365 = vcmask 588800
    %v6367 = vsel %vm6365, %v6257, 0
    %vm6369 = vcmask 1043456
    %v6371 = vsel %vm6369, %v6352, 0
    %6373 = vmatprep.subr.bf16.mxu0 0
    %6374 = vmatpush1.bf16.msra.mxu0 %v6340
    %6375 = vmatprep.subr.bf16.mxu0 0
    %6376 = vmatpush1.bf16.msra.mxu0 %v6341
    %6377 = vmatprep.subr.bf16.mxu0 0
    %6378 = vmatpush1.bf16.msra.mxu0 %v6342
    %6379 = vmatprep.subr.bf16.mxu0 0
    %6380 = vmatpush1.bf16.msra.mxu0 %v6343
    %6381 = vmatprep.subr.bf16.mxu0 0
    %6382 = vmatpush1.bf16.msra.mxu0 %v6344
    %6383 = vmatprep.subr.bf16.mxu0 0
    %6384 = vmatpush1.bf16.msra.mxu0 %v6345
    %6385 = vmatprep.subr.bf16.mxu0 0
    %6386 = vmatpush1.bf16.msra.mxu0 %v6346
    %6387 = vmatprep.subr.bf16.mxu0 0
    %6388 = vmatpush1.bf16.msra.mxu0 %v6347
    %6389 = vmatprep.subr.bf16.mxu0 0
    %6390 = vmatpush1.bf16.msra.mxu0 %v6348
    %6391 = vmatprep.subr.bf16.mxu0 0
    %6392 = vmatpush1.bf16.msra.mxu0 %v6349
    %6393 = vmatprep.subr.bf16.mxu0 0
    %6394 = vmatpush1.bf16.msra.mxu0 %v6350
    %6395 = vmatprep.subr.bf16.mxu0 0
    %6396 = vmatpush1.bf16.msra.mxu0 %v6351
    %6397 = vmatprep.subr.bf16.mxu0 0
    %6398 = vmatpush1.bf16.msra.mxu0 %v6371
    %6399 = vmatprep.subr.bf16.mxu0 0
    %6400 = vmatpush1.bf16.msra.mxu0 0
    %6401 = vmatprep.subr.bf16.mxu0 0
    %6402 = vmatpush1.bf16.msra.mxu0 0
    %6403 = vmatprep.subr.bf16.mxu0 0
    %6404 = vmatpush1.bf16.msra.mxu0 0
    %6405 = vmatprep.mubr.bf16.mxu0 %v6367
    %6406 = vmatmul.mubr.bf16.gmra.mrb[0].mxu0 %v6256
    %v6407 = vpop.f32.mrb[0].mxu0
    %v6408 = vadd.f32 %v6288, %v6407
    %v6409 = vpop.f32.mrb[0].mxu0
    %v6410 = vpop.f32.mrb[0].mxu0
    %v6411 = vpop.f32.mrb[0].mxu0
    %6412 = vdwg.mxu0
    %vm6413 = vcmask 326656
    %v6414 = vsel %vm6413, %v6408, -inf
    %6415 = vmax.xlane.f32.xlu0 %v6414
    %v6416 = vpop.xlane.xlu0 %6415
    %v6417 = vsub.f32 %v6408, %v6416
    %v6418 = vmul.f32 %v6417, 1.442695
    %v6419 = vpow.pop %v6418
    %v6420 = vsel %vm6413, %v6419, 0.0
    %6421 = vadd.xlane.f32.xlu0 %v6420
    %v6422 = vpop.xlane.xlu0 %6421
    %v6423 = vrcp.pop %v6422
    %v6424 = vmul.f32 %v6419, %v6423
    %6425 = vst.msk [vmem:[#allocation2] sm:$0xff] %vm6413, %v6424
    // Predicated region
    $region22: #{tpu_custom_call.1} parent=1 // pred_check
      _
    $region23: #{tpu_custom_call.1} parent=1 // pred_check_branch
      %6427 = sbr.rel (0) target = $region25
    $region24: #{tpu_custom_call.1} parent=1 // pred_region
      %s6429 = ssub.s32 128, 32
      %6430 = vsyncadd [#allocation3], %s6429
      %s6431 = sshll.u32 [#allocation2], 4
      %s6432 = int_to_ptr.vmem [resolvable:$true] %s6431
      %6437 = dma.vmem_to_hbm [thread:$0]  %s6432, 32, %s5, [#allocation3], 32, 32, 2
    $region25: #{tpu_custom_call.1} parent=1 // pred_fallthru
      _
    // Predicated region
    $region26: #{tpu_custom_call.1} parent=1 // pred_check
      _
    $region27: #{tpu_custom_call.1} parent=1 // pred_check_branch
      %6439 = sbr.rel (0) target = $region29
    $region28: #{tpu_custom_call.1} parent=1 // pred_region
      %6440 = dma.done [#allocation3], 128
    $region29: #{tpu_custom_call.1} parent=1 // pred_fallthru
      _
    %6441 = vsyncpa [#allocation3], 1

// kernel: tpu_custom_call.1
$region0: #{tpu_custom_call.1}
  #allocation0 [shape = 'u32[]', space=smem, size = 0x4, offset = 0x4, fixed_abs, tag = 'smem constant byte address 0x4 - core index']
  #allocation1 [shape = 'u32[144,128]{1,0:T(1,128)}', space=vmem, size = 0x12000, scoped, tag = 'internal scratch']
  %s0 = inlined_call_operand.vmem [shape: f32[2,6144], index: 0, kind: input, shape index: {}]
  %s1 = inlined_call_operand.vmem [shape: bf16[6144,200], index: 1, kind: input, shape index: {}]
  %s2 = inlined_call_operand.vmem [shape: f32[1,200], index: 2, kind: input, shape index: {}]
  %s3 = inlined_call_operand.vmem [shape: bf16[200,40], index: 3, kind: input, shape index: {}]
  %s4 = inlined_call_operand.vmem [shape: f32[1,40], index: 4, kind: input, shape index: {}]
  %s5 = inlined_call_operand.hbm [shape: f32[2,40], index: 5, kind: output, shape index: {}]
  %s6 = sld [smem:[#allocation0]]
  $region30: #{tpu_custom_call.1} parent=0
    _
  %s8 = ssub.s32 1, %s6
  %s9 = scalar_select 0, %s8, %s6
  $region1: #{tpu_custom_call.1} parent=0
    #allocation2 [shape = 'u8[4096]{0}', space=vmem, size = 0x1000, scoped, tag = 'output window, operand 0, single buffered']
    #allocation3 [shape = 's32[1]{0}', space=sflag, size = 0x4, scoped, tag = 'scoped memory for tpu_custom_call.1']
    %10 = vsyncpa [#allocation3], 0
    // Predicated region
    $region2: #{tpu_custom_call.1} parent=1 // pred_check
      _
    $region3: #{tpu_custom_call.1} parent=1 // pred_check_branch
      %12 = sbr.rel (0) target = $region5
    $region4: #{tpu_custom_call.1} parent=1 // pred_region
      _
    $region5: #{tpu_custom_call.1} parent=1 // pred_fallthru
      _
    // Predicated region
    $region6: #{tpu_custom_call.1} parent=1 // pred_check
      _
    $region7: #{tpu_custom_call.1} parent=1 // pred_check_branch
      %14 = sbr.rel (0) target = $region9
    $region8: #{tpu_custom_call.1} parent=1 // pred_region
      _
    $region9: #{tpu_custom_call.1} parent=1 // pred_fallthru
      _
    // Predicated region
    $region10: #{tpu_custom_call.1} parent=1 // pred_check
      _
    $region11: #{tpu_custom_call.1} parent=1 // pred_check_branch
      %16 = sbr.rel (0) target = $region13
    $region12: #{tpu_custom_call.1} parent=1 // pred_region
      _
    $region13: #{tpu_custom_call.1} parent=1 // pred_fallthru
      _
    // Predicated region
    $region14: #{tpu_custom_call.1} parent=1 // pred_check
      _
    $region15: #{tpu_custom_call.1} parent=1 // pred_check_branch
      %18 = sbr.rel (0) target = $region17
    $region16: #{tpu_custom_call.1} parent=1 // pred_region
      _
    $region17: #{tpu_custom_call.1} parent=1 // pred_fallthru
      _
    // Predicated region
    $region18: #{tpu_custom_call.1} parent=1 // pred_check
      _
    $region19: #{tpu_custom_call.1} parent=1 // pred_check_branch
      %20 = sbr.rel (0) target = $region21
    $region20: #{tpu_custom_call.1} parent=1 // pred_region
      _
    $region21: #{tpu_custom_call.1} parent=1 // pred_fallthru
      _
    %v22 = vld [vmem:[%s0] sm:$0xff]
    %v23 = vld [vmem:[%s0 + $0x8] sm:$0xff]
    %v24 = vld [vmem:[%s0 + $0x10] sm:$0xff]
    %v25 = vld [vmem:[%s0 + $0x18] sm:$0xff]
    %v26 = vld [vmem:[%s0 + $0x60] sm:$0xff]
    %v27 = vld [vmem:[%s0 + $0x68] sm:$0xff]
    %v28 = vld [vmem:[%s0 + $0x70] sm:$0xff]
    %v29 = vld [vmem:[%s0 + $0x78] sm:$0xff]
    %v30 = vld [vmem:[%s0 + $0xc0] sm:$0xff]
    %v31 = vld [vmem:[%s0 + $0xc8] sm:$0xff]
    %v32 = vld [vmem:[%s0 + $0xd0] sm:$0xff]
    %v33 = vld [vmem:[%s0 + $0xd8] sm:$0xff]
    %v34 = vld [vmem:[%s0 + $0x120] sm:$0xff]
    %v35 = vld [vmem:[%s0 + $0x128] sm:$0xff]
    %v36 = vld [vmem:[%s0 + $0x130] sm:$0xff]
    %v37 = vld [vmem:[%s0 + $0x138] sm:$0xff]
    %v54 = vcombine.low %v22, %v26
    %v55 = vcombine.high %v22, %v26
    %v56 = vcombine.low %v30, %v34
    %v57 = vcombine.high %v30, %v34
    %v59 = vunpack.c.l.s4 1983009808
    %v60 = vunpack.c.0.s8 %v59
    %v61 = vlaneseq
    %v62 = vshrl.u32 %v61, 7
    %v63 = vsub.s32 %v60, %v62
    %v64 = vrot.slane %v54, %v63
    %v66 = vunpack.c.l.s4 1983009808
    %v67 = vunpack.c.0.s8 %v66
    %v68 = vlaneseq
    %v69 = vshrl.u32 %v68, 7
    %v70 = vsub.s32 %v67, %v69
    %v71 = vrot.slane %v55, %v70
    %v73 = vunpack.c.l.s4 1983009808
    %v74 = vunpack.c.0.s8 %v73
    %v75 = vlaneseq
    %v76 = vshrl.u32 %v75, 7
    %v77 = vsub.s32 %v74, %v76
    %v78 = vrot.slane %v56, %v77
    %v80 = vunpack.c.l.s4 1983009808
    %v81 = vunpack.c.0.s8 %v80
    %v82 = vlaneseq
    %v83 = vshrl.u32 %v82, 7
    %v84 = vsub.s32 %v81, %v83
    %v85 = vrot.slane %v57, %v84
    %v86 = vcombine.low %v64, %v78
    %v87 = vcombine.high %v64, %v78
    %v88 = vcombine.low %v71, %v85
    %v89 = vcombine.high %v71, %v85
    %v90 = vcombine.low %v23, %v27
    %v91 = vcombine.high %v23, %v27
    %v92 = vcombine.low %v31, %v35
    %v93 = vcombine.high %v31, %v35
    %v95 = vunpack.c.l.s4 1983009808
    %v96 = vunpack.c.0.s8 %v95
    %v97 = vlaneseq
    %v98 = vshrl.u32 %v97, 7
    %v99 = vsub.s32 %v96, %v98
    %v100 = vrot.slane %v90, %v99
    %v102 = vunpack.c.l.s4 1983009808
    %v103 = vunpack.c.0.s8 %v102
    %v104 = vlaneseq
    %v105 = vshrl.u32 %v104, 7
    %v106 = vsub.s32 %v103, %v105
    %v107 = vrot.slane %v91, %v106
    %v109 = vunpack.c.l.s4 1983009808
    %v110 = vunpack.c.0.s8 %v109
    %v111 = vlaneseq
    %v112 = vshrl.u32 %v111, 7
    %v113 = vsub.s32 %v110, %v112
    %v114 = vrot.slane %v92, %v113
    %v116 = vunpack.c.l.s4 1983009808
    %v117 = vunpack.c.0.s8 %v116
    %v118 = vlaneseq
    %v119 = vshrl.u32 %v118, 7
    %v120 = vsub.s32 %v117, %v119
    %v121 = vrot.slane %v93, %v120
    %v122 = vcombine.low %v100, %v114
    %v123 = vcombine.high %v100, %v114
    %v124 = vcombine.low %v107, %v121
    %v125 = vcombine.high %v107, %v121
    %v126 = vcombine.low %v24, %v28
    %v127 = vcombine.high %v24, %v28
    %v128 = vcombine.low %v32, %v36
    %v129 = vcombine.high %v32, %v36
    %v131 = vunpack.c.l.s4 1983009808
    %v132 = vunpack.c.0.s8 %v131
    %v133 = vlaneseq
    %v134 = vshrl.u32 %v133, 7
    %v135 = vsub.s32 %v132, %v134
    %v136 = vrot.slane %v126, %v135
    %v138 = vunpack.c.l.s4 1983009808
    %v139 = vunpack.c.0.s8 %v138
    %v140 = vlaneseq
    %v141 = vshrl.u32 %v140, 7
    %v142 = vsub.s32 %v139, %v141
    %v143 = vrot.slane %v127, %v142
    %v145 = vunpack.c.l.s4 1983009808
    %v146 = vunpack.c.0.s8 %v145
    %v147 = vlaneseq
    %v148 = vshrl.u32 %v147, 7
    %v149 = vsub.s32 %v146, %v148
    %v150 = vrot.slane %v128, %v149
    %v152 = vunpack.c.l.s4 1983009808
    %v153 = vunpack.c.0.s8 %v152
    %v154 = vlaneseq
    %v155 = vshrl.u32 %v154, 7
    %v156 = vsub.s32 %v153, %v155
    %v157 = vrot.slane %v129, %v156
    %v158 = vcombine.low %v136, %v150
    %v159 = vcombine.high %v136, %v150
    %v160 = vcombine.low %v143, %v157
    %v161 = vcombine.high %v143, %v157
    %v162 = vcombine.low %v25, %v29
    %v163 = vcombine.high %v25, %v29
    %v164 = vcombine.low %v33, %v37
    %v165 = vcombine.high %v33, %v37
    %v167 = vunpack.c.l.s4 1983009808
    %v168 = vunpack.c.0.s8 %v167
    %v169 = vlaneseq
    %v170 = vshrl.u32 %v169, 7
    %v171 = vsub.s32 %v168, %v170
    %v172 = vrot.slane %v162, %v171
    %v174 = vunpack.c.l.s4 1983009808
    %v175 = vunpack.c.0.s8 %v174
    %v176 = vlaneseq
    %v177 = vshrl.u32 %v176, 7
    %v178 = vsub.s32 %v175, %v177
    %v179 = vrot.slane %v163, %v178
    %v181 = vunpack.c.l.s4 1983009808
    %v182 = vunpack.c.0.s8 %v181
    %v183 = vlaneseq
    %v184 = vshrl.u32 %v183, 7
    %v185 = vsub.s32 %v182, %v184
    %v186 = vrot.slane %v164, %v185
    %v188 = vunpack.c.l.s4 1983009808
    %v189 = vunpack.c.0.s8 %v188
    %v190 = vlaneseq
    %v191 = vshrl.u32 %v190, 7
    %v192 = vsub.s32 %v189, %v191
    %v193 = vrot.slane %v165, %v192
    %v194 = vcombine.low %v172, %v186
    %v195 = vcombine.high %v172, %v186
    %v196 = vcombine.low %v179, %v193
    %v197 = vcombine.high %v179, %v193
    %v214 = vpack.c.bf16 %v86, %v86
    %v215 = vpack.c.bf16 %v87, %v87
    %v216 = vpack.c.bf16 %v88, %v88
    %v217 = vpack.c.bf16 %v89, %v89
    %v218 = vpack.c.bf16 %v122, %v122
    %v219 = vpack.c.bf16 %v123, %v123
    %v220 = vpack.c.bf16 %v124, %v124
    %v221 = vpack.c.bf16 %v125, %v125
    %v222 = vpack.c.bf16 %v158, %v158
    %v223 = vpack.c.bf16 %v159, %v159
    %v224 = vpack.c.bf16 %v160, %v160
    %v225 = vpack.c.bf16 %v161, %v161
    %v226 = vpack.c.bf16 %v194, %v194
    %v227 = vpack.c.bf16 %v195, %v195
    %v228 = vpack.c.bf16 %v196, %v196
    %v229 = vpack.c.bf16 %v197, %v197
    %v230 = vld [vmem:[%s1] sm:$0xff]
    %v231 = vld [vmem:[%s1 + $0x8] sm:$0xff]
    %v232 = vld [vmem:[%s1 + $0x10] sm:$0xff]
    %v233 = vld [vmem:[%s1 + $0x18] sm:$0xff]
    %v234 = vld [vmem:[%s1 + $0x20] sm:$0xff]
    %v235 = vld [vmem:[%s1 + $0x28] sm:$0xff]
    %v236 = vld [vmem:[%s1 + $0x30] sm:$0xff]
    %v237 = vld [vmem:[%s1 + $0x38] sm:$0xff]
    %v238 = vld [vmem:[%s1 + $0x40] sm:$0xff]
    %v239 = vld [vmem:[%s1 + $0x48] sm:$0xff]
    %v240 = vld [vmem:[%s1 + $0x50] sm:$0xff]
    %v241 = vld [vmem:[%s1 + $0x58] sm:$0xff]
    %v242 = vld [vmem:[%s1 + $0x60] sm:$0xff]
    %v243 = vld [vmem:[%s1 + $0x68] sm:$0xff]
    %v244 = vld [vmem:[%s1 + $0x70] sm:$0xff]
    %v245 = vld [vmem:[%s1 + $0x78] sm:$0xff]
    %v246 = vld [vmem:[%s1 + $0x80] sm:$0xff]
    %v247 = vld [vmem:[%s1 + $0x88] sm:$0xff]
    %v248 = vld [vmem:[%s1 + $0x90] sm:$0xff]
    %v249 = vld [vmem:[%s1 + $0x98] sm:$0xff]
    %v250 = vld [vmem:[%s1 + $0xa0] sm:$0xff]
    %v251 = vld [vmem:[%s1 + $0xa8] sm:$0xff]
    %v252 = vld [vmem:[%s1 + $0xb0] sm:$0xff]
    %v253 = vld [vmem:[%s1 + $0xb8] sm:$0xff]
    %v254 = vld [vmem:[%s1 + $0xc0] sm:$0xff]
    %v255 = vld [vmem:[%s1 + $0xc8] sm:$0xff]
    %v256 = vld [vmem:[%s1 + $0xd0] sm:$0xff]
    %v257 = vld [vmem:[%s1 + $0xd8] sm:$0xff]
    %v258 = vld [vmem:[%s1 + $0xe0] sm:$0xff]
    %v259 = vld [vmem:[%s1 + $0xe8] sm:$0xff]
    %v260 = vld [vmem:[%s1 + $0xf0] sm:$0xff]
    %v261 = vld [vmem:[%s1 + $0xf8] sm:$0xff]
    %v262 = vld [vmem:[%s1 + $0x100] sm:$0xff]
    %v263 = vld [vmem:[%s1 + $0x108] sm:$0xff]
    %v264 = vld [vmem:[%s1 + $0x110] sm:$0xff]
    %v265 = vld [vmem:[%s1 + $0x118] sm:$0xff]
    %v266 = vld [vmem:[%s1 + $0x120] sm:$0xff]
    %v267 = vld [vmem:[%s1 + $0x128] sm:$0xff]
    %v268 = vld [vmem:[%s1 + $0x130] sm:$0xff]
    %v269 = vld [vmem:[%s1 + $0x138] sm:$0xff]
    %v270 = vld [vmem:[%s1 + $0x140] sm:$0xff]
    %v271 = vld [vmem:[%s1 + $0x148] sm:$0xff]
    %v272 = vld [vmem:[%s1 + $0x150] sm:$0xff]
    %v273 = vld [vmem:[%s1 + $0x158] sm:$0xff]
    %v274 = vld [vmem:[%s1 + $0x160] sm:$0xff]
    %v275 = vld [vmem:[%s1 + $0x168] sm:$0xff]
    %v276 = vld [vmem:[%s1 + $0x170] sm:$0xff]
    %v277 = vld [vmem:[%s1 + $0x178] sm:$0xff]
    %v278 = vld [vmem:[%s1 + $0x180] sm:$0xff]
    %v279 = vld [vmem:[%s1 + $0x188] sm:$0xff]
    %v280 = vld [vmem:[%s1 + $0x190] sm:$0xff]
    %v281 = vld [vmem:[%s1 + $0x198] sm:$0xff]
    %v282 = vld [vmem:[%s1 + $0x1a0] sm:$0xff]
    %v283 = vld [vmem:[%s1 + $0x1a8] sm:$0xff]
    %v284 = vld [vmem:[%s1 + $0x1b0] sm:$0xff]
    %v285 = vld [vmem:[%s1 + $0x1b8] sm:$0xff]
    %v286 = vld [vmem:[%s1 + $0x1c0] sm:$0xff]
    %v287 = vld [vmem:[%s1 + $0x1c8] sm:$0xff]
    %v288 = vld [vmem:[%s1 + $0x1d0] sm:$0xff]
    %v289 = vld [vmem:[%s1 + $0x1d8] sm:$0xff]
    %v290 = vld [vmem:[%s1 + $0x1e0] sm:$0xff]
    %v291 = vld [vmem:[%s1 + $0x1e8] sm:$0xff]
    %v292 = vld [vmem:[%s1 + $0x1f0] sm:$0xff]
    %v293 = vld [vmem:[%s1 + $0x1f8] sm:$0xff]
    %v294 = vld [vmem:[%s1 + $0x200] sm:$0xff]
    %v295 = vld [vmem:[%s1 + $0x208] sm:$0xff]
    %v296 = vld [vmem:[%s1 + $0x210] sm:$0xff]
    %v297 = vld [vmem:[%s1 + $0x218] sm:$0xff]
    %v298 = vld [vmem:[%s1 + $0x220] sm:$0xff]
    %v299 = vld [vmem:[%s1 + $0x228] sm:$0xff]
    %v300 = vld [vmem:[%s1 + $0x230] sm:$0xff]
    %v301 = vld [vmem:[%s1 + $0x238] sm:$0xff]
    %v302 = vld [vmem:[%s1 + $0x240] sm:$0xff]
    %v303 = vld [vmem:[%s1 + $0x248] sm:$0xff]
    %v304 = vld [vmem:[%s1 + $0x250] sm:$0xff]
    %v305 = vld [vmem:[%s1 + $0x258] sm:$0xff]
    %v306 = vld [vmem:[%s1 + $0x260] sm:$0xff]
    %v307 = vld [vmem:[%s1 + $0x268] sm:$0xff]
    %v308 = vld [vmem:[%s1 + $0x270] sm:$0xff]
    %v309 = vld [vmem:[%s1 + $0x278] sm:$0xff]
    %v310 = vld [vmem:[%s1 + $0x280] sm:$0xff]
    %v311 = vld [vmem:[%s1 + $0x288] sm:$0xff]
    %v312 = vld [vmem:[%s1 + $0x290] sm:$0xff]
    %v313 = vld [vmem:[%s1 + $0x298] sm:$0xff]
    %v314 = vld [vmem:[%s1 + $0x2a0] sm:$0xff]
    %v315 = vld [vmem:[%s1 + $0x2a8] sm:$0xff]
    %v316 = vld [vmem:[%s1 + $0x2b0] sm:$0xff]
    %v317 = vld [vmem:[%s1 + $0x2b8] sm:$0xff]
    %v318 = vld [vmem:[%s1 + $0x2c0] sm:$0xff]
    %v319 = vld [vmem:[%s1 + $0x2c8] sm:$0xff]
    %v320 = vld [vmem:[%s1 + $0x2d0] sm:$0xff]
    %v321 = vld [vmem:[%s1 + $0x2d8] sm:$0xff]
    %v322 = vld [vmem:[%s1 + $0x2e0] sm:$0xff]
    %v323 = vld [vmem:[%s1 + $0x2e8] sm:$0xff]
    %v324 = vld [vmem:[%s1 + $0x2f0] sm:$0xff]
    %v325 = vld [vmem:[%s1 + $0x2f8] sm:$0xff]
    %v326 = vld [vmem:[%s1 + $0x300] sm:$0xff]
    %v327 = vld [vmem:[%s1 + $0x308] sm:$0xff]
    %v328 = vld [vmem:[%s1 + $0x310] sm:$0xff]
    %v329 = vld [vmem:[%s1 + $0x318] sm:$0xff]
    %v330 = vld [vmem:[%s1 + $0x320] sm:$0xff]
    %v331 = vld [vmem:[%s1 + $0x328] sm:$0xff]
    %v332 = vld [vmem:[%s1 + $0x330] sm:$0xff]
    %v333 = vld [vmem:[%s1 + $0x338] sm:$0xff]
    %v334 = vld [vmem:[%s1 + $0x340] sm:$0xff]
    %v335 = vld [vmem:[%s1 + $0x348] sm:$0xff]
    %v336 = vld [vmem:[%s1 + $0x350] sm:$0xff]
    %v337 = vld [vmem:[%s1 + $0x358] sm:$0xff]
    %v338 = vld [vmem:[%s1 + $0x360] sm:$0xff]
    %v339 = vld [vmem:[%s1 + $0x368] sm:$0xff]
    %v340 = vld [vmem:[%s1 + $0x370] sm:$0xff]
    %v341 = vld [vmem:[%s1 + $0x378] sm:$0xff]
    %v342 = vld [vmem:[%s1 + $0x380] sm:$0xff]
    %v343 = vld [vmem:[%s1 + $0x388] sm:$0xff]
    %v344 = vld [vmem:[%s1 + $0x390] sm:$0xff]
    %v345 = vld [vmem:[%s1 + $0x398] sm:$0xff]
    %v346 = vld [vmem:[%s1 + $0x3a0] sm:$0xff]
    %v347 = vld [vmem:[%s1 + $0x3a8] sm:$0xff]
    %v348 = vld [vmem:[%s1 + $0x3b0] sm:$0xff]
    %v349 = vld [vmem:[%s1 + $0x3b8] sm:$0xff]
    %v350 = vld [vmem:[%s1 + $0x3c0] sm:$0xff]
    %v351 = vld [vmem:[%s1 + $0x3c8] sm:$0xff]
    %v352 = vld [vmem:[%s1 + $0x3d0] sm:$0xff]
    %v353 = vld [vmem:[%s1 + $0x3d8] sm:$0xff]
    %v354 = vld [vmem:[%s1 + $0x3e0] sm:$0xff]
    %v355 = vld [vmem:[%s1 + $0x3e8] sm:$0xff]
    %v356 = vld [vmem:[%s1 + $0x3f0] sm:$0xff]
    %v357 = vld [vmem:[%s1 + $0x3f8] sm:$0xff]
    %v358 = vld [vmem:[%s1 + $0x400] sm:$0xff]
    %v359 = vld [vmem:[%s1 + $0x408] sm:$0xff]
    %v360 = vld [vmem:[%s1 + $0x410] sm:$0xff]
    %v361 = vld [vmem:[%s1 + $0x418] sm:$0xff]
    %v362 = vld [vmem:[%s1 + $0x420] sm:$0xff]
    %v363 = vld [vmem:[%s1 + $0x428] sm:$0xff]
    %v364 = vld [vmem:[%s1 + $0x430] sm:$0xff]
    %v365 = vld [vmem:[%s1 + $0x438] sm:$0xff]
    %v366 = vld [vmem:[%s1 + $0x440] sm:$0xff]
    %v367 = vld [vmem:[%s1 + $0x448] sm:$0xff]
    %v368 = vld [vmem:[%s1 + $0x450] sm:$0xff]
    %v369 = vld [vmem:[%s1 + $0x458] sm:$0xff]
    %v370 = vld [vmem:[%s1 + $0x460] sm:$0xff]
    %v371 = vld [vmem:[%s1 + $0x468] sm:$0xff]
    %v372 = vld [vmem:[%s1 + $0x470] sm:$0xff]
    %v373 = vld [vmem:[%s1 + $0x478] sm:$0xff]
    %v374 = vld [vmem:[%s1 + $0x480] sm:$0xff]
    %v375 = vld [vmem:[%s1 + $0x488] sm:$0xff]
    %v376 = vld [vmem:[%s1 + $0x490] sm:$0xff]
    %v377 = vld [vmem:[%s1 + $0x498] sm:$0xff]
    %v378 = vld [vmem:[%s1 + $0x4a0] sm:$0xff]
    %v379 = vld [vmem:[%s1 + $0x4a8] sm:$0xff]
    %v380 = vld [vmem:[%s1 + $0x4b0] sm:$0xff]
    %v381 = vld [vmem:[%s1 + $0x4b8] sm:$0xff]
    %v382 = vld [vmem:[%s1 + $0x4c0] sm:$0xff]
    %v383 = vld [vmem:[%s1 + $0x4c8] sm:$0xff]
    %v384 = vld [vmem:[%s1 + $0x4d0] sm:$0xff]
    %v385 = vld [vmem:[%s1 + $0x4d8] sm:$0xff]
    %v386 = vld [vmem:[%s1 + $0x4e0] sm:$0xff]
    %v387 = vld [vmem:[%s1 + $0x4e8] sm:$0xff]
    %v388 = vld [vmem:[%s1 + $0x4f0] sm:$0xff]
    %v389 = vld [vmem:[%s1 + $0x4f8] sm:$0xff]
    %v390 = vld [vmem:[%s1 + $0x500] sm:$0xff]
    %v391 = vld [vmem:[%s1 + $0x508] sm:$0xff]
    %v392 = vld [vmem:[%s1 + $0x510] sm:$0xff]
    %v393 = vld [vmem:[%s1 + $0x518] sm:$0xff]
    %v394 = vld [vmem:[%s1 + $0x520] sm:$0xff]
    %v395 = vld [vmem:[%s1 + $0x528] sm:$0xff]
    %v396 = vld [vmem:[%s1 + $0x530] sm:$0xff]
    %v397 = vld [vmem:[%s1 + $0x538] sm:$0xff]
    %v398 = vld [vmem:[%s1 + $0x540] sm:$0xff]
    %v399 = vld [vmem:[%s1 + $0x548] sm:$0xff]
    %v400 = vld [vmem:[%s1 + $0x550] sm:$0xff]
    %v401 = vld [vmem:[%s1 + $0x558] sm:$0xff]
    %v402 = vld [vmem:[%s1 + $0x560] sm:$0xff]
    %v403 = vld [vmem:[%s1 + $0x568] sm:$0xff]
    %v404 = vld [vmem:[%s1 + $0x570] sm:$0xff]
    %v405 = vld [vmem:[%s1 + $0x578] sm:$0xff]
    %v406 = vld [vmem:[%s1 + $0x580] sm:$0xff]
    %v407 = vld [vmem:[%s1 + $0x588] sm:$0xff]
    %v408 = vld [vmem:[%s1 + $0x590] sm:$0xff]
    %v409 = vld [vmem:[%s1 + $0x598] sm:$0xff]
    %v410 = vld [vmem:[%s1 + $0x5a0] sm:$0xff]
    %v411 = vld [vmem:[%s1 + $0x5a8] sm:$0xff]
    %v412 = vld [vmem:[%s1 + $0x5b0] sm:$0xff]
    %v413 = vld [vmem:[%s1 + $0x5b8] sm:$0xff]
    %v414 = vld [vmem:[%s1 + $0x5c0] sm:$0xff]
    %v415 = vld [vmem:[%s1 + $0x5c8] sm:$0xff]
    %v416 = vld [vmem:[%s1 + $0x5d0] sm:$0xff]
    %v417 = vld [vmem:[%s1 + $0x5d8] sm:$0xff]
    %v418 = vld [vmem:[%s1 + $0x5e0] sm:$0xff]
    %v419 = vld [vmem:[%s1 + $0x5e8] sm:$0xff]
    %v420 = vld [vmem:[%s1 + $0x5f0] sm:$0xff]
    %v421 = vld [vmem:[%s1 + $0x5f8] sm:$0xff]
    %v422 = vld [vmem:[%s1 + $0x600] sm:$0xff]
    %v423 = vld [vmem:[%s1 + $0x608] sm:$0xff]
    %v424 = vld [vmem:[%s1 + $0x610] sm:$0xff]
    %v425 = vld [vmem:[%s1 + $0x618] sm:$0xff]
    %v426 = vld [vmem:[%s1 + $0x620] sm:$0xff]
    %v427 = vld [vmem:[%s1 + $0x628] sm:$0xff]
    %v428 = vld [vmem:[%s1 + $0x630] sm:$0xff]
    %v429 = vld [vmem:[%s1 + $0x638] sm:$0xff]
    %v430 = vld [vmem:[%s1 + $0x640] sm:$0xff]
    %v431 = vld [vmem:[%s1 + $0x648] sm:$0xff]
    %v432 = vld [vmem:[%s1 + $0x650] sm:$0xff]
    %v433 = vld [vmem:[%s1 + $0x658] sm:$0xff]
    %v434 = vld [vmem:[%s1 + $0x660] sm:$0xff]
    %v435 = vld [vmem:[%s1 + $0x668] sm:$0xff]
    %v436 = vld [vmem:[%s1 + $0x670] sm:$0xff]
    %v437 = vld [vmem:[%s1 + $0x678] sm:$0xff]
    %v438 = vld [vmem:[%s1 + $0x680] sm:$0xff]
    %v439 = vld [vmem:[%s1 + $0x688] sm:$0xff]
    %v440 = vld [vmem:[%s1 + $0x690] sm:$0xff]
    %v441 = vld [vmem:[%s1 + $0x698] sm:$0xff]
    %v442 = vld [vmem:[%s1 + $0x6a0] sm:$0xff]
    %v443 = vld [vmem:[%s1 + $0x6a8] sm:$0xff]
    %v444 = vld [vmem:[%s1 + $0x6b0] sm:$0xff]
    %v445 = vld [vmem:[%s1 + $0x6b8] sm:$0xff]
    %v446 = vld [vmem:[%s1 + $0x6c0] sm:$0xff]
    %v447 = vld [vmem:[%s1 + $0x6c8] sm:$0xff]
    %v448 = vld [vmem:[%s1 + $0x6d0] sm:$0xff]
    %v449 = vld [vmem:[%s1 + $0x6d8] sm:$0xff]
    %v450 = vld [vmem:[%s1 + $0x6e0] sm:$0xff]
    %v451 = vld [vmem:[%s1 + $0x6e8] sm:$0xff]
    %v452 = vld [vmem:[%s1 + $0x6f0] sm:$0xff]
    %v453 = vld [vmem:[%s1 + $0x6f8] sm:$0xff]
    %v454 = vld [vmem:[%s1 + $0x700] sm:$0xff]
    %v455 = vld [vmem:[%s1 + $0x708] sm:$0xff]
    %v456 = vld [vmem:[%s1 + $0x710] sm:$0xff]
    %v457 = vld [vmem:[%s1 + $0x718] sm:$0xff]
    %v458 = vld [vmem:[%s1 + $0x720] sm:$0xff]
    %v459 = vld [vmem:[%s1 + $0x728] sm:$0xff]
    %v460 = vld [vmem:[%s1 + $0x730] sm:$0xff]
    %v461 = vld [vmem:[%s1 + $0x738] sm:$0xff]
    %v462 = vld [vmem:[%s1 + $0x740] sm:$0xff]
    %v463 = vld [vmem:[%s1 + $0x748] sm:$0xff]
    %v464 = vld [vmem:[%s1 + $0x750] sm:$0xff]
    %v465 = vld [vmem:[%s1 + $0x758] sm:$0xff]
    %v466 = vld [vmem:[%s1 + $0x760] sm:$0xff]
    %v467 = vld [vmem:[%s1 + $0x768] sm:$0xff]
    %v468 = vld [vmem:[%s1 + $0x770] sm:$0xff]
    %v469 = vld [vmem:[%s1 + $0x778] sm:$0xff]
    %v470 = vld [vmem:[%s1 + $0x780] sm:$0xff]
    %v471 = vld [vmem:[%s1 + $0x788] sm:$0xff]
    %v472 = vld [vmem:[%s1 + $0x790] sm:$0xff]
    %v473 = vld [vmem:[%s1 + $0x798] sm:$0xff]
    %v474 = vld [vmem:[%s1 + $0x7a0] sm:$0xff]
    %v475 = vld [vmem:[%s1 + $0x7a8] sm:$0xff]
    %v476 = vld [vmem:[%s1 + $0x7b0] sm:$0xff]
    %v477 = vld [vmem:[%s1 + $0x7b8] sm:$0xff]
    %v478 = vld [vmem:[%s1 + $0x7c0] sm:$0xff]
    %v479 = vld [vmem:[%s1 + $0x7c8] sm:$0xff]
    %v480 = vld [vmem:[%s1 + $0x7d0] sm:$0xff]
    %v481 = vld [vmem:[%s1 + $0x7d8] sm:$0xff]
    %v482 = vld [vmem:[%s1 + $0x7e0] sm:$0xff]
    %v483 = vld [vmem:[%s1 + $0x7e8] sm:$0xff]
    %v484 = vld [vmem:[%s1 + $0x7f0] sm:$0xff]
    %v485 = vld [vmem:[%s1 + $0x7f8] sm:$0xff]
    %v486 = vld [vmem:[%s0 + $0x20] sm:$0xff]
    %v487 = vld [vmem:[%s0 + $0x28] sm:$0xff]
    %v488 = vld [vmem:[%s0 + $0x30] sm:$0xff]
    %v489 = vld [vmem:[%s0 + $0x38] sm:$0xff]
    %v490 = vld [vmem:[%s0 + $0x80] sm:$0xff]
    %v491 = vld [vmem:[%s0 + $0x88] sm:$0xff]
    %v492 = vld [vmem:[%s0 + $0x90] sm:$0xff]
    %v493 = vld [vmem:[%s0 + $0x98] sm:$0xff]
    %v494 = vld [vmem:[%s0 + $0xe0] sm:$0xff]
    %v495 = vld [vmem:[%s0 + $0xe8] sm:$0xff]
    %v496 = vld [vmem:[%s0 + $0xf0] sm:$0xff]
    %v497 = vld [vmem:[%s0 + $0xf8] sm:$0xff]
    %v498 = vld [vmem:[%s0 + $0x140] sm:$0xff]
    %v499 = vld [vmem:[%s0 + $0x148] sm:$0xff]
    %v500 = vld [vmem:[%s0 + $0x150] sm:$0xff]
    %v501 = vld [vmem:[%s0 + $0x158] sm:$0xff]
    %v518 = vcombine.low %v486, %v490
    %v519 = vcombine.high %v486, %v490
    %v520 = vcombine.low %v494, %v498
    %v521 = vcombine.high %v494, %v498
    %v523 = vunpack.c.l.s4 1983009808
    %v524 = vunpack.c.0.s8 %v523
    %v525 = vlaneseq
    %v526 = vshrl.u32 %v525, 7
    %v527 = vsub.s32 %v524, %v526
    %v528 = vrot.slane %v518, %v527
    %v530 = vunpack.c.l.s4 1983009808
    %v531 = vunpack.c.0.s8 %v530
    %v532 = vlaneseq
    %v533 = vshrl.u32 %v532, 7
    %v534 = vsub.s32 %v531, %v533
    %v535 = vrot.slane %v519, %v534
    %v537 = vunpack.c.l.s4 1983009808
    %v538 = vunpack.c.0.s8 %v537
    %v539 = vlaneseq
    %v540 = vshrl.u32 %v539, 7
    %v541 = vsub.s32 %v538, %v540
    %v542 = vrot.slane %v520, %v541
    %v544 = vunpack.c.l.s4 1983009808
    %v545 = vunpack.c.0.s8 %v544
    %v546 = vlaneseq
    %v547 = vshrl.u32 %v546, 7
    %v548 = vsub.s32 %v545, %v547
    %v549 = vrot.slane %v521, %v548
    %v550 = vcombine.low %v528, %v542
    %v551 = vcombine.high %v528, %v542
    %v552 = vcombine.low %v535, %v549
    %v553 = vcombine.high %v535, %v549
    %v554 = vcombine.low %v487, %v491
    %v555 = vcombine.high %v487, %v491
    %v556 = vcombine.low %v495, %v499
    %v557 = vcombine.high %v495, %v499
    %v559 = vunpack.c.l.s4 1983009808
    %v560 = vunpack.c.0.s8 %v559
    %v561 = vlaneseq
    %v562 = vshrl.u32 %v561, 7
    %v563 = vsub.s32 %v560, %v562
    %v564 = vrot.slane %v554, %v563
    %v566 = vunpack.c.l.s4 1983009808
    %v567 = vunpack.c.0.s8 %v566
    %v568 = vlaneseq
    %v569 = vshrl.u32 %v568, 7
    %v570 = vsub.s32 %v567, %v569
    %v571 = vrot.slane %v555, %v570
    %v573 = vunpack.c.l.s4 1983009808
    %v574 = vunpack.c.0.s8 %v573
    %v575 = vlaneseq
    %v576 = vshrl.u32 %v575, 7
    %v577 = vsub.s32 %v574, %v576
    %v578 = vrot.slane %v556, %v577
    %v580 = vunpack.c.l.s4 1983009808
    %v581 = vunpack.c.0.s8 %v580
    %v582 = vlaneseq
    %v583 = vshrl.u32 %v582, 7
    %v584 = vsub.s32 %v581, %v583
    %v585 = vrot.slane %v557, %v584
    %v586 = vcombine.low %v564, %v578
    %v587 = vcombine.high %v564, %v578
    %v588 = vcombine.low %v571, %v585
    %v589 = vcombine.high %v571, %v585
    %v590 = vcombine.low %v488, %v492
    %v591 = vcombine.high %v488, %v492
    %v592 = vcombine.low %v496, %v500
    %v593 = vcombine.high %v496, %v500
    %v595 = vunpack.c.l.s4 1983009808
    %v596 = vunpack.c.0.s8 %v595
    %v597 = vlaneseq
    %v598 = vshrl.u32 %v597, 7
    %v599 = vsub.s32 %v596, %v598
    %v600 = vrot.slane %v590, %v599
    %v602 = vunpack.c.l.s4 1983009808
    %v603 = vunpack.c.0.s8 %v602
    %v604 = vlaneseq
    %v605 = vshrl.u32 %v604, 7
    %v606 = vsub.s32 %v603, %v605
    %v607 = vrot.slane %v591, %v606
    %v609 = vunpack.c.l.s4 1983009808
    %v610 = vunpack.c.0.s8 %v609
    %v611 = vlaneseq
    %v612 = vshrl.u32 %v611, 7
    %v613 = vsub.s32 %v610, %v612
    %v614 = vrot.slane %v592, %v613
    %v616 = vunpack.c.l.s4 1983009808
    %v617 = vunpack.c.0.s8 %v616
    %v618 = vlaneseq
    %v619 = vshrl.u32 %v618, 7
    %v620 = vsub.s32 %v617, %v619
    %v621 = vrot.slane %v593, %v620
    %v622 = vcombine.low %v600, %v614
    %v623 = vcombine.high %v600, %v614
    %v624 = vcombine.low %v607, %v621
    %v625 = vcombine.high %v607, %v621
    %v626 = vcombine.low %v489, %v493
    %v627 = vcombine.high %v489, %v493
    %v628 = vcombine.low %v497, %v501
    %v629 = vcombine.high %v497, %v501
    %v631 = vunpack.c.l.s4 1983009808
    %v632 = vunpack.c.0.s8 %v631
    %v633 = vlaneseq
    %v634 = vshrl.u32 %v633, 7
    %v635 = vsub.s32 %v632, %v634
    %v636 = vrot.slane %v626, %v635
    %v638 = vunpack.c.l.s4 1983009808
    %v639 = vunpack.c.0.s8 %v638
    %v640 = vlaneseq
    %v641 = vshrl.u32 %v640, 7
    %v642 = vsub.s32 %v639, %v641
    %v643 = vrot.slane %v627, %v642
    %v645 = vunpack.c.l.s4 1983009808
    %v646 = vunpack.c.0.s8 %v645
    %v647 = vlaneseq
    %v648 = vshrl.u32 %v647, 7
    %v649 = vsub.s32 %v646, %v648
    %v650 = vrot.slane %v628, %v649
    %v652 = vunpack.c.l.s4 1983009808
    %v653 = vunpack.c.0.s8 %v652
    %v654 = vlaneseq
    %v655 = vshrl.u32 %v654, 7
    %v656 = vsub.s32 %v653, %v655
    %v657 = vrot.slane %v629, %v656
    %v658 = vcombine.low %v636, %v650
    %v659 = vcombine.high %v636, %v650
    %v660 = vcombine.low %v643, %v657
    %v661 = vcombine.high %v643, %v657
    %v678 = vpack.c.bf16 %v550, %v550
    %v679 = vpack.c.bf16 %v551, %v551
    %v680 = vpack.c.bf16 %v552, %v552
    %v681 = vpack.c.bf16 %v553, %v553
    %v682 = vpack.c.bf16 %v586, %v586
    %v683 = vpack.c.bf16 %v587, %v587
    %v684 = vpack.c.bf16 %v588, %v588
    %v685 = vpack.c.bf16 %v589, %v589
    %v686 = vpack.c.bf16 %v622, %v622
    %v687 = vpack.c.bf16 %v623, %v623
    %v688 = vpack.c.bf16 %v624, %v624
    %v689 = vpack.c.bf16 %v625, %v625
    %v690 = vpack.c.bf16 %v658, %v658
    %v691 = vpack.c.bf16 %v659, %v659
    %v692 = vpack.c.bf16 %v660, %v660
    %v693 = vpack.c.bf16 %v661, %v661
    %v694 = vld [vmem:[%s1 + $0x800] sm:$0xff]
    %v695 = vld [vmem:[%s1 + $0x808] sm:$0xff]
    %v696 = vld [vmem:[%s1 + $0x810] sm:$0xff]
    %v697 = vld [vmem:[%s1 + $0x818] sm:$0xff]
    %v698 = vld [vmem:[%s1 + $0x820] sm:$0xff]
    %v699 = vld [vmem:[%s1 + $0x828] sm:$0xff]
    %v700 = vld [vmem:[%s1 + $0x830] sm:$0xff]
    %v701 = vld [vmem:[%s1 + $0x838] sm:$0xff]
    %v702 = vld [vmem:[%s1 + $0x840] sm:$0xff]
    %v703 = vld [vmem:[%s1 + $0x848] sm:$0xff]
    %v704 = vld [vmem:[%s1 + $0x850] sm:$0xff]
    %v705 = vld [vmem:[%s1 + $0x858] sm:$0xff]
    %v706 = vld [vmem:[%s1 + $0x860] sm:$0xff]
    %v707 = vld [vmem:[%s1 + $0x868] sm:$0xff]
    %v708 = vld [vmem:[%s1 + $0x870] sm:$0xff]
    %v709 = vld [vmem:[%s1 + $0x878] sm:$0xff]
    %v710 = vld [vmem:[%s1 + $0x880] sm:$0xff]
    %v711 = vld [vmem:[%s1 + $0x888] sm:$0xff]
    %v712 = vld [vmem:[%s1 + $0x890] sm:$0xff]
    %v713 = vld [vmem:[%s1 + $0x898] sm:$0xff]
    %v714 = vld [vmem:[%s1 + $0x8a0] sm:$0xff]
    %v715 = vld [vmem:[%s1 + $0x8a8] sm:$0xff]
    %v716 = vld [vmem:[%s1 + $0x8b0] sm:$0xff]
    %v717 = vld [vmem:[%s1 + $0x8b8] sm:$0xff]
    %v718 = vld [vmem:[%s1 + $0x8c0] sm:$0xff]
    %v719 = vld [vmem:[%s1 + $0x8c8] sm:$0xff]
    %v720 = vld [vmem:[%s1 + $0x8d0] sm:$0xff]
    %v721 = vld [vmem:[%s1 + $0x8d8] sm:$0xff]
    %v722 = vld [vmem:[%s1 + $0x8e0] sm:$0xff]
    %v723 = vld [vmem:[%s1 + $0x8e8] sm:$0xff]
    %v724 = vld [vmem:[%s1 + $0x8f0] sm:$0xff]
    %v725 = vld [vmem:[%s1 + $0x8f8] sm:$0xff]
    %v726 = vld [vmem:[%s1 + $0x900] sm:$0xff]
    %v727 = vld [vmem:[%s1 + $0x908] sm:$0xff]
    %v728 = vld [vmem:[%s1 + $0x910] sm:$0xff]
    %v729 = vld [vmem:[%s1 + $0x918] sm:$0xff]
    %v730 = vld [vmem:[%s1 + $0x920] sm:$0xff]
    %v731 = vld [vmem:[%s1 + $0x928] sm:$0xff]
    %v732 = vld [vmem:[%s1 + $0x930] sm:$0xff]
    %v733 = vld [vmem:[%s1 + $0x938] sm:$0xff]
    %v734 = vld [vmem:[%s1 + $0x940] sm:$0xff]
    %v735 = vld [vmem:[%s1 + $0x948] sm:$0xff]
    %v736 = vld [vmem:[%s1 + $0x950] sm:$0xff]
    %v737 = vld [vmem:[%s1 + $0x958] sm:$0xff]
    %v738 = vld [vmem:[%s1 + $0x960] sm:$0xff]
    %v739 = vld [vmem:[%s1 + $0x968] sm:$0xff]
    %v740 = vld [vmem:[%s1 + $0x970] sm:$0xff]
    %v741 = vld [vmem:[%s1 + $0x978] sm:$0xff]
    %v742 = vld [vmem:[%s1 + $0x980] sm:$0xff]
    %v743 = vld [vmem:[%s1 + $0x988] sm:$0xff]
    %v744 = vld [vmem:[%s1 + $0x990] sm:$0xff]
    %v745 = vld [vmem:[%s1 + $0x998] sm:$0xff]
    %v746 = vld [vmem:[%s1 + $0x9a0] sm:$0xff]
    %v747 = vld [vmem:[%s1 + $0x9a8] sm:$0xff]
    %v748 = vld [vmem:[%s1 + $0x9b0] sm:$0xff]
    %v749 = vld [vmem:[%s1 + $0x9b8] sm:$0xff]
    %v750 = vld [vmem:[%s1 + $0x9c0] sm:$0xff]
    %v751 = vld [vmem:[%s1 + $0x9c8] sm:$0xff]
    %v752 = vld [vmem:[%s1 + $0x9d0] sm:$0xff]
    %v753 = vld [vmem:[%s1 + $0x9d8] sm:$0xff]
    %v754 = vld [vmem:[%s1 + $0x9e0] sm:$0xff]
    %v755 = vld [vmem:[%s1 + $0x9e8] sm:$0xff]
    %v756 = vld [vmem:[%s1 + $0x9f0] sm:$0xff]
    %v757 = vld [vmem:[%s1 + $0x9f8] sm:$0xff]
    %v758 = vld [vmem:[%s1 + $0xa00] sm:$0xff]
    %v759 = vld [vmem:[%s1 + $0xa08] sm:$0xff]
    %v760 = vld [vmem:[%s1 + $0xa10] sm:$0xff]
    %v761 = vld [vmem:[%s1 + $0xa18] sm:$0xff]
    %v762 = vld [vmem:[%s1 + $0xa20] sm:$0xff]
    %v763 = vld [vmem:[%s1 + $0xa28] sm:$0xff]
    %v764 = vld [vmem:[%s1 + $0xa30] sm:$0xff]
    %v765 = vld [vmem:[%s1 + $0xa38] sm:$0xff]
    %v766 = vld [vmem:[%s1 + $0xa40] sm:$0xff]
    %v767 = vld [vmem:[%s1 + $0xa48] sm:$0xff]
    %v768 = vld [vmem:[%s1 + $0xa50] sm:$0xff]
    %v769 = vld [vmem:[%s1 + $0xa58] sm:$0xff]
    %v770 = vld [vmem:[%s1 + $0xa60] sm:$0xff]
    %v771 = vld [vmem:[%s1 + $0xa68] sm:$0xff]
    %v772 = vld [vmem:[%s1 + $0xa70] sm:$0xff]
    %v773 = vld [vmem:[%s1 + $0xa78] sm:$0xff]
    %v774 = vld [vmem:[%s1 + $0xa80] sm:$0xff]
    %v775 = vld [vmem:[%s1 + $0xa88] sm:$0xff]
    %v776 = vld [vmem:[%s1 + $0xa90] sm:$0xff]
    %v777 = vld [vmem:[%s1 + $0xa98] sm:$0xff]
    %v778 = vld [vmem:[%s1 + $0xaa0] sm:$0xff]
    %v779 = vld [vmem:[%s1 + $0xaa8] sm:$0xff]
    %v780 = vld [vmem:[%s1 + $0xab0] sm:$0xff]
    %v781 = vld [vmem:[%s1 + $0xab8] sm:$0xff]
    %v782 = vld [vmem:[%s1 + $0xac0] sm:$0xff]
    %v783 = vld [vmem:[%s1 + $0xac8] sm:$0xff]
    %v784 = vld [vmem:[%s1 + $0xad0] sm:$0xff]
    %v785 = vld [vmem:[%s1 + $0xad8] sm:$0xff]
    %v786 = vld [vmem:[%s1 + $0xae0] sm:$0xff]
    %v787 = vld [vmem:[%s1 + $0xae8] sm:$0xff]
    %v788 = vld [vmem:[%s1 + $0xaf0] sm:$0xff]
    %v789 = vld [vmem:[%s1 + $0xaf8] sm:$0xff]
    %v790 = vld [vmem:[%s1 + $0xb00] sm:$0xff]
    %v791 = vld [vmem:[%s1 + $0xb08] sm:$0xff]
    %v792 = vld [vmem:[%s1 + $0xb10] sm:$0xff]
    %v793 = vld [vmem:[%s1 + $0xb18] sm:$0xff]
    %v794 = vld [vmem:[%s1 + $0xb20] sm:$0xff]
    %v795 = vld [vmem:[%s1 + $0xb28] sm:$0xff]
    %v796 = vld [vmem:[%s1 + $0xb30] sm:$0xff]
    %v797 = vld [vmem:[%s1 + $0xb38] sm:$0xff]
    %v798 = vld [vmem:[%s1 + $0xb40] sm:$0xff]
    %v799 = vld [vmem:[%s1 + $0xb48] sm:$0xff]
    %v800 = vld [vmem:[%s1 + $0xb50] sm:$0xff]
    %v801 = vld [vmem:[%s1 + $0xb58] sm:$0xff]
    %v802 = vld [vmem:[%s1 + $0xb60] sm:$0xff]
    %v803 = vld [vmem:[%s1 + $0xb68] sm:$0xff]
    %v804 = vld [vmem:[%s1 + $0xb70] sm:$0xff]
    %v805 = vld [vmem:[%s1 + $0xb78] sm:$0xff]
    %v806 = vld [vmem:[%s1 + $0xb80] sm:$0xff]
    %v807 = vld [vmem:[%s1 + $0xb88] sm:$0xff]
    %v808 = vld [vmem:[%s1 + $0xb90] sm:$0xff]
    %v809 = vld [vmem:[%s1 + $0xb98] sm:$0xff]
    %v810 = vld [vmem:[%s1 + $0xba0] sm:$0xff]
    %v811 = vld [vmem:[%s1 + $0xba8] sm:$0xff]
    %v812 = vld [vmem:[%s1 + $0xbb0] sm:$0xff]
    %v813 = vld [vmem:[%s1 + $0xbb8] sm:$0xff]
    %v814 = vld [vmem:[%s1 + $0xbc0] sm:$0xff]
    %v815 = vld [vmem:[%s1 + $0xbc8] sm:$0xff]
    %v816 = vld [vmem:[%s1 + $0xbd0] sm:$0xff]
    %v817 = vld [vmem:[%s1 + $0xbd8] sm:$0xff]
    %v818 = vld [vmem:[%s1 + $0xbe0] sm:$0xff]
    %v819 = vld [vmem:[%s1 + $0xbe8] sm:$0xff]
    %v820 = vld [vmem:[%s1 + $0xbf0] sm:$0xff]
    %v821 = vld [vmem:[%s1 + $0xbf8] sm:$0xff]
    %v822 = vld [vmem:[%s1 + $0xc00] sm:$0xff]
    %v823 = vld [vmem:[%s1 + $0xc08] sm:$0xff]
    %v824 = vld [vmem:[%s1 + $0xc10] sm:$0xff]
    %v825 = vld [vmem:[%s1 + $0xc18] sm:$0xff]
    %v826 = vld [vmem:[%s1 + $0xc20] sm:$0xff]
    %v827 = vld [vmem:[%s1 + $0xc28] sm:$0xff]
    %v828 = vld [vmem:[%s1 + $0xc30] sm:$0xff]
    %v829 = vld [vmem:[%s1 + $0xc38] sm:$0xff]
    %v830 = vld [vmem:[%s1 + $0xc40] sm:$0xff]
    %v831 = vld [vmem:[%s1 + $0xc48] sm:$0xff]
    %v832 = vld [vmem:[%s1 + $0xc50] sm:$0xff]
    %v833 = vld [vmem:[%s1 + $0xc58] sm:$0xff]
    %v834 = vld [vmem:[%s1 + $0xc60] sm:$0xff]
    %v835 = vld [vmem:[%s1 + $0xc68] sm:$0xff]
    %v836 = vld [vmem:[%s1 + $0xc70] sm:$0xff]
    %v837 = vld [vmem:[%s1 + $0xc78] sm:$0xff]
    %v838 = vld [vmem:[%s1 + $0xc80] sm:$0xff]
    %v839 = vld [vmem:[%s1 + $0xc88] sm:$0xff]
    %v840 = vld [vmem:[%s1 + $0xc90] sm:$0xff]
    %v841 = vld [vmem:[%s1 + $0xc98] sm:$0xff]
    %v842 = vld [vmem:[%s1 + $0xca0] sm:$0xff]
    %v843 = vld [vmem:[%s1 + $0xca8] sm:$0xff]
    %v844 = vld [vmem:[%s1 + $0xcb0] sm:$0xff]
    %v845 = vld [vmem:[%s1 + $0xcb8] sm:$0xff]
    %v846 = vld [vmem:[%s1 + $0xcc0] sm:$0xff]
    %v847 = vld [vmem:[%s1 + $0xcc8] sm:$0xff]
    %v848 = vld [vmem:[%s1 + $0xcd0] sm:$0xff]
    %v849 = vld [vmem:[%s1 + $0xcd8] sm:$0xff]
    %v850 = vld [vmem:[%s1 + $0xce0] sm:$0xff]
    %v851 = vld [vmem:[%s1 + $0xce8] sm:$0xff]
    %v852 = vld [vmem:[%s1 + $0xcf0] sm:$0xff]
    %v853 = vld [vmem:[%s1 + $0xcf8] sm:$0xff]
    %v854 = vld [vmem:[%s1 + $0xd00] sm:$0xff]
    %v855 = vld [vmem:[%s1 + $0xd08] sm:$0xff]
    %v856 = vld [vmem:[%s1 + $0xd10] sm:$0xff]
    %v857 = vld [vmem:[%s1 + $0xd18] sm:$0xff]
    %v858 = vld [vmem:[%s1 + $0xd20] sm:$0xff]
    %v859 = vld [vmem:[%s1 + $0xd28] sm:$0xff]
    %v860 = vld [vmem:[%s1 + $0xd30] sm:$0xff]
    %v861 = vld [vmem:[%s1 + $0xd38] sm:$0xff]
    %v862 = vld [vmem:[%s1 + $0xd40] sm:$0xff]
    %v863 = vld [vmem:[%s1 + $0xd48] sm:$0xff]
    %v864 = vld [vmem:[%s1 + $0xd50] sm:$0xff]
    %v865 = vld [vmem:[%s1 + $0xd58] sm:$0xff]
    %v866 = vld [vmem:[%s1 + $0xd60] sm:$0xff]
    %v867 = vld [vmem:[%s1 + $0xd68] sm:$0xff]
    %v868 = vld [vmem:[%s1 + $0xd70] sm:$0xff]
    %v869 = vld [vmem:[%s1 + $0xd78] sm:$0xff]
    %v870 = vld [vmem:[%s1 + $0xd80] sm:$0xff]
    %v871 = vld [vmem:[%s1 + $0xd88] sm:$0xff]
    %v872 = vld [vmem:[%s1 + $0xd90] sm:$0xff]
    %v873 = vld [vmem:[%s1 + $0xd98] sm:$0xff]
    %v874 = vld [vmem:[%s1 + $0xda0] sm:$0xff]
    %v875 = vld [vmem:[%s1 + $0xda8] sm:$0xff]
    %v876 = vld [vmem:[%s1 + $0xdb0] sm:$0xff]
    %v877 = vld [vmem:[%s1 + $0xdb8] sm:$0xff]
    %v878 = vld [vmem:[%s1 + $0xdc0] sm:$0xff]
    %v879 = vld [vmem:[%s1 + $0xdc8] sm:$0xff]
    %v880 = vld [vmem:[%s1 + $0xdd0] sm:$0xff]
    %v881 = vld [vmem:[%s1 + $0xdd8] sm:$0xff]
    %v882 = vld [vmem:[%s1 + $0xde0] sm:$0xff]
    %v883 = vld [vmem:[%s1 + $0xde8] sm:$0xff]
    %v884 = vld [vmem:[%s1 + $0xdf0] sm:$0xff]
    %v885 = vld [vmem:[%s1 + $0xdf8] sm:$0xff]
    %v886 = vld [vmem:[%s1 + $0xe00] sm:$0xff]
    %v887 = vld [vmem:[%s1 + $0xe08] sm:$0xff]
    %v888 = vld [vmem:[%s1 + $0xe10] sm:$0xff]
    %v889 = vld [vmem:[%s1 + $0xe18] sm:$0xff]
    %v890 = vld [vmem:[%s1 + $0xe20] sm:$0xff]
    %v891 = vld [vmem:[%s1 + $0xe28] sm:$0xff]
    %v892 = vld [vmem:[%s1 + $0xe30] sm:$0xff]
    %v893 = vld [vmem:[%s1 + $0xe38] sm:$0xff]
    %v894 = vld [vmem:[%s1 + $0xe40] sm:$0xff]
    %v895 = vld [vmem:[%s1 + $0xe48] sm:$0xff]
    %v896 = vld [vmem:[%s1 + $0xe50] sm:$0xff]
    %v897 = vld [vmem:[%s1 + $0xe58] sm:$0xff]
    %v898 = vld [vmem:[%s1 + $0xe60] sm:$0xff]
    %v899 = vld [vmem:[%s1 + $0xe68] sm:$0xff]
    %v900 = vld [vmem:[%s1 + $0xe70] sm:$0xff]
    %v901 = vld [vmem:[%s1 + $0xe78] sm:$0xff]
    %v902 = vld [vmem:[%s1 + $0xe80] sm:$0xff]
    %v903 = vld [vmem:[%s1 + $0xe88] sm:$0xff]
    %v904 = vld [vmem:[%s1 + $0xe90] sm:$0xff]
    %v905 = vld [vmem:[%s1 + $0xe98] sm:$0xff]
    %v906 = vld [vmem:[%s1 + $0xea0] sm:$0xff]
    %v907 = vld [vmem:[%s1 + $0xea8] sm:$0xff]
    %v908 = vld [vmem:[%s1 + $0xeb0] sm:$0xff]
    %v909 = vld [vmem:[%s1 + $0xeb8] sm:$0xff]
    %v910 = vld [vmem:[%s1 + $0xec0] sm:$0xff]
    %v911 = vld [vmem:[%s1 + $0xec8] sm:$0xff]
    %v912 = vld [vmem:[%s1 + $0xed0] sm:$0xff]
    %v913 = vld [vmem:[%s1 + $0xed8] sm:$0xff]
    %v914 = vld [vmem:[%s1 + $0xee0] sm:$0xff]
    %v915 = vld [vmem:[%s1 + $0xee8] sm:$0xff]
    %v916 = vld [vmem:[%s1 + $0xef0] sm:$0xff]
    %v917 = vld [vmem:[%s1 + $0xef8] sm:$0xff]
    %v918 = vld [vmem:[%s1 + $0xf00] sm:$0xff]
    %v919 = vld [vmem:[%s1 + $0xf08] sm:$0xff]
    %v920 = vld [vmem:[%s1 + $0xf10] sm:$0xff]
    %v921 = vld [vmem:[%s1 + $0xf18] sm:$0xff]
    %v922 = vld [vmem:[%s1 + $0xf20] sm:$0xff]
    %v923 = vld [vmem:[%s1 + $0xf28] sm:$0xff]
    %v924 = vld [vmem:[%s1 + $0xf30] sm:$0xff]
    %v925 = vld [vmem:[%s1 + $0xf38] sm:$0xff]
    %v926 = vld [vmem:[%s1 + $0xf40] sm:$0xff]
    %v927 = vld [vmem:[%s1 + $0xf48] sm:$0xff]
    %v928 = vld [vmem:[%s1 + $0xf50] sm:$0xff]
    %v929 = vld [vmem:[%s1 + $0xf58] sm:$0xff]
    %v930 = vld [vmem:[%s1 + $0xf60] sm:$0xff]
    %v931 = vld [vmem:[%s1 + $0xf68] sm:$0xff]
    %v932 = vld [vmem:[%s1 + $0xf70] sm:$0xff]
    %v933 = vld [vmem:[%s1 + $0xf78] sm:$0xff]
    %v934 = vld [vmem:[%s1 + $0xf80] sm:$0xff]
    %v935 = vld [vmem:[%s1 + $0xf88] sm:$0xff]
    %v936 = vld [vmem:[%s1 + $0xf90] sm:$0xff]
    %v937 = vld [vmem:[%s1 + $0xf98] sm:$0xff]
    %v938 = vld [vmem:[%s1 + $0xfa0] sm:$0xff]
    %v939 = vld [vmem:[%s1 + $0xfa8] sm:$0xff]
    %v940 = vld [vmem:[%s1 + $0xfb0] sm:$0xff]
    %v941 = vld [vmem:[%s1 + $0xfb8] sm:$0xff]
    %v942 = vld [vmem:[%s1 + $0xfc0] sm:$0xff]
    %v943 = vld [vmem:[%s1 + $0xfc8] sm:$0xff]
    %v944 = vld [vmem:[%s1 + $0xfd0] sm:$0xff]
    %v945 = vld [vmem:[%s1 + $0xfd8] sm:$0xff]
    %v946 = vld [vmem:[%s1 + $0xfe0] sm:$0xff]
    %v947 = vld [vmem:[%s1 + $0xfe8] sm:$0xff]
    %v948 = vld [vmem:[%s1 + $0xff0] sm:$0xff]
    %v949 = vld [vmem:[%s1 + $0xff8] sm:$0xff]
    %v1206 = vunpack.c.l.b16 %v694
    %v1207 = vunpack.c.h.b16 %v694
    %v1208 = vunpack.c.l.b16 %v695
    %v1209 = vunpack.c.h.b16 %v695
    %v1210 = vunpack.c.l.b16 %v696
    %v1211 = vunpack.c.h.b16 %v696
    %v1212 = vunpack.c.l.b16 %v697
    %v1213 = vunpack.c.h.b16 %v697
    %v1214 = vunpack.c.l.b16 %v698
    %v1215 = vunpack.c.h.b16 %v698
    %v1216 = vunpack.c.l.b16 %v699
    %v1217 = vunpack.c.h.b16 %v699
    %v1218 = vunpack.c.l.b16 %v700
    %v1219 = vunpack.c.h.b16 %v700
    %v1220 = vunpack.c.l.b16 %v701
    %v1221 = vunpack.c.h.b16 %v701
    %v1222 = vunpack.c.l.b16 %v702
    %v1223 = vunpack.c.h.b16 %v702
    %v1224 = vunpack.c.l.b16 %v703
    %v1225 = vunpack.c.h.b16 %v703
    %v1226 = vunpack.c.l.b16 %v704
    %v1227 = vunpack.c.h.b16 %v704
    %v1228 = vunpack.c.l.b16 %v705
    %v1229 = vunpack.c.h.b16 %v705
    %v1230 = vunpack.c.l.b16 %v706
    %v1231 = vunpack.c.h.b16 %v706
    %v1232 = vunpack.c.l.b16 %v707
    %v1233 = vunpack.c.h.b16 %v707
    %v1234 = vunpack.c.l.b16 %v708
    %v1235 = vunpack.c.h.b16 %v708
    %v1236 = vunpack.c.l.b16 %v709
    %v1237 = vunpack.c.h.b16 %v709
    %v1238 = vunpack.c.l.b16 %v710
    %v1239 = vunpack.c.h.b16 %v710
    %v1240 = vunpack.c.l.b16 %v711
    %v1241 = vunpack.c.h.b16 %v711
    %v1242 = vunpack.c.l.b16 %v712
    %v1243 = vunpack.c.h.b16 %v712
    %v1244 = vunpack.c.l.b16 %v713
    %v1245 = vunpack.c.h.b16 %v713
    %v1246 = vunpack.c.l.b16 %v714
    %v1247 = vunpack.c.h.b16 %v714
    %v1248 = vunpack.c.l.b16 %v715
    %v1249 = vunpack.c.h.b16 %v715
    %v1250 = vunpack.c.l.b16 %v716
    %v1251 = vunpack.c.h.b16 %v716
    %v1252 = vunpack.c.l.b16 %v717
    %v1253 = vunpack.c.h.b16 %v717
    %v1254 = vunpack.c.l.b16 %v718
    %v1255 = vunpack.c.h.b16 %v718
    %v1256 = vunpack.c.l.b16 %v719
    %v1257 = vunpack.c.h.b16 %v719
    %v1258 = vunpack.c.l.b16 %v720
    %v1259 = vunpack.c.h.b16 %v720
    %v1260 = vunpack.c.l.b16 %v721
    %v1261 = vunpack.c.h.b16 %v721
    %v1262 = vunpack.c.l.b16 %v722
    %v1263 = vunpack.c.h.b16 %v722
    %v1264 = vunpack.c.l.b16 %v723
    %v1265 = vunpack.c.h.b16 %v723
    %v1266 = vunpack.c.l.b16 %v724
    %v1267 = vunpack.c.h.b16 %v724
    %v1268 = vunpack.c.l.b16 %v725
    %v1269 = vunpack.c.h.b16 %v725
    %v1270 = vunpack.c.l.b16 %v726
    %v1271 = vunpack.c.h.b16 %v726
    %v1272 = vunpack.c.l.b16 %v727
    %v1273 = vunpack.c.h.b16 %v727
    %v1274 = vunpack.c.l.b16 %v728
    %v1275 = vunpack.c.h.b16 %v728
    %v1276 = vunpack.c.l.b16 %v729
    %v1277 = vunpack.c.h.b16 %v729
    %v1278 = vunpack.c.l.b16 %v730
    %v1279 = vunpack.c.h.b16 %v730
    %v1280 = vunpack.c.l.b16 %v731
    %v1281 = vunpack.c.h.b16 %v731
    %v1282 = vunpack.c.l.b16 %v732
    %v1283 = vunpack.c.h.b16 %v732
    %v1284 = vunpack.c.l.b16 %v733
    %v1285 = vunpack.c.h.b16 %v733
    %v1286 = vunpack.c.l.b16 %v734
    %v1287 = vunpack.c.h.b16 %v734
    %v1288 = vunpack.c.l.b16 %v735
    %v1289 = vunpack.c.h.b16 %v735
    %v1290 = vunpack.c.l.b16 %v736
    %v1291 = vunpack.c.h.b16 %v736
    %v1292 = vunpack.c.l.b16 %v737
    %v1293 = vunpack.c.h.b16 %v737
    %v1294 = vunpack.c.l.b16 %v738
    %v1295 = vunpack.c.h.b16 %v738
    %v1296 = vunpack.c.l.b16 %v739
    %v1297 = vunpack.c.h.b16 %v739
    %v1298 = vunpack.c.l.b16 %v740
    %v1299 = vunpack.c.h.b16 %v740
    %v1300 = vunpack.c.l.b16 %v741
    %v1301 = vunpack.c.h.b16 %v741
    %v1302 = vunpack.c.l.b16 %v742
    %v1303 = vunpack.c.h.b16 %v742
    %v1304 = vunpack.c.l.b16 %v743
    %v1305 = vunpack.c.h.b16 %v743
    %v1306 = vunpack.c.l.b16 %v744
    %v1307 = vunpack.c.h.b16 %v744
    %v1308 = vunpack.c.l.b16 %v745
    %v1309 = vunpack.c.h.b16 %v745
    %v1310 = vunpack.c.l.b16 %v746
    %v1311 = vunpack.c.h.b16 %v746
    %v1312 = vunpack.c.l.b16 %v747
    %v1313 = vunpack.c.h.b16 %v747
    %v1314 = vunpack.c.l.b16 %v748
    %v1315 = vunpack.c.h.b16 %v748
    %v1316 = vunpack.c.l.b16 %v749
    %v1317 = vunpack.c.h.b16 %v749
    %v1318 = vunpack.c.l.b16 %v750
    %v1319 = vunpack.c.h.b16 %v750
    %v1320 = vunpack.c.l.b16 %v751
    %v1321 = vunpack.c.h.b16 %v751
    %v1322 = vunpack.c.l.b16 %v752
    %v1323 = vunpack.c.h.b16 %v752
    %v1324 = vunpack.c.l.b16 %v753
    %v1325 = vunpack.c.h.b16 %v753
    %v1326 = vunpack.c.l.b16 %v754
    %v1327 = vunpack.c.h.b16 %v754
    %v1328 = vunpack.c.l.b16 %v755
    %v1329 = vunpack.c.h.b16 %v755
    %v1330 = vunpack.c.l.b16 %v756
    %v1331 = vunpack.c.h.b16 %v756
    %v1332 = vunpack.c.l.b16 %v757
    %v1333 = vunpack.c.h.b16 %v757
    %v1334 = vunpack.c.l.b16 %v758
    %v1335 = vunpack.c.h.b16 %v758
    %v1336 = vunpack.c.l.b16 %v759
    %v1337 = vunpack.c.h.b16 %v759
    %v1338 = vunpack.c.l.b16 %v760
    %v1339 = vunpack.c.h.b16 %v760
    %v1340 = vunpack.c.l.b16 %v761
    %v1341 = vunpack.c.h.b16 %v761
    %v1342 = vunpack.c.l.b16 %v762
    %v1343 = vunpack.c.h.b16 %v762
    %v1344 = vunpack.c.l.b16 %v763
    %v1345 = vunpack.c.h.b16 %v763
    %v1346 = vunpack.c.l.b16 %v764
    %v1347 = vunpack.c.h.b16 %v764
    %v1348 = vunpack.c.l.b16 %v765
    %v1349 = vunpack.c.h.b16 %v765
    %v1350 = vunpack.c.l.b16 %v766
    %v1351 = vunpack.c.h.b16 %v766
    %v1352 = vunpack.c.l.b16 %v767
    %v1353 = vunpack.c.h.b16 %v767
    %v1354 = vunpack.c.l.b16 %v768
    %v1355 = vunpack.c.h.b16 %v768
    %v1356 = vunpack.c.l.b16 %v769
    %v1357 = vunpack.c.h.b16 %v769
    %v1358 = vunpack.c.l.b16 %v770
    %v1359 = vunpack.c.h.b16 %v770
    %v1360 = vunpack.c.l.b16 %v771
    %v1361 = vunpack.c.h.b16 %v771
    %v1362 = vunpack.c.l.b16 %v772
    %v1363 = vunpack.c.h.b16 %v772
    %v1364 = vunpack.c.l.b16 %v773
    %v1365 = vunpack.c.h.b16 %v773
    %v1366 = vunpack.c.l.b16 %v774
    %v1367 = vunpack.c.h.b16 %v774
    %v1368 = vunpack.c.l.b16 %v775
    %v1369 = vunpack.c.h.b16 %v775
    %v1370 = vunpack.c.l.b16 %v776
    %v1371 = vunpack.c.h.b16 %v776
    %v1372 = vunpack.c.l.b16 %v777
    %v1373 = vunpack.c.h.b16 %v777
    %v1374 = vunpack.c.l.b16 %v778
    %v1375 = vunpack.c.h.b16 %v778
    %v1376 = vunpack.c.l.b16 %v779
    %v1377 = vunpack.c.h.b16 %v779
    %v1378 = vunpack.c.l.b16 %v780
    %v1379 = vunpack.c.h.b16 %v780
    %v1380 = vunpack.c.l.b16 %v781
    %v1381 = vunpack.c.h.b16 %v781
    %v1382 = vunpack.c.l.b16 %v782
    %v1383 = vunpack.c.h.b16 %v782
    %v1384 = vunpack.c.l.b16 %v783
    %v1385 = vunpack.c.h.b16 %v783
    %v1386 = vunpack.c.l.b16 %v784
    %v1387 = vunpack.c.h.b16 %v784
    %v1388 = vunpack.c.l.b16 %v785
    %v1389 = vunpack.c.h.b16 %v785
    %v1390 = vunpack.c.l.b16 %v786
    %v1391 = vunpack.c.h.b16 %v786
    %v1392 = vunpack.c.l.b16 %v787
    %v1393 = vunpack.c.h.b16 %v787
    %v1394 = vunpack.c.l.b16 %v788
    %v1395 = vunpack.c.h.b16 %v788
    %v1396 = vunpack.c.l.b16 %v789
    %v1397 = vunpack.c.h.b16 %v789
    %v1398 = vunpack.c.l.b16 %v790
    %v1399 = vunpack.c.h.b16 %v790
    %v1400 = vunpack.c.l.b16 %v791
    %v1401 = vunpack.c.h.b16 %v791
    %v1402 = vunpack.c.l.b16 %v792
    %v1403 = vunpack.c.h.b16 %v792
    %v1404 = vunpack.c.l.b16 %v793
    %v1405 = vunpack.c.h.b16 %v793
    %v1406 = vunpack.c.l.b16 %v794
    %v1407 = vunpack.c.h.b16 %v794
    %v1408 = vunpack.c.l.b16 %v795
    %v1409 = vunpack.c.h.b16 %v795
    %v1410 = vunpack.c.l.b16 %v796
    %v1411 = vunpack.c.h.b16 %v796
    %v1412 = vunpack.c.l.b16 %v797
    %v1413 = vunpack.c.h.b16 %v797
    %v1414 = vunpack.c.l.b16 %v798
    %v1415 = vunpack.c.h.b16 %v798
    %v1416 = vunpack.c.l.b16 %v799
    %v1417 = vunpack.c.h.b16 %v799
    %v1418 = vunpack.c.l.b16 %v800
    %v1419 = vunpack.c.h.b16 %v800
    %v1420 = vunpack.c.l.b16 %v801
    %v1421 = vunpack.c.h.b16 %v801
    %v1422 = vunpack.c.l.b16 %v802
    %v1423 = vunpack.c.h.b16 %v802
    %v1424 = vunpack.c.l.b16 %v803
    %v1425 = vunpack.c.h.b16 %v803
    %v1426 = vunpack.c.l.b16 %v804
    %v1427 = vunpack.c.h.b16 %v804
    %v1428 = vunpack.c.l.b16 %v805
    %v1429 = vunpack.c.h.b16 %v805
    %v1430 = vunpack.c.l.b16 %v806
    %v1431 = vunpack.c.h.b16 %v806
    %v1432 = vunpack.c.l.b16 %v807
    %v1433 = vunpack.c.h.b16 %v807
    %v1434 = vunpack.c.l.b16 %v808
    %v1435 = vunpack.c.h.b16 %v808
    %v1436 = vunpack.c.l.b16 %v809
    %v1437 = vunpack.c.h.b16 %v809
    %v1438 = vunpack.c.l.b16 %v810
    %v1439 = vunpack.c.h.b16 %v810
    %v1440 = vunpack.c.l.b16 %v811
    %v1441 = vunpack.c.h.b16 %v811
    %v1442 = vunpack.c.l.b16 %v812
    %v1443 = vunpack.c.h.b16 %v812
    %v1444 = vunpack.c.l.b16 %v813
    %v1445 = vunpack.c.h.b16 %v813
    %v1446 = vunpack.c.l.b16 %v814
    %v1447 = vunpack.c.h.b16 %v814
    %v1448 = vunpack.c.l.b16 %v815
    %v1449 = vunpack.c.h.b16 %v815
    %v1450 = vunpack.c.l.b16 %v816
    %v1451 = vunpack.c.h.b16 %v816
    %v1452 = vunpack.c.l.b16 %v817
    %v1453 = vunpack.c.h.b16 %v817
    %v1454 = vunpack.c.l.b16 %v818
    %v1455 = vunpack.c.h.b16 %v818
    %v1456 = vunpack.c.l.b16 %v819
    %v1457 = vunpack.c.h.b16 %v819
    %v1458 = vunpack.c.l.b16 %v820
    %v1459 = vunpack.c.h.b16 %v820
    %v1460 = vunpack.c.l.b16 %v821
    %v1461 = vunpack.c.h.b16 %v821
    %v1462 = vunpack.c.l.b16 %v822
    %v1463 = vunpack.c.h.b16 %v822
    %v1464 = vunpack.c.l.b16 %v823
    %v1465 = vunpack.c.h.b16 %v823
    %v1466 = vunpack.c.l.b16 %v824
    %v1467 = vunpack.c.h.b16 %v824
    %v1468 = vunpack.c.l.b16 %v825
    %v1469 = vunpack.c.h.b16 %v825
    %v1470 = vunpack.c.l.b16 %v826
    %v1471 = vunpack.c.h.b16 %v826
    %v1472 = vunpack.c.l.b16 %v827
    %v1473 = vunpack.c.h.b16 %v827
    %v1474 = vunpack.c.l.b16 %v828
    %v1475 = vunpack.c.h.b16 %v828
    %v1476 = vunpack.c.l.b16 %v829
    %v1477 = vunpack.c.h.b16 %v829
    %v1478 = vunpack.c.l.b16 %v830
    %v1479 = vunpack.c.h.b16 %v830
    %v1480 = vunpack.c.l.b16 %v831
    %v1481 = vunpack.c.h.b16 %v831
    %v1482 = vunpack.c.l.b16 %v832
    %v1483 = vunpack.c.h.b16 %v832
    %v1484 = vunpack.c.l.b16 %v833
    %v1485 = vunpack.c.h.b16 %v833
    %v1486 = vunpack.c.l.b16 %v834
    %v1487 = vunpack.c.h.b16 %v834
    %v1488 = vunpack.c.l.b16 %v835
    %v1489 = vunpack.c.h.b16 %v835
    %v1490 = vunpack.c.l.b16 %v836
    %v1491 = vunpack.c.h.b16 %v836
    %v1492 = vunpack.c.l.b16 %v837
    %v1493 = vunpack.c.h.b16 %v837
    %v1494 = vunpack.c.l.b16 %v838
    %v1495 = vunpack.c.h.b16 %v838
    %v1496 = vunpack.c.l.b16 %v839
    %v1497 = vunpack.c.h.b16 %v839
    %v1498 = vunpack.c.l.b16 %v840
    %v1499 = vunpack.c.h.b16 %v840
    %v1500 = vunpack.c.l.b16 %v841
    %v1501 = vunpack.c.h.b16 %v841
    %v1502 = vunpack.c.l.b16 %v842
    %v1503 = vunpack.c.h.b16 %v842
    %v1504 = vunpack.c.l.b16 %v843
    %v1505 = vunpack.c.h.b16 %v843
    %v1506 = vunpack.c.l.b16 %v844
    %v1507 = vunpack.c.h.b16 %v844
    %v1508 = vunpack.c.l.b16 %v845
    %v1509 = vunpack.c.h.b16 %v845
    %v1510 = vunpack.c.l.b16 %v846
    %v1511 = vunpack.c.h.b16 %v846
    %v1512 = vunpack.c.l.b16 %v847
    %v1513 = vunpack.c.h.b16 %v847
    %v1514 = vunpack.c.l.b16 %v848
    %v1515 = vunpack.c.h.b16 %v848
    %v1516 = vunpack.c.l.b16 %v849
    %v1517 = vunpack.c.h.b16 %v849
    %v1518 = vunpack.c.l.b16 %v850
    %v1519 = vunpack.c.h.b16 %v850
    %v1520 = vunpack.c.l.b16 %v851
    %v1521 = vunpack.c.h.b16 %v851
    %v1522 = vunpack.c.l.b16 %v852
    %v1523 = vunpack.c.h.b16 %v852
    %v1524 = vunpack.c.l.b16 %v853
    %v1525 = vunpack.c.h.b16 %v853
    %v1526 = vunpack.c.l.b16 %v854
    %v1527 = vunpack.c.h.b16 %v854
    %v1528 = vunpack.c.l.b16 %v855
    %v1529 = vunpack.c.h.b16 %v855
    %v1530 = vunpack.c.l.b16 %v856
    %v1531 = vunpack.c.h.b16 %v856
    %v1532 = vunpack.c.l.b16 %v857
    %v1533 = vunpack.c.h.b16 %v857
    %v1534 = vunpack.c.l.b16 %v858
    %v1535 = vunpack.c.h.b16 %v858
    %v1536 = vunpack.c.l.b16 %v859
    %v1537 = vunpack.c.h.b16 %v859
    %v1538 = vunpack.c.l.b16 %v860
    %v1539 = vunpack.c.h.b16 %v860
    %v1540 = vunpack.c.l.b16 %v861
    %v1541 = vunpack.c.h.b16 %v861
    %v1542 = vunpack.c.l.b16 %v862
    %v1543 = vunpack.c.h.b16 %v862
    %v1544 = vunpack.c.l.b16 %v863
    %v1545 = vunpack.c.h.b16 %v863
    %v1546 = vunpack.c.l.b16 %v864
    %v1547 = vunpack.c.h.b16 %v864
    %v1548 = vunpack.c.l.b16 %v865
    %v1549 = vunpack.c.h.b16 %v865
    %v1550 = vunpack.c.l.b16 %v866
    %v1551 = vunpack.c.h.b16 %v866
    %v1552 = vunpack.c.l.b16 %v867
    %v1553 = vunpack.c.h.b16 %v867
    %v1554 = vunpack.c.l.b16 %v868
    %v1555 = vunpack.c.h.b16 %v868
    %v1556 = vunpack.c.l.b16 %v869
    %v1557 = vunpack.c.h.b16 %v869
    %v1558 = vunpack.c.l.b16 %v870
    %v1559 = vunpack.c.h.b16 %v870
    %v1560 = vunpack.c.l.b16 %v871
    %v1561 = vunpack.c.h.b16 %v871
    %v1562 = vunpack.c.l.b16 %v872
    %v1563 = vunpack.c.h.b16 %v872
    %v1564 = vunpack.c.l.b16 %v873
    %v1565 = vunpack.c.h.b16 %v873
    %v1566 = vunpack.c.l.b16 %v874
    %v1567 = vunpack.c.h.b16 %v874
    %v1568 = vunpack.c.l.b16 %v875
    %v1569 = vunpack.c.h.b16 %v875
    %v1570 = vunpack.c.l.b16 %v876
    %v1571 = vunpack.c.h.b16 %v876
    %v1572 = vunpack.c.l.b16 %v877
    %v1573 = vunpack.c.h.b16 %v877
    %v1574 = vunpack.c.l.b16 %v878
    %v1575 = vunpack.c.h.b16 %v878
    %v1576 = vunpack.c.l.b16 %v879
    %v1577 = vunpack.c.h.b16 %v879
    %v1578 = vunpack.c.l.b16 %v880
    %v1579 = vunpack.c.h.b16 %v880
    %v1580 = vunpack.c.l.b16 %v881
    %v1581 = vunpack.c.h.b16 %v881
    %v1582 = vunpack.c.l.b16 %v882
    %v1583 = vunpack.c.h.b16 %v882
    %v1584 = vunpack.c.l.b16 %v883
    %v1585 = vunpack.c.h.b16 %v883
    %v1586 = vunpack.c.l.b16 %v884
    %v1587 = vunpack.c.h.b16 %v884
    %v1588 = vunpack.c.l.b16 %v885
    %v1589 = vunpack.c.h.b16 %v885
    %v1590 = vunpack.c.l.b16 %v886
    %v1591 = vunpack.c.h.b16 %v886
    %v1592 = vunpack.c.l.b16 %v887
    %v1593 = vunpack.c.h.b16 %v887
    %v1594 = vunpack.c.l.b16 %v888
    %v1595 = vunpack.c.h.b16 %v888
    %v1596 = vunpack.c.l.b16 %v889
    %v1597 = vunpack.c.h.b16 %v889
    %v1598 = vunpack.c.l.b16 %v890
    %v1599 = vunpack.c.h.b16 %v890
    %v1600 = vunpack.c.l.b16 %v891
    %v1601 = vunpack.c.h.b16 %v891
    %v1602 = vunpack.c.l.b16 %v892
    %v1603 = vunpack.c.h.b16 %v892
    %v1604 = vunpack.c.l.b16 %v893
    %v1605 = vunpack.c.h.b16 %v893
    %v1606 = vunpack.c.l.b16 %v894
    %v1607 = vunpack.c.h.b16 %v894
    %v1608 = vunpack.c.l.b16 %v895
    %v1609 = vunpack.c.h.b16 %v895
    %v1610 = vunpack.c.l.b16 %v896
    %v1611 = vunpack.c.h.b16 %v896
    %v1612 = vunpack.c.l.b16 %v897
    %v1613 = vunpack.c.h.b16 %v897
    %v1614 = vunpack.c.l.b16 %v898
    %v1615 = vunpack.c.h.b16 %v898
    %v1616 = vunpack.c.l.b16 %v899
    %v1617 = vunpack.c.h.b16 %v899
    %v1618 = vunpack.c.l.b16 %v900
    %v1619 = vunpack.c.h.b16 %v900
    %v1620 = vunpack.c.l.b16 %v901
    %v1621 = vunpack.c.h.b16 %v901
    %v1622 = vunpack.c.l.b16 %v902
    %v1623 = vunpack.c.h.b16 %v902
    %v1624 = vunpack.c.l.b16 %v903
    %v1625 = vunpack.c.h.b16 %v903
    %v1626 = vunpack.c.l.b16 %v904
    %v1627 = vunpack.c.h.b16 %v904
    %v1628 = vunpack.c.l.b16 %v905
    %v1629 = vunpack.c.h.b16 %v905
    %v1630 = vunpack.c.l.b16 %v906
    %v1631 = vunpack.c.h.b16 %v906
    %v1632 = vunpack.c.l.b16 %v907
    %v1633 = vunpack.c.h.b16 %v907
    %v1634 = vunpack.c.l.b16 %v908
    %v1635 = vunpack.c.h.b16 %v908
    %v1636 = vunpack.c.l.b16 %v909
    %v1637 = vunpack.c.h.b16 %v909
    %v1638 = vunpack.c.l.b16 %v910
    %v1639 = vunpack.c.h.b16 %v910
    %v1640 = vunpack.c.l.b16 %v911
    %v1641 = vunpack.c.h.b16 %v911
    %v1642 = vunpack.c.l.b16 %v912
    %v1643 = vunpack.c.h.b16 %v912
    %v1644 = vunpack.c.l.b16 %v913
    %v1645 = vunpack.c.h.b16 %v913
    %v1646 = vunpack.c.l.b16 %v914
    %v1647 = vunpack.c.h.b16 %v914
    %v1648 = vunpack.c.l.b16 %v915
    %v1649 = vunpack.c.h.b16 %v915
    %v1650 = vunpack.c.l.b16 %v916
    %v1651 = vunpack.c.h.b16 %v916
    %v1652 = vunpack.c.l.b16 %v917
    %v1653 = vunpack.c.h.b16 %v917
    %v1654 = vunpack.c.l.b16 %v918
    %v1655 = vunpack.c.h.b16 %v918
    %v1656 = vunpack.c.l.b16 %v919
    %v1657 = vunpack.c.h.b16 %v919
    %v1658 = vunpack.c.l.b16 %v920
    %v1659 = vunpack.c.h.b16 %v920
    %v1660 = vunpack.c.l.b16 %v921
    %v1661 = vunpack.c.h.b16 %v921
    %v1662 = vunpack.c.l.b16 %v922
    %v1663 = vunpack.c.h.b16 %v922
    %v1664 = vunpack.c.l.b16 %v923
    %v1665 = vunpack.c.h.b16 %v923
    %v1666 = vunpack.c.l.b16 %v924
    %v1667 = vunpack.c.h.b16 %v924
    %v1668 = vunpack.c.l.b16 %v925
    %v1669 = vunpack.c.h.b16 %v925
    %v1670 = vunpack.c.l.b16 %v926
    %v1671 = vunpack.c.h.b16 %v926
    %v1672 = vunpack.c.l.b16 %v927
    %v1673 = vunpack.c.h.b16 %v927
    %v1674 = vunpack.c.l.b16 %v928
    %v1675 = vunpack.c.h.b16 %v928
    %v1676 = vunpack.c.l.b16 %v929
    %v1677 = vunpack.c.h.b16 %v929
    %v1678 = vunpack.c.l.b16 %v930
    %v1679 = vunpack.c.h.b16 %v930
    %v1680 = vunpack.c.l.b16 %v931
    %v1681 = vunpack.c.h.b16 %v931
    %v1682 = vunpack.c.l.b16 %v932
    %v1683 = vunpack.c.h.b16 %v932
    %v1684 = vunpack.c.l.b16 %v933
    %v1685 = vunpack.c.h.b16 %v933
    %v1686 = vunpack.c.l.b16 %v934
    %v1687 = vunpack.c.h.b16 %v934
    %v1688 = vunpack.c.l.b16 %v935
    %v1689 = vunpack.c.h.b16 %v935
    %v1690 = vunpack.c.l.b16 %v936
    %v1691 = vunpack.c.h.b16 %v936
    %v1692 = vunpack.c.l.b16 %v937
    %v1693 = vunpack.c.h.b16 %v937
    %v1694 = vunpack.c.l.b16 %v938
    %v1695 = vunpack.c.h.b16 %v938
    %v1696 = vunpack.c.l.b16 %v939
    %v1697 = vunpack.c.h.b16 %v939
    %v1698 = vunpack.c.l.b16 %v940
    %v1699 = vunpack.c.h.b16 %v940
    %v1700 = vunpack.c.l.b16 %v941
    %v1701 = vunpack.c.h.b16 %v941
    %v1702 = vunpack.c.l.b16 %v942
    %v1703 = vunpack.c.h.b16 %v942
    %v1704 = vunpack.c.l.b16 %v943
    %v1705 = vunpack.c.h.b16 %v943
    %v1706 = vunpack.c.l.b16 %v944
    %v1707 = vunpack.c.h.b16 %v944
    %v1708 = vunpack.c.l.b16 %v945
    %v1709 = vunpack.c.h.b16 %v945
    %v1710 = vunpack.c.l.b16 %v946
    %v1711 = vunpack.c.h.b16 %v946
    %v1712 = vunpack.c.l.b16 %v947
    %v1713 = vunpack.c.h.b16 %v947
    %v1714 = vunpack.c.l.b16 %v948
    %v1715 = vunpack.c.h.b16 %v948
    %v1716 = vunpack.c.l.b16 %v949
    %v1717 = vunpack.c.h.b16 %v949
    %v1718 = vpack.c.b16 %v1208, %v1206
    %v1719 = vpack.c.b16 %v1209, %v1207
    %v1720 = vpack.c.b16 %v1212, %v1210
    %v1721 = vpack.c.b16 %v1213, %v1211
    %v1722 = vpack.c.b16 %v1216, %v1214
    %v1723 = vpack.c.b16 %v1217, %v1215
    %v1724 = vpack.c.b16 %v1220, %v1218
    %v1725 = vpack.c.b16 %v1221, %v1219
    %v1726 = vpack.c.b16 %v1224, %v1222
    %v1727 = vpack.c.b16 %v1225, %v1223
    %v1728 = vpack.c.b16 %v1228, %v1226
    %v1729 = vpack.c.b16 %v1229, %v1227
    %v1730 = vpack.c.b16 %v1232, %v1230
    %v1731 = vpack.c.b16 %v1233, %v1231
    %v1732 = vpack.c.b16 %v1236, %v1234
    %v1733 = vpack.c.b16 %v1237, %v1235
    %v1734 = vpack.c.b16 %v1240, %v1238
    %v1735 = vpack.c.b16 %v1241, %v1239
    %v1736 = vpack.c.b16 %v1244, %v1242
    %v1737 = vpack.c.b16 %v1245, %v1243
    %v1738 = vpack.c.b16 %v1248, %v1246
    %v1739 = vpack.c.b16 %v1249, %v1247
    %v1740 = vpack.c.b16 %v1252, %v1250
    %v1741 = vpack.c.b16 %v1253, %v1251
    %v1742 = vpack.c.b16 %v1256, %v1254
    %v1743 = vpack.c.b16 %v1257, %v1255
    %v1744 = vpack.c.b16 %v1260, %v1258
    %v1745 = vpack.c.b16 %v1261, %v1259
    %v1746 = vpack.c.b16 %v1264, %v1262
    %v1747 = vpack.c.b16 %v1265, %v1263
    %v1748 = vpack.c.b16 %v1268, %v1266
    %v1749 = vpack.c.b16 %v1269, %v1267
    %v1750 = vpack.c.b16 %v1272, %v1270
    %v1751 = vpack.c.b16 %v1273, %v1271
    %v1752 = vpack.c.b16 %v1276, %v1274
    %v1753 = vpack.c.b16 %v1277, %v1275
    %v1754 = vpack.c.b16 %v1280, %v1278
    %v1755 = vpack.c.b16 %v1281, %v1279
    %v1756 = vpack.c.b16 %v1284, %v1282
    %v1757 = vpack.c.b16 %v1285, %v1283
    %v1758 = vpack.c.b16 %v1288, %v1286
    %v1759 = vpack.c.b16 %v1289, %v1287
    %v1760 = vpack.c.b16 %v1292, %v1290
    %v1761 = vpack.c.b16 %v1293, %v1291
    %v1762 = vpack.c.b16 %v1296, %v1294
    %v1763 = vpack.c.b16 %v1297, %v1295
    %v1764 = vpack.c.b16 %v1300, %v1298
    %v1765 = vpack.c.b16 %v1301, %v1299
    %v1766 = vpack.c.b16 %v1304, %v1302
    %v1767 = vpack.c.b16 %v1305, %v1303
    %v1768 = vpack.c.b16 %v1308, %v1306
    %v1769 = vpack.c.b16 %v1309, %v1307
    %v1770 = vpack.c.b16 %v1312, %v1310
    %v1771 = vpack.c.b16 %v1313, %v1311
    %v1772 = vpack.c.b16 %v1316, %v1314
    %v1773 = vpack.c.b16 %v1317, %v1315
    %v1774 = vpack.c.b16 %v1320, %v1318
    %v1775 = vpack.c.b16 %v1321, %v1319
    %v1776 = vpack.c.b16 %v1324, %v1322
    %v1777 = vpack.c.b16 %v1325, %v1323
    %v1778 = vpack.c.b16 %v1328, %v1326
    %v1779 = vpack.c.b16 %v1329, %v1327
    %v1780 = vpack.c.b16 %v1332, %v1330
    %v1781 = vpack.c.b16 %v1333, %v1331
    %v1782 = vpack.c.b16 %v1336, %v1334
    %v1783 = vpack.c.b16 %v1337, %v1335
    %v1784 = vpack.c.b16 %v1340, %v1338
    %v1785 = vpack.c.b16 %v1341, %v1339
    %v1786 = vpack.c.b16 %v1344, %v1342
    %v1787 = vpack.c.b16 %v1345, %v1343
    %v1788 = vpack.c.b16 %v1348, %v1346
    %v1789 = vpack.c.b16 %v1349, %v1347
    %v1790 = vpack.c.b16 %v1352, %v1350
    %v1791 = vpack.c.b16 %v1353, %v1351
    %v1792 = vpack.c.b16 %v1356, %v1354
    %v1793 = vpack.c.b16 %v1357, %v1355
    %v1794 = vpack.c.b16 %v1360, %v1358
    %v1795 = vpack.c.b16 %v1361, %v1359
    %v1796 = vpack.c.b16 %v1364, %v1362
    %v1797 = vpack.c.b16 %v1365, %v1363
    %v1798 = vpack.c.b16 %v1368, %v1366
    %v1799 = vpack.c.b16 %v1369, %v1367
    %v1800 = vpack.c.b16 %v1372, %v1370
    %v1801 = vpack.c.b16 %v1373, %v1371
    %v1802 = vpack.c.b16 %v1376, %v1374
    %v1803 = vpack.c.b16 %v1377, %v1375
    %v1804 = vpack.c.b16 %v1380, %v1378
    %v1805 = vpack.c.b16 %v1381, %v1379
    %v1806 = vpack.c.b16 %v1384, %v1382
    %v1807 = vpack.c.b16 %v1385, %v1383
    %v1808 = vpack.c.b16 %v1388, %v1386
    %v1809 = vpack.c.b16 %v1389, %v1387
    %v1810 = vpack.c.b16 %v1392, %v1390
    %v1811 = vpack.c.b16 %v1393, %v1391
    %v1812 = vpack.c.b16 %v1396, %v1394
    %v1813 = vpack.c.b16 %v1397, %v1395
    %v1814 = vpack.c.b16 %v1400, %v1398
    %v1815 = vpack.c.b16 %v1401, %v1399
    %v1816 = vpack.c.b16 %v1404, %v1402
    %v1817 = vpack.c.b16 %v1405, %v1403
    %v1818 = vpack.c.b16 %v1408, %v1406
    %v1819 = vpack.c.b16 %v1409, %v1407
    %v1820 = vpack.c.b16 %v1412, %v1410
    %v1821 = vpack.c.b16 %v1413, %v1411
    %v1822 = vpack.c.b16 %v1416, %v1414
    %v1823 = vpack.c.b16 %v1417, %v1415
    %v1824 = vpack.c.b16 %v1420, %v1418
    %v1825 = vpack.c.b16 %v1421, %v1419
    %v1826 = vpack.c.b16 %v1424, %v1422
    %v1827 = vpack.c.b16 %v1425, %v1423
    %v1828 = vpack.c.b16 %v1428, %v1426
    %v1829 = vpack.c.b16 %v1429, %v1427
    %v1830 = vpack.c.b16 %v1432, %v1430
    %v1831 = vpack.c.b16 %v1433, %v1431
    %v1832 = vpack.c.b16 %v1436, %v1434
    %v1833 = vpack.c.b16 %v1437, %v1435
    %v1834 = vpack.c.b16 %v1440, %v1438
    %v1835 = vpack.c.b16 %v1441, %v1439
    %v1836 = vpack.c.b16 %v1444, %v1442
    %v1837 = vpack.c.b16 %v1445, %v1443
    %v1838 = vpack.c.b16 %v1448, %v1446
    %v1839 = vpack.c.b16 %v1449, %v1447
    %v1840 = vpack.c.b16 %v1452, %v1450
    %v1841 = vpack.c.b16 %v1453, %v1451
    %v1842 = vpack.c.b16 %v1456, %v1454
    %v1843 = vpack.c.b16 %v1457, %v1455
    %v1844 = vpack.c.b16 %v1460, %v1458
    %v1845 = vpack.c.b16 %v1461, %v1459
    %v1846 = vpack.c.b16 %v1464, %v1462
    %v1847 = vpack.c.b16 %v1465, %v1463
    %v1848 = vpack.c.b16 %v1468, %v1466
    %v1849 = vpack.c.b16 %v1469, %v1467
    %v1850 = vpack.c.b16 %v1472, %v1470
    %v1851 = vpack.c.b16 %v1473, %v1471
    %v1852 = vpack.c.b16 %v1476, %v1474
    %v1853 = vpack.c.b16 %v1477, %v1475
    %v1854 = vpack.c.b16 %v1480, %v1478
    %v1855 = vpack.c.b16 %v1481, %v1479
    %v1856 = vpack.c.b16 %v1484, %v1482
    %v1857 = vpack.c.b16 %v1485, %v1483
    %v1858 = vpack.c.b16 %v1488, %v1486
    %v1859 = vpack.c.b16 %v1489, %v1487
    %v1860 = vpack.c.b16 %v1492, %v1490
    %v1861 = vpack.c.b16 %v1493, %v1491
    %v1862 = vpack.c.b16 %v1496, %v1494
    %v1863 = vpack.c.b16 %v1497, %v1495
    %v1864 = vpack.c.b16 %v1500, %v1498
    %v1865 = vpack.c.b16 %v1501, %v1499
    %v1866 = vpack.c.b16 %v1504, %v1502
    %v1867 = vpack.c.b16 %v1505, %v1503
    %v1868 = vpack.c.b16 %v1508, %v1506
    %v1869 = vpack.c.b16 %v1509, %v1507
    %v1870 = vpack.c.b16 %v1512, %v1510
    %v1871 = vpack.c.b16 %v1513, %v1511
    %v1872 = vpack.c.b16 %v1516, %v1514
    %v1873 = vpack.c.b16 %v1517, %v1515
    %v1874 = vpack.c.b16 %v1520, %v1518
    %v1875 = vpack.c.b16 %v1521, %v1519
    %v1876 = vpack.c.b16 %v1524, %v1522
    %v1877 = vpack.c.b16 %v1525, %v1523
    %v1878 = vpack.c.b16 %v1528, %v1526
    %v1879 = vpack.c.b16 %v1529, %v1527
    %v1880 = vpack.c.b16 %v1532, %v1530
    %v1881 = vpack.c.b16 %v1533, %v1531
    %v1882 = vpack.c.b16 %v1536, %v1534
    %v1883 = vpack.c.b16 %v1537, %v1535
    %v1884 = vpack.c.b16 %v1540, %v1538
    %v1885 = vpack.c.b16 %v1541, %v1539
    %v1886 = vpack.c.b16 %v1544, %v1542
    %v1887 = vpack.c.b16 %v1545, %v1543
    %v1888 = vpack.c.b16 %v1548, %v1546
    %v1889 = vpack.c.b16 %v1549, %v1547
    %v1890 = vpack.c.b16 %v1552, %v1550
    %v1891 = vpack.c.b16 %v1553, %v1551
    %v1892 = vpack.c.b16 %v1556, %v1554
    %v1893 = vpack.c.b16 %v1557, %v1555
    %v1894 = vpack.c.b16 %v1560, %v1558
    %v1895 = vpack.c.b16 %v1561, %v1559
    %v1896 = vpack.c.b16 %v1564, %v1562
    %v1897 = vpack.c.b16 %v1565, %v1563
    %v1898 = vpack.c.b16 %v1568, %v1566
    %v1899 = vpack.c.b16 %v1569, %v1567
    %v1900 = vpack.c.b16 %v1572, %v1570
    %v1901 = vpack.c.b16 %v1573, %v1571
    %v1902 = vpack.c.b16 %v1576, %v1574
    %v1903 = vpack.c.b16 %v1577, %v1575
    %v1904 = vpack.c.b16 %v1580, %v1578
    %v1905 = vpack.c.b16 %v1581, %v1579
    %v1906 = vpack.c.b16 %v1584, %v1582
    %v1907 = vpack.c.b16 %v1585, %v1583
    %v1908 = vpack.c.b16 %v1588, %v1586
    %v1909 = vpack.c.b16 %v1589, %v1587
    %v1910 = vpack.c.b16 %v1592, %v1590
    %v1911 = vpack.c.b16 %v1593, %v1591
    %v1912 = vpack.c.b16 %v1596, %v1594
    %v1913 = vpack.c.b16 %v1597, %v1595
    %v1914 = vpack.c.b16 %v1600, %v1598
    %v1915 = vpack.c.b16 %v1601, %v1599
    %v1916 = vpack.c.b16 %v1604, %v1602
    %v1917 = vpack.c.b16 %v1605, %v1603
    %v1918 = vpack.c.b16 %v1608, %v1606
    %v1919 = vpack.c.b16 %v1609, %v1607
    %v1920 = vpack.c.b16 %v1612, %v1610
    %v1921 = vpack.c.b16 %v1613, %v1611
    %v1922 = vpack.c.b16 %v1616, %v1614
    %v1923 = vpack.c.b16 %v1617, %v1615
    %v1924 = vpack.c.b16 %v1620, %v1618
    %v1925 = vpack.c.b16 %v1621, %v1619
    %v1926 = vpack.c.b16 %v1624, %v1622
    %v1927 = vpack.c.b16 %v1625, %v1623
    %v1928 = vpack.c.b16 %v1628, %v1626
    %v1929 = vpack.c.b16 %v1629, %v1627
    %v1930 = vpack.c.b16 %v1632, %v1630
    %v1931 = vpack.c.b16 %v1633, %v1631
    %v1932 = vpack.c.b16 %v1636, %v1634
    %v1933 = vpack.c.b16 %v1637, %v1635
    %v1934 = vpack.c.b16 %v1640, %v1638
    %v1935 = vpack.c.b16 %v1641, %v1639
    %v1936 = vpack.c.b16 %v1644, %v1642
    %v1937 = vpack.c.b16 %v1645, %v1643
    %v1938 = vpack.c.b16 %v1648, %v1646
    %v1939 = vpack.c.b16 %v1649, %v1647
    %v1940 = vpack.c.b16 %v1652, %v1650
    %v1941 = vpack.c.b16 %v1653, %v1651
    %v1942 = vpack.c.b16 %v1656, %v1654
    %v1943 = vpack.c.b16 %v1657, %v1655
    %v1944 = vpack.c.b16 %v1660, %v1658
    %v1945 = vpack.c.b16 %v1661, %v1659
    %v1946 = vpack.c.b16 %v1664, %v1662
    %v1947 = vpack.c.b16 %v1665, %v1663
    %v1948 = vpack.c.b16 %v1668, %v1666
    %v1949 = vpack.c.b16 %v1669, %v1667
    %v1950 = vpack.c.b16 %v1672, %v1670
    %v1951 = vpack.c.b16 %v1673, %v1671
    %v1952 = vpack.c.b16 %v1676, %v1674
    %v1953 = vpack.c.b16 %v1677, %v1675
    %v1954 = vpack.c.b16 %v1680, %v1678
    %v1955 = vpack.c.b16 %v1681, %v1679
    %v1956 = vpack.c.b16 %v1684, %v1682
    %v1957 = vpack.c.b16 %v1685, %v1683
    %v1958 = vpack.c.b16 %v1688, %v1686
    %v1959 = vpack.c.b16 %v1689, %v1687
    %v1960 = vpack.c.b16 %v1692, %v1690
    %v1961 = vpack.c.b16 %v1693, %v1691
    %v1962 = vpack.c.b16 %v1696, %v1694
    %v1963 = vpack.c.b16 %v1697, %v1695
    %v1964 = vpack.c.b16 %v1700, %v1698
    %v1965 = vpack.c.b16 %v1701, %v1699
    %v1966 = vpack.c.b16 %v1704, %v1702
    %v1967 = vpack.c.b16 %v1705, %v1703
    %v1968 = vpack.c.b16 %v1708, %v1706
    %v1969 = vpack.c.b16 %v1709, %v1707
    %v1970 = vpack.c.b16 %v1712, %v1710
    %v1971 = vpack.c.b16 %v1713, %v1711
    %v1972 = vpack.c.b16 %v1716, %v1714
    %v1973 = vpack.c.b16 %v1717, %v1715
    %2230 = vmatprep.subr.bf16.mxu0 %v1719
    %2231 = vmatpush1.bf16.msra.mxu0 %v1718
    %2232 = vmatprep.subr.bf16.mxu0 %v1721
    %2233 = vmatpush1.bf16.msra.mxu0 %v1720
    %2234 = vmatprep.subr.bf16.mxu0 %v1723
    %2235 = vmatpush1.bf16.msra.mxu0 %v1722
    %2236 = vmatprep.subr.bf16.mxu0 %v1725
    %2237 = vmatpush1.bf16.msra.mxu0 %v1724
    %2238 = vmatprep.subr.bf16.mxu0 %v1727
    %2239 = vmatpush1.bf16.msra.mxu0 %v1726
    %2240 = vmatprep.subr.bf16.mxu0 %v1729
    %2241 = vmatpush1.bf16.msra.mxu0 %v1728
    %2242 = vmatprep.subr.bf16.mxu0 %v1731
    %2243 = vmatpush1.bf16.msra.mxu0 %v1730
    %2244 = vmatprep.subr.bf16.mxu0 %v1733
    %2245 = vmatpush1.bf16.msra.mxu0 %v1732
    %2246 = vmatprep.subr.bf16.mxu0 %v1735
    %2247 = vmatpush1.bf16.msra.mxu0 %v1734
    %2248 = vmatprep.subr.bf16.mxu0 %v1737
    %2249 = vmatpush1.bf16.msra.mxu0 %v1736
    %2250 = vmatprep.subr.bf16.mxu0 %v1739
    %2251 = vmatpush1.bf16.msra.mxu0 %v1738
    %2252 = vmatprep.subr.bf16.mxu0 %v1741
    %2253 = vmatpush1.bf16.msra.mxu0 %v1740
    %2254 = vmatprep.subr.bf16.mxu0 %v1743
    %2255 = vmatpush1.bf16.msra.mxu0 %v1742
    %2256 = vmatprep.subr.bf16.mxu0 %v1745
    %2257 = vmatpush1.bf16.msra.mxu0 %v1744
    %2258 = vmatprep.subr.bf16.mxu0 %v1747
    %2259 = vmatpush1.bf16.msra.mxu0 %v1746
    %2260 = vmatprep.subr.bf16.mxu0 %v1749
    %2261 = vmatpush1.bf16.msra.mxu0 %v1748
    %2262 = vmatprep.mubr.bf16.mxu0 %v679
    %2263 = vmatmul.mubr.bf16.gmra.mrb[0].mxu0 %v678
    %v2264 = vpop.f32.mrb[0].mxu0
    %v2265 = vadd.f32 0.0, %v2264
    %v2266 = vpop.f32.mrb[0].mxu0
    %v2267 = vadd.f32 0.0, %v2266
    %v2268 = vpop.f32.mrb[0].mxu0
    %v2269 = vpop.f32.mrb[0].mxu0
    %2270 = vdwg.mxu0
    %2271 = vmatprep.subr.bf16.mxu0 %v1751
    %2272 = vmatpush1.bf16.msra.mxu0 %v1750
    %2273 = vmatprep.subr.bf16.mxu0 %v1753
    %2274 = vmatpush1.bf16.msra.mxu0 %v1752
    %2275 = vmatprep.subr.bf16.mxu0 %v1755
    %2276 = vmatpush1.bf16.msra.mxu0 %v1754
    %2277 = vmatprep.subr.bf16.mxu0 %v1757
    %2278 = vmatpush1.bf16.msra.mxu0 %v1756
    %2279 = vmatprep.subr.bf16.mxu0 %v1759
    %2280 = vmatpush1.bf16.msra.mxu0 %v1758
    %2281 = vmatprep.subr.bf16.mxu0 %v1761
    %2282 = vmatpush1.bf16.msra.mxu0 %v1760
    %2283 = vmatprep.subr.bf16.mxu0 %v1763
    %2284 = vmatpush1.bf16.msra.mxu0 %v1762
    %2285 = vmatprep.subr.bf16.mxu0 %v1765
    %2286 = vmatpush1.bf16.msra.mxu0 %v1764
    %2287 = vmatprep.subr.bf16.mxu0 %v1767
    %2288 = vmatpush1.bf16.msra.mxu0 %v1766
    %2289 = vmatprep.subr.bf16.mxu0 %v1769
    %2290 = vmatpush1.bf16.msra.mxu0 %v1768
    %2291 = vmatprep.subr.bf16.mxu0 %v1771
    %2292 = vmatpush1.bf16.msra.mxu0 %v1770
    %2293 = vmatprep.subr.bf16.mxu0 %v1773
    %2294 = vmatpush1.bf16.msra.mxu0 %v1772
    %2295 = vmatprep.subr.bf16.mxu0 %v1775
    %2296 = vmatpush1.bf16.msra.mxu0 %v1774
    %2297 = vmatprep.subr.bf16.mxu0 %v1777
    %2298 = vmatpush1.bf16.msra.mxu0 %v1776
    %2299 = vmatprep.subr.bf16.mxu0 %v1779
    %2300 = vmatpush1.bf16.msra.mxu0 %v1778
    %2301 = vmatprep.subr.bf16.mxu0 %v1781
    %2302 = vmatpush1.bf16.msra.mxu0 %v1780
    %2303 = vmatprep.mubr.bf16.mxu0 %v681
    %2304 = vmatmul.mubr.bf16.gmra.mrb[0].mxu0 %v680
    %v2305 = vpop.f32.mrb[0].mxu0
    %v2306 = vadd.f32 %v2265, %v2305
    %v2307 = vpop.f32.mrb[0].mxu0
    %v2308 = vadd.f32 %v2267, %v2307
    %v2309 = vpop.f32.mrb[0].mxu0
    %v2310 = vpop.f32.mrb[0].mxu0
    %2311 = vdwg.mxu0
    %2312 = vmatprep.subr.bf16.mxu0 %v1783
    %2313 = vmatpush1.bf16.msra.mxu0 %v1782
    %2314 = vmatprep.subr.bf16.mxu0 %v1785
    %2315 = vmatpush1.bf16.msra.mxu0 %v1784
    %2316 = vmatprep.subr.bf16.mxu0 %v1787
    %2317 = vmatpush1.bf16.msra.mxu0 %v1786
    %2318 = vmatprep.subr.bf16.mxu0 %v1789
    %2319 = vmatpush1.bf16.msra.mxu0 %v1788
    %2320 = vmatprep.subr.bf16.mxu0 %v1791
    %2321 = vmatpush1.bf16.msra.mxu0 %v1790
    %2322 = vmatprep.subr.bf16.mxu0 %v1793
    %2323 = vmatpush1.bf16.msra.mxu0 %v1792
    %2324 = vmatprep.subr.bf16.mxu0 %v1795
    %2325 = vmatpush1.bf16.msra.mxu0 %v1794
    %2326 = vmatprep.subr.bf16.mxu0 %v1797
    %2327 = vmatpush1.bf16.msra.mxu0 %v1796
    %2328 = vmatprep.subr.bf16.mxu0 %v1799
    %2329 = vmatpush1.bf16.msra.mxu0 %v1798
    %2330 = vmatprep.subr.bf16.mxu0 %v1801
    %2331 = vmatpush1.bf16.msra.mxu0 %v1800
    %2332 = vmatprep.subr.bf16.mxu0 %v1803
    %2333 = vmatpush1.bf16.msra.mxu0 %v1802
    %2334 = vmatprep.subr.bf16.mxu0 %v1805
    %2335 = vmatpush1.bf16.msra.mxu0 %v1804
    %2336 = vmatprep.subr.bf16.mxu0 %v1807
    %2337 = vmatpush1.bf16.msra.mxu0 %v1806
    %2338 = vmatprep.subr.bf16.mxu0 %v1809
    %2339 = vmatpush1.bf16.msra.mxu0 %v1808
    %2340 = vmatprep.subr.bf16.mxu0 %v1811
    %2341 = vmatpush1.bf16.msra.mxu0 %v1810
    %2342 = vmatprep.subr.bf16.mxu0 %v1813
    %2343 = vmatpush1.bf16.msra.mxu0 %v1812
    %2344 = vmatprep.mubr.bf16.mxu0 %v683
    %2345 = vmatmul.mubr.bf16.gmra.mrb[0].mxu0 %v682
    %v2346 = vpop.f32.mrb[0].mxu0
    %v2347 = vadd.f32 %v2306, %v2346
    %v2348 = vpop.f32.mrb[0].mxu0
    %v2349 = vadd.f32 %v2308, %v2348
    %v2350 = vpop.f32.mrb[0].mxu0
    %v2351 = vpop.f32.mrb[0].mxu0
    %2352 = vdwg.mxu0
    %2353 = vmatprep.subr.bf16.mxu0 %v1815
    %2354 = vmatpush1.bf16.msra.mxu0 %v1814
    %2355 = vmatprep.subr.bf16.mxu0 %v1817
    %2356 = vmatpush1.bf16.msra.mxu0 %v1816
    %2357 = vmatprep.subr.bf16.mxu0 %v1819
    %2358 = vmatpush1.bf16.msra.mxu0 %v1818
    %2359 = vmatprep.subr.bf16.mxu0 %v1821
    %2360 = vmatpush1.bf16.msra.mxu0 %v1820
    %2361 = vmatprep.subr.bf16.mxu0 %v1823
    %2362 = vmatpush1.bf16.msra.mxu0 %v1822
    %2363 = vmatprep.subr.bf16.mxu0 %v1825
    %2364 = vmatpush1.bf16.msra.mxu0 %v1824
    %2365 = vmatprep.subr.bf16.mxu0 %v1827
    %2366 = vmatpush1.bf16.msra.mxu0 %v1826
    %2367 = vmatprep.subr.bf16.mxu0 %v1829
    %2368 = vmatpush1.bf16.msra.mxu0 %v1828
    %2369 = vmatprep.subr.bf16.mxu0 %v1831
    %2370 = vmatpush1.bf16.msra.mxu0 %v1830
    %2371 = vmatprep.subr.bf16.mxu0 %v1833
    %2372 = vmatpush1.bf16.msra.mxu0 %v1832
    %2373 = vmatprep.subr.bf16.mxu0 %v1835
    %2374 = vmatpush1.bf16.msra.mxu0 %v1834
    %2375 = vmatprep.subr.bf16.mxu0 %v1837
    %2376 = vmatpush1.bf16.msra.mxu0 %v1836
    %2377 = vmatprep.subr.bf16.mxu0 %v1839
    %2378 = vmatpush1.bf16.msra.mxu0 %v1838
    %2379 = vmatprep.subr.bf16.mxu0 %v1841
    %2380 = vmatpush1.bf16.msra.mxu0 %v1840
    %2381 = vmatprep.subr.bf16.mxu0 %v1843
    %2382 = vmatpush1.bf16.msra.mxu0 %v1842
    %2383 = vmatprep.subr.bf16.mxu0 %v1845
    %2384 = vmatpush1.bf16.msra.mxu0 %v1844
    %2385 = vmatprep.mubr.bf16.mxu0 %v685
    %2386 = vmatmul.mubr.bf16.gmra.mrb[0].mxu0 %v684
    %v2387 = vpop.f32.mrb[0].mxu0
    %v2388 = vadd.f32 %v2347, %v2387
    %v2389 = vpop.f32.mrb[0].mxu0
    %v2390 = vadd.f32 %v2349, %v2389
    %v2391 = vpop.f32.mrb[0].mxu0
    %v2392 = vpop.f32.mrb[0].mxu0
    %2393 = vdwg.mxu0
    %2394 = vmatprep.subr.bf16.mxu0 %v1847
    %2395 = vmatpush1.bf16.msra.mxu0 %v1846
    %2396 = vmatprep.subr.bf16.mxu0 %v1849
    %2397 = vmatpush1.bf16.msra.mxu0 %v1848
    %2398 = vmatprep.subr.bf16.mxu0 %v1851
    %2399 = vmatpush1.bf16.msra.mxu0 %v1850
    %2400 = vmatprep.subr.bf16.mxu0 %v1853
    %2401 = vmatpush1.bf16.msra.mxu0 %v1852
    %2402 = vmatprep.subr.bf16.mxu0 %v1855
    %2403 = vmatpush1.bf16.msra.mxu0 %v1854
    %2404 = vmatprep.subr.bf16.mxu0 %v1857
    %2405 = vmatpush1.bf16.msra.mxu0 %v1856
    %2406 = vmatprep.subr.bf16.mxu0 %v1859
    %2407 = vmatpush1.bf16.msra.mxu0 %v1858
    %2408 = vmatprep.subr.bf16.mxu0 %v1861
    %2409 = vmatpush1.bf16.msra.mxu0 %v1860
    %2410 = vmatprep.subr.bf16.mxu0 %v1863
    %2411 = vmatpush1.bf16.msra.mxu0 %v1862
    %2412 = vmatprep.subr.bf16.mxu0 %v1865
    %2413 = vmatpush1.bf16.msra.mxu0 %v1864
    %2414 = vmatprep.subr.bf16.mxu0 %v1867
    %2415 = vmatpush1.bf16.msra.mxu0 %v1866
    %2416 = vmatprep.subr.bf16.mxu0 %v1869
    %2417 = vmatpush1.bf16.msra.mxu0 %v1868
    %2418 = vmatprep.subr.bf16.mxu0 %v1871
    %2419 = vmatpush1.bf16.msra.mxu0 %v1870
    %2420 = vmatprep.subr.bf16.mxu0 %v1873
    %2421 = vmatpush1.bf16.msra.mxu0 %v1872
    %2422 = vmatprep.subr.bf16.mxu0 %v1875
    %2423 = vmatpush1.bf16.msra.mxu0 %v1874
    %2424 = vmatprep.subr.bf16.mxu0 %v1877
    %2425 = vmatpush1.bf16.msra.mxu0 %v1876
    %2426 = vmatprep.mubr.bf16.mxu0 %v687
    %2427 = vmatmul.mubr.bf16.gmra.mrb[0].mxu0 %v686
    %v2428 = vpop.f32.mrb[0].mxu0
    %v2429 = vadd.f32 %v2388, %v2428
    %v2430 = vpop.f32.mrb[0].mxu0
    %v2431 = vadd.f32 %v2390, %v2430
    %v2432 = vpop.f32.mrb[0].mxu0
    %v2433 = vpop.f32.mrb[0].mxu0
    %2434 = vdwg.mxu0
    %2435 = vmatprep.subr.bf16.mxu0 %v1879
    %2436 = vmatpush1.bf16.msra.mxu0 %v1878
    %2437 = vmatprep.subr.bf16.mxu0 %v1881
    %2438 = vmatpush1.bf16.msra.mxu0 %v1880
    %2439 = vmatprep.subr.bf16.mxu0 %v1883
    %2440 = vmatpush1.bf16.msra.mxu0 %v1882
    %2441 = vmatprep.subr.bf16.mxu0 %v1885
    %2442 = vmatpush1.bf16.msra.mxu0 %v1884
    %2443 = vmatprep.subr.bf16.mxu0 %v1887
    %2444 = vmatpush1.bf16.msra.mxu0 %v1886
    %2445 = vmatprep.subr.bf16.mxu0 %v1889
    %2446 = vmatpush1.bf16.msra.mxu0 %v1888
    %2447 = vmatprep.subr.bf16.mxu0 %v1891
    %2448 = vmatpush1.bf16.msra.mxu0 %v1890
    %2449 = vmatprep.subr.bf16.mxu0 %v1893
    %2450 = vmatpush1.bf16.msra.mxu0 %v1892
    %2451 = vmatprep.subr.bf16.mxu0 %v1895
    %2452 = vmatpush1.bf16.msra.mxu0 %v1894
    %2453 = vmatprep.subr.bf16.mxu0 %v1897
    %2454 = vmatpush1.bf16.msra.mxu0 %v1896
    %2455 = vmatprep.subr.bf16.mxu0 %v1899
    %2456 = vmatpush1.bf16.msra.mxu0 %v1898
    %2457 = vmatprep.subr.bf16.mxu0 %v1901
    %2458 = vmatpush1.bf16.msra.mxu0 %v1900
    %2459 = vmatprep.subr.bf16.mxu0 %v1903
    %2460 = vmatpush1.bf16.msra.mxu0 %v1902
    %2461 = vmatprep.subr.bf16.mxu0 %v1905
    %2462 = vmatpush1.bf16.msra.mxu0 %v1904
    %2463 = vmatprep.subr.bf16.mxu0 %v1907
    %2464 = vmatpush1.bf16.msra.mxu0 %v1906
    %2465 = vmatprep.subr.bf16.mxu0 %v1909
    %2466 = vmatpush1.bf16.msra.mxu0 %v1908
    %2467 = vmatprep.mubr.bf16.mxu0 %v689
    %2468 = vmatmul.mubr.bf16.gmra.mrb[0].mxu0 %v688
    %v2469 = vpop.f32.mrb[0].mxu0
    %v2470 = vadd.f32 %v2429, %v2469
    %v2471 = vpop.f32.mrb[0].mxu0
    %v2472 = vadd.f32 %v2431, %v2471
    %v2473 = vpop.f32.mrb[0].mxu0
    %v2474 = vpop.f32.mrb[0].mxu0
    %2475 = vdwg.mxu0
    %2476 = vmatprep.subr.bf16.mxu0 %v1911
    %2477 = vmatpush1.bf16.msra.mxu0 %v1910
    %2478 = vmatprep.subr.bf16.mxu0 %v1913
    %2479 = vmatpush1.bf16.msra.mxu0 %v1912
    %2480 = vmatprep.subr.bf16.mxu0 %v1915
    %2481 = vmatpush1.bf16.msra.mxu0 %v1914
    %2482 = vmatprep.subr.bf16.mxu0 %v1917
    %2483 = vmatpush1.bf16.msra.mxu0 %v1916
    %2484 = vmatprep.subr.bf16.mxu0 %v1919
    %2485 = vmatpush1.bf16.msra.mxu0 %v1918
    %2486 = vmatprep.subr.bf16.mxu0 %v1921
    %2487 = vmatpush1.bf16.msra.mxu0 %v1920
    %2488 = vmatprep.subr.bf16.mxu0 %v1923
    %2489 = vmatpush1.bf16.msra.mxu0 %v1922
    %2490 = vmatprep.subr.bf16.mxu0 %v1925
    %2491 = vmatpush1.bf16.msra.mxu0 %v1924
    %2492 = vmatprep.subr.bf16.mxu0 %v1927
    %2493 = vmatpush1.bf16.msra.mxu0 %v1926
    %2494 = vmatprep.subr.bf16.mxu0 %v1929
    %2495 = vmatpush1.bf16.msra.mxu0 %v1928
    %2496 = vmatprep.subr.bf16.mxu0 %v1931
    %2497 = vmatpush1.bf16.msra.mxu0 %v1930
    %2498 = vmatprep.subr.bf16.mxu0 %v1933
    %2499 = vmatpush1.bf16.msra.mxu0 %v1932
    %2500 = vmatprep.subr.bf16.mxu0 %v1935
    %2501 = vmatpush1.bf16.msra.mxu0 %v1934
    %2502 = vmatprep.subr.bf16.mxu0 %v1937
    %2503 = vmatpush1.bf16.msra.mxu0 %v1936
    %2504 = vmatprep.subr.bf16.mxu0 %v1939
    %2505 = vmatpush1.bf16.msra.mxu0 %v1938
    %2506 = vmatprep.subr.bf16.mxu0 %v1941
    %2507 = vmatpush1.bf16.msra.mxu0 %v1940
    %2508 = vmatprep.mubr.bf16.mxu0 %v691
    %2509 = vmatmul.mubr.bf16.gmra.mrb[0].mxu0 %v690
    %v2510 = vpop.f32.mrb[0].mxu0
    %v2511 = vadd.f32 %v2470, %v2510
    %v2512 = vpop.f32.mrb[0].mxu0
    %v2513 = vadd.f32 %v2472, %v2512
    %v2514 = vpop.f32.mrb[0].mxu0
    %v2515 = vpop.f32.mrb[0].mxu0
    %2516 = vdwg.mxu0
    %2517 = vmatprep.subr.bf16.mxu0 %v1943
    %2518 = vmatpush1.bf16.msra.mxu0 %v1942
    %2519 = vmatprep.subr.bf16.mxu0 %v1945
    %2520 = vmatpush1.bf16.msra.mxu0 %v1944
    %2521 = vmatprep.subr.bf16.mxu0 %v1947
    %2522 = vmatpush1.bf16.msra.mxu0 %v1946
    %2523 = vmatprep.subr.bf16.mxu0 %v1949
    %2524 = vmatpush1.bf16.msra.mxu0 %v1948
    %2525 = vmatprep.subr.bf16.mxu0 %v1951
    %2526 = vmatpush1.bf16.msra.mxu0 %v1950
    %2527 = vmatprep.subr.bf16.mxu0 %v1953
    %2528 = vmatpush1.bf16.msra.mxu0 %v1952
    %2529 = vmatprep.subr.bf16.mxu0 %v1955
    %2530 = vmatpush1.bf16.msra.mxu0 %v1954
    %2531 = vmatprep.subr.bf16.mxu0 %v1957
    %2532 = vmatpush1.bf16.msra.mxu0 %v1956
    %2533 = vmatprep.subr.bf16.mxu0 %v1959
    %2534 = vmatpush1.bf16.msra.mxu0 %v1958
    %2535 = vmatprep.subr.bf16.mxu0 %v1961
    %2536 = vmatpush1.bf16.msra.mxu0 %v1960
    %2537 = vmatprep.subr.bf16.mxu0 %v1963
    %2538 = vmatpush1.bf16.msra.mxu0 %v1962
    %2539 = vmatprep.subr.bf16.mxu0 %v1965
    %2540 = vmatpush1.bf16.msra.mxu0 %v1964
    %2541 = vmatprep.subr.bf16.mxu0 %v1967
    %2542 = vmatpush1.bf16.msra.mxu0 %v1966
    %2543 = vmatprep.subr.bf16.mxu0 %v1969
    %2544 = vmatpush1.bf16.msra.mxu0 %v1968
    %2545 = vmatprep.subr.bf16.mxu0 %v1971
    %2546 = vmatpush1.bf16.msra.mxu0 %v1970
    %2547 = vmatprep.subr.bf16.mxu0 %v1973
    %2548 = vmatpush1.bf16.msra.mxu0 %v1972
    %2549 = vmatprep.mubr.bf16.mxu0 %v693
    %2550 = vmatmul.mubr.bf16.gmra.mrb[0].mxu0 %v692
    %v2551 = vpop.f32.mrb[0].mxu0
    %v2552 = vadd.f32 %v2511, %v2551
    %v2553 = vpop.f32.mrb[0].mxu0
    %v2554 = vadd.f32 %v2513, %v2553
    %v2555 = vpop.f32.mrb[0].mxu0
    %v2556 = vpop.f32.mrb[0].mxu0
    %2557 = vdwg.mxu0
    %v2814 = vunpack.c.l.b16 %v230
    %v2815 = vunpack.c.h.b16 %v230
    %v2816 = vunpack.c.l.b16 %v231
    %v2817 = vunpack.c.h.b16 %v231
    %v2818 = vunpack.c.l.b16 %v232
    %v2819 = vunpack.c.h.b16 %v232
    %v2820 = vunpack.c.l.b16 %v233
    %v2821 = vunpack.c.h.b16 %v233
    %v2822 = vunpack.c.l.b16 %v234
    %v2823 = vunpack.c.h.b16 %v234
    %v2824 = vunpack.c.l.b16 %v235
    %v2825 = vunpack.c.h.b16 %v235
    %v2826 = vunpack.c.l.b16 %v236
    %v2827 = vunpack.c.h.b16 %v236
    %v2828 = vunpack.c.l.b16 %v237
    %v2829 = vunpack.c.h.b16 %v237
    %v2830 = vunpack.c.l.b16 %v238
    %v2831 = vunpack.c.h.b16 %v238
    %v2832 = vunpack.c.l.b16 %v239
    %v2833 = vunpack.c.h.b16 %v239
    %v2834 = vunpack.c.l.b16 %v240
    %v2835 = vunpack.c.h.b16 %v240
    %v2836 = vunpack.c.l.b16 %v241
    %v2837 = vunpack.c.h.b16 %v241
    %v2838 = vunpack.c.l.b16 %v242
    %v2839 = vunpack.c.h.b16 %v242
    %v2840 = vunpack.c.l.b16 %v243
    %v2841 = vunpack.c.h.b16 %v243
    %v2842 = vunpack.c.l.b16 %v244
    %v2843 = vunpack.c.h.b16 %v244
    %v2844 = vunpack.c.l.b16 %v245
    %v2845 = vunpack.c.h.b16 %v245
    %v2846 = vunpack.c.l.b16 %v246
    %v2847 = vunpack.c.h.b16 %v246
    %v2848 = vunpack.c.l.b16 %v247
    %v2849 = vunpack.c.h.b16 %v247
    %v2850 = vunpack.c.l.b16 %v248
    %v2851 = vunpack.c.h.b16 %v248
    %v2852 = vunpack.c.l.b16 %v249
    %v2853 = vunpack.c.h.b16 %v249
    %v2854 = vunpack.c.l.b16 %v250
    %v2855 = vunpack.c.h.b16 %v250
    %v2856 = vunpack.c.l.b16 %v251
    %v2857 = vunpack.c.h.b16 %v251
    %v2858 = vunpack.c.l.b16 %v252
    %v2859 = vunpack.c.h.b16 %v252
    %v2860 = vunpack.c.l.b16 %v253
    %v2861 = vunpack.c.h.b16 %v253
    %v2862 = vunpack.c.l.b16 %v254
    %v2863 = vunpack.c.h.b16 %v254
    %v2864 = vunpack.c.l.b16 %v255
    %v2865 = vunpack.c.h.b16 %v255
    %v2866 = vunpack.c.l.b16 %v256
    %v2867 = vunpack.c.h.b16 %v256
    %v2868 = vunpack.c.l.b16 %v257
    %v2869 = vunpack.c.h.b16 %v257
    %v2870 = vunpack.c.l.b16 %v258
    %v2871 = vunpack.c.h.b16 %v258
    %v2872 = vunpack.c.l.b16 %v259
    %v2873 = vunpack.c.h.b16 %v259
    %v2874 = vunpack.c.l.b16 %v260
    %v2875 = vunpack.c.h.b16 %v260
    %v2876 = vunpack.c.l.b16 %v261
    %v2877 = vunpack.c.h.b16 %v261
    %v2878 = vunpack.c.l.b16 %v262
    %v2879 = vunpack.c.h.b16 %v262
    %v2880 = vunpack.c.l.b16 %v263
    %v2881 = vunpack.c.h.b16 %v263
    %v2882 = vunpack.c.l.b16 %v264
    %v2883 = vunpack.c.h.b16 %v264
    %v2884 = vunpack.c.l.b16 %v265
    %v2885 = vunpack.c.h.b16 %v265
    %v2886 = vunpack.c.l.b16 %v266
    %v2887 = vunpack.c.h.b16 %v266
    %v2888 = vunpack.c.l.b16 %v267
    %v2889 = vunpack.c.h.b16 %v267
    %v2890 = vunpack.c.l.b16 %v268
    %v2891 = vunpack.c.h.b16 %v268
    %v2892 = vunpack.c.l.b16 %v269
    %v2893 = vunpack.c.h.b16 %v269
    %v2894 = vunpack.c.l.b16 %v270
    %v2895 = vunpack.c.h.b16 %v270
    %v2896 = vunpack.c.l.b16 %v271
    %v2897 = vunpack.c.h.b16 %v271
    %v2898 = vunpack.c.l.b16 %v272
    %v2899 = vunpack.c.h.b16 %v272
    %v2900 = vunpack.c.l.b16 %v273
    %v2901 = vunpack.c.h.b16 %v273
    %v2902 = vunpack.c.l.b16 %v274
    %v2903 = vunpack.c.h.b16 %v274
    %v2904 = vunpack.c.l.b16 %v275
    %v2905 = vunpack.c.h.b16 %v275
    %v2906 = vunpack.c.l.b16 %v276
    %v2907 = vunpack.c.h.b16 %v276
    %v2908 = vunpack.c.l.b16 %v277
    %v2909 = vunpack.c.h.b16 %v277
    %v2910 = vunpack.c.l.b16 %v278
    %v2911 = vunpack.c.h.b16 %v278
    %v2912 = vunpack.c.l.b16 %v279
    %v2913 = vunpack.c.h.b16 %v279
    %v2914 = vunpack.c.l.b16 %v280
    %v2915 = vunpack.c.h.b16 %v280
    %v2916 = vunpack.c.l.b16 %v281
    %v2917 = vunpack.c.h.b16 %v281
    %v2918 = vunpack.c.l.b16 %v282
    %v2919 = vunpack.c.h.b16 %v282
    %v2920 = vunpack.c.l.b16 %v283
    %v2921 = vunpack.c.h.b16 %v283
    %v2922 = vunpack.c.l.b16 %v284
    %v2923 = vunpack.c.h.b16 %v284
    %v2924 = vunpack.c.l.b16 %v285
    %v2925 = vunpack.c.h.b16 %v285
    %v2926 = vunpack.c.l.b16 %v286
    %v2927 = vunpack.c.h.b16 %v286
    %v2928 = vunpack.c.l.b16 %v287
    %v2929 = vunpack.c.h.b16 %v287
    %v2930 = vunpack.c.l.b16 %v288
    %v2931 = vunpack.c.h.b16 %v288
    %v2932 = vunpack.c.l.b16 %v289
    %v2933 = vunpack.c.h.b16 %v289
    %v2934 = vunpack.c.l.b16 %v290
    %v2935 = vunpack.c.h.b16 %v290
    %v2936 = vunpack.c.l.b16 %v291
    %v2937 = vunpack.c.h.b16 %v291
    %v2938 = vunpack.c.l.b16 %v292
    %v2939 = vunpack.c.h.b16 %v292
    %v2940 = vunpack.c.l.b16 %v293
    %v2941 = vunpack.c.h.b16 %v293
    %v2942 = vunpack.c.l.b16 %v294
    %v2943 = vunpack.c.h.b16 %v294
    %v2944 = vunpack.c.l.b16 %v295
    %v2945 = vunpack.c.h.b16 %v295
    %v2946 = vunpack.c.l.b16 %v296
    %v2947 = vunpack.c.h.b16 %v296
    %v2948 = vunpack.c.l.b16 %v297
    %v2949 = vunpack.c.h.b16 %v297
    %v2950 = vunpack.c.l.b16 %v298
    %v2951 = vunpack.c.h.b16 %v298
    %v2952 = vunpack.c.l.b16 %v299
    %v2953 = vunpack.c.h.b16 %v299
    %v2954 = vunpack.c.l.b16 %v300
    %v2955 = vunpack.c.h.b16 %v300
    %v2956 = vunpack.c.l.b16 %v301
    %v2957 = vunpack.c.h.b16 %v301
    %v2958 = vunpack.c.l.b16 %v302
    %v2959 = vunpack.c.h.b16 %v302
    %v2960 = vunpack.c.l.b16 %v303
    %v2961 = vunpack.c.h.b16 %v303
    %v2962 = vunpack.c.l.b16 %v304
    %v2963 = vunpack.c.h.b16 %v304
    %v2964 = vunpack.c.l.b16 %v305
    %v2965 = vunpack.c.h.b16 %v305
    %v2966 = vunpack.c.l.b16 %v306
    %v2967 = vunpack.c.h.b16 %v306
    %v2968 = vunpack.c.l.b16 %v307
    %v2969 = vunpack.c.h.b16 %v307
    %v2970 = vunpack.c.l.b16 %v308
    %v2971 = vunpack.c.h.b16 %v308
    %v2972 = vunpack.c.l.b16 %v309
    %v2973 = vunpack.c.h.b16 %v309
    %v2974 = vunpack.c.l.b16 %v310
    %v2975 = vunpack.c.h.b16 %v310
    %v2976 = vunpack.c.l.b16 %v311
    %v2977 = vunpack.c.h.b16 %v311
    %v2978 = vunpack.c.l.b16 %v312
    %v2979 = vunpack.c.h.b16 %v312
    %v2980 = vunpack.c.l.b16 %v313
    %v2981 = vunpack.c.h.b16 %v313
    %v2982 = vunpack.c.l.b16 %v314
    %v2983 = vunpack.c.h.b16 %v314
    %v2984 = vunpack.c.l.b16 %v315
    %v2985 = vunpack.c.h.b16 %v315
    %v2986 = vunpack.c.l.b16 %v316
    %v2987 = vunpack.c.h.b16 %v316
    %v2988 = vunpack.c.l.b16 %v317
    %v2989 = vunpack.c.h.b16 %v317
    %v2990 = vunpack.c.l.b16 %v318
    %v2991 = vunpack.c.h.b16 %v318
    %v2992 = vunpack.c.l.b16 %v319
    %v2993 = vunpack.c.h.b16 %v319
    %v2994 = vunpack.c.l.b16 %v320
    %v2995 = vunpack.c.h.b16 %v320
    %v2996 = vunpack.c.l.b16 %v321
    %v2997 = vunpack.c.h.b16 %v321
    %v2998 = vunpack.c.l.b16 %v322
    %v2999 = vunpack.c.h.b16 %v322
    %v3000 = vunpack.c.l.b16 %v323
    %v3001 = vunpack.c.h.b16 %v323
    %v3002 = vunpack.c.l.b16 %v324
    %v3003 = vunpack.c.h.b16 %v324
    %v3004 = vunpack.c.l.b16 %v325
    %v3005 = vunpack.c.h.b16 %v325
    %v3006 = vunpack.c.l.b16 %v326
    %v3007 = vunpack.c.h.b16 %v326
    %v3008 = vunpack.c.l.b16 %v327
    %v3009 = vunpack.c.h.b16 %v327
    %v3010 = vunpack.c.l.b16 %v328
    %v3011 = vunpack.c.h.b16 %v328
    %v3012 = vunpack.c.l.b16 %v329
    %v3013 = vunpack.c.h.b16 %v329
    %v3014 = vunpack.c.l.b16 %v330
    %v3015 = vunpack.c.h.b16 %v330
    %v3016 = vunpack.c.l.b16 %v331
    %v3017 = vunpack.c.h.b16 %v331
    %v3018 = vunpack.c.l.b16 %v332
    %v3019 = vunpack.c.h.b16 %v332
    %v3020 = vunpack.c.l.b16 %v333
    %v3021 = vunpack.c.h.b16 %v333
    %v3022 = vunpack.c.l.b16 %v334
    %v3023 = vunpack.c.h.b16 %v334
    %v3024 = vunpack.c.l.b16 %v335
    %v3025 = vunpack.c.h.b16 %v335
    %v3026 = vunpack.c.l.b16 %v336
    %v3027 = vunpack.c.h.b16 %v336
    %v3028 = vunpack.c.l.b16 %v337
    %v3029 = vunpack.c.h.b16 %v337
    %v3030 = vunpack.c.l.b16 %v338
    %v3031 = vunpack.c.h.b16 %v338
    %v3032 = vunpack.c.l.b16 %v339
    %v3033 = vunpack.c.h.b16 %v339
    %v3034 = vunpack.c.l.b16 %v340
    %v3035 = vunpack.c.h.b16 %v340
    %v3036 = vunpack.c.l.b16 %v341
    %v3037 = vunpack.c.h.b16 %v341
    %v3038 = vunpack.c.l.b16 %v342
    %v3039 = vunpack.c.h.b16 %v342
    %v3040 = vunpack.c.l.b16 %v343
    %v3041 = vunpack.c.h.b16 %v343
    %v3042 = vunpack.c.l.b16 %v344
    %v3043 = vunpack.c.h.b16 %v344
    %v3044 = vunpack.c.l.b16 %v345
    %v3045 = vunpack.c.h.b16 %v345
    %v3046 = vunpack.c.l.b16 %v346
    %v3047 = vunpack.c.h.b16 %v346
    %v3048 = vunpack.c.l.b16 %v347
    %v3049 = vunpack.c.h.b16 %v347
    %v3050 = vunpack.c.l.b16 %v348
    %v3051 = vunpack.c.h.b16 %v348
    %v3052 = vunpack.c.l.b16 %v349
    %v3053 = vunpack.c.h.b16 %v349
    %v3054 = vunpack.c.l.b16 %v350
    %v3055 = vunpack.c.h.b16 %v350
    %v3056 = vunpack.c.l.b16 %v351
    %v3057 = vunpack.c.h.b16 %v351
    %v3058 = vunpack.c.l.b16 %v352
    %v3059 = vunpack.c.h.b16 %v352
    %v3060 = vunpack.c.l.b16 %v353
    %v3061 = vunpack.c.h.b16 %v353
    %v3062 = vunpack.c.l.b16 %v354
    %v3063 = vunpack.c.h.b16 %v354
    %v3064 = vunpack.c.l.b16 %v355
    %v3065 = vunpack.c.h.b16 %v355
    %v3066 = vunpack.c.l.b16 %v356
    %v3067 = vunpack.c.h.b16 %v356
    %v3068 = vunpack.c.l.b16 %v357
    %v3069 = vunpack.c.h.b16 %v357
    %v3070 = vunpack.c.l.b16 %v358
    %v3071 = vunpack.c.h.b16 %v358
    %v3072 = vunpack.c.l.b16 %v359
    %v3073 = vunpack.c.h.b16 %v359
    %v3074 = vunpack.c.l.b16 %v360
    %v3075 = vunpack.c.h.b16 %v360
    %v3076 = vunpack.c.l.b16 %v361
    %v3077 = vunpack.c.h.b16 %v361
    %v3078 = vunpack.c.l.b16 %v362
    %v3079 = vunpack.c.h.b16 %v362
    %v3080 = vunpack.c.l.b16 %v363
    %v3081 = vunpack.c.h.b16 %v363
    %v3082 = vunpack.c.l.b16 %v364
    %v3083 = vunpack.c.h.b16 %v364
    %v3084 = vunpack.c.l.b16 %v365
    %v3085 = vunpack.c.h.b16 %v365
    %v3086 = vunpack.c.l.b16 %v366
    %v3087 = vunpack.c.h.b16 %v366
    %v3088 = vunpack.c.l.b16 %v367
    %v3089 = vunpack.c.h.b16 %v367
    %v3090 = vunpack.c.l.b16 %v368
    %v3091 = vunpack.c.h.b16 %v368
    %v3092 = vunpack.c.l.b16 %v369
    %v3093 = vunpack.c.h.b16 %v369
    %v3094 = vunpack.c.l.b16 %v370
    %v3095 = vunpack.c.h.b16 %v370
    %v3096 = vunpack.c.l.b16 %v371
    %v3097 = vunpack.c.h.b16 %v371
    %v3098 = vunpack.c.l.b16 %v372
    %v3099 = vunpack.c.h.b16 %v372
    %v3100 = vunpack.c.l.b16 %v373
    %v3101 = vunpack.c.h.b16 %v373
    %v3102 = vunpack.c.l.b16 %v374
    %v3103 = vunpack.c.h.b16 %v374
    %v3104 = vunpack.c.l.b16 %v375
    %v3105 = vunpack.c.h.b16 %v375
    %v3106 = vunpack.c.l.b16 %v376
    %v3107 = vunpack.c.h.b16 %v376
    %v3108 = vunpack.c.l.b16 %v377
    %v3109 = vunpack.c.h.b16 %v377
    %v3110 = vunpack.c.l.b16 %v378
    %v3111 = vunpack.c.h.b16 %v378
    %v3112 = vunpack.c.l.b16 %v379
    %v3113 = vunpack.c.h.b16 %v379
    %v3114 = vunpack.c.l.b16 %v380
    %v3115 = vunpack.c.h.b16 %v380
    %v3116 = vunpack.c.l.b16 %v381
    %v3117 = vunpack.c.h.b16 %v381
    %v3118 = vunpack.c.l.b16 %v382
    %v3119 = vunpack.c.h.b16 %v382
    %v3120 = vunpack.c.l.b16 %v383
    %v3121 = vunpack.c.h.b16 %v383
    %v3122 = vunpack.c.l.b16 %v384
    %v3123 = vunpack.c.h.b16 %v384
    %v3124 = vunpack.c.l.b16 %v385
    %v3125 = vunpack.c.h.b16 %v385
    %v3126 = vunpack.c.l.b16 %v386
    %v3127 = vunpack.c.h.b16 %v386
    %v3128 = vunpack.c.l.b16 %v387
    %v3129 = vunpack.c.h.b16 %v387
    %v3130 = vunpack.c.l.b16 %v388
    %v3131 = vunpack.c.h.b16 %v388
    %v3132 = vunpack.c.l.b16 %v389
    %v3133 = vunpack.c.h.b16 %v389
    %v3134 = vunpack.c.l.b16 %v390
    %v3135 = vunpack.c.h.b16 %v390
    %v3136 = vunpack.c.l.b16 %v391
    %v3137 = vunpack.c.h.b16 %v391
    %v3138 = vunpack.c.l.b16 %v392
    %v3139 = vunpack.c.h.b16 %v392
    %v3140 = vunpack.c.l.b16 %v393
    %v3141 = vunpack.c.h.b16 %v393
    %v3142 = vunpack.c.l.b16 %v394
    %v3143 = vunpack.c.h.b16 %v394
    %v3144 = vunpack.c.l.b16 %v395
    %v3145 = vunpack.c.h.b16 %v395
    %v3146 = vunpack.c.l.b16 %v396
    %v3147 = vunpack.c.h.b16 %v396
    %v3148 = vunpack.c.l.b16 %v397
    %v3149 = vunpack.c.h.b16 %v397
    %v3150 = vunpack.c.l.b16 %v398
    %v3151 = vunpack.c.h.b16 %v398
    %v3152 = vunpack.c.l.b16 %v399
    %v3153 = vunpack.c.h.b16 %v399
    %v3154 = vunpack.c.l.b16 %v400
    %v3155 = vunpack.c.h.b16 %v400
    %v3156 = vunpack.c.l.b16 %v401
    %v3157 = vunpack.c.h.b16 %v401
    %v3158 = vunpack.c.l.b16 %v402
    %v3159 = vunpack.c.h.b16 %v402
    %v3160 = vunpack.c.l.b16 %v403
    %v3161 = vunpack.c.h.b16 %v403
    %v3162 = vunpack.c.l.b16 %v404
    %v3163 = vunpack.c.h.b16 %v404
    %v3164 = vunpack.c.l.b16 %v405
    %v3165 = vunpack.c.h.b16 %v405
    %v3166 = vunpack.c.l.b16 %v406
    %v3167 = vunpack.c.h.b16 %v406
    %v3168 = vunpack.c.l.b16 %v407
    %v3169 = vunpack.c.h.b16 %v407
    %v3170 = vunpack.c.l.b16 %v408
    %v3171 = vunpack.c.h.b16 %v408
    %v3172 = vunpack.c.l.b16 %v409
    %v3173 = vunpack.c.h.b16 %v409
    %v3174 = vunpack.c.l.b16 %v410
    %v3175 = vunpack.c.h.b16 %v410
    %v3176 = vunpack.c.l.b16 %v411
    %v3177 = vunpack.c.h.b16 %v411
    %v3178 = vunpack.c.l.b16 %v412
    %v3179 = vunpack.c.h.b16 %v412
    %v3180 = vunpack.c.l.b16 %v413
    %v3181 = vunpack.c.h.b16 %v413
    %v3182 = vunpack.c.l.b16 %v414
    %v3183 = vunpack.c.h.b16 %v414
    %v3184 = vunpack.c.l.b16 %v415
    %v3185 = vunpack.c.h.b16 %v415
    %v3186 = vunpack.c.l.b16 %v416
    %v3187 = vunpack.c.h.b16 %v416
    %v3188 = vunpack.c.l.b16 %v417
    %v3189 = vunpack.c.h.b16 %v417
    %v3190 = vunpack.c.l.b16 %v418
    %v3191 = vunpack.c.h.b16 %v418
    %v3192 = vunpack.c.l.b16 %v419
    %v3193 = vunpack.c.h.b16 %v419
    %v3194 = vunpack.c.l.b16 %v420
    %v3195 = vunpack.c.h.b16 %v420
    %v3196 = vunpack.c.l.b16 %v421
    %v3197 = vunpack.c.h.b16 %v421
    %v3198 = vunpack.c.l.b16 %v422
    %v3199 = vunpack.c.h.b16 %v422
    %v3200 = vunpack.c.l.b16 %v423
    %v3201 = vunpack.c.h.b16 %v423
    %v3202 = vunpack.c.l.b16 %v424
    %v3203 = vunpack.c.h.b16 %v424
    %v3204 = vunpack.c.l.b16 %v425
    %v3205 = vunpack.c.h.b16 %v425
    %v3206 = vunpack.c.l.b16 %v426
    %v3207 = vunpack.c.h.b16 %v426
    %v3208 = vunpack.c.l.b16 %v427
    %v3209 = vunpack.c.h.b16 %v427
    %v3210 = vunpack.c.l.b16 %v428
    %v3211 = vunpack.c.h.b16 %v428
    %v3212 = vunpack.c.l.b16 %v429
    %v3213 = vunpack.c.h.b16 %v429
    %v3214 = vunpack.c.l.b16 %v430
    %v3215 = vunpack.c.h.b16 %v430
    %v3216 = vunpack.c.l.b16 %v431
    %v3217 = vunpack.c.h.b16 %v431
    %v3218 = vunpack.c.l.b16 %v432
    %v3219 = vunpack.c.h.b16 %v432
    %v3220 = vunpack.c.l.b16 %v433
    %v3221 = vunpack.c.h.b16 %v433
    %v3222 = vunpack.c.l.b16 %v434
    %v3223 = vunpack.c.h.b16 %v434
    %v3224 = vunpack.c.l.b16 %v435
    %v3225 = vunpack.c.h.b16 %v435
    %v3226 = vunpack.c.l.b16 %v436
    %v3227 = vunpack.c.h.b16 %v436
    %v3228 = vunpack.c.l.b16 %v437
    %v3229 = vunpack.c.h.b16 %v437
    %v3230 = vunpack.c.l.b16 %v438
    %v3231 = vunpack.c.h.b16 %v438
    %v3232 = vunpack.c.l.b16 %v439
    %v3233 = vunpack.c.h.b16 %v439
    %v3234 = vunpack.c.l.b16 %v440
    %v3235 = vunpack.c.h.b16 %v440
    %v3236 = vunpack.c.l.b16 %v441
    %v3237 = vunpack.c.h.b16 %v441
    %v3238 = vunpack.c.l.b16 %v442
    %v3239 = vunpack.c.h.b16 %v442
    %v3240 = vunpack.c.l.b16 %v443
    %v3241 = vunpack.c.h.b16 %v443
    %v3242 = vunpack.c.l.b16 %v444
    %v3243 = vunpack.c.h.b16 %v444
    %v3244 = vunpack.c.l.b16 %v445
    %v3245 = vunpack.c.h.b16 %v445
    %v3246 = vunpack.c.l.b16 %v446
    %v3247 = vunpack.c.h.b16 %v446
    %v3248 = vunpack.c.l.b16 %v447
    %v3249 = vunpack.c.h.b16 %v447
    %v3250 = vunpack.c.l.b16 %v448
    %v3251 = vunpack.c.h.b16 %v448
    %v3252 = vunpack.c.l.b16 %v449
    %v3253 = vunpack.c.h.b16 %v449
    %v3254 = vunpack.c.l.b16 %v450
    %v3255 = vunpack.c.h.b16 %v450
    %v3256 = vunpack.c.l.b16 %v451
    %v3257 = vunpack.c.h.b16 %v451
    %v3258 = vunpack.c.l.b16 %v452
    %v3259 = vunpack.c.h.b16 %v452
    %v3260 = vunpack.c.l.b16 %v453
    %v3261 = vunpack.c.h.b16 %v453
    %v3262 = vunpack.c.l.b16 %v454
    %v3263 = vunpack.c.h.b16 %v454
    %v3264 = vunpack.c.l.b16 %v455
    %v3265 = vunpack.c.h.b16 %v455
    %v3266 = vunpack.c.l.b16 %v456
    %v3267 = vunpack.c.h.b16 %v456
    %v3268 = vunpack.c.l.b16 %v457
    %v3269 = vunpack.c.h.b16 %v457
    %v3270 = vunpack.c.l.b16 %v458
    %v3271 = vunpack.c.h.b16 %v458
    %v3272 = vunpack.c.l.b16 %v459
    %v3273 = vunpack.c.h.b16 %v459
    %v3274 = vunpack.c.l.b16 %v460
    %v3275 = vunpack.c.h.b16 %v460
    %v3276 = vunpack.c.l.b16 %v461
    %v3277 = vunpack.c.h.b16 %v461
    %v3278 = vunpack.c.l.b16 %v462
    %v3279 = vunpack.c.h.b16 %v462
    %v3280 = vunpack.c.l.b16 %v463
    %v3281 = vunpack.c.h.b16 %v463
    %v3282 = vunpack.c.l.b16 %v464
    %v3283 = vunpack.c.h.b16 %v464
    %v3284 = vunpack.c.l.b16 %v465
    %v3285 = vunpack.c.h.b16 %v465
    %v3286 = vunpack.c.l.b16 %v466
    %v3287 = vunpack.c.h.b16 %v466
    %v3288 = vunpack.c.l.b16 %v467
    %v3289 = vunpack.c.h.b16 %v467
    %v3290 = vunpack.c.l.b16 %v468
    %v3291 = vunpack.c.h.b16 %v468
    %v3292 = vunpack.c.l.b16 %v469
    %v3293 = vunpack.c.h.b16 %v469
    %v3294 = vunpack.c.l.b16 %v470
    %v3295 = vunpack.c.h.b16 %v470
    %v3296 = vunpack.c.l.b16 %v471
    %v3297 = vunpack.c.h.b16 %v471
    %v3298 = vunpack.c.l.b16 %v472
    %v3299 = vunpack.c.h.b16 %v472
    %v3300 = vunpack.c.l.b16 %v473
    %v3301 = vunpack.c.h.b16 %v473
    %v3302 = vunpack.c.l.b16 %v474
    %v3303 = vunpack.c.h.b16 %v474
    %v3304 = vunpack.c.l.b16 %v475
    %v3305 = vunpack.c.h.b16 %v475
    %v3306 = vunpack.c.l.b16 %v476
    %v3307 = vunpack.c.h.b16 %v476
    %v3308 = vunpack.c.l.b16 %v477
    %v3309 = vunpack.c.h.b16 %v477
    %v3310 = vunpack.c.l.b16 %v478
    %v3311 = vunpack.c.h.b16 %v478
    %v3312 = vunpack.c.l.b16 %v479
    %v3313 = vunpack.c.h.b16 %v479
    %v3314 = vunpack.c.l.b16 %v480
    %v3315 = vunpack.c.h.b16 %v480
    %v3316 = vunpack.c.l.b16 %v481
    %v3317 = vunpack.c.h.b16 %v481
    %v3318 = vunpack.c.l.b16 %v482
    %v3319 = vunpack.c.h.b16 %v482
    %v3320 = vunpack.c.l.b16 %v483
    %v3321 = vunpack.c.h.b16 %v483
    %v3322 = vunpack.c.l.b16 %v484
    %v3323 = vunpack.c.h.b16 %v484
    %v3324 = vunpack.c.l.b16 %v485
    %v3325 = vunpack.c.h.b16 %v485
    %v3326 = vpack.c.b16 %v2816, %v2814
    %v3327 = vpack.c.b16 %v2817, %v2815
    %v3328 = vpack.c.b16 %v2820, %v2818
    %v3329 = vpack.c.b16 %v2821, %v2819
    %v3330 = vpack.c.b16 %v2824, %v2822
    %v3331 = vpack.c.b16 %v2825, %v2823
    %v3332 = vpack.c.b16 %v2828, %v2826
    %v3333 = vpack.c.b16 %v2829, %v2827
    %v3334 = vpack.c.b16 %v2832, %v2830
    %v3335 = vpack.c.b16 %v2833, %v2831
    %v3336 = vpack.c.b16 %v2836, %v2834
    %v3337 = vpack.c.b16 %v2837, %v2835
    %v3338 = vpack.c.b16 %v2840, %v2838
    %v3339 = vpack.c.b16 %v2841, %v2839
    %v3340 = vpack.c.b16 %v2844, %v2842
    %v3341 = vpack.c.b16 %v2845, %v2843
    %v3342 = vpack.c.b16 %v2848, %v2846
    %v3343 = vpack.c.b16 %v2849, %v2847
    %v3344 = vpack.c.b16 %v2852, %v2850
    %v3345 = vpack.c.b16 %v2853, %v2851
    %v3346 = vpack.c.b16 %v2856, %v2854
    %v3347 = vpack.c.b16 %v2857, %v2855
    %v3348 = vpack.c.b16 %v2860, %v2858
    %v3349 = vpack.c.b16 %v2861, %v2859
    %v3350 = vpack.c.b16 %v2864, %v2862
    %v3351 = vpack.c.b16 %v2865, %v2863
    %v3352 = vpack.c.b16 %v2868, %v2866
    %v3353 = vpack.c.b16 %v2869, %v2867
    %v3354 = vpack.c.b16 %v2872, %v2870
    %v3355 = vpack.c.b16 %v2873, %v2871
    %v3356 = vpack.c.b16 %v2876, %v2874
    %v3357 = vpack.c.b16 %v2877, %v2875
    %v3358 = vpack.c.b16 %v2880, %v2878
    %v3359 = vpack.c.b16 %v2881, %v2879
    %v3360 = vpack.c.b16 %v2884, %v2882
    %v3361 = vpack.c.b16 %v2885, %v2883
    %v3362 = vpack.c.b16 %v2888, %v2886
    %v3363 = vpack.c.b16 %v2889, %v2887
    %v3364 = vpack.c.b16 %v2892, %v2890
    %v3365 = vpack.c.b16 %v2893, %v2891
    %v3366 = vpack.c.b16 %v2896, %v2894
    %v3367 = vpack.c.b16 %v2897, %v2895
    %v3368 = vpack.c.b16 %v2900, %v2898
    %v3369 = vpack.c.b16 %v2901, %v2899
    %v3370 = vpack.c.b16 %v2904, %v2902
    %v3371 = vpack.c.b16 %v2905, %v2903
    %v3372 = vpack.c.b16 %v2908, %v2906
    %v3373 = vpack.c.b16 %v2909, %v2907
    %v3374 = vpack.c.b16 %v2912, %v2910
    %v3375 = vpack.c.b16 %v2913, %v2911
    %v3376 = vpack.c.b16 %v2916, %v2914
    %v3377 = vpack.c.b16 %v2917, %v2915
    %v3378 = vpack.c.b16 %v2920, %v2918
    %v3379 = vpack.c.b16 %v2921, %v2919
    %v3380 = vpack.c.b16 %v2924, %v2922
    %v3381 = vpack.c.b16 %v2925, %v2923
    %v3382 = vpack.c.b16 %v2928, %v2926
    %v3383 = vpack.c.b16 %v2929, %v2927
    %v3384 = vpack.c.b16 %v2932, %v2930
    %v3385 = vpack.c.b16 %v2933, %v2931
    %v3386 = vpack.c.b16 %v2936, %v2934
    %v3387 = vpack.c.b16 %v2937, %v2935
    %v3388 = vpack.c.b16 %v2940, %v2938
    %v3389 = vpack.c.b16 %v2941, %v2939
    %v3390 = vpack.c.b16 %v2944, %v2942
    %v3391 = vpack.c.b16 %v2945, %v2943
    %v3392 = vpack.c.b16 %v2948, %v2946
    %v3393 = vpack.c.b16 %v2949, %v2947
    %v3394 = vpack.c.b16 %v2952, %v2950
    %v3395 = vpack.c.b16 %v2953, %v2951
    %v3396 = vpack.c.b16 %v2956, %v2954
    %v3397 = vpack.c.b16 %v2957, %v2955
    %v3398 = vpack.c.b16 %v2960, %v2958
    %v3399 = vpack.c.b16 %v2961, %v2959
    %v3400 = vpack.c.b16 %v2964, %v2962
    %v3401 = vpack.c.b16 %v2965, %v2963
    %v3402 = vpack.c.b16 %v2968, %v2966
    %v3403 = vpack.c.b16 %v2969, %v2967
    %v3404 = vpack.c.b16 %v2972, %v2970
    %v3405 = vpack.c.b16 %v2973, %v2971
    %v3406 = vpack.c.b16 %v2976, %v2974
    %v3407 = vpack.c.b16 %v2977, %v2975
    %v3408 = vpack.c.b16 %v2980, %v2978
    %v3409 = vpack.c.b16 %v2981, %v2979
    %v3410 = vpack.c.b16 %v2984, %v2982
    %v3411 = vpack.c.b16 %v2985, %v2983
    %v3412 = vpack.c.b16 %v2988, %v2986
    %v3413 = vpack.c.b16 %v2989, %v2987
    %v3414 = vpack.c.b16 %v2992, %v2990
    %v3415 = vpack.c.b16 %v2993, %v2991
    %v3416 = vpack.c.b16 %v2996, %v2994
    %v3417 = vpack.c.b16 %v2997, %v2995
    %v3418 = vpack.c.b16 %v3000, %v2998
    %v3419 = vpack.c.b16 %v3001, %v2999
    %v3420 = vpack.c.b16 %v3004, %v3002
    %v3421 = vpack.c.b16 %v3005, %v3003
    %v3422 = vpack.c.b16 %v3008, %v3006
    %v3423 = vpack.c.b16 %v3009, %v3007
    %v3424 = vpack.c.b16 %v3012, %v3010
    %v3425 = vpack.c.b16 %v3013, %v3011
    %v3426 = vpack.c.b16 %v3016, %v3014
    %v3427 = vpack.c.b16 %v3017, %v3015
    %v3428 = vpack.c.b16 %v3020, %v3018
    %v3429 = vpack.c.b16 %v3021, %v3019
    %v3430 = vpack.c.b16 %v3024, %v3022
    %v3431 = vpack.c.b16 %v3025, %v3023
    %v3432 = vpack.c.b16 %v3028, %v3026
    %v3433 = vpack.c.b16 %v3029, %v3027
    %v3434 = vpack.c.b16 %v3032, %v3030
    %v3435 = vpack.c.b16 %v3033, %v3031
    %v3436 = vpack.c.b16 %v3036, %v3034
    %v3437 = vpack.c.b16 %v3037, %v3035
    %v3438 = vpack.c.b16 %v3040, %v3038
    %v3439 = vpack.c.b16 %v3041, %v3039
    %v3440 = vpack.c.b16 %v3044, %v3042
    %v3441 = vpack.c.b16 %v3045, %v3043
    %v3442 = vpack.c.b16 %v3048, %v3046
    %v3443 = vpack.c.b16 %v3049, %v3047
    %v3444 = vpack.c.b16 %v3052, %v3050
    %v3445 = vpack.c.b16 %v3053, %v3051
    %v3446 = vpack.c.b16 %v3056, %v3054
    %v3447 = vpack.c.b16 %v3057, %v3055
    %v3448 = vpack.c.b16 %v3060, %v3058
    %v3449 = vpack.c.b16 %v3061, %v3059
    %v3450 = vpack.c.b16 %v3064, %v3062
    %v3451 = vpack.c.b16 %v3065, %v3063
    %v3452 = vpack.c.b16 %v3068, %v3066
    %v3453 = vpack.c.b16 %v3069, %v3067
    %v3454 = vpack.c.b16 %v3072, %v3070
    %v3455 = vpack.c.b16 %v3073, %v3071
    %v3456 = vpack.c.b16 %v3076, %v3074
    %v3457 = vpack.c.b16 %v3077, %v3075
    %v3458 = vpack.c.b16 %v3080, %v3078
    %v3459 = vpack.c.b16 %v3081, %v3079
    %v3460 = vpack.c.b16 %v3084, %v3082
    %v3461 = vpack.c.b16 %v3085, %v3083
    %v3462 = vpack.c.b16 %v3088, %v3086
    %v3463 = vpack.c.b16 %v3089, %v3087
    %v3464 = vpack.c.b16 %v3092, %v3090
    %v3465 = vpack.c.b16 %v3093, %v3091
    %v3466 = vpack.c.b16 %v3096, %v3094
    %v3467 = vpack.c.b16 %v3097, %v3095
    %v3468 = vpack.c.b16 %v3100, %v3098
    %v3469 = vpack.c.b16 %v3101, %v3099
    %v3470 = vpack.c.b16 %v3104, %v3102
    %v3471 = vpack.c.b16 %v3105, %v3103
    %v3472 = vpack.c.b16 %v3108, %v3106
    %v3473 = vpack.c.b16 %v3109, %v3107
    %v3474 = vpack.c.b16 %v3112, %v3110
    %v3475 = vpack.c.b16 %v3113, %v3111
    %v3476 = vpack.c.b16 %v3116, %v3114
    %v3477 = vpack.c.b16 %v3117, %v3115
    %v3478 = vpack.c.b16 %v3120, %v3118
    %v3479 = vpack.c.b16 %v3121, %v3119
    %v3480 = vpack.c.b16 %v3124, %v3122
    %v3481 = vpack.c.b16 %v3125, %v3123
    %v3482 = vpack.c.b16 %v3128, %v3126
    %v3483 = vpack.c.b16 %v3129, %v3127
    %v3484 = vpack.c.b16 %v3132, %v3130
    %v3485 = vpack.c.b16 %v3133, %v3131
    %v3486 = vpack.c.b16 %v3136, %v3134
    %v3487 = vpack.c.b16 %v3137, %v3135
    %v3488 = vpack.c.b16 %v3140, %v3138
    %v3489 = vpack.c.b16 %v3141, %v3139
    %v3490 = vpack.c.b16 %v3144, %v3142
    %v3491 = vpack.c.b16 %v3145, %v3143
    %v3492 = vpack.c.b16 %v3148, %v3146
    %v3493 = vpack.c.b16 %v3149, %v3147
    %v3494 = vpack.c.b16 %v3152, %v3150
    %v3495 = vpack.c.b16 %v3153, %v3151
    %v3496 = vpack.c.b16 %v3156, %v3154
    %v3497 = vpack.c.b16 %v3157, %v3155
    %v3498 = vpack.c.b16 %v3160, %v3158
    %v3499 = vpack.c.b16 %v3161, %v3159
    %v3500 = vpack.c.b16 %v3164, %v3162
    %v3501 = vpack.c.b16 %v3165, %v3163
    %v3502 = vpack.c.b16 %v3168, %v3166
    %v3503 = vpack.c.b16 %v3169, %v3167
    %v3504 = vpack.c.b16 %v3172, %v3170
    %v3505 = vpack.c.b16 %v3173, %v3171
    %v3506 = vpack.c.b16 %v3176, %v3174
    %v3507 = vpack.c.b16 %v3177, %v3175
    %v3508 = vpack.c.b16 %v3180, %v3178
    %v3509 = vpack.c.b16 %v3181, %v3179
    %v3510 = vpack.c.b16 %v3184, %v3182
    %v3511 = vpack.c.b16 %v3185, %v3183
    %v3512 = vpack.c.b16 %v3188, %v3186
    %v3513 = vpack.c.b16 %v3189, %v3187
    %v3514 = vpack.c.b16 %v3192, %v3190
    %v3515 = vpack.c.b16 %v3193, %v3191
    %v3516 = vpack.c.b16 %v3196, %v3194
    %v3517 = vpack.c.b16 %v3197, %v3195
    %v3518 = vpack.c.b16 %v3200, %v3198
    %v3519 = vpack.c.b16 %v3201, %v3199
    %v3520 = vpack.c.b16 %v3204, %v3202
    %v3521 = vpack.c.b16 %v3205, %v3203
    %v3522 = vpack.c.b16 %v3208, %v3206
    %v3523 = vpack.c.b16 %v3209, %v3207
    %v3524 = vpack.c.b16 %v3212, %v3210
    %v3525 = vpack.c.b16 %v3213, %v3211
    %v3526 = vpack.c.b16 %v3216, %v3214
    %v3527 = vpack.c.b16 %v3217, %v3215
    %v3528 = vpack.c.b16 %v3220, %v3218
    %v3529 = vpack.c.b16 %v3221, %v3219
    %v3530 = vpack.c.b16 %v3224, %v3222
    %v3531 = vpack.c.b16 %v3225, %v3223
    %v3532 = vpack.c.b16 %v3228, %v3226
    %v3533 = vpack.c.b16 %v3229, %v3227
    %v3534 = vpack.c.b16 %v3232, %v3230
    %v3535 = vpack.c.b16 %v3233, %v3231
    %v3536 = vpack.c.b16 %v3236, %v3234
    %v3537 = vpack.c.b16 %v3237, %v3235
    %v3538 = vpack.c.b16 %v3240, %v3238
    %v3539 = vpack.c.b16 %v3241, %v3239
    %v3540 = vpack.c.b16 %v3244, %v3242
    %v3541 = vpack.c.b16 %v3245, %v3243
    %v3542 = vpack.c.b16 %v3248, %v3246
    %v3543 = vpack.c.b16 %v3249, %v3247
    %v3544 = vpack.c.b16 %v3252, %v3250
    %v3545 = vpack.c.b16 %v3253, %v3251
    %v3546 = vpack.c.b16 %v3256, %v3254
    %v3547 = vpack.c.b16 %v3257, %v3255
    %v3548 = vpack.c.b16 %v3260, %v3258
    %v3549 = vpack.c.b16 %v3261, %v3259
    %v3550 = vpack.c.b16 %v3264, %v3262
    %v3551 = vpack.c.b16 %v3265, %v3263
    %v3552 = vpack.c.b16 %v3268, %v3266
    %v3553 = vpack.c.b16 %v3269, %v3267
    %v3554 = vpack.c.b16 %v3272, %v3270
    %v3555 = vpack.c.b16 %v3273, %v3271
    %v3556 = vpack.c.b16 %v3276, %v3274
    %v3557 = vpack.c.b16 %v3277, %v3275
    %v3558 = vpack.c.b16 %v3280, %v3278
    %v3559 = vpack.c.b16 %v3281, %v3279
    %v3560 = vpack.c.b16 %v3284, %v3282
    %v3561 = vpack.c.b16 %v3285, %v3283
    %v3562 = vpack.c.b16 %v3288, %v3286
    %v3563 = vpack.c.b16 %v3289, %v3287
    %v3564 = vpack.c.b16 %v3292, %v3290
    %v3565 = vpack.c.b16 %v3293, %v3291
    %v3566 = vpack.c.b16 %v3296, %v3294
    %v3567 = vpack.c.b16 %v3297, %v3295
    %v3568 = vpack.c.b16 %v3300, %v3298
    %v3569 = vpack.c.b16 %v3301, %v3299
    %v3570 = vpack.c.b16 %v3304, %v3302
    %v3571 = vpack.c.b16 %v3305, %v3303
    %v3572 = vpack.c.b16 %v3308, %v3306
    %v3573 = vpack.c.b16 %v3309, %v3307
    %v3574 = vpack.c.b16 %v3312, %v3310
    %v3575 = vpack.c.b16 %v3313, %v3311
    %v3576 = vpack.c.b16 %v3316, %v3314
    %v3577 = vpack.c.b16 %v3317, %v3315
    %v3578 = vpack.c.b16 %v3320, %v3318
    %v3579 = vpack.c.b16 %v3321, %v3319
    %v3580 = vpack.c.b16 %v3324, %v3322
    %v3581 = vpack.c.b16 %v3325, %v3323
    %3838 = vmatprep.subr.bf16.mxu0 %v3327
    %3839 = vmatpush1.bf16.msra.mxu0 %v3326
    %3840 = vmatprep.subr.bf16.mxu0 %v3329
    %3841 = vmatpush1.bf16.msra.mxu0 %v3328
    %3842 = vmatprep.subr.bf16.mxu0 %v3331
    %3843 = vmatpush1.bf16.msra.mxu0 %v3330
    %3844 = vmatprep.subr.bf16.mxu0 %v3333
    %3845 = vmatpush1.bf16.msra.mxu0 %v3332
    %3846 = vmatprep.subr.bf16.mxu0 %v3335
    %3847 = vmatpush1.bf16.msra.mxu0 %v3334
    %3848 = vmatprep.subr.bf16.mxu0 %v3337
    %3849 = vmatpush1.bf16.msra.mxu0 %v3336
    %3850 = vmatprep.subr.bf16.mxu0 %v3339
    %3851 = vmatpush1.bf16.msra.mxu0 %v3338
    %3852 = vmatprep.subr.bf16.mxu0 %v3341
    %3853 = vmatpush1.bf16.msra.mxu0 %v3340
    %3854 = vmatprep.subr.bf16.mxu0 %v3343
    %3855 = vmatpush1.bf16.msra.mxu0 %v3342
    %3856 = vmatprep.subr.bf16.mxu0 %v3345
    %3857 = vmatpush1.bf16.msra.mxu0 %v3344
    %3858 = vmatprep.subr.bf16.mxu0 %v3347
    %3859 = vmatpush1.bf16.msra.mxu0 %v3346
    %3860 = vmatprep.subr.bf16.mxu0 %v3349
    %3861 = vmatpush1.bf16.msra.mxu0 %v3348
    %3862 = vmatprep.subr.bf16.mxu0 %v3351
    %3863 = vmatpush1.bf16.msra.mxu0 %v3350
    %3864 = vmatprep.subr.bf16.mxu0 %v3353
    %3865 = vmatpush1.bf16.msra.mxu0 %v3352
    %3866 = vmatprep.subr.bf16.mxu0 %v3355
    %3867 = vmatpush1.bf16.msra.mxu0 %v3354
    %3868 = vmatprep.subr.bf16.mxu0 %v3357
    %3869 = vmatpush1.bf16.msra.mxu0 %v3356
    %3870 = vmatprep.mubr.bf16.mxu0 %v215
    %3871 = vmatmul.mubr.bf16.gmra.mrb[0].mxu0 %v214
    %v3872 = vpop.f32.mrb[0].mxu0
    %v3873 = vadd.f32 %v2552, %v3872
    %v3874 = vpop.f32.mrb[0].mxu0
    %v3875 = vadd.f32 %v2554, %v3874
    %v3876 = vpop.f32.mrb[0].mxu0
    %v3877 = vpop.f32.mrb[0].mxu0
    %3878 = vdwg.mxu0
    %3879 = vmatprep.subr.bf16.mxu0 %v3359
    %3880 = vmatpush1.bf16.msra.mxu0 %v3358
    %3881 = vmatprep.subr.bf16.mxu0 %v3361
    %3882 = vmatpush1.bf16.msra.mxu0 %v3360
    %3883 = vmatprep.subr.bf16.mxu0 %v3363
    %3884 = vmatpush1.bf16.msra.mxu0 %v3362
    %3885 = vmatprep.subr.bf16.mxu0 %v3365
    %3886 = vmatpush1.bf16.msra.mxu0 %v3364
    %3887 = vmatprep.subr.bf16.mxu0 %v3367
    %3888 = vmatpush1.bf16.msra.mxu0 %v3366
    %3889 = vmatprep.subr.bf16.mxu0 %v3369
    %3890 = vmatpush1.bf16.msra.mxu0 %v3368
    %3891 = vmatprep.subr.bf16.mxu0 %v3371
    %3892 = vmatpush1.bf16.msra.mxu0 %v3370
    %3893 = vmatprep.subr.bf16.mxu0 %v3373
    %3894 = vmatpush1.bf16.msra.mxu0 %v3372
    %3895 = vmatprep.subr.bf16.mxu0 %v3375
    %3896 = vmatpush1.bf16.msra.mxu0 %v3374
    %3897 = vmatprep.subr.bf16.mxu0 %v3377
    %3898 = vmatpush1.bf16.msra.mxu0 %v3376
    %3899 = vmatprep.subr.bf16.mxu0 %v3379
    %3900 = vmatpush1.bf16.msra.mxu0 %v3378
    %3901 = vmatprep.subr.bf16.mxu0 %v3381
    %3902 = vmatpush1.bf16.msra.mxu0 %v3380
    %3903 = vmatprep.subr.bf16.mxu0 %v3383
    %3904 = vmatpush1.bf16.msra.mxu0 %v3382
    %3905 = vmatprep.subr.bf16.mxu0 %v3385
    %3906 = vmatpush1.bf16.msra.mxu0 %v3384
    %3907 = vmatprep.subr.bf16.mxu0 %v3387
    %3908 = vmatpush1.bf16.msra.mxu0 %v3386
    %3909 = vmatprep.subr.bf16.mxu0 %v3389
    %3910 = vmatpush1.bf16.msra.mxu0 %v3388
    %3911 = vmatprep.mubr.bf16.mxu0 %v217
    %3912 = vmatmul.mubr.bf16.gmra.mrb[0].mxu0 %v216
    %v3913 = vpop.f32.mrb[0].mxu0
    %v3914 = vadd.f32 %v3873, %v3913
    %v3915 = vpop.f32.mrb[0].mxu0
    %v3916 = vadd.f32 %v3875, %v3915
    %v3917 = vpop.f32.mrb[0].mxu0
    %v3918 = vpop.f32.mrb[0].mxu0
    %3919 = vdwg.mxu0
    %3920 = vmatprep.subr.bf16.mxu0 %v3391
    %3921 = vmatpush1.bf16.msra.mxu0 %v3390
    %3922 = vmatprep.subr.bf16.mxu0 %v3393
    %3923 = vmatpush1.bf16.msra.mxu0 %v3392
    %3924 = vmatprep.subr.bf16.mxu0 %v3395
    %3925 = vmatpush1.bf16.msra.mxu0 %v3394
    %3926 = vmatprep.subr.bf16.mxu0 %v3397
    %3927 = vmatpush1.bf16.msra.mxu0 %v3396
    %3928 = vmatprep.subr.bf16.mxu0 %v3399
    %3929 = vmatpush1.bf16.msra.mxu0 %v3398
    %3930 = vmatprep.subr.bf16.mxu0 %v3401
    %3931 = vmatpush1.bf16.msra.mxu0 %v3400
    %3932 = vmatprep.subr.bf16.mxu0 %v3403
    %3933 = vmatpush1.bf16.msra.mxu0 %v3402
    %3934 = vmatprep.subr.bf16.mxu0 %v3405
    %3935 = vmatpush1.bf16.msra.mxu0 %v3404
    %3936 = vmatprep.subr.bf16.mxu0 %v3407
    %3937 = vmatpush1.bf16.msra.mxu0 %v3406
    %3938 = vmatprep.subr.bf16.mxu0 %v3409
    %3939 = vmatpush1.bf16.msra.mxu0 %v3408
    %3940 = vmatprep.subr.bf16.mxu0 %v3411
    %3941 = vmatpush1.bf16.msra.mxu0 %v3410
    %3942 = vmatprep.subr.bf16.mxu0 %v3413
    %3943 = vmatpush1.bf16.msra.mxu0 %v3412
    %3944 = vmatprep.subr.bf16.mxu0 %v3415
    %3945 = vmatpush1.bf16.msra.mxu0 %v3414
    %3946 = vmatprep.subr.bf16.mxu0 %v3417
    %3947 = vmatpush1.bf16.msra.mxu0 %v3416
    %3948 = vmatprep.subr.bf16.mxu0 %v3419
    %3949 = vmatpush1.bf16.msra.mxu0 %v3418
    %3950 = vmatprep.subr.bf16.mxu0 %v3421
    %3951 = vmatpush1.bf16.msra.mxu0 %v3420
    %3952 = vmatprep.mubr.bf16.mxu0 %v219
    %3953 = vmatmul.mubr.bf16.gmra.mrb[0].mxu0 %v218
    %v3954 = vpop.f32.mrb[0].mxu0
    %v3955 = vadd.f32 %v3914, %v3954
    %v3956 = vpop.f32.mrb[0].mxu0
    %v3957 = vadd.f32 %v3916, %v3956
    %v3958 = vpop.f32.mrb[0].mxu0
    %v3959 = vpop.f32.mrb[0].mxu0
    %3960 = vdwg.mxu0
    %3961 = vmatprep.subr.bf16.mxu0 %v3423
    %3962 = vmatpush1.bf16.msra.mxu0 %v3422
    %3963 = vmatprep.subr.bf16.mxu0 %v3425
    %3964 = vmatpush1.bf16.msra.mxu0 %v3424
    %3965 = vmatprep.subr.bf16.mxu0 %v3427
    %3966 = vmatpush1.bf16.msra.mxu0 %v3426
    %3967 = vmatprep.subr.bf16.mxu0 %v3429
    %3968 = vmatpush1.bf16.msra.mxu0 %v3428
    %3969 = vmatprep.subr.bf16.mxu0 %v3431
    %3970 = vmatpush1.bf16.msra.mxu0 %v3430
    %3971 = vmatprep.subr.bf16.mxu0 %v3433
    %3972 = vmatpush1.bf16.msra.mxu0 %v3432
    %3973 = vmatprep.subr.bf16.mxu0 %v3435
    %3974 = vmatpush1.bf16.msra.mxu0 %v3434
    %3975 = vmatprep.subr.bf16.mxu0 %v3437
    %3976 = vmatpush1.bf16.msra.mxu0 %v3436
    %3977 = vmatprep.subr.bf16.mxu0 %v3439
    %3978 = vmatpush1.bf16.msra.mxu0 %v3438
    %3979 = vmatprep.subr.bf16.mxu0 %v3441
    %3980 = vmatpush1.bf16.msra.mxu0 %v3440
    %3981 = vmatprep.subr.bf16.mxu0 %v3443
    %3982 = vmatpush1.bf16.msra.mxu0 %v3442
    %3983 = vmatprep.subr.bf16.mxu0 %v3445
    %3984 = vmatpush1.bf16.msra.mxu0 %v3444
    %3985 = vmatprep.subr.bf16.mxu0 %v3447
    %3986 = vmatpush1.bf16.msra.mxu0 %v3446
    %3987 = vmatprep.subr.bf16.mxu0 %v3449
    %3988 = vmatpush1.bf16.msra.mxu0 %v3448
    %3989 = vmatprep.subr.bf16.mxu0 %v3451
    %3990 = vmatpush1.bf16.msra.mxu0 %v3450
    %3991 = vmatprep.subr.bf16.mxu0 %v3453
    %3992 = vmatpush1.bf16.msra.mxu0 %v3452
    %3993 = vmatprep.mubr.bf16.mxu0 %v221
    %3994 = vmatmul.mubr.bf16.gmra.mrb[0].mxu0 %v220
    %v3995 = vpop.f32.mrb[0].mxu0
    %v3996 = vadd.f32 %v3955, %v3995
    %v3997 = vpop.f32.mrb[0].mxu0
    %v3998 = vadd.f32 %v3957, %v3997
    %v3999 = vpop.f32.mrb[0].mxu0
    %v4000 = vpop.f32.mrb[0].mxu0
    %4001 = vdwg.mxu0
    %4002 = vmatprep.subr.bf16.mxu0 %v3455
    %4003 = vmatpush1.bf16.msra.mxu0 %v3454
    %4004 = vmatprep.subr.bf16.mxu0 %v3457
    %4005 = vmatpush1.bf16.msra.mxu0 %v3456
    %4006 = vmatprep.subr.bf16.mxu0 %v3459
    %4007 = vmatpush1.bf16.msra.mxu0 %v3458
    %4008 = vmatprep.subr.bf16.mxu0 %v3461
    %4009 = vmatpush1.bf16.msra.mxu0 %v3460
    %4010 = vmatprep.subr.bf16.mxu0 %v3463
    %4011 = vmatpush1.bf16.msra.mxu0 %v3462
    %4012 = vmatprep.subr.bf16.mxu0 %v3465
    %4013 = vmatpush1.bf16.msra.mxu0 %v3464
    %4014 = vmatprep.subr.bf16.mxu0 %v3467
    %4015 = vmatpush1.bf16.msra.mxu0 %v3466
    %4016 = vmatprep.subr.bf16.mxu0 %v3469
    %4017 = vmatpush1.bf16.msra.mxu0 %v3468
    %4018 = vmatprep.subr.bf16.mxu0 %v3471
    %4019 = vmatpush1.bf16.msra.mxu0 %v3470
    %4020 = vmatprep.subr.bf16.mxu0 %v3473
    %4021 = vmatpush1.bf16.msra.mxu0 %v3472
    %4022 = vmatprep.subr.bf16.mxu0 %v3475
    %4023 = vmatpush1.bf16.msra.mxu0 %v3474
    %4024 = vmatprep.subr.bf16.mxu0 %v3477
    %4025 = vmatpush1.bf16.msra.mxu0 %v3476
    %4026 = vmatprep.subr.bf16.mxu0 %v3479
    %4027 = vmatpush1.bf16.msra.mxu0 %v3478
    %4028 = vmatprep.subr.bf16.mxu0 %v3481
    %4029 = vmatpush1.bf16.msra.mxu0 %v3480
    %4030 = vmatprep.subr.bf16.mxu0 %v3483
    %4031 = vmatpush1.bf16.msra.mxu0 %v3482
    %4032 = vmatprep.subr.bf16.mxu0 %v3485
    %4033 = vmatpush1.bf16.msra.mxu0 %v3484
    %4034 = vmatprep.mubr.bf16.mxu0 %v223
    %4035 = vmatmul.mubr.bf16.gmra.mrb[0].mxu0 %v222
    %v4036 = vpop.f32.mrb[0].mxu0
    %v4037 = vadd.f32 %v3996, %v4036
    %v4038 = vpop.f32.mrb[0].mxu0
    %v4039 = vadd.f32 %v3998, %v4038
    %v4040 = vpop.f32.mrb[0].mxu0
    %v4041 = vpop.f32.mrb[0].mxu0
    %4042 = vdwg.mxu0
    %4043 = vmatprep.subr.bf16.mxu0 %v3487
    %4044 = vmatpush1.bf16.msra.mxu0 %v3486
    %4045 = vmatprep.subr.bf16.mxu0 %v3489
    %4046 = vmatpush1.bf16.msra.mxu0 %v3488
    %4047 = vmatprep.subr.bf16.mxu0 %v3491
    %4048 = vmatpush1.bf16.msra.mxu0 %v3490
    %4049 = vmatprep.subr.bf16.mxu0 %v3493
    %4050 = vmatpush1.bf16.msra.mxu0 %v3492
    %4051 = vmatprep.subr.bf16.mxu0 %v3495
    %4052 = vmatpush1.bf16.msra.mxu0 %v3494
    %4053 = vmatprep.subr.bf16.mxu0 %v3497
    %4054 = vmatpush1.bf16.msra.mxu0 %v3496
    %4055 = vmatprep.subr.bf16.mxu0 %v3499
    %4056 = vmatpush1.bf16.msra.mxu0 %v3498
    %4057 = vmatprep.subr.bf16.mxu0 %v3501
    %4058 = vmatpush1.bf16.msra.mxu0 %v3500
    %4059 = vmatprep.subr.bf16.mxu0 %v3503
    %4060 = vmatpush1.bf16.msra.mxu0 %v3502
    %4061 = vmatprep.subr.bf16.mxu0 %v3505
    %4062 = vmatpush1.bf16.msra.mxu0 %v3504
    %4063 = vmatprep.subr.bf16.mxu0 %v3507
    %4064 = vmatpush1.bf16.msra.mxu0 %v3506
    %4065 = vmatprep.subr.bf16.mxu0 %v3509
    %4066 = vmatpush1.bf16.msra.mxu0 %v3508
    %4067 = vmatprep.subr.bf16.mxu0 %v3511
    %4068 = vmatpush1.bf16.msra.mxu0 %v3510
    %4069 = vmatprep.subr.bf16.mxu0 %v3513
    %4070 = vmatpush1.bf16.msra.mxu0 %v3512
    %4071 = vmatprep.subr.bf16.mxu0 %v3515
    %4072 = vmatpush1.bf16.msra.mxu0 %v3514
    %4073 = vmatprep.subr.bf16.mxu0 %v3517
    %4074 = vmatpush1.bf16.msra.mxu0 %v3516
    %4075 = vmatprep.mubr.bf16.mxu0 %v225
    %4076 = vmatmul.mubr.bf16.gmra.mrb[0].mxu0 %v224
    %v4077 = vpop.f32.mrb[0].mxu0
    %v4078 = vadd.f32 %v4037, %v4077
    %v4079 = vpop.f32.mrb[0].mxu0
    %v4080 = vadd.f32 %v4039, %v4079
    %v4081 = vpop.f32.mrb[0].mxu0
    %v4082 = vpop.f32.mrb[0].mxu0
    %4083 = vdwg.mxu0
    %4084 = vmatprep.subr.bf16.mxu0 %v3519
    %4085 = vmatpush1.bf16.msra.mxu0 %v3518
    %4086 = vmatprep.subr.bf16.mxu0 %v3521
    %4087 = vmatpush1.bf16.msra.mxu0 %v3520
    %4088 = vmatprep.subr.bf16.mxu0 %v3523
    %4089 = vmatpush1.bf16.msra.mxu0 %v3522
    %4090 = vmatprep.subr.bf16.mxu0 %v3525
    %4091 = vmatpush1.bf16.msra.mxu0 %v3524
    %4092 = vmatprep.subr.bf16.mxu0 %v3527
    %4093 = vmatpush1.bf16.msra.mxu0 %v3526
    %4094 = vmatprep.subr.bf16.mxu0 %v3529
    %4095 = vmatpush1.bf16.msra.mxu0 %v3528
    %4096 = vmatprep.subr.bf16.mxu0 %v3531
    %4097 = vmatpush1.bf16.msra.mxu0 %v3530
    %4098 = vmatprep.subr.bf16.mxu0 %v3533
    %4099 = vmatpush1.bf16.msra.mxu0 %v3532
    %4100 = vmatprep.subr.bf16.mxu0 %v3535
    %4101 = vmatpush1.bf16.msra.mxu0 %v3534
    %4102 = vmatprep.subr.bf16.mxu0 %v3537
    %4103 = vmatpush1.bf16.msra.mxu0 %v3536
    %4104 = vmatprep.subr.bf16.mxu0 %v3539
    %4105 = vmatpush1.bf16.msra.mxu0 %v3538
    %4106 = vmatprep.subr.bf16.mxu0 %v3541
    %4107 = vmatpush1.bf16.msra.mxu0 %v3540
    %4108 = vmatprep.subr.bf16.mxu0 %v3543
    %4109 = vmatpush1.bf16.msra.mxu0 %v3542
    %4110 = vmatprep.subr.bf16.mxu0 %v3545
    %4111 = vmatpush1.bf16.msra.mxu0 %v3544
    %4112 = vmatprep.subr.bf16.mxu0 %v3547
    %4113 = vmatpush1.bf16.msra.mxu0 %v3546
    %4114 = vmatprep.subr.bf16.mxu0 %v3549
    %4115 = vmatpush1.bf16.msra.mxu0 %v3548
    %4116 = vmatprep.mubr.bf16.mxu0 %v227
    %4117 = vmatmul.mubr.bf16.gmra.mrb[0].mxu0 %v226
    %v4118 = vpop.f32.mrb[0].mxu0
    %v4119 = vadd.f32 %v4078, %v4118
    %v4120 = vpop.f32.mrb[0].mxu0
    %v4121 = vadd.f32 %v4080, %v4120
    %v4122 = vpop.f32.mrb[0].mxu0
    %v4123 = vpop.f32.mrb[0].mxu0
    %4124 = vdwg.mxu0
    %4125 = vmatprep.subr.bf16.mxu0 %v3551
    %4126 = vmatpush1.bf16.msra.mxu0 %v3550
    %4127 = vmatprep.subr.bf16.mxu0 %v3553
    %4128 = vmatpush1.bf16.msra.mxu0 %v3552
    %4129 = vmatprep.subr.bf16.mxu0 %v3555
    %4130 = vmatpush1.bf16.msra.mxu0 %v3554
    %4131 = vmatprep.subr.bf16.mxu0 %v3557
    %4132 = vmatpush1.bf16.msra.mxu0 %v3556
    %4133 = vmatprep.subr.bf16.mxu0 %v3559
    %4134 = vmatpush1.bf16.msra.mxu0 %v3558
    %4135 = vmatprep.subr.bf16.mxu0 %v3561
    %4136 = vmatpush1.bf16.msra.mxu0 %v3560
    %4137 = vmatprep.subr.bf16.mxu0 %v3563
    %4138 = vmatpush1.bf16.msra.mxu0 %v3562
    %4139 = vmatprep.subr.bf16.mxu0 %v3565
    %4140 = vmatpush1.bf16.msra.mxu0 %v3564
    %4141 = vmatprep.subr.bf16.mxu0 %v3567
    %4142 = vmatpush1.bf16.msra.mxu0 %v3566
    %4143 = vmatprep.subr.bf16.mxu0 %v3569
    %4144 = vmatpush1.bf16.msra.mxu0 %v3568
    %4145 = vmatprep.subr.bf16.mxu0 %v3571
    %4146 = vmatpush1.bf16.msra.mxu0 %v3570
    %4147 = vmatprep.subr.bf16.mxu0 %v3573
    %4148 = vmatpush1.bf16.msra.mxu0 %v3572
    %4149 = vmatprep.subr.bf16.mxu0 %v3575
    %4150 = vmatpush1.bf16.msra.mxu0 %v3574
    %4151 = vmatprep.subr.bf16.mxu0 %v3577
    %4152 = vmatpush1.bf16.msra.mxu0 %v3576
    %4153 = vmatprep.subr.bf16.mxu0 %v3579
    %4154 = vmatpush1.bf16.msra.mxu0 %v3578
    %4155 = vmatprep.subr.bf16.mxu0 %v3581
    %4156 = vmatpush1.bf16.msra.mxu0 %v3580
    %4157 = vmatprep.mubr.bf16.mxu0 %v229
    %4158 = vmatmul.mubr.bf16.gmra.mrb[0].mxu0 %v228
    %v4159 = vpop.f32.mrb[0].mxu0
    %v4160 = vadd.f32 %v4119, %v4159
    %v4161 = vpop.f32.mrb[0].mxu0
    %v4162 = vadd.f32 %v4121, %v4161
    %v4163 = vpop.f32.mrb[0].mxu0
    %v4164 = vpop.f32.mrb[0].mxu0
    %4165 = vdwg.mxu0
    %v4166 = vld [vmem:[%s0 + $0x40] sm:$0xff]
    %v4167 = vld [vmem:[%s0 + $0x48] sm:$0xff]
    %v4168 = vld [vmem:[%s0 + $0x50] sm:$0xff]
    %v4169 = vld [vmem:[%s0 + $0x58] sm:$0xff]
    %v4170 = vld [vmem:[%s0 + $0xa0] sm:$0xff]
    %v4171 = vld [vmem:[%s0 + $0xa8] sm:$0xff]
    %v4172 = vld [vmem:[%s0 + $0xb0] sm:$0xff]
    %v4173 = vld [vmem:[%s0 + $0xb8] sm:$0xff]
    %v4174 = vld [vmem:[%s0 + $0x100] sm:$0xff]
    %v4175 = vld [vmem:[%s0 + $0x108] sm:$0xff]
    %v4176 = vld [vmem:[%s0 + $0x110] sm:$0xff]
    %v4177 = vld [vmem:[%s0 + $0x118] sm:$0xff]
    %v4178 = vld [vmem:[%s0 + $0x160] sm:$0xff]
    %v4179 = vld [vmem:[%s0 + $0x168] sm:$0xff]
    %v4180 = vld [vmem:[%s0 + $0x170] sm:$0xff]
    %v4181 = vld [vmem:[%s0 + $0x178] sm:$0xff]
    %v4198 = vcombine.low %v4166, %v4170
    %v4199 = vcombine.high %v4166, %v4170
    %v4200 = vcombine.low %v4174, %v4178
    %v4201 = vcombine.high %v4174, %v4178
    %v4203 = vunpack.c.l.s4 1983009808
    %v4204 = vunpack.c.0.s8 %v4203
    %v4205 = vlaneseq
    %v4206 = vshrl.u32 %v4205, 7
    %v4207 = vsub.s32 %v4204, %v4206
    %v4208 = vrot.slane %v4198, %v4207
    %v4210 = vunpack.c.l.s4 1983009808
    %v4211 = vunpack.c.0.s8 %v4210
    %v4212 = vlaneseq
    %v4213 = vshrl.u32 %v4212, 7
    %v4214 = vsub.s32 %v4211, %v4213
    %v4215 = vrot.slane %v4199, %v4214
    %v4217 = vunpack.c.l.s4 1983009808
    %v4218 = vunpack.c.0.s8 %v4217
    %v4219 = vlaneseq
    %v4220 = vshrl.u32 %v4219, 7
    %v4221 = vsub.s32 %v4218, %v4220
    %v4222 = vrot.slane %v4200, %v4221
    %v4224 = vunpack.c.l.s4 1983009808
    %v4225 = vunpack.c.0.s8 %v4224
    %v4226 = vlaneseq
    %v4227 = vshrl.u32 %v4226, 7
    %v4228 = vsub.s32 %v4225, %v4227
    %v4229 = vrot.slane %v4201, %v4228
    %v4230 = vcombine.low %v4208, %v4222
    %v4231 = vcombine.high %v4208, %v4222
    %v4232 = vcombine.low %v4215, %v4229
    %v4233 = vcombine.high %v4215, %v4229
    %v4234 = vcombine.low %v4167, %v4171
    %v4235 = vcombine.high %v4167, %v4171
    %v4236 = vcombine.low %v4175, %v4179
    %v4237 = vcombine.high %v4175, %v4179
    %v4239 = vunpack.c.l.s4 1983009808
    %v4240 = vunpack.c.0.s8 %v4239
    %v4241 = vlaneseq
    %v4242 = vshrl.u32 %v4241, 7
    %v4243 = vsub.s32 %v4240, %v4242
    %v4244 = vrot.slane %v4234, %v4243
    %v4246 = vunpack.c.l.s4 1983009808
    %v4247 = vunpack.c.0.s8 %v4246
    %v4248 = vlaneseq
    %v4249 = vshrl.u32 %v4248, 7
    %v4250 = vsub.s32 %v4247, %v4249
    %v4251 = vrot.slane %v4235, %v4250
    %v4253 = vunpack.c.l.s4 1983009808
    %v4254 = vunpack.c.0.s8 %v4253
    %v4255 = vlaneseq
    %v4256 = vshrl.u32 %v4255, 7
    %v4257 = vsub.s32 %v4254, %v4256
    %v4258 = vrot.slane %v4236, %v4257
    %v4260 = vunpack.c.l.s4 1983009808
    %v4261 = vunpack.c.0.s8 %v4260
    %v4262 = vlaneseq
    %v4263 = vshrl.u32 %v4262, 7
    %v4264 = vsub.s32 %v4261, %v4263
    %v4265 = vrot.slane %v4237, %v4264
    %v4266 = vcombine.low %v4244, %v4258
    %v4267 = vcombine.high %v4244, %v4258
    %v4268 = vcombine.low %v4251, %v4265
    %v4269 = vcombine.high %v4251, %v4265
    %v4270 = vcombine.low %v4168, %v4172
    %v4271 = vcombine.high %v4168, %v4172
    %v4272 = vcombine.low %v4176, %v4180
    %v4273 = vcombine.high %v4176, %v4180
    %v4275 = vunpack.c.l.s4 1983009808
    %v4276 = vunpack.c.0.s8 %v4275
    %v4277 = vlaneseq
    %v4278 = vshrl.u32 %v4277, 7
    %v4279 = vsub.s32 %v4276, %v4278
    %v4280 = vrot.slane %v4270, %v4279
    %v4282 = vunpack.c.l.s4 1983009808
    %v4283 = vunpack.c.0.s8 %v4282
    %v4284 = vlaneseq
    %v4285 = vshrl.u32 %v4284, 7
    %v4286 = vsub.s32 %v4283, %v4285
    %v4287 = vrot.slane %v4271, %v4286
    %v4289 = vunpack.c.l.s4 1983009808
    %v4290 = vunpack.c.0.s8 %v4289
    %v4291 = vlaneseq
    %v4292 = vshrl.u32 %v4291, 7
    %v4293 = vsub.s32 %v4290, %v4292
    %v4294 = vrot.slane %v4272, %v4293
    %v4296 = vunpack.c.l.s4 1983009808
    %v4297 = vunpack.c.0.s8 %v4296
    %v4298 = vlaneseq
    %v4299 = vshrl.u32 %v4298, 7
    %v4300 = vsub.s32 %v4297, %v4299
    %v4301 = vrot.slane %v4273, %v4300
    %v4302 = vcombine.low %v4280, %v4294
    %v4303 = vcombine.high %v4280, %v4294
    %v4304 = vcombine.low %v4287, %v4301
    %v4305 = vcombine.high %v4287, %v4301
    %v4306 = vcombine.low %v4169, %v4173
    %v4307 = vcombine.high %v4169, %v4173
    %v4308 = vcombine.low %v4177, %v4181
    %v4309 = vcombine.high %v4177, %v4181
    %v4311 = vunpack.c.l.s4 1983009808
    %v4312 = vunpack.c.0.s8 %v4311
    %v4313 = vlaneseq
    %v4314 = vshrl.u32 %v4313, 7
    %v4315 = vsub.s32 %v4312, %v4314
    %v4316 = vrot.slane %v4306, %v4315
    %v4318 = vunpack.c.l.s4 1983009808
    %v4319 = vunpack.c.0.s8 %v4318
    %v4320 = vlaneseq
    %v4321 = vshrl.u32 %v4320, 7
    %v4322 = vsub.s32 %v4319, %v4321
    %v4323 = vrot.slane %v4307, %v4322
    %v4325 = vunpack.c.l.s4 1983009808
    %v4326 = vunpack.c.0.s8 %v4325
    %v4327 = vlaneseq
    %v4328 = vshrl.u32 %v4327, 7
    %v4329 = vsub.s32 %v4326, %v4328
    %v4330 = vrot.slane %v4308, %v4329
    %v4332 = vunpack.c.l.s4 1983009808
    %v4333 = vunpack.c.0.s8 %v4332
    %v4334 = vlaneseq
    %v4335 = vshrl.u32 %v4334, 7
    %v4336 = vsub.s32 %v4333, %v4335
    %v4337 = vrot.slane %v4309, %v4336
    %v4338 = vcombine.low %v4316, %v4330
    %v4339 = vcombine.high %v4316, %v4330
    %v4340 = vcombine.low %v4323, %v4337
    %v4341 = vcombine.high %v4323, %v4337
    %v4358 = vpack.c.bf16 %v4230, %v4230
    %v4359 = vpack.c.bf16 %v4231, %v4231
    %v4360 = vpack.c.bf16 %v4232, %v4232
    %v4361 = vpack.c.bf16 %v4233, %v4233
    %v4362 = vpack.c.bf16 %v4266, %v4266
    %v4363 = vpack.c.bf16 %v4267, %v4267
    %v4364 = vpack.c.bf16 %v4268, %v4268
    %v4365 = vpack.c.bf16 %v4269, %v4269
    %v4366 = vpack.c.bf16 %v4302, %v4302
    %v4367 = vpack.c.bf16 %v4303, %v4303
    %v4368 = vpack.c.bf16 %v4304, %v4304
    %v4369 = vpack.c.bf16 %v4305, %v4305
    %v4370 = vpack.c.bf16 %v4338, %v4338
    %v4371 = vpack.c.bf16 %v4339, %v4339
    %v4372 = vpack.c.bf16 %v4340, %v4340
    %v4373 = vpack.c.bf16 %v4341, %v4341
    %v4374 = vld [vmem:[%s1 + $0x1000] sm:$0xff]
    %v4375 = vld [vmem:[%s1 + $0x1008] sm:$0xff]
    %v4376 = vld [vmem:[%s1 + $0x1010] sm:$0xff]
    %v4377 = vld [vmem:[%s1 + $0x1018] sm:$0xff]
    %v4378 = vld [vmem:[%s1 + $0x1020] sm:$0xff]
    %v4379 = vld [vmem:[%s1 + $0x1028] sm:$0xff]
    %v4380 = vld [vmem:[%s1 + $0x1030] sm:$0xff]
    %v4381 = vld [vmem:[%s1 + $0x1038] sm:$0xff]
    %v4382 = vld [vmem:[%s1 + $0x1040] sm:$0xff]
    %v4383 = vld [vmem:[%s1 + $0x1048] sm:$0xff]
    %v4384 = vld [vmem:[%s1 + $0x1050] sm:$0xff]
    %v4385 = vld [vmem:[%s1 + $0x1058] sm:$0xff]
    %v4386 = vld [vmem:[%s1 + $0x1060] sm:$0xff]
    %v4387 = vld [vmem:[%s1 + $0x1068] sm:$0xff]
    %v4388 = vld [vmem:[%s1 + $0x1070] sm:$0xff]
    %v4389 = vld [vmem:[%s1 + $0x1078] sm:$0xff]
    %v4390 = vld [vmem:[%s1 + $0x1080] sm:$0xff]
    %v4391 = vld [vmem:[%s1 + $0x1088] sm:$0xff]
    %v4392 = vld [vmem:[%s1 + $0x1090] sm:$0xff]
    %v4393 = vld [vmem:[%s1 + $0x1098] sm:$0xff]
    %v4394 = vld [vmem:[%s1 + $0x10a0] sm:$0xff]
    %v4395 = vld [vmem:[%s1 + $0x10a8] sm:$0xff]
    %v4396 = vld [vmem:[%s1 + $0x10b0] sm:$0xff]
    %v4397 = vld [vmem:[%s1 + $0x10b8] sm:$0xff]
    %v4398 = vld [vmem:[%s1 + $0x10c0] sm:$0xff]
    %v4399 = vld [vmem:[%s1 + $0x10c8] sm:$0xff]
    %v4400 = vld [vmem:[%s1 + $0x10d0] sm:$0xff]
    %v4401 = vld [vmem:[%s1 + $0x10d8] sm:$0xff]
    %v4402 = vld [vmem:[%s1 + $0x10e0] sm:$0xff]
    %v4403 = vld [vmem:[%s1 + $0x10e8] sm:$0xff]
    %v4404 = vld [vmem:[%s1 + $0x10f0] sm:$0xff]
    %v4405 = vld [vmem:[%s1 + $0x10f8] sm:$0xff]
    %v4406 = vld [vmem:[%s1 + $0x1100] sm:$0xff]
    %v4407 = vld [vmem:[%s1 + $0x1108] sm:$0xff]
    %v4408 = vld [vmem:[%s1 + $0x1110] sm:$0xff]
    %v4409 = vld [vmem:[%s1 + $0x1118] sm:$0xff]
    %v4410 = vld [vmem:[%s1 + $0x1120] sm:$0xff]
    %v4411 = vld [vmem:[%s1 + $0x1128] sm:$0xff]
    %v4412 = vld [vmem:[%s1 + $0x1130] sm:$0xff]
    %v4413 = vld [vmem:[%s1 + $0x1138] sm:$0xff]
    %v4414 = vld [vmem:[%s1 + $0x1140] sm:$0xff]
    %v4415 = vld [vmem:[%s1 + $0x1148] sm:$0xff]
    %v4416 = vld [vmem:[%s1 + $0x1150] sm:$0xff]
    %v4417 = vld [vmem:[%s1 + $0x1158] sm:$0xff]
    %v4418 = vld [vmem:[%s1 + $0x1160] sm:$0xff]
    %v4419 = vld [vmem:[%s1 + $0x1168] sm:$0xff]
    %v4420 = vld [vmem:[%s1 + $0x1170] sm:$0xff]
    %v4421 = vld [vmem:[%s1 + $0x1178] sm:$0xff]
    %v4422 = vld [vmem:[%s1 + $0x1180] sm:$0xff]
    %v4423 = vld [vmem:[%s1 + $0x1188] sm:$0xff]
    %v4424 = vld [vmem:[%s1 + $0x1190] sm:$0xff]
    %v4425 = vld [vmem:[%s1 + $0x1198] sm:$0xff]
    %v4426 = vld [vmem:[%s1 + $0x11a0] sm:$0xff]
    %v4427 = vld [vmem:[%s1 + $0x11a8] sm:$0xff]
    %v4428 = vld [vmem:[%s1 + $0x11b0] sm:$0xff]
    %v4429 = vld [vmem:[%s1 + $0x11b8] sm:$0xff]
    %v4430 = vld [vmem:[%s1 + $0x11c0] sm:$0xff]
    %v4431 = vld [vmem:[%s1 + $0x11c8] sm:$0xff]
    %v4432 = vld [vmem:[%s1 + $0x11d0] sm:$0xff]
    %v4433 = vld [vmem:[%s1 + $0x11d8] sm:$0xff]
    %v4434 = vld [vmem:[%s1 + $0x11e0] sm:$0xff]
    %v4435 = vld [vmem:[%s1 + $0x11e8] sm:$0xff]
    %v4436 = vld [vmem:[%s1 + $0x11f0] sm:$0xff]
    %v4437 = vld [vmem:[%s1 + $0x11f8] sm:$0xff]
    %v4438 = vld [vmem:[%s1 + $0x1200] sm:$0xff]
    %v4439 = vld [vmem:[%s1 + $0x1208] sm:$0xff]
    %v4440 = vld [vmem:[%s1 + $0x1210] sm:$0xff]
    %v4441 = vld [vmem:[%s1 + $0x1218] sm:$0xff]
    %v4442 = vld [vmem:[%s1 + $0x1220] sm:$0xff]
    %v4443 = vld [vmem:[%s1 + $0x1228] sm:$0xff]
    %v4444 = vld [vmem:[%s1 + $0x1230] sm:$0xff]
    %v4445 = vld [vmem:[%s1 + $0x1238] sm:$0xff]
    %v4446 = vld [vmem:[%s1 + $0x1240] sm:$0xff]
    %v4447 = vld [vmem:[%s1 + $0x1248] sm:$0xff]
    %v4448 = vld [vmem:[%s1 + $0x1250] sm:$0xff]
    %v4449 = vld [vmem:[%s1 + $0x1258] sm:$0xff]
    %v4450 = vld [vmem:[%s1 + $0x1260] sm:$0xff]
    %v4451 = vld [vmem:[%s1 + $0x1268] sm:$0xff]
    %v4452 = vld [vmem:[%s1 + $0x1270] sm:$0xff]
    %v4453 = vld [vmem:[%s1 + $0x1278] sm:$0xff]
    %v4454 = vld [vmem:[%s1 + $0x1280] sm:$0xff]
    %v4455 = vld [vmem:[%s1 + $0x1288] sm:$0xff]
    %v4456 = vld [vmem:[%s1 + $0x1290] sm:$0xff]
    %v4457 = vld [vmem:[%s1 + $0x1298] sm:$0xff]
    %v4458 = vld [vmem:[%s1 + $0x12a0] sm:$0xff]
    %v4459 = vld [vmem:[%s1 + $0x12a8] sm:$0xff]
    %v4460 = vld [vmem:[%s1 + $0x12b0] sm:$0xff]
    %v4461 = vld [vmem:[%s1 + $0x12b8] sm:$0xff]
    %v4462 = vld [vmem:[%s1 + $0x12c0] sm:$0xff]
    %v4463 = vld [vmem:[%s1 + $0x12c8] sm:$0xff]
    %v4464 = vld [vmem:[%s1 + $0x12d0] sm:$0xff]
    %v4465 = vld [vmem:[%s1 + $0x12d8] sm:$0xff]
    %v4466 = vld [vmem:[%s1 + $0x12e0] sm:$0xff]
    %v4467 = vld [vmem:[%s1 + $0x12e8] sm:$0xff]
    %v4468 = vld [vmem:[%s1 + $0x12f0] sm:$0xff]
    %v4469 = vld [vmem:[%s1 + $0x12f8] sm:$0xff]
    %v4470 = vld [vmem:[%s1 + $0x1300] sm:$0xff]
    %v4471 = vld [vmem:[%s1 + $0x1308] sm:$0xff]
    %v4472 = vld [vmem:[%s1 + $0x1310] sm:$0xff]
    %v4473 = vld [vmem:[%s1 + $0x1318] sm:$0xff]
    %v4474 = vld [vmem:[%s1 + $0x1320] sm:$0xff]
    %v4475 = vld [vmem:[%s1 + $0x1328] sm:$0xff]
    %v4476 = vld [vmem:[%s1 + $0x1330] sm:$0xff]
    %v4477 = vld [vmem:[%s1 + $0x1338] sm:$0xff]
    %v4478 = vld [vmem:[%s1 + $0x1340] sm:$0xff]
    %v4479 = vld [vmem:[%s1 + $0x1348] sm:$0xff]
    %v4480 = vld [vmem:[%s1 + $0x1350] sm:$0xff]
    %v4481 = vld [vmem:[%s1 + $0x1358] sm:$0xff]
    %v4482 = vld [vmem:[%s1 + $0x1360] sm:$0xff]
    %v4483 = vld [vmem:[%s1 + $0x1368] sm:$0xff]
    %v4484 = vld [vmem:[%s1 + $0x1370] sm:$0xff]
    %v4485 = vld [vmem:[%s1 + $0x1378] sm:$0xff]
    %v4486 = vld [vmem:[%s1 + $0x1380] sm:$0xff]
    %v4487 = vld [vmem:[%s1 + $0x1388] sm:$0xff]
    %v4488 = vld [vmem:[%s1 + $0x1390] sm:$0xff]
    %v4489 = vld [vmem:[%s1 + $0x1398] sm:$0xff]
    %v4490 = vld [vmem:[%s1 + $0x13a0] sm:$0xff]
    %v4491 = vld [vmem:[%s1 + $0x13a8] sm:$0xff]
    %v4492 = vld [vmem:[%s1 + $0x13b0] sm:$0xff]
    %v4493 = vld [vmem:[%s1 + $0x13b8] sm:$0xff]
    %v4494 = vld [vmem:[%s1 + $0x13c0] sm:$0xff]
    %v4495 = vld [vmem:[%s1 + $0x13c8] sm:$0xff]
    %v4496 = vld [vmem:[%s1 + $0x13d0] sm:$0xff]
    %v4497 = vld [vmem:[%s1 + $0x13d8] sm:$0xff]
    %v4498 = vld [vmem:[%s1 + $0x13e0] sm:$0xff]
    %v4499 = vld [vmem:[%s1 + $0x13e8] sm:$0xff]
    %v4500 = vld [vmem:[%s1 + $0x13f0] sm:$0xff]
    %v4501 = vld [vmem:[%s1 + $0x13f8] sm:$0xff]
    %v4502 = vld [vmem:[%s1 + $0x1400] sm:$0xff]
    %v4503 = vld [vmem:[%s1 + $0x1408] sm:$0xff]
    %v4504 = vld [vmem:[%s1 + $0x1410] sm:$0xff]
    %v4505 = vld [vmem:[%s1 + $0x1418] sm:$0xff]
    %v4506 = vld [vmem:[%s1 + $0x1420] sm:$0xff]
    %v4507 = vld [vmem:[%s1 + $0x1428] sm:$0xff]
    %v4508 = vld [vmem:[%s1 + $0x1430] sm:$0xff]
    %v4509 = vld [vmem:[%s1 + $0x1438] sm:$0xff]
    %v4510 = vld [vmem:[%s1 + $0x1440] sm:$0xff]
    %v4511 = vld [vmem:[%s1 + $0x1448] sm:$0xff]
    %v4512 = vld [vmem:[%s1 + $0x1450] sm:$0xff]
    %v4513 = vld [vmem:[%s1 + $0x1458] sm:$0xff]
    %v4514 = vld [vmem:[%s1 + $0x1460] sm:$0xff]
    %v4515 = vld [vmem:[%s1 + $0x1468] sm:$0xff]
    %v4516 = vld [vmem:[%s1 + $0x1470] sm:$0xff]
    %v4517 = vld [vmem:[%s1 + $0x1478] sm:$0xff]
    %v4518 = vld [vmem:[%s1 + $0x1480] sm:$0xff]
    %v4519 = vld [vmem:[%s1 + $0x1488] sm:$0xff]
    %v4520 = vld [vmem:[%s1 + $0x1490] sm:$0xff]
    %v4521 = vld [vmem:[%s1 + $0x1498] sm:$0xff]
    %v4522 = vld [vmem:[%s1 + $0x14a0] sm:$0xff]
    %v4523 = vld [vmem:[%s1 + $0x14a8] sm:$0xff]
    %v4524 = vld [vmem:[%s1 + $0x14b0] sm:$0xff]
    %v4525 = vld [vmem:[%s1 + $0x14b8] sm:$0xff]
    %v4526 = vld [vmem:[%s1 + $0x14c0] sm:$0xff]
    %v4527 = vld [vmem:[%s1 + $0x14c8] sm:$0xff]
    %v4528 = vld [vmem:[%s1 + $0x14d0] sm:$0xff]
    %v4529 = vld [vmem:[%s1 + $0x14d8] sm:$0xff]
    %v4530 = vld [vmem:[%s1 + $0x14e0] sm:$0xff]
    %v4531 = vld [vmem:[%s1 + $0x14e8] sm:$0xff]
    %v4532 = vld [vmem:[%s1 + $0x14f0] sm:$0xff]
    %v4533 = vld [vmem:[%s1 + $0x14f8] sm:$0xff]
    %v4534 = vld [vmem:[%s1 + $0x1500] sm:$0xff]
    %v4535 = vld [vmem:[%s1 + $0x1508] sm:$0xff]
    %v4536 = vld [vmem:[%s1 + $0x1510] sm:$0xff]
    %v4537 = vld [vmem:[%s1 + $0x1518] sm:$0xff]
    %v4538 = vld [vmem:[%s1 + $0x1520] sm:$0xff]
    %v4539 = vld [vmem:[%s1 + $0x1528] sm:$0xff]
    %v4540 = vld [vmem:[%s1 + $0x1530] sm:$0xff]
    %v4541 = vld [vmem:[%s1 + $0x1538] sm:$0xff]
    %v4542 = vld [vmem:[%s1 + $0x1540] sm:$0xff]
    %v4543 = vld [vmem:[%s1 + $0x1548] sm:$0xff]
    %v4544 = vld [vmem:[%s1 + $0x1550] sm:$0xff]
    %v4545 = vld [vmem:[%s1 + $0x1558] sm:$0xff]
    %v4546 = vld [vmem:[%s1 + $0x1560] sm:$0xff]
    %v4547 = vld [vmem:[%s1 + $0x1568] sm:$0xff]
    %v4548 = vld [vmem:[%s1 + $0x1570] sm:$0xff]
    %v4549 = vld [vmem:[%s1 + $0x1578] sm:$0xff]
    %v4550 = vld [vmem:[%s1 + $0x1580] sm:$0xff]
    %v4551 = vld [vmem:[%s1 + $0x1588] sm:$0xff]
    %v4552 = vld [vmem:[%s1 + $0x1590] sm:$0xff]
    %v4553 = vld [vmem:[%s1 + $0x1598] sm:$0xff]
    %v4554 = vld [vmem:[%s1 + $0x15a0] sm:$0xff]
    %v4555 = vld [vmem:[%s1 + $0x15a8] sm:$0xff]
    %v4556 = vld [vmem:[%s1 + $0x15b0] sm:$0xff]
    %v4557 = vld [vmem:[%s1 + $0x15b8] sm:$0xff]
    %v4558 = vld [vmem:[%s1 + $0x15c0] sm:$0xff]
    %v4559 = vld [vmem:[%s1 + $0x15c8] sm:$0xff]
    %v4560 = vld [vmem:[%s1 + $0x15d0] sm:$0xff]
    %v4561 = vld [vmem:[%s1 + $0x15d8] sm:$0xff]
    %v4562 = vld [vmem:[%s1 + $0x15e0] sm:$0xff]
    %v4563 = vld [vmem:[%s1 + $0x15e8] sm:$0xff]
    %v4564 = vld [vmem:[%s1 + $0x15f0] sm:$0xff]
    %v4565 = vld [vmem:[%s1 + $0x15f8] sm:$0xff]
    %v4566 = vld [vmem:[%s1 + $0x1600] sm:$0xff]
    %v4567 = vld [vmem:[%s1 + $0x1608] sm:$0xff]
    %v4568 = vld [vmem:[%s1 + $0x1610] sm:$0xff]
    %v4569 = vld [vmem:[%s1 + $0x1618] sm:$0xff]
    %v4570 = vld [vmem:[%s1 + $0x1620] sm:$0xff]
    %v4571 = vld [vmem:[%s1 + $0x1628] sm:$0xff]
    %v4572 = vld [vmem:[%s1 + $0x1630] sm:$0xff]
    %v4573 = vld [vmem:[%s1 + $0x1638] sm:$0xff]
    %v4574 = vld [vmem:[%s1 + $0x1640] sm:$0xff]
    %v4575 = vld [vmem:[%s1 + $0x1648] sm:$0xff]
    %v4576 = vld [vmem:[%s1 + $0x1650] sm:$0xff]
    %v4577 = vld [vmem:[%s1 + $0x1658] sm:$0xff]
    %v4578 = vld [vmem:[%s1 + $0x1660] sm:$0xff]
    %v4579 = vld [vmem:[%s1 + $0x1668] sm:$0xff]
    %v4580 = vld [vmem:[%s1 + $0x1670] sm:$0xff]
    %v4581 = vld [vmem:[%s1 + $0x1678] sm:$0xff]
    %v4582 = vld [vmem:[%s1 + $0x1680] sm:$0xff]
    %v4583 = vld [vmem:[%s1 + $0x1688] sm:$0xff]
    %v4584 = vld [vmem:[%s1 + $0x1690] sm:$0xff]
    %v4585 = vld [vmem:[%s1 + $0x1698] sm:$0xff]
    %v4586 = vld [vmem:[%s1 + $0x16a0] sm:$0xff]
    %v4587 = vld [vmem:[%s1 + $0x16a8] sm:$0xff]
    %v4588 = vld [vmem:[%s1 + $0x16b0] sm:$0xff]
    %v4589 = vld [vmem:[%s1 + $0x16b8] sm:$0xff]
    %v4590 = vld [vmem:[%s1 + $0x16c0] sm:$0xff]
    %v4591 = vld [vmem:[%s1 + $0x16c8] sm:$0xff]
    %v4592 = vld [vmem:[%s1 + $0x16d0] sm:$0xff]
    %v4593 = vld [vmem:[%s1 + $0x16d8] sm:$0xff]
    %v4594 = vld [vmem:[%s1 + $0x16e0] sm:$0xff]
    %v4595 = vld [vmem:[%s1 + $0x16e8] sm:$0xff]
    %v4596 = vld [vmem:[%s1 + $0x16f0] sm:$0xff]
    %v4597 = vld [vmem:[%s1 + $0x16f8] sm:$0xff]
    %v4598 = vld [vmem:[%s1 + $0x1700] sm:$0xff]
    %v4599 = vld [vmem:[%s1 + $0x1708] sm:$0xff]
    %v4600 = vld [vmem:[%s1 + $0x1710] sm:$0xff]
    %v4601 = vld [vmem:[%s1 + $0x1718] sm:$0xff]
    %v4602 = vld [vmem:[%s1 + $0x1720] sm:$0xff]
    %v4603 = vld [vmem:[%s1 + $0x1728] sm:$0xff]
    %v4604 = vld [vmem:[%s1 + $0x1730] sm:$0xff]
    %v4605 = vld [vmem:[%s1 + $0x1738] sm:$0xff]
    %v4606 = vld [vmem:[%s1 + $0x1740] sm:$0xff]
    %v4607 = vld [vmem:[%s1 + $0x1748] sm:$0xff]
    %v4608 = vld [vmem:[%s1 + $0x1750] sm:$0xff]
    %v4609 = vld [vmem:[%s1 + $0x1758] sm:$0xff]
    %v4610 = vld [vmem:[%s1 + $0x1760] sm:$0xff]
    %v4611 = vld [vmem:[%s1 + $0x1768] sm:$0xff]
    %v4612 = vld [vmem:[%s1 + $0x1770] sm:$0xff]
    %v4613 = vld [vmem:[%s1 + $0x1778] sm:$0xff]
    %v4614 = vld [vmem:[%s1 + $0x1780] sm:$0xff]
    %v4615 = vld [vmem:[%s1 + $0x1788] sm:$0xff]
    %v4616 = vld [vmem:[%s1 + $0x1790] sm:$0xff]
    %v4617 = vld [vmem:[%s1 + $0x1798] sm:$0xff]
    %v4618 = vld [vmem:[%s1 + $0x17a0] sm:$0xff]
    %v4619 = vld [vmem:[%s1 + $0x17a8] sm:$0xff]
    %v4620 = vld [vmem:[%s1 + $0x17b0] sm:$0xff]
    %v4621 = vld [vmem:[%s1 + $0x17b8] sm:$0xff]
    %v4622 = vld [vmem:[%s1 + $0x17c0] sm:$0xff]
    %v4623 = vld [vmem:[%s1 + $0x17c8] sm:$0xff]
    %v4624 = vld [vmem:[%s1 + $0x17d0] sm:$0xff]
    %v4625 = vld [vmem:[%s1 + $0x17d8] sm:$0xff]
    %v4626 = vld [vmem:[%s1 + $0x17e0] sm:$0xff]
    %v4627 = vld [vmem:[%s1 + $0x17e8] sm:$0xff]
    %v4628 = vld [vmem:[%s1 + $0x17f0] sm:$0xff]
    %v4629 = vld [vmem:[%s1 + $0x17f8] sm:$0xff]
    %v4886 = vunpack.c.l.b16 %v4374
    %v4887 = vunpack.c.h.b16 %v4374
    %v4888 = vunpack.c.l.b16 %v4375
    %v4889 = vunpack.c.h.b16 %v4375
    %v4890 = vunpack.c.l.b16 %v4376
    %v4891 = vunpack.c.h.b16 %v4376
    %v4892 = vunpack.c.l.b16 %v4377
    %v4893 = vunpack.c.h.b16 %v4377
    %v4894 = vunpack.c.l.b16 %v4378
    %v4895 = vunpack.c.h.b16 %v4378
    %v4896 = vunpack.c.l.b16 %v4379
    %v4897 = vunpack.c.h.b16 %v4379
    %v4898 = vunpack.c.l.b16 %v4380
    %v4899 = vunpack.c.h.b16 %v4380
    %v4900 = vunpack.c.l.b16 %v4381
    %v4901 = vunpack.c.h.b16 %v4381
    %v4902 = vunpack.c.l.b16 %v4382
    %v4903 = vunpack.c.h.b16 %v4382
    %v4904 = vunpack.c.l.b16 %v4383
    %v4905 = vunpack.c.h.b16 %v4383
    %v4906 = vunpack.c.l.b16 %v4384
    %v4907 = vunpack.c.h.b16 %v4384
    %v4908 = vunpack.c.l.b16 %v4385
    %v4909 = vunpack.c.h.b16 %v4385
    %v4910 = vunpack.c.l.b16 %v4386
    %v4911 = vunpack.c.h.b16 %v4386
    %v4912 = vunpack.c.l.b16 %v4387
    %v4913 = vunpack.c.h.b16 %v4387
    %v4914 = vunpack.c.l.b16 %v4388
    %v4915 = vunpack.c.h.b16 %v4388
    %v4916 = vunpack.c.l.b16 %v4389
    %v4917 = vunpack.c.h.b16 %v4389
    %v4918 = vunpack.c.l.b16 %v4390
    %v4919 = vunpack.c.h.b16 %v4390
    %v4920 = vunpack.c.l.b16 %v4391
    %v4921 = vunpack.c.h.b16 %v4391
    %v4922 = vunpack.c.l.b16 %v4392
    %v4923 = vunpack.c.h.b16 %v4392
    %v4924 = vunpack.c.l.b16 %v4393
    %v4925 = vunpack.c.h.b16 %v4393
    %v4926 = vunpack.c.l.b16 %v4394
    %v4927 = vunpack.c.h.b16 %v4394
    %v4928 = vunpack.c.l.b16 %v4395
    %v4929 = vunpack.c.h.b16 %v4395
    %v4930 = vunpack.c.l.b16 %v4396
    %v4931 = vunpack.c.h.b16 %v4396
    %v4932 = vunpack.c.l.b16 %v4397
    %v4933 = vunpack.c.h.b16 %v4397
    %v4934 = vunpack.c.l.b16 %v4398
    %v4935 = vunpack.c.h.b16 %v4398
    %v4936 = vunpack.c.l.b16 %v4399
    %v4937 = vunpack.c.h.b16 %v4399
    %v4938 = vunpack.c.l.b16 %v4400
    %v4939 = vunpack.c.h.b16 %v4400
    %v4940 = vunpack.c.l.b16 %v4401
    %v4941 = vunpack.c.h.b16 %v4401
    %v4942 = vunpack.c.l.b16 %v4402
    %v4943 = vunpack.c.h.b16 %v4402
    %v4944 = vunpack.c.l.b16 %v4403
    %v4945 = vunpack.c.h.b16 %v4403
    %v4946 = vunpack.c.l.b16 %v4404
    %v4947 = vunpack.c.h.b16 %v4404
    %v4948 = vunpack.c.l.b16 %v4405
    %v4949 = vunpack.c.h.b16 %v4405
    %v4950 = vunpack.c.l.b16 %v4406
    %v4951 = vunpack.c.h.b16 %v4406
    %v4952 = vunpack.c.l.b16 %v4407
    %v4953 = vunpack.c.h.b16 %v4407
    %v4954 = vunpack.c.l.b16 %v4408
    %v4955 = vunpack.c.h.b16 %v4408
    %v4956 = vunpack.c.l.b16 %v4409
    %v4957 = vunpack.c.h.b16 %v4409
    %v4958 = vunpack.c.l.b16 %v4410
    %v4959 = vunpack.c.h.b16 %v4410
    %v4960 = vunpack.c.l.b16 %v4411
    %v4961 = vunpack.c.h.b16 %v4411
    %v4962 = vunpack.c.l.b16 %v4412
    %v4963 = vunpack.c.h.b16 %v4412
    %v4964 = vunpack.c.l.b16 %v4413
    %v4965 = vunpack.c.h.b16 %v4413
    %v4966 = vunpack.c.l.b16 %v4414
    %v4967 = vunpack.c.h.b16 %v4414
    %v4968 = vunpack.c.l.b16 %v4415
    %v4969 = vunpack.c.h.b16 %v4415
    %v4970 = vunpack.c.l.b16 %v4416
    %v4971 = vunpack.c.h.b16 %v4416
    %v4972 = vunpack.c.l.b16 %v4417
    %v4973 = vunpack.c.h.b16 %v4417
    %v4974 = vunpack.c.l.b16 %v4418
    %v4975 = vunpack.c.h.b16 %v4418
    %v4976 = vunpack.c.l.b16 %v4419
    %v4977 = vunpack.c.h.b16 %v4419
    %v4978 = vunpack.c.l.b16 %v4420
    %v4979 = vunpack.c.h.b16 %v4420
    %v4980 = vunpack.c.l.b16 %v4421
    %v4981 = vunpack.c.h.b16 %v4421
    %v4982 = vunpack.c.l.b16 %v4422
    %v4983 = vunpack.c.h.b16 %v4422
    %v4984 = vunpack.c.l.b16 %v4423
    %v4985 = vunpack.c.h.b16 %v4423
    %v4986 = vunpack.c.l.b16 %v4424
    %v4987 = vunpack.c.h.b16 %v4424
    %v4988 = vunpack.c.l.b16 %v4425
    %v4989 = vunpack.c.h.b16 %v4425
    %v4990 = vunpack.c.l.b16 %v4426
    %v4991 = vunpack.c.h.b16 %v4426
    %v4992 = vunpack.c.l.b16 %v4427
    %v4993 = vunpack.c.h.b16 %v4427
    %v4994 = vunpack.c.l.b16 %v4428
    %v4995 = vunpack.c.h.b16 %v4428
    %v4996 = vunpack.c.l.b16 %v4429
    %v4997 = vunpack.c.h.b16 %v4429
    %v4998 = vunpack.c.l.b16 %v4430
    %v4999 = vunpack.c.h.b16 %v4430
    %v5000 = vunpack.c.l.b16 %v4431
    %v5001 = vunpack.c.h.b16 %v4431
    %v5002 = vunpack.c.l.b16 %v4432
    %v5003 = vunpack.c.h.b16 %v4432
    %v5004 = vunpack.c.l.b16 %v4433
    %v5005 = vunpack.c.h.b16 %v4433
    %v5006 = vunpack.c.l.b16 %v4434
    %v5007 = vunpack.c.h.b16 %v4434
    %v5008 = vunpack.c.l.b16 %v4435
    %v5009 = vunpack.c.h.b16 %v4435
    %v5010 = vunpack.c.l.b16 %v4436
    %v5011 = vunpack.c.h.b16 %v4436
    %v5012 = vunpack.c.l.b16 %v4437
    %v5013 = vunpack.c.h.b16 %v4437
    %v5014 = vunpack.c.l.b16 %v4438
    %v5015 = vunpack.c.h.b16 %v4438
    %v5016 = vunpack.c.l.b16 %v4439
    %v5017 = vunpack.c.h.b16 %v4439
    %v5018 = vunpack.c.l.b16 %v4440
    %v5019 = vunpack.c.h.b16 %v4440
    %v5020 = vunpack.c.l.b16 %v4441
    %v5021 = vunpack.c.h.b16 %v4441
    %v5022 = vunpack.c.l.b16 %v4442
    %v5023 = vunpack.c.h.b16 %v4442
    %v5024 = vunpack.c.l.b16 %v4443
    %v5025 = vunpack.c.h.b16 %v4443
    %v5026 = vunpack.c.l.b16 %v4444
    %v5027 = vunpack.c.h.b16 %v4444
    %v5028 = vunpack.c.l.b16 %v4445
    %v5029 = vunpack.c.h.b16 %v4445
    %v5030 = vunpack.c.l.b16 %v4446
    %v5031 = vunpack.c.h.b16 %v4446
    %v5032 = vunpack.c.l.b16 %v4447
    %v5033 = vunpack.c.h.b16 %v4447
    %v5034 = vunpack.c.l.b16 %v4448
    %v5035 = vunpack.c.h.b16 %v4448
    %v5036 = vunpack.c.l.b16 %v4449
    %v5037 = vunpack.c.h.b16 %v4449
    %v5038 = vunpack.c.l.b16 %v4450
    %v5039 = vunpack.c.h.b16 %v4450
    %v5040 = vunpack.c.l.b16 %v4451
    %v5041 = vunpack.c.h.b16 %v4451
    %v5042 = vunpack.c.l.b16 %v4452
    %v5043 = vunpack.c.h.b16 %v4452
    %v5044 = vunpack.c.l.b16 %v4453
    %v5045 = vunpack.c.h.b16 %v4453
    %v5046 = vunpack.c.l.b16 %v4454
    %v5047 = vunpack.c.h.b16 %v4454
    %v5048 = vunpack.c.l.b16 %v4455
    %v5049 = vunpack.c.h.b16 %v4455
    %v5050 = vunpack.c.l.b16 %v4456
    %v5051 = vunpack.c.h.b16 %v4456
    %v5052 = vunpack.c.l.b16 %v4457
    %v5053 = vunpack.c.h.b16 %v4457
    %v5054 = vunpack.c.l.b16 %v4458
    %v5055 = vunpack.c.h.b16 %v4458
    %v5056 = vunpack.c.l.b16 %v4459
    %v5057 = vunpack.c.h.b16 %v4459
    %v5058 = vunpack.c.l.b16 %v4460
    %v5059 = vunpack.c.h.b16 %v4460
    %v5060 = vunpack.c.l.b16 %v4461
    %v5061 = vunpack.c.h.b16 %v4461
    %v5062 = vunpack.c.l.b16 %v4462
    %v5063 = vunpack.c.h.b16 %v4462
    %v5064 = vunpack.c.l.b16 %v4463
    %v5065 = vunpack.c.h.b16 %v4463
    %v5066 = vunpack.c.l.b16 %v4464
    %v5067 = vunpack.c.h.b16 %v4464
    %v5068 = vunpack.c.l.b16 %v4465
    %v5069 = vunpack.c.h.b16 %v4465
    %v5070 = vunpack.c.l.b16 %v4466
    %v5071 = vunpack.c.h.b16 %v4466
    %v5072 = vunpack.c.l.b16 %v4467
    %v5073 = vunpack.c.h.b16 %v4467
    %v5074 = vunpack.c.l.b16 %v4468
    %v5075 = vunpack.c.h.b16 %v4468
    %v5076 = vunpack.c.l.b16 %v4469
    %v5077 = vunpack.c.h.b16 %v4469
    %v5078 = vunpack.c.l.b16 %v4470
    %v5079 = vunpack.c.h.b16 %v4470
    %v5080 = vunpack.c.l.b16 %v4471
    %v5081 = vunpack.c.h.b16 %v4471
    %v5082 = vunpack.c.l.b16 %v4472
    %v5083 = vunpack.c.h.b16 %v4472
    %v5084 = vunpack.c.l.b16 %v4473
    %v5085 = vunpack.c.h.b16 %v4473
    %v5086 = vunpack.c.l.b16 %v4474
    %v5087 = vunpack.c.h.b16 %v4474
    %v5088 = vunpack.c.l.b16 %v4475
    %v5089 = vunpack.c.h.b16 %v4475
    %v5090 = vunpack.c.l.b16 %v4476
    %v5091 = vunpack.c.h.b16 %v4476
    %v5092 = vunpack.c.l.b16 %v4477
    %v5093 = vunpack.c.h.b16 %v4477
    %v5094 = vunpack.c.l.b16 %v4478
    %v5095 = vunpack.c.h.b16 %v4478
    %v5096 = vunpack.c.l.b16 %v4479
    %v5097 = vunpack.c.h.b16 %v4479
    %v5098 = vunpack.c.l.b16 %v4480
    %v5099 = vunpack.c.h.b16 %v4480
    %v5100 = vunpack.c.l.b16 %v4481
    %v5101 = vunpack.c.h.b16 %v4481
    %v5102 = vunpack.c.l.b16 %v4482
    %v5103 = vunpack.c.h.b16 %v4482
    %v5104 = vunpack.c.l.b16 %v4483
    %v5105 = vunpack.c.h.b16 %v4483
    %v5106 = vunpack.c.l.b16 %v4484
    %v5107 = vunpack.c.h.b16 %v4484
    %v5108 = vunpack.c.l.b16 %v4485
    %v5109 = vunpack.c.h.b16 %v4485
    %v5110 = vunpack.c.l.b16 %v4486
    %v5111 = vunpack.c.h.b16 %v4486
    %v5112 = vunpack.c.l.b16 %v4487
    %v5113 = vunpack.c.h.b16 %v4487
    %v5114 = vunpack.c.l.b16 %v4488
    %v5115 = vunpack.c.h.b16 %v4488
    %v5116 = vunpack.c.l.b16 %v4489
    %v5117 = vunpack.c.h.b16 %v4489
    %v5118 = vunpack.c.l.b16 %v4490
    %v5119 = vunpack.c.h.b16 %v4490
    %v5120 = vunpack.c.l.b16 %v4491
    %v5121 = vunpack.c.h.b16 %v4491
    %v5122 = vunpack.c.l.b16 %v4492
    %v5123 = vunpack.c.h.b16 %v4492
    %v5124 = vunpack.c.l.b16 %v4493
    %v5125 = vunpack.c.h.b16 %v4493
    %v5126 = vunpack.c.l.b16 %v4494
    %v5127 = vunpack.c.h.b16 %v4494
    %v5128 = vunpack.c.l.b16 %v4495
    %v5129 = vunpack.c.h.b16 %v4495
    %v5130 = vunpack.c.l.b16 %v4496
    %v5131 = vunpack.c.h.b16 %v4496
    %v5132 = vunpack.c.l.b16 %v4497
    %v5133 = vunpack.c.h.b16 %v4497
    %v5134 = vunpack.c.l.b16 %v4498
    %v5135 = vunpack.c.h.b16 %v4498
    %v5136 = vunpack.c.l.b16 %v4499
    %v5137 = vunpack.c.h.b16 %v4499
    %v5138 = vunpack.c.l.b16 %v4500
    %v5139 = vunpack.c.h.b16 %v4500
    %v5140 = vunpack.c.l.b16 %v4501
    %v5141 = vunpack.c.h.b16 %v4501
    %v5142 = vunpack.c.l.b16 %v4502
    %v5143 = vunpack.c.h.b16 %v4502
    %v5144 = vunpack.c.l.b16 %v4503
    %v5145 = vunpack.c.h.b16 %v4503
    %v5146 = vunpack.c.l.b16 %v4504
    %v5147 = vunpack.c.h.b16 %v4504
    %v5148 = vunpack.c.l.b16 %v4505
    %v5149 = vunpack.c.h.b16 %v4505
    %v5150 = vunpack.c.l.b16 %v4506
    %v5151 = vunpack.c.h.b16 %v4506
    %v5152 = vunpack.c.l.b16 %v4507
    %v5153 = vunpack.c.h.b16 %v4507
    %v5154 = vunpack.c.l.b16 %v4508
    %v5155 = vunpack.c.h.b16 %v4508
    %v5156 = vunpack.c.l.b16 %v4509
    %v5157 = vunpack.c.h.b16 %v4509
    %v5158 = vunpack.c.l.b16 %v4510
    %v5159 = vunpack.c.h.b16 %v4510
    %v5160 = vunpack.c.l.b16 %v4511
    %v5161 = vunpack.c.h.b16 %v4511
    %v5162 = vunpack.c.l.b16 %v4512
    %v5163 = vunpack.c.h.b16 %v4512
    %v5164 = vunpack.c.l.b16 %v4513
    %v5165 = vunpack.c.h.b16 %v4513
    %v5166 = vunpack.c.l.b16 %v4514
    %v5167 = vunpack.c.h.b16 %v4514
    %v5168 = vunpack.c.l.b16 %v4515
    %v5169 = vunpack.c.h.b16 %v4515
    %v5170 = vunpack.c.l.b16 %v4516
    %v5171 = vunpack.c.h.b16 %v4516
    %v5172 = vunpack.c.l.b16 %v4517
    %v5173 = vunpack.c.h.b16 %v4517
    %v5174 = vunpack.c.l.b16 %v4518
    %v5175 = vunpack.c.h.b16 %v4518
    %v5176 = vunpack.c.l.b16 %v4519
    %v5177 = vunpack.c.h.b16 %v4519
    %v5178 = vunpack.c.l.b16 %v4520
    %v5179 = vunpack.c.h.b16 %v4520
    %v5180 = vunpack.c.l.b16 %v4521
    %v5181 = vunpack.c.h.b16 %v4521
    %v5182 = vunpack.c.l.b16 %v4522
    %v5183 = vunpack.c.h.b16 %v4522
    %v5184 = vunpack.c.l.b16 %v4523
    %v5185 = vunpack.c.h.b16 %v4523
    %v5186 = vunpack.c.l.b16 %v4524
    %v5187 = vunpack.c.h.b16 %v4524
    %v5188 = vunpack.c.l.b16 %v4525
    %v5189 = vunpack.c.h.b16 %v4525
    %v5190 = vunpack.c.l.b16 %v4526
    %v5191 = vunpack.c.h.b16 %v4526
    %v5192 = vunpack.c.l.b16 %v4527
    %v5193 = vunpack.c.h.b16 %v4527
    %v5194 = vunpack.c.l.b16 %v4528
    %v5195 = vunpack.c.h.b16 %v4528
    %v5196 = vunpack.c.l.b16 %v4529
    %v5197 = vunpack.c.h.b16 %v4529
    %v5198 = vunpack.c.l.b16 %v4530
    %v5199 = vunpack.c.h.b16 %v4530
    %v5200 = vunpack.c.l.b16 %v4531
    %v5201 = vunpack.c.h.b16 %v4531
    %v5202 = vunpack.c.l.b16 %v4532
    %v5203 = vunpack.c.h.b16 %v4532
    %v5204 = vunpack.c.l.b16 %v4533
    %v5205 = vunpack.c.h.b16 %v4533
    %v5206 = vunpack.c.l.b16 %v4534
    %v5207 = vunpack.c.h.b16 %v4534
    %v5208 = vunpack.c.l.b16 %v4535
    %v5209 = vunpack.c.h.b16 %v4535
    %v5210 = vunpack.c.l.b16 %v4536
    %v5211 = vunpack.c.h.b16 %v4536
    %v5212 = vunpack.c.l.b16 %v4537
    %v5213 = vunpack.c.h.b16 %v4537
    %v5214 = vunpack.c.l.b16 %v4538
    %v5215 = vunpack.c.h.b16 %v4538
    %v5216 = vunpack.c.l.b16 %v4539
    %v5217 = vunpack.c.h.b16 %v4539
    %v5218 = vunpack.c.l.b16 %v4540
    %v5219 = vunpack.c.h.b16 %v4540
    %v5220 = vunpack.c.l.b16 %v4541
    %v5221 = vunpack.c.h.b16 %v4541
    %v5222 = vunpack.c.l.b16 %v4542
    %v5223 = vunpack.c.h.b16 %v4542
    %v5224 = vunpack.c.l.b16 %v4543
    %v5225 = vunpack.c.h.b16 %v4543
    %v5226 = vunpack.c.l.b16 %v4544
    %v5227 = vunpack.c.h.b16 %v4544
    %v5228 = vunpack.c.l.b16 %v4545
    %v5229 = vunpack.c.h.b16 %v4545
    %v5230 = vunpack.c.l.b16 %v4546
    %v5231 = vunpack.c.h.b16 %v4546
    %v5232 = vunpack.c.l.b16 %v4547
    %v5233 = vunpack.c.h.b16 %v4547
    %v5234 = vunpack.c.l.b16 %v4548
    %v5235 = vunpack.c.h.b16 %v4548
    %v5236 = vunpack.c.l.b16 %v4549
    %v5237 = vunpack.c.h.b16 %v4549
    %v5238 = vunpack.c.l.b16 %v4550
    %v5239 = vunpack.c.h.b16 %v4550
    %v5240 = vunpack.c.l.b16 %v4551
    %v5241 = vunpack.c.h.b16 %v4551
    %v5242 = vunpack.c.l.b16 %v4552
    %v5243 = vunpack.c.h.b16 %v4552
    %v5244 = vunpack.c.l.b16 %v4553
    %v5245 = vunpack.c.h.b16 %v4553
    %v5246 = vunpack.c.l.b16 %v4554
    %v5247 = vunpack.c.h.b16 %v4554
    %v5248 = vunpack.c.l.b16 %v4555
    %v5249 = vunpack.c.h.b16 %v4555
    %v5250 = vunpack.c.l.b16 %v4556
    %v5251 = vunpack.c.h.b16 %v4556
    %v5252 = vunpack.c.l.b16 %v4557
    %v5253 = vunpack.c.h.b16 %v4557
    %v5254 = vunpack.c.l.b16 %v4558
    %v5255 = vunpack.c.h.b16 %v4558
    %v5256 = vunpack.c.l.b16 %v4559
    %v5257 = vunpack.c.h.b16 %v4559
    %v5258 = vunpack.c.l.b16 %v4560
    %v5259 = vunpack.c.h.b16 %v4560
    %v5260 = vunpack.c.l.b16 %v4561
    %v5261 = vunpack.c.h.b16 %v4561
    %v5262 = vunpack.c.l.b16 %v4562
    %v5263 = vunpack.c.h.b16 %v4562
    %v5264 = vunpack.c.l.b16 %v4563
    %v5265 = vunpack.c.h.b16 %v4563
    %v5266 = vunpack.c.l.b16 %v4564
    %v5267 = vunpack.c.h.b16 %v4564
    %v5268 = vunpack.c.l.b16 %v4565
    %v5269 = vunpack.c.h.b16 %v4565
    %v5270 = vunpack.c.l.b16 %v4566
    %v5271 = vunpack.c.h.b16 %v4566
    %v5272 = vunpack.c.l.b16 %v4567
    %v5273 = vunpack.c.h.b16 %v4567
    %v5274 = vunpack.c.l.b16 %v4568
    %v5275 = vunpack.c.h.b16 %v4568
    %v5276 = vunpack.c.l.b16 %v4569
    %v5277 = vunpack.c.h.b16 %v4569
    %v5278 = vunpack.c.l.b16 %v4570
    %v5279 = vunpack.c.h.b16 %v4570
    %v5280 = vunpack.c.l.b16 %v4571
    %v5281 = vunpack.c.h.b16 %v4571
    %v5282 = vunpack.c.l.b16 %v4572
    %v5283 = vunpack.c.h.b16 %v4572
    %v5284 = vunpack.c.l.b16 %v4573
    %v5285 = vunpack.c.h.b16 %v4573
    %v5286 = vunpack.c.l.b16 %v4574
    %v5287 = vunpack.c.h.b16 %v4574
    %v5288 = vunpack.c.l.b16 %v4575
    %v5289 = vunpack.c.h.b16 %v4575
    %v5290 = vunpack.c.l.b16 %v4576
    %v5291 = vunpack.c.h.b16 %v4576
    %v5292 = vunpack.c.l.b16 %v4577
    %v5293 = vunpack.c.h.b16 %v4577
    %v5294 = vunpack.c.l.b16 %v4578
    %v5295 = vunpack.c.h.b16 %v4578
    %v5296 = vunpack.c.l.b16 %v4579
    %v5297 = vunpack.c.h.b16 %v4579
    %v5298 = vunpack.c.l.b16 %v4580
    %v5299 = vunpack.c.h.b16 %v4580
    %v5300 = vunpack.c.l.b16 %v4581
    %v5301 = vunpack.c.h.b16 %v4581
    %v5302 = vunpack.c.l.b16 %v4582
    %v5303 = vunpack.c.h.b16 %v4582
    %v5304 = vunpack.c.l.b16 %v4583
    %v5305 = vunpack.c.h.b16 %v4583
    %v5306 = vunpack.c.l.b16 %v4584
    %v5307 = vunpack.c.h.b16 %v4584
    %v5308 = vunpack.c.l.b16 %v4585
    %v5309 = vunpack.c.h.b16 %v4585
    %v5310 = vunpack.c.l.b16 %v4586
    %v5311 = vunpack.c.h.b16 %v4586
    %v5312 = vunpack.c.l.b16 %v4587
    %v5313 = vunpack.c.h.b16 %v4587
    %v5314 = vunpack.c.l.b16 %v4588
    %v5315 = vunpack.c.h.b16 %v4588
    %v5316 = vunpack.c.l.b16 %v4589
    %v5317 = vunpack.c.h.b16 %v4589
    %v5318 = vunpack.c.l.b16 %v4590
    %v5319 = vunpack.c.h.b16 %v4590
    %v5320 = vunpack.c.l.b16 %v4591
    %v5321 = vunpack.c.h.b16 %v4591
    %v5322 = vunpack.c.l.b16 %v4592
    %v5323 = vunpack.c.h.b16 %v4592
    %v5324 = vunpack.c.l.b16 %v4593
    %v5325 = vunpack.c.h.b16 %v4593
    %v5326 = vunpack.c.l.b16 %v4594
    %v5327 = vunpack.c.h.b16 %v4594
    %v5328 = vunpack.c.l.b16 %v4595
    %v5329 = vunpack.c.h.b16 %v4595
    %v5330 = vunpack.c.l.b16 %v4596
    %v5331 = vunpack.c.h.b16 %v4596
    %v5332 = vunpack.c.l.b16 %v4597
    %v5333 = vunpack.c.h.b16 %v4597
    %v5334 = vunpack.c.l.b16 %v4598
    %v5335 = vunpack.c.h.b16 %v4598
    %v5336 = vunpack.c.l.b16 %v4599
    %v5337 = vunpack.c.h.b16 %v4599
    %v5338 = vunpack.c.l.b16 %v4600
    %v5339 = vunpack.c.h.b16 %v4600
    %v5340 = vunpack.c.l.b16 %v4601
    %v5341 = vunpack.c.h.b16 %v4601
    %v5342 = vunpack.c.l.b16 %v4602
    %v5343 = vunpack.c.h.b16 %v4602
    %v5344 = vunpack.c.l.b16 %v4603
    %v5345 = vunpack.c.h.b16 %v4603
    %v5346 = vunpack.c.l.b16 %v4604
    %v5347 = vunpack.c.h.b16 %v4604
    %v5348 = vunpack.c.l.b16 %v4605
    %v5349 = vunpack.c.h.b16 %v4605
    %v5350 = vunpack.c.l.b16 %v4606
    %v5351 = vunpack.c.h.b16 %v4606
    %v5352 = vunpack.c.l.b16 %v4607
    %v5353 = vunpack.c.h.b16 %v4607
    %v5354 = vunpack.c.l.b16 %v4608
    %v5355 = vunpack.c.h.b16 %v4608
    %v5356 = vunpack.c.l.b16 %v4609
    %v5357 = vunpack.c.h.b16 %v4609
    %v5358 = vunpack.c.l.b16 %v4610
    %v5359 = vunpack.c.h.b16 %v4610
    %v5360 = vunpack.c.l.b16 %v4611
    %v5361 = vunpack.c.h.b16 %v4611
    %v5362 = vunpack.c.l.b16 %v4612
    %v5363 = vunpack.c.h.b16 %v4612
    %v5364 = vunpack.c.l.b16 %v4613
    %v5365 = vunpack.c.h.b16 %v4613
    %v5366 = vunpack.c.l.b16 %v4614
    %v5367 = vunpack.c.h.b16 %v4614
    %v5368 = vunpack.c.l.b16 %v4615
    %v5369 = vunpack.c.h.b16 %v4615
    %v5370 = vunpack.c.l.b16 %v4616
    %v5371 = vunpack.c.h.b16 %v4616
    %v5372 = vunpack.c.l.b16 %v4617
    %v5373 = vunpack.c.h.b16 %v4617
    %v5374 = vunpack.c.l.b16 %v4618
    %v5375 = vunpack.c.h.b16 %v4618
    %v5376 = vunpack.c.l.b16 %v4619
    %v5377 = vunpack.c.h.b16 %v4619
    %v5378 = vunpack.c.l.b16 %v4620
    %v5379 = vunpack.c.h.b16 %v4620
    %v5380 = vunpack.c.l.b16 %v4621
    %v5381 = vunpack.c.h.b16 %v4621
    %v5382 = vunpack.c.l.b16 %v4622
    %v5383 = vunpack.c.h.b16 %v4622
    %v5384 = vunpack.c.l.b16 %v4623
    %v5385 = vunpack.c.h.b16 %v4623
    %v5386 = vunpack.c.l.b16 %v4624
    %v5387 = vunpack.c.h.b16 %v4624
    %v5388 = vunpack.c.l.b16 %v4625
    %v5389 = vunpack.c.h.b16 %v4625
    %v5390 = vunpack.c.l.b16 %v4626
    %v5391 = vunpack.c.h.b16 %v4626
    %v5392 = vunpack.c.l.b16 %v4627
    %v5393 = vunpack.c.h.b16 %v4627
    %v5394 = vunpack.c.l.b16 %v4628
    %v5395 = vunpack.c.h.b16 %v4628
    %v5396 = vunpack.c.l.b16 %v4629
    %v5397 = vunpack.c.h.b16 %v4629
    %v5398 = vpack.c.b16 %v4888, %v4886
    %v5399 = vpack.c.b16 %v4889, %v4887
    %v5400 = vpack.c.b16 %v4892, %v4890
    %v5401 = vpack.c.b16 %v4893, %v4891
    %v5402 = vpack.c.b16 %v4896, %v4894
    %v5403 = vpack.c.b16 %v4897, %v4895
    %v5404 = vpack.c.b16 %v4900, %v4898
    %v5405 = vpack.c.b16 %v4901, %v4899
    %v5406 = vpack.c.b16 %v4904, %v4902
    %v5407 = vpack.c.b16 %v4905, %v4903
    %v5408 = vpack.c.b16 %v4908, %v4906
    %v5409 = vpack.c.b16 %v4909, %v4907
    %v5410 = vpack.c.b16 %v4912, %v4910
    %v5411 = vpack.c.b16 %v4913, %v4911
    %v5412 = vpack.c.b16 %v4916, %v4914
    %v5413 = vpack.c.b16 %v4917, %v4915
    %v5414 = vpack.c.b16 %v4920, %v4918
    %v5415 = vpack.c.b16 %v4921, %v4919
    %v5416 = vpack.c.b16 %v4924, %v4922
    %v5417 = vpack.c.b16 %v4925, %v4923
    %v5418 = vpack.c.b16 %v4928, %v4926
    %v5419 = vpack.c.b16 %v4929, %v4927
    %v5420 = vpack.c.b16 %v4932, %v4930
    %v5421 = vpack.c.b16 %v4933, %v4931
    %v5422 = vpack.c.b16 %v4936, %v4934
    %v5423 = vpack.c.b16 %v4937, %v4935
    %v5424 = vpack.c.b16 %v4940, %v4938
    %v5425 = vpack.c.b16 %v4941, %v4939
    %v5426 = vpack.c.b16 %v4944, %v4942
    %v5427 = vpack.c.b16 %v4945, %v4943
    %v5428 = vpack.c.b16 %v4948, %v4946
    %v5429 = vpack.c.b16 %v4949, %v4947
    %v5430 = vpack.c.b16 %v4952, %v4950
    %v5431 = vpack.c.b16 %v4953, %v4951
    %v5432 = vpack.c.b16 %v4956, %v4954
    %v5433 = vpack.c.b16 %v4957, %v4955
    %v5434 = vpack.c.b16 %v4960, %v4958
    %v5435 = vpack.c.b16 %v4961, %v4959
    %v5436 = vpack.c.b16 %v4964, %v4962
    %v5437 = vpack.c.b16 %v4965, %v4963
    %v5438 = vpack.c.b16 %v4968, %v4966
    %v5439 = vpack.c.b16 %v4969, %v4967
    %v5440 = vpack.c.b16 %v4972, %v4970
    %v5441 = vpack.c.b16 %v4973, %v4971
    %v5442 = vpack.c.b16 %v4976, %v4974
    %v5443 = vpack.c.b16 %v4977, %v4975
    %v5444 = vpack.c.b16 %v4980, %v4978
    %v5445 = vpack.c.b16 %v4981, %v4979
    %v5446 = vpack.c.b16 %v4984, %v4982
    %v5447 = vpack.c.b16 %v4985, %v4983
    %v5448 = vpack.c.b16 %v4988, %v4986
    %v5449 = vpack.c.b16 %v4989, %v4987
    %v5450 = vpack.c.b16 %v4992, %v4990
    %v5451 = vpack.c.b16 %v4993, %v4991
    %v5452 = vpack.c.b16 %v4996, %v4994
    %v5453 = vpack.c.b16 %v4997, %v4995
    %v5454 = vpack.c.b16 %v5000, %v4998
    %v5455 = vpack.c.b16 %v5001, %v4999
    %v5456 = vpack.c.b16 %v5004, %v5002
    %v5457 = vpack.c.b16 %v5005, %v5003
    %v5458 = vpack.c.b16 %v5008, %v5006
    %v5459 = vpack.c.b16 %v5009, %v5007
    %v5460 = vpack.c.b16 %v5012, %v5010
    %v5461 = vpack.c.b16 %v5013, %v5011
    %v5462 = vpack.c.b16 %v5016, %v5014
    %v5463 = vpack.c.b16 %v5017, %v5015
    %v5464 = vpack.c.b16 %v5020, %v5018
    %v5465 = vpack.c.b16 %v5021, %v5019
    %v5466 = vpack.c.b16 %v5024, %v5022
    %v5467 = vpack.c.b16 %v5025, %v5023
    %v5468 = vpack.c.b16 %v5028, %v5026
    %v5469 = vpack.c.b16 %v5029, %v5027
    %v5470 = vpack.c.b16 %v5032, %v5030
    %v5471 = vpack.c.b16 %v5033, %v5031
    %v5472 = vpack.c.b16 %v5036, %v5034
    %v5473 = vpack.c.b16 %v5037, %v5035
    %v5474 = vpack.c.b16 %v5040, %v5038
    %v5475 = vpack.c.b16 %v5041, %v5039
    %v5476 = vpack.c.b16 %v5044, %v5042
    %v5477 = vpack.c.b16 %v5045, %v5043
    %v5478 = vpack.c.b16 %v5048, %v5046
    %v5479 = vpack.c.b16 %v5049, %v5047
    %v5480 = vpack.c.b16 %v5052, %v5050
    %v5481 = vpack.c.b16 %v5053, %v5051
    %v5482 = vpack.c.b16 %v5056, %v5054
    %v5483 = vpack.c.b16 %v5057, %v5055
    %v5484 = vpack.c.b16 %v5060, %v5058
    %v5485 = vpack.c.b16 %v5061, %v5059
    %v5486 = vpack.c.b16 %v5064, %v5062
    %v5487 = vpack.c.b16 %v5065, %v5063
    %v5488 = vpack.c.b16 %v5068, %v5066
    %v5489 = vpack.c.b16 %v5069, %v5067
    %v5490 = vpack.c.b16 %v5072, %v5070
    %v5491 = vpack.c.b16 %v5073, %v5071
    %v5492 = vpack.c.b16 %v5076, %v5074
    %v5493 = vpack.c.b16 %v5077, %v5075
    %v5494 = vpack.c.b16 %v5080, %v5078
    %v5495 = vpack.c.b16 %v5081, %v5079
    %v5496 = vpack.c.b16 %v5084, %v5082
    %v5497 = vpack.c.b16 %v5085, %v5083
    %v5498 = vpack.c.b16 %v5088, %v5086
    %v5499 = vpack.c.b16 %v5089, %v5087
    %v5500 = vpack.c.b16 %v5092, %v5090
    %v5501 = vpack.c.b16 %v5093, %v5091
    %v5502 = vpack.c.b16 %v5096, %v5094
    %v5503 = vpack.c.b16 %v5097, %v5095
    %v5504 = vpack.c.b16 %v5100, %v5098
    %v5505 = vpack.c.b16 %v5101, %v5099
    %v5506 = vpack.c.b16 %v5104, %v5102
    %v5507 = vpack.c.b16 %v5105, %v5103
    %v5508 = vpack.c.b16 %v5108, %v5106
    %v5509 = vpack.c.b16 %v5109, %v5107
    %v5510 = vpack.c.b16 %v5112, %v5110
    %v5511 = vpack.c.b16 %v5113, %v5111
    %v5512 = vpack.c.b16 %v5116, %v5114
    %v5513 = vpack.c.b16 %v5117, %v5115
    %v5514 = vpack.c.b16 %v5120, %v5118
    %v5515 = vpack.c.b16 %v5121, %v5119
    %v5516 = vpack.c.b16 %v5124, %v5122
    %v5517 = vpack.c.b16 %v5125, %v5123
    %v5518 = vpack.c.b16 %v5128, %v5126
    %v5519 = vpack.c.b16 %v5129, %v5127
    %v5520 = vpack.c.b16 %v5132, %v5130
    %v5521 = vpack.c.b16 %v5133, %v5131
    %v5522 = vpack.c.b16 %v5136, %v5134
    %v5523 = vpack.c.b16 %v5137, %v5135
    %v5524 = vpack.c.b16 %v5140, %v5138
    %v5525 = vpack.c.b16 %v5141, %v5139
    %v5526 = vpack.c.b16 %v5144, %v5142
    %v5527 = vpack.c.b16 %v5145, %v5143
    %v5528 = vpack.c.b16 %v5148, %v5146
    %v5529 = vpack.c.b16 %v5149, %v5147
    %v5530 = vpack.c.b16 %v5152, %v5150
    %v5531 = vpack.c.b16 %v5153, %v5151
    %v5532 = vpack.c.b16 %v5156, %v5154
    %v5533 = vpack.c.b16 %v5157, %v5155
    %v5534 = vpack.c.b16 %v5160, %v5158
    %v5535 = vpack.c.b16 %v5161, %v5159
    %v5536 = vpack.c.b16 %v5164, %v5162
    %v5537 = vpack.c.b16 %v5165, %v5163
    %v5538 = vpack.c.b16 %v5168, %v5166
    %v5539 = vpack.c.b16 %v5169, %v5167
    %v5540 = vpack.c.b16 %v5172, %v5170
    %v5541 = vpack.c.b16 %v5173, %v5171
    %v5542 = vpack.c.b16 %v5176, %v5174
    %v5543 = vpack.c.b16 %v5177, %v5175
    %v5544 = vpack.c.b16 %v5180, %v5178
    %v5545 = vpack.c.b16 %v5181, %v5179
    %v5546 = vpack.c.b16 %v5184, %v5182
    %v5547 = vpack.c.b16 %v5185, %v5183
    %v5548 = vpack.c.b16 %v5188, %v5186
    %v5549 = vpack.c.b16 %v5189, %v5187
    %v5550 = vpack.c.b16 %v5192, %v5190
    %v5551 = vpack.c.b16 %v5193, %v5191
    %v5552 = vpack.c.b16 %v5196, %v5194
    %v5553 = vpack.c.b16 %v5197, %v5195
    %v5554 = vpack.c.b16 %v5200, %v5198
    %v5555 = vpack.c.b16 %v5201, %v5199
    %v5556 = vpack.c.b16 %v5204, %v5202
    %v5557 = vpack.c.b16 %v5205, %v5203
    %v5558 = vpack.c.b16 %v5208, %v5206
    %v5559 = vpack.c.b16 %v5209, %v5207
    %v5560 = vpack.c.b16 %v5212, %v5210
    %v5561 = vpack.c.b16 %v5213, %v5211
    %v5562 = vpack.c.b16 %v5216, %v5214
    %v5563 = vpack.c.b16 %v5217, %v5215
    %v5564 = vpack.c.b16 %v5220, %v5218
    %v5565 = vpack.c.b16 %v5221, %v5219
    %v5566 = vpack.c.b16 %v5224, %v5222
    %v5567 = vpack.c.b16 %v5225, %v5223
    %v5568 = vpack.c.b16 %v5228, %v5226
    %v5569 = vpack.c.b16 %v5229, %v5227
    %v5570 = vpack.c.b16 %v5232, %v5230
    %v5571 = vpack.c.b16 %v5233, %v5231
    %v5572 = vpack.c.b16 %v5236, %v5234
    %v5573 = vpack.c.b16 %v5237, %v5235
    %v5574 = vpack.c.b16 %v5240, %v5238
    %v5575 = vpack.c.b16 %v5241, %v5239
    %v5576 = vpack.c.b16 %v5244, %v5242
    %v5577 = vpack.c.b16 %v5245, %v5243
    %v5578 = vpack.c.b16 %v5248, %v5246
    %v5579 = vpack.c.b16 %v5249, %v5247
    %v5580 = vpack.c.b16 %v5252, %v5250
    %v5581 = vpack.c.b16 %v5253, %v5251
    %v5582 = vpack.c.b16 %v5256, %v5254
    %v5583 = vpack.c.b16 %v5257, %v5255
    %v5584 = vpack.c.b16 %v5260, %v5258
    %v5585 = vpack.c.b16 %v5261, %v5259
    %v5586 = vpack.c.b16 %v5264, %v5262
    %v5587 = vpack.c.b16 %v5265, %v5263
    %v5588 = vpack.c.b16 %v5268, %v5266
    %v5589 = vpack.c.b16 %v5269, %v5267
    %v5590 = vpack.c.b16 %v5272, %v5270
    %v5591 = vpack.c.b16 %v5273, %v5271
    %v5592 = vpack.c.b16 %v5276, %v5274
    %v5593 = vpack.c.b16 %v5277, %v5275
    %v5594 = vpack.c.b16 %v5280, %v5278
    %v5595 = vpack.c.b16 %v5281, %v5279
    %v5596 = vpack.c.b16 %v5284, %v5282
    %v5597 = vpack.c.b16 %v5285, %v5283
    %v5598 = vpack.c.b16 %v5288, %v5286
    %v5599 = vpack.c.b16 %v5289, %v5287
    %v5600 = vpack.c.b16 %v5292, %v5290
    %v5601 = vpack.c.b16 %v5293, %v5291
    %v5602 = vpack.c.b16 %v5296, %v5294
    %v5603 = vpack.c.b16 %v5297, %v5295
    %v5604 = vpack.c.b16 %v5300, %v5298
    %v5605 = vpack.c.b16 %v5301, %v5299
    %v5606 = vpack.c.b16 %v5304, %v5302
    %v5607 = vpack.c.b16 %v5305, %v5303
    %v5608 = vpack.c.b16 %v5308, %v5306
    %v5609 = vpack.c.b16 %v5309, %v5307
    %v5610 = vpack.c.b16 %v5312, %v5310
    %v5611 = vpack.c.b16 %v5313, %v5311
    %v5612 = vpack.c.b16 %v5316, %v5314
    %v5613 = vpack.c.b16 %v5317, %v5315
    %v5614 = vpack.c.b16 %v5320, %v5318
    %v5615 = vpack.c.b16 %v5321, %v5319
    %v5616 = vpack.c.b16 %v5324, %v5322
    %v5617 = vpack.c.b16 %v5325, %v5323
    %v5618 = vpack.c.b16 %v5328, %v5326
    %v5619 = vpack.c.b16 %v5329, %v5327
    %v5620 = vpack.c.b16 %v5332, %v5330
    %v5621 = vpack.c.b16 %v5333, %v5331
    %v5622 = vpack.c.b16 %v5336, %v5334
    %v5623 = vpack.c.b16 %v5337, %v5335
    %v5624 = vpack.c.b16 %v5340, %v5338
    %v5625 = vpack.c.b16 %v5341, %v5339
    %v5626 = vpack.c.b16 %v5344, %v5342
    %v5627 = vpack.c.b16 %v5345, %v5343
    %v5628 = vpack.c.b16 %v5348, %v5346
    %v5629 = vpack.c.b16 %v5349, %v5347
    %v5630 = vpack.c.b16 %v5352, %v5350
    %v5631 = vpack.c.b16 %v5353, %v5351
    %v5632 = vpack.c.b16 %v5356, %v5354
    %v5633 = vpack.c.b16 %v5357, %v5355
    %v5634 = vpack.c.b16 %v5360, %v5358
    %v5635 = vpack.c.b16 %v5361, %v5359
    %v5636 = vpack.c.b16 %v5364, %v5362
    %v5637 = vpack.c.b16 %v5365, %v5363
    %v5638 = vpack.c.b16 %v5368, %v5366
    %v5639 = vpack.c.b16 %v5369, %v5367
    %v5640 = vpack.c.b16 %v5372, %v5370
    %v5641 = vpack.c.b16 %v5373, %v5371
    %v5642 = vpack.c.b16 %v5376, %v5374
    %v5643 = vpack.c.b16 %v5377, %v5375
    %v5644 = vpack.c.b16 %v5380, %v5378
    %v5645 = vpack.c.b16 %v5381, %v5379
    %v5646 = vpack.c.b16 %v5384, %v5382
    %v5647 = vpack.c.b16 %v5385, %v5383
    %v5648 = vpack.c.b16 %v5388, %v5386
    %v5649 = vpack.c.b16 %v5389, %v5387
    %v5650 = vpack.c.b16 %v5392, %v5390
    %v5651 = vpack.c.b16 %v5393, %v5391
    %v5652 = vpack.c.b16 %v5396, %v5394
    %v5653 = vpack.c.b16 %v5397, %v5395
    %5910 = vmatprep.subr.bf16.mxu0 %v5399
    %5911 = vmatpush1.bf16.msra.mxu0 %v5398
    %5912 = vmatprep.subr.bf16.mxu0 %v5401
    %5913 = vmatpush1.bf16.msra.mxu0 %v5400
    %5914 = vmatprep.subr.bf16.mxu0 %v5403
    %5915 = vmatpush1.bf16.msra.mxu0 %v5402
    %5916 = vmatprep.subr.bf16.mxu0 %v5405
    %5917 = vmatpush1.bf16.msra.mxu0 %v5404
    %5918 = vmatprep.subr.bf16.mxu0 %v5407
    %5919 = vmatpush1.bf16.msra.mxu0 %v5406
    %5920 = vmatprep.subr.bf16.mxu0 %v5409
    %5921 = vmatpush1.bf16.msra.mxu0 %v5408
    %5922 = vmatprep.subr.bf16.mxu0 %v5411
    %5923 = vmatpush1.bf16.msra.mxu0 %v5410
    %5924 = vmatprep.subr.bf16.mxu0 %v5413
    %5925 = vmatpush1.bf16.msra.mxu0 %v5412
    %5926 = vmatprep.subr.bf16.mxu0 %v5415
    %5927 = vmatpush1.bf16.msra.mxu0 %v5414
    %5928 = vmatprep.subr.bf16.mxu0 %v5417
    %5929 = vmatpush1.bf16.msra.mxu0 %v5416
    %5930 = vmatprep.subr.bf16.mxu0 %v5419
    %5931 = vmatpush1.bf16.msra.mxu0 %v5418
    %5932 = vmatprep.subr.bf16.mxu0 %v5421
    %5933 = vmatpush1.bf16.msra.mxu0 %v5420
    %5934 = vmatprep.subr.bf16.mxu0 %v5423
    %5935 = vmatpush1.bf16.msra.mxu0 %v5422
    %5936 = vmatprep.subr.bf16.mxu0 %v5425
    %5937 = vmatpush1.bf16.msra.mxu0 %v5424
    %5938 = vmatprep.subr.bf16.mxu0 %v5427
    %5939 = vmatpush1.bf16.msra.mxu0 %v5426
    %5940 = vmatprep.subr.bf16.mxu0 %v5429
    %5941 = vmatpush1.bf16.msra.mxu0 %v5428
    %5942 = vmatprep.mubr.bf16.mxu0 %v4359
    %5943 = vmatmul.mubr.bf16.gmra.mrb[0].mxu0 %v4358
    %v5944 = vpop.f32.mrb[0].mxu0
    %v5945 = vadd.f32 0.0, %v5944
    %v5946 = vpop.f32.mrb[0].mxu0
    %v5947 = vadd.f32 0.0, %v5946
    %v5948 = vpop.f32.mrb[0].mxu0
    %v5949 = vpop.f32.mrb[0].mxu0
    %5950 = vdwg.mxu0
    %5951 = vmatprep.subr.bf16.mxu0 %v5431
    %5952 = vmatpush1.bf16.msra.mxu0 %v5430
    %5953 = vmatprep.subr.bf16.mxu0 %v5433
    %5954 = vmatpush1.bf16.msra.mxu0 %v5432
    %5955 = vmatprep.subr.bf16.mxu0 %v5435
    %5956 = vmatpush1.bf16.msra.mxu0 %v5434
    %5957 = vmatprep.subr.bf16.mxu0 %v5437
    %5958 = vmatpush1.bf16.msra.mxu0 %v5436
    %5959 = vmatprep.subr.bf16.mxu0 %v5439
    %5960 = vmatpush1.bf16.msra.mxu0 %v5438
    %5961 = vmatprep.subr.bf16.mxu0 %v5441
    %5962 = vmatpush1.bf16.msra.mxu0 %v5440
    %5963 = vmatprep.subr.bf16.mxu0 %v5443
    %5964 = vmatpush1.bf16.msra.mxu0 %v5442
    %5965 = vmatprep.subr.bf16.mxu0 %v5445
    %5966 = vmatpush1.bf16.msra.mxu0 %v5444
    %5967 = vmatprep.subr.bf16.mxu0 %v5447
    %5968 = vmatpush1.bf16.msra.mxu0 %v5446
    %5969 = vmatprep.subr.bf16.mxu0 %v5449
    %5970 = vmatpush1.bf16.msra.mxu0 %v5448
    %5971 = vmatprep.subr.bf16.mxu0 %v5451
    %5972 = vmatpush1.bf16.msra.mxu0 %v5450
    %5973 = vmatprep.subr.bf16.mxu0 %v5453
    %5974 = vmatpush1.bf16.msra.mxu0 %v5452
    %5975 = vmatprep.subr.bf16.mxu0 %v5455
    %5976 = vmatpush1.bf16.msra.mxu0 %v5454
    %5977 = vmatprep.subr.bf16.mxu0 %v5457
    %5978 = vmatpush1.bf16.msra.mxu0 %v5456
    %5979 = vmatprep.subr.bf16.mxu0 %v5459
    %5980 = vmatpush1.bf16.msra.mxu0 %v5458
    %5981 = vmatprep.subr.bf16.mxu0 %v5461
    %5982 = vmatpush1.bf16.msra.mxu0 %v5460
    %5983 = vmatprep.mubr.bf16.mxu0 %v4361
    %5984 = vmatmul.mubr.bf16.gmra.mrb[0].mxu0 %v4360
    %v5985 = vpop.f32.mrb[0].mxu0
    %v5986 = vadd.f32 %v5945, %v5985
    %v5987 = vpop.f32.mrb[0].mxu0
    %v5988 = vadd.f32 %v5947, %v5987
    %v5989 = vpop.f32.mrb[0].mxu0
    %v5990 = vpop.f32.mrb[0].mxu0
    %5991 = vdwg.mxu0
    %5992 = vmatprep.subr.bf16.mxu0 %v5463
    %5993 = vmatpush1.bf16.msra.mxu0 %v5462
    %5994 = vmatprep.subr.bf16.mxu0 %v5465
    %5995 = vmatpush1.bf16.msra.mxu0 %v5464
    %5996 = vmatprep.subr.bf16.mxu0 %v5467
    %5997 = vmatpush1.bf16.msra.mxu0 %v5466
    %5998 = vmatprep.subr.bf16.mxu0 %v5469
    %5999 = vmatpush1.bf16.msra.mxu0 %v5468
    %6000 = vmatprep.subr.bf16.mxu0 %v5471
    %6001 = vmatpush1.bf16.msra.mxu0 %v5470
    %6002 = vmatprep.subr.bf16.mxu0 %v5473
    %6003 = vmatpush1.bf16.msra.mxu0 %v5472
    %6004 = vmatprep.subr.bf16.mxu0 %v5475
    %6005 = vmatpush1.bf16.msra.mxu0 %v5474
    %6006 = vmatprep.subr.bf16.mxu0 %v5477
    %6007 = vmatpush1.bf16.msra.mxu0 %v5476
    %6008 = vmatprep.subr.bf16.mxu0 %v5479
    %6009 = vmatpush1.bf16.msra.mxu0 %v5478
    %6010 = vmatprep.subr.bf16.mxu0 %v5481
    %6011 = vmatpush1.bf16.msra.mxu0 %v5480
    %6012 = vmatprep.subr.bf16.mxu0 %v5483
    %6013 = vmatpush1.bf16.msra.mxu0 %v5482
    %6014 = vmatprep.subr.bf16.mxu0 %v5485
    %6015 = vmatpush1.bf16.msra.mxu0 %v5484
    %6016 = vmatprep.subr.bf16.mxu0 %v5487
    %6017 = vmatpush1.bf16.msra.mxu0 %v5486
    %6018 = vmatprep.subr.bf16.mxu0 %v5489
    %6019 = vmatpush1.bf16.msra.mxu0 %v5488
    %6020 = vmatprep.subr.bf16.mxu0 %v5491
    %6021 = vmatpush1.bf16.msra.mxu0 %v5490
    %6022 = vmatprep.subr.bf16.mxu0 %v5493
    %6023 = vmatpush1.bf16.msra.mxu0 %v5492
    %6024 = vmatprep.mubr.bf16.mxu0 %v4363
    %6025 = vmatmul.mubr.bf16.gmra.mrb[0].mxu0 %v4362
    %v6026 = vpop.f32.mrb[0].mxu0
    %v6027 = vadd.f32 %v5986, %v6026
    %v6028 = vpop.f32.mrb[0].mxu0
    %v6029 = vadd.f32 %v5988, %v6028
    %v6030 = vpop.f32.mrb[0].mxu0
    %v6031 = vpop.f32.mrb[0].mxu0
    %6032 = vdwg.mxu0
    %6033 = vmatprep.subr.bf16.mxu0 %v5495
    %6034 = vmatpush1.bf16.msra.mxu0 %v5494
    %6035 = vmatprep.subr.bf16.mxu0 %v5497
    %6036 = vmatpush1.bf16.msra.mxu0 %v5496
    %6037 = vmatprep.subr.bf16.mxu0 %v5499
    %6038 = vmatpush1.bf16.msra.mxu0 %v5498
    %6039 = vmatprep.subr.bf16.mxu0 %v5501
    %6040 = vmatpush1.bf16.msra.mxu0 %v5500
    %6041 = vmatprep.subr.bf16.mxu0 %v5503
    %6042 = vmatpush1.bf16.msra.mxu0 %v5502
    %6043 = vmatprep.subr.bf16.mxu0 %v5505
    %6044 = vmatpush1.bf16.msra.mxu0 %v5504
    %6045 = vmatprep.subr.bf16.mxu0 %v5507
    %6046 = vmatpush1.bf16.msra.mxu0 %v5506
    %6047 = vmatprep.subr.bf16.mxu0 %v5509
    %6048 = vmatpush1.bf16.msra.mxu0 %v5508
    %6049 = vmatprep.subr.bf16.mxu0 %v5511
    %6050 = vmatpush1.bf16.msra.mxu0 %v5510
    %6051 = vmatprep.subr.bf16.mxu0 %v5513
    %6052 = vmatpush1.bf16.msra.mxu0 %v5512
    %6053 = vmatprep.subr.bf16.mxu0 %v5515
    %6054 = vmatpush1.bf16.msra.mxu0 %v5514
    %6055 = vmatprep.subr.bf16.mxu0 %v5517
    %6056 = vmatpush1.bf16.msra.mxu0 %v5516
    %6057 = vmatprep.subr.bf16.mxu0 %v5519
    %6058 = vmatpush1.bf16.msra.mxu0 %v5518
    %6059 = vmatprep.subr.bf16.mxu0 %v5521
    %6060 = vmatpush1.bf16.msra.mxu0 %v5520
    %6061 = vmatprep.subr.bf16.mxu0 %v5523
    %6062 = vmatpush1.bf16.msra.mxu0 %v5522
    %6063 = vmatprep.subr.bf16.mxu0 %v5525
    %6064 = vmatpush1.bf16.msra.mxu0 %v5524
    %6065 = vmatprep.mubr.bf16.mxu0 %v4365
    %6066 = vmatmul.mubr.bf16.gmra.mrb[0].mxu0 %v4364
    %v6067 = vpop.f32.mrb[0].mxu0
    %v6068 = vadd.f32 %v6027, %v6067
    %v6069 = vpop.f32.mrb[0].mxu0
    %v6070 = vadd.f32 %v6029, %v6069
    %v6071 = vpop.f32.mrb[0].mxu0
    %v6072 = vpop.f32.mrb[0].mxu0
    %6073 = vdwg.mxu0
    %6074 = vmatprep.subr.bf16.mxu0 %v5527
    %6075 = vmatpush1.bf16.msra.mxu0 %v5526
    %6076 = vmatprep.subr.bf16.mxu0 %v5529
    %6077 = vmatpush1.bf16.msra.mxu0 %v5528
    %6078 = vmatprep.subr.bf16.mxu0 %v5531
    %6079 = vmatpush1.bf16.msra.mxu0 %v5530
    %6080 = vmatprep.subr.bf16.mxu0 %v5533
    %6081 = vmatpush1.bf16.msra.mxu0 %v5532
    %6082 = vmatprep.subr.bf16.mxu0 %v5535
    %6083 = vmatpush1.bf16.msra.mxu0 %v5534
    %6084 = vmatprep.subr.bf16.mxu0 %v5537
    %6085 = vmatpush1.bf16.msra.mxu0 %v5536
    %6086 = vmatprep.subr.bf16.mxu0 %v5539
    %6087 = vmatpush1.bf16.msra.mxu0 %v5538
    %6088 = vmatprep.subr.bf16.mxu0 %v5541
    %6089 = vmatpush1.bf16.msra.mxu0 %v5540
    %6090 = vmatprep.subr.bf16.mxu0 %v5543
    %6091 = vmatpush1.bf16.msra.mxu0 %v5542
    %6092 = vmatprep.subr.bf16.mxu0 %v5545
    %6093 = vmatpush1.bf16.msra.mxu0 %v5544
    %6094 = vmatprep.subr.bf16.mxu0 %v5547
    %6095 = vmatpush1.bf16.msra.mxu0 %v5546
    %6096 = vmatprep.subr.bf16.mxu0 %v5549
    %6097 = vmatpush1.bf16.msra.mxu0 %v5548
    %6098 = vmatprep.subr.bf16.mxu0 %v5551
    %6099 = vmatpush1.bf16.msra.mxu0 %v5550
    %6100 = vmatprep.subr.bf16.mxu0 %v5553
    %6101 = vmatpush1.bf16.msra.mxu0 %v5552
    %6102 = vmatprep.subr.bf16.mxu0 %v5555
    %6103 = vmatpush1.bf16.msra.mxu0 %v5554
    %6104 = vmatprep.subr.bf16.mxu0 %v5557
    %6105 = vmatpush1.bf16.msra.mxu0 %v5556
    %6106 = vmatprep.mubr.bf16.mxu0 %v4367
    %6107 = vmatmul.mubr.bf16.gmra.mrb[0].mxu0 %v4366
    %v6108 = vpop.f32.mrb[0].mxu0
    %v6109 = vadd.f32 %v6068, %v6108
    %v6110 = vpop.f32.mrb[0].mxu0
    %v6111 = vadd.f32 %v6070, %v6110
    %v6112 = vpop.f32.mrb[0].mxu0
    %v6113 = vpop.f32.mrb[0].mxu0
    %6114 = vdwg.mxu0
    %6115 = vmatprep.subr.bf16.mxu0 %v5559
    %6116 = vmatpush1.bf16.msra.mxu0 %v5558
    %6117 = vmatprep.subr.bf16.mxu0 %v5561
    %6118 = vmatpush1.bf16.msra.mxu0 %v5560
    %6119 = vmatprep.subr.bf16.mxu0 %v5563
    %6120 = vmatpush1.bf16.msra.mxu0 %v5562
    %6121 = vmatprep.subr.bf16.mxu0 %v5565
    %6122 = vmatpush1.bf16.msra.mxu0 %v5564
    %6123 = vmatprep.subr.bf16.mxu0 %v5567
    %6124 = vmatpush1.bf16.msra.mxu0 %v5566
    %6125 = vmatprep.subr.bf16.mxu0 %v5569
    %6126 = vmatpush1.bf16.msra.mxu0 %v5568
    %6127 = vmatprep.subr.bf16.mxu0 %v5571
    %6128 = vmatpush1.bf16.msra.mxu0 %v5570
    %6129 = vmatprep.subr.bf16.mxu0 %v5573
    %6130 = vmatpush1.bf16.msra.mxu0 %v5572
    %6131 = vmatprep.subr.bf16.mxu0 %v5575
    %6132 = vmatpush1.bf16.msra.mxu0 %v5574
    %6133 = vmatprep.subr.bf16.mxu0 %v5577
    %6134 = vmatpush1.bf16.msra.mxu0 %v5576
    %6135 = vmatprep.subr.bf16.mxu0 %v5579
    %6136 = vmatpush1.bf16.msra.mxu0 %v5578
    %6137 = vmatprep.subr.bf16.mxu0 %v5581
    %6138 = vmatpush1.bf16.msra.mxu0 %v5580
    %6139 = vmatprep.subr.bf16.mxu0 %v5583
    %6140 = vmatpush1.bf16.msra.mxu0 %v5582
    %6141 = vmatprep.subr.bf16.mxu0 %v5585
    %6142 = vmatpush1.bf16.msra.mxu0 %v5584
    %6143 = vmatprep.subr.bf16.mxu0 %v5587
    %6144 = vmatpush1.bf16.msra.mxu0 %v5586
    %6145 = vmatprep.subr.bf16.mxu0 %v5589
    %6146 = vmatpush1.bf16.msra.mxu0 %v5588
    %6147 = vmatprep.mubr.bf16.mxu0 %v4369
    %6148 = vmatmul.mubr.bf16.gmra.mrb[0].mxu0 %v4368
    %v6149 = vpop.f32.mrb[0].mxu0
    %v6150 = vadd.f32 %v6109, %v6149
    %v6151 = vpop.f32.mrb[0].mxu0
    %v6152 = vadd.f32 %v6111, %v6151
    %v6153 = vpop.f32.mrb[0].mxu0
    %v6154 = vpop.f32.mrb[0].mxu0
    %6155 = vdwg.mxu0
    %6156 = vmatprep.subr.bf16.mxu0 %v5591
    %6157 = vmatpush1.bf16.msra.mxu0 %v5590
    %6158 = vmatprep.subr.bf16.mxu0 %v5593
    %6159 = vmatpush1.bf16.msra.mxu0 %v5592
    %6160 = vmatprep.subr.bf16.mxu0 %v5595
    %6161 = vmatpush1.bf16.msra.mxu0 %v5594
    %6162 = vmatprep.subr.bf16.mxu0 %v5597
    %6163 = vmatpush1.bf16.msra.mxu0 %v5596
    %6164 = vmatprep.subr.bf16.mxu0 %v5599
    %6165 = vmatpush1.bf16.msra.mxu0 %v5598
    %6166 = vmatprep.subr.bf16.mxu0 %v5601
    %6167 = vmatpush1.bf16.msra.mxu0 %v5600
    %6168 = vmatprep.subr.bf16.mxu0 %v5603
    %6169 = vmatpush1.bf16.msra.mxu0 %v5602
    %6170 = vmatprep.subr.bf16.mxu0 %v5605
    %6171 = vmatpush1.bf16.msra.mxu0 %v5604
    %6172 = vmatprep.subr.bf16.mxu0 %v5607
    %6173 = vmatpush1.bf16.msra.mxu0 %v5606
    %6174 = vmatprep.subr.bf16.mxu0 %v5609
    %6175 = vmatpush1.bf16.msra.mxu0 %v5608
    %6176 = vmatprep.subr.bf16.mxu0 %v5611
    %6177 = vmatpush1.bf16.msra.mxu0 %v5610
    %6178 = vmatprep.subr.bf16.mxu0 %v5613
    %6179 = vmatpush1.bf16.msra.mxu0 %v5612
    %6180 = vmatprep.subr.bf16.mxu0 %v5615
    %6181 = vmatpush1.bf16.msra.mxu0 %v5614
    %6182 = vmatprep.subr.bf16.mxu0 %v5617
    %6183 = vmatpush1.bf16.msra.mxu0 %v5616
    %6184 = vmatprep.subr.bf16.mxu0 %v5619
    %6185 = vmatpush1.bf16.msra.mxu0 %v5618
    %6186 = vmatprep.subr.bf16.mxu0 %v5621
    %6187 = vmatpush1.bf16.msra.mxu0 %v5620
    %6188 = vmatprep.mubr.bf16.mxu0 %v4371
    %6189 = vmatmul.mubr.bf16.gmra.mrb[0].mxu0 %v4370
    %v6190 = vpop.f32.mrb[0].mxu0
    %v6191 = vadd.f32 %v6150, %v6190
    %v6192 = vpop.f32.mrb[0].mxu0
    %v6193 = vadd.f32 %v6152, %v6192
    %v6194 = vpop.f32.mrb[0].mxu0
    %v6195 = vpop.f32.mrb[0].mxu0
    %6196 = vdwg.mxu0
    %6197 = vmatprep.subr.bf16.mxu0 %v5623
    %6198 = vmatpush1.bf16.msra.mxu0 %v5622
    %6199 = vmatprep.subr.bf16.mxu0 %v5625
    %6200 = vmatpush1.bf16.msra.mxu0 %v5624
    %6201 = vmatprep.subr.bf16.mxu0 %v5627
    %6202 = vmatpush1.bf16.msra.mxu0 %v5626
    %6203 = vmatprep.subr.bf16.mxu0 %v5629
    %6204 = vmatpush1.bf16.msra.mxu0 %v5628
    %6205 = vmatprep.subr.bf16.mxu0 %v5631
    %6206 = vmatpush1.bf16.msra.mxu0 %v5630
    %6207 = vmatprep.subr.bf16.mxu0 %v5633
    %6208 = vmatpush1.bf16.msra.mxu0 %v5632
    %6209 = vmatprep.subr.bf16.mxu0 %v5635
    %6210 = vmatpush1.bf16.msra.mxu0 %v5634
    %6211 = vmatprep.subr.bf16.mxu0 %v5637
    %6212 = vmatpush1.bf16.msra.mxu0 %v5636
    %6213 = vmatprep.subr.bf16.mxu0 %v5639
    %6214 = vmatpush1.bf16.msra.mxu0 %v5638
    %6215 = vmatprep.subr.bf16.mxu0 %v5641
    %6216 = vmatpush1.bf16.msra.mxu0 %v5640
    %6217 = vmatprep.subr.bf16.mxu0 %v5643
    %6218 = vmatpush1.bf16.msra.mxu0 %v5642
    %6219 = vmatprep.subr.bf16.mxu0 %v5645
    %6220 = vmatpush1.bf16.msra.mxu0 %v5644
    %6221 = vmatprep.subr.bf16.mxu0 %v5647
    %6222 = vmatpush1.bf16.msra.mxu0 %v5646
    %6223 = vmatprep.subr.bf16.mxu0 %v5649
    %6224 = vmatpush1.bf16.msra.mxu0 %v5648
    %6225 = vmatprep.subr.bf16.mxu0 %v5651
    %6226 = vmatpush1.bf16.msra.mxu0 %v5650
    %6227 = vmatprep.subr.bf16.mxu0 %v5653
    %6228 = vmatpush1.bf16.msra.mxu0 %v5652
    %6229 = vmatprep.mubr.bf16.mxu0 %v4373
    %6230 = vmatmul.mubr.bf16.gmra.mrb[0].mxu0 %v4372
    %v6231 = vpop.f32.mrb[0].mxu0
    %v6232 = vadd.f32 %v6191, %v6231
    %v6233 = vpop.f32.mrb[0].mxu0
    %v6234 = vadd.f32 %v6193, %v6233
    %v6235 = vpop.f32.mrb[0].mxu0
    %v6236 = vpop.f32.mrb[0].mxu0
    %6237 = vdwg.mxu0
    %v6238 = vadd.f32 %v4160, %v6232
    %v6239 = vadd.f32 %v4162, %v6234
    %v6240 = vld [vmem:[%s2] sm:$0x3]
    %v6242 = vlaneseq
    %v6243 = vshrl.u32 %v6242, 7
    %v6244 = vsub.s32 0, %v6243
    %v6245 = vrot.slane %v6240, %v6244
    %v6246 = vlaneseq
    %v6247 = vshrl.u32 %v6246, 7
    %v6248 = vsub.s32 1, %v6247
    %v6249 = vrot.slane %v6240, %v6248
    %v6252 = vadd.f32 %v6238, %v6245
    %v6253 = vadd.f32 %v6239, %v6249
    %v6254 = vmax.f32 %v6252, 0.0
    %v6255 = vmax.f32 %v6253, 0.0
    %v6256 = vpack.c.bf16 %v6254, %v6254
    %v6257 = vpack.c.bf16 %v6255, %v6255
    %v6258 = vld [vmem:[%s3] sm:$0xf]
    %v6259 = vld [vmem:[%s3 + $0x4] sm:$0xf]
    %v6260 = vld [vmem:[%s3 + $0x8] sm:$0xf]
    %v6261 = vld [vmem:[%s3 + $0xc] sm:$0xf]
    %v6262 = vld [vmem:[%s3 + $0x10] sm:$0xf]
    %v6263 = vld [vmem:[%s3 + $0x14] sm:$0xf]
    %v6264 = vld [vmem:[%s3 + $0x18] sm:$0xf]
    %v6265 = vld [vmem:[%s3 + $0x1c] sm:$0xf]
    %v6266 = vld [vmem:[%s3 + $0x20] sm:$0xf]
    %v6267 = vld [vmem:[%s3 + $0x24] sm:$0xf]
    %v6268 = vld [vmem:[%s3 + $0x28] sm:$0xf]
    %v6269 = vld [vmem:[%s3 + $0x2c] sm:$0xf]
    %v6270 = vld [vmem:[%s3 + $0x30] sm:$0xf]
    %v6271 = vld [vmem:[%s3 + $0x34] sm:$0xf]
    %v6272 = vld [vmem:[%s3 + $0x38] sm:$0xf]
    %v6273 = vld [vmem:[%s3 + $0x3c] sm:$0xf]
    %v6274 = vld [vmem:[%s3 + $0x40] sm:$0xf]
    %v6275 = vld [vmem:[%s3 + $0x44] sm:$0xf]
    %v6276 = vld [vmem:[%s3 + $0x48] sm:$0xf]
    %v6277 = vld [vmem:[%s3 + $0x4c] sm:$0xf]
    %v6278 = vld [vmem:[%s3 + $0x50] sm:$0xf]
    %v6279 = vld [vmem:[%s3 + $0x54] sm:$0xf]
    %v6280 = vld [vmem:[%s3 + $0x58] sm:$0xf]
    %v6281 = vld [vmem:[%s3 + $0x5c] sm:$0xf]
    %v6282 = vld [vmem:[%s3 + $0x60] sm:$0xf]
    %v6283 = vld [vmem:[%s4] sm:$0x1]
    %v6285 = vlaneseq
    %v6286 = vshrl.u32 %v6285, 7
    %v6287 = vsub.s32 0, %v6286
    %v6288 = vrot.slane %v6283, %v6287
    %v6315 = vunpack.c.l.b16 %v6258
    %v6316 = vunpack.c.l.b16 %v6259
    %v6317 = vunpack.c.l.b16 %v6260
    %v6318 = vunpack.c.l.b16 %v6261
    %v6319 = vunpack.c.l.b16 %v6262
    %v6320 = vunpack.c.l.b16 %v6263
    %v6321 = vunpack.c.l.b16 %v6264
    %v6322 = vunpack.c.l.b16 %v6265
    %v6323 = vunpack.c.l.b16 %v6266
    %v6324 = vunpack.c.l.b16 %v6267
    %v6325 = vunpack.c.l.b16 %v6268
    %v6326 = vunpack.c.l.b16 %v6269
    %v6327 = vunpack.c.l.b16 %v6270
    %v6328 = vunpack.c.l.b16 %v6271
    %v6329 = vunpack.c.l.b16 %v6272
    %v6330 = vunpack.c.l.b16 %v6273
    %v6331 = vunpack.c.l.b16 %v6274
    %v6332 = vunpack.c.l.b16 %v6275
    %v6333 = vunpack.c.l.b16 %v6276
    %v6334 = vunpack.c.l.b16 %v6277
    %v6335 = vunpack.c.l.b16 %v6278
    %v6336 = vunpack.c.l.b16 %v6279
    %v6337 = vunpack.c.l.b16 %v6280
    %v6338 = vunpack.c.l.b16 %v6281
    %v6339 = vunpack.c.l.b16 %v6282
    %v6340 = vpack.c.b16 %v6316, %v6315
    %v6341 = vpack.c.b16 %v6318, %v6317
    %v6342 = vpack.c.b16 %v6320, %v6319
    %v6343 = vpack.c.b16 %v6322, %v6321
    %v6344 = vpack.c.b16 %v6324, %v6323
    %v6345 = vpack.c.b16 %v6326, %v6325
    %v6346 = vpack.c.b16 %v6328, %v6327
    %v6347 = vpack.c.b16 %v6330, %v6329
    %v6348 = vpack.c.b16 %v6332, %v6331
    %v6349 = vpack.c.b16 %v6334, %v6333
    %v6350 = vpack.c.b16 %v6336, %v6335
    %v6351 = vpack.c.b16 %v6338, %v6337
    %v6352 = vpack.c.b16 %v6339, %v6339
    %vm6365 = vcmask 588800
    %v6367 = vsel %vm6365, %v6257, 0
    %vm6369 = vcmask 1043456
    %v6371 = vsel %vm6369, %v6352, 0
    %6373 = vmatprep.subr.bf16.mxu0 0
    %6374 = vmatpush1.bf16.msra.mxu0 %v6340
    %6375 = vmatprep.subr.bf16.mxu0 0
    %6376 = vmatpush1.bf16.msra.mxu0 %v6341
    %6377 = vmatprep.subr.bf16.mxu0 0
    %6378 = vmatpush1.bf16.msra.mxu0 %v6342
    %6379 = vmatprep.subr.bf16.mxu0 0
    %6380 = vmatpush1.bf16.msra.mxu0 %v6343
    %6381 = vmatprep.subr.bf16.mxu0 0
    %6382 = vmatpush1.bf16.msra.mxu0 %v6344
    %6383 = vmatprep.subr.bf16.mxu0 0
    %6384 = vmatpush1.bf16.msra.mxu0 %v6345
    %6385 = vmatprep.subr.bf16.mxu0 0
    %6386 = vmatpush1.bf16.msra.mxu0 %v6346
    %6387 = vmatprep.subr.bf16.mxu0 0
    %6388 = vmatpush1.bf16.msra.mxu0 %v6347
    %6389 = vmatprep.subr.bf16.mxu0 0
    %6390 = vmatpush1.bf16.msra.mxu0 %v6348
    %6391 = vmatprep.subr.bf16.mxu0 0
    %6392 = vmatpush1.bf16.msra.mxu0 %v6349
    %6393 = vmatprep.subr.bf16.mxu0 0
    %6394 = vmatpush1.bf16.msra.mxu0 %v6350
    %6395 = vmatprep.subr.bf16.mxu0 0
    %6396 = vmatpush1.bf16.msra.mxu0 %v6351
    %6397 = vmatprep.subr.bf16.mxu0 0
    %6398 = vmatpush1.bf16.msra.mxu0 %v6371
    %6399 = vmatprep.subr.bf16.mxu0 0
    %6400 = vmatpush1.bf16.msra.mxu0 0
    %6401 = vmatprep.subr.bf16.mxu0 0
    %6402 = vmatpush1.bf16.msra.mxu0 0
    %6403 = vmatprep.subr.bf16.mxu0 0
    %6404 = vmatpush1.bf16.msra.mxu0 0
    %6405 = vmatprep.mubr.bf16.mxu0 %v6367
    %6406 = vmatmul.mubr.bf16.gmra.mrb[0].mxu0 %v6256
    %v6407 = vpop.f32.mrb[0].mxu0
    %v6408 = vadd.f32 %v6288, %v6407
    %v6409 = vpop.f32.mrb[0].mxu0
    %v6410 = vpop.f32.mrb[0].mxu0
    %v6411 = vpop.f32.mrb[0].mxu0
    %6412 = vdwg.mxu0
    %vm6413 = vcmask 326656
    %v6414 = vsel %vm6413, %v6408, -inf
    %6415 = vmax.xlane.f32.xlu0 %v6414
    %v6416 = vpop.xlane.xlu0 %6415
    %v6417 = vsub.f32 %v6408, %v6416
    %v6418 = vmul.f32 %v6417, 1.442695
    %v6419 = vpow.pop %v6418
    %v6420 = vsel %vm6413, %v6419, 0.0
    %6421 = vadd.xlane.f32.xlu0 %v6420
    %v6422 = vpop.xlane.xlu0 %6421
    %v6423 = vrcp.pop %v6422
    %v6424 = vmul.f32 %v6419, %v6423
    %6425 = vst.msk [vmem:[#allocation2] sm:$0xff] %vm6413, %v6424
    // Predicated region
    $region22: #{tpu_custom_call.1} parent=1 // pred_check
      _
    $region23: #{tpu_custom_call.1} parent=1 // pred_check_branch
      %6427 = sbr.rel (0) target = $region25
    $region24: #{tpu_custom_call.1} parent=1 // pred_region
      %s6429 = ssub.s32 128, 32
      %6430 = vsyncadd [#allocation3], %s6429
      %s6431 = sshll.u32 [#allocation2], 4
      %s6432 = int_to_ptr.vmem [resolvable:$true] %s6431
      %6437 = dma.vmem_to_hbm [thread:$0]  %s6432, 32, %s5, [#allocation3], 32, 32, 2
    $region25: #{tpu_custom_call.1} parent=1 // pred_fallthru
      _
    // Predicated region
    $region26: #{tpu_custom_call.1} parent=1 // pred_check
      _
    $region27: #{tpu_custom_call.1} parent=1 // pred_check_branch
      %6439 = sbr.rel (0) target = $region29
    $region28: #{tpu_custom_call.1} parent=1 // pred_region
      %6440 = dma.done [#allocation3], 128
    $region29: #{tpu_custom_call.1} parent=1 // pred_fallthru
      _
    %6441 = vsyncpa [#allocation3], 1

</llo_original>
